<compile_context>
chip_gen: v6e
topology: v6e:2x2x1
jax: 0.10.0
libtpu: 0.0.40
codegen_flags: <defaults>
</compile_context>

<pallas_src>
import math
import jax
import jax.numpy as jnp
from jax.experimental import pallas as pl
from jax.experimental.pallas import tpu as pltpu

MAX_LEN = 512
NUM_BASES = 4
NUM_CLASSES = 2
EMBED = 128
HEADS = 4
HEAD_DIM = EMBED // HEADS
FF = 256
NUM_LAYERS = 4
KSIZE = 5
CONV_OUT = 64
LN_EPS = 1e-5

KC = KSIZE * NUM_BASES          # 20 real im2col columns
KC_PAD = 32                     # zero-padded contraction dim
CONV_PAD = 128                  # lane-dense padded conv channel dim (real: 64)
OUT_PAD = 128                   # lane-dense padded class dim (real: 2)
MM_DTYPE = jnp.bfloat16         # MXU input dtype (f32 accumulation everywhere)


def _layernorm(x, gamma, beta):
    mu = jnp.mean(x, axis=-1, keepdims=True)
    var = jnp.mean((x - mu) ** 2, axis=-1, keepdims=True)
    return (x - mu) * jax.lax.rsqrt(var + LN_EPS) * gamma + beta


# --------------------------- single fused forward kernel ---------------------------
def fused_kernel(xcol_ref, pe_ref, wc_ref, wp_ref, fb_ref,
                 wqkv_ref, bqkv_ref, wo_ref, w1_ref, b1_ref, w2_ref,
                 lnb_ref, wfc_ref, o_ref):
    TB, L, kc = xcol_ref.shape
    S = L // 2
    R = TB * S                                          # flattened (batch_tile * seq) rows

    fb = fb_ref[...]                                    # (3,128): [conv bias, proj bias, fc bias]

    # ---- frontend: im2col Conv1d(k=5,pad=2) + ReLU + MaxPool1d(2) + Linear(64->128) + PE ----
    xcol = xcol_ref[...].reshape(TB * L, kc)            # already bf16
    h = jnp.dot(xcol, wc_ref[...], preferred_element_type=jnp.float32) + fb[0:1]
    h = jnp.maximum(h, 0.0)                             # ReLU, (TB*L, 128) f32 (lane-dense pad)
    p = jnp.max(h.reshape(R, 2, CONV_PAD), axis=1)      # MaxPool1d(2) over length
    x = (jnp.dot(p.astype(MM_DTYPE), wp_ref[...], preferred_element_type=jnp.float32)
         + fb[1:2])                                     # projection, (R, 128)
    x = (x.reshape(TB, S, EMBED) + pe_ref[...]).reshape(R, EMBED)   # + positional encoding

    # ---- NUM_LAYERS x TransformerEncoderLayer (post-norm, ReLU, batch_first), unrolled ----
    # dropout(p=0.1) is inference-mode identity; attention scale pre-folded into wqkv.
    for l in range(NUM_LAYERS):
        lnb = lnb_ref[l]                                # (6,128): [bo, g1, be1, b2, g2, be2]
        qkv = (jnp.dot(x.astype(MM_DTYPE), wqkv_ref[l],
                       preferred_element_type=jnp.float32) + bqkv_ref[l])   # (R, 384)
        qkv3 = qkv.reshape(TB, S, 3 * EMBED)
        wo_l = wo_ref[l]
        attn = jnp.zeros((R, EMBED), jnp.float32)
        for hh in range(HEADS):                         # static 4-way loop; batched over TB
            c0 = hh * HEAD_DIM
            qh = qkv3[:, :, c0:c0 + HEAD_DIM].astype(MM_DTYPE)
            kh = qkv3[:, :, EMBED + c0:EMBED + c0 + HEAD_DIM].astype(MM_DTYPE)
            vh = qkv3[:, :, 2 * EMBED + c0:2 * EMBED + c0 + HEAD_DIM].astype(MM_DTYPE)
            s = jnp.einsum('bqd,bkd->bqk', qh, kh,
                           preferred_element_type=jnp.float32)      # (TB, S, S)
            s = s - jnp.max(s, axis=-1, keepdims=True)
            e = jnp.exp(s)
            pr = e * pl.reciprocal(jnp.sum(e, axis=-1, keepdims=True), approx=True)
            ctx = jnp.einsum('bqk,bkd->bqd', pr.astype(MM_DTYPE), vh,
                             preferred_element_type=jnp.float32)    # (TB, S, HEAD_DIM)
            # fold head concat into the output projection:
            #   concat_h(ctx_h) @ Wo == sum_h ctx_h @ Wo[h*dh:(h+1)*dh, :]
            attn = attn + jnp.dot(ctx.reshape(R, HEAD_DIM).astype(MM_DTYPE),
                                  wo_l[c0:c0 + HEAD_DIM, :],
                                  preferred_element_type=jnp.float32)
        attn = attn + lnb[0:1]
        y = _layernorm(x + attn, lnb[1:2], lnb[2:3])                # residual + LayerNorm1
        f = jnp.maximum(jnp.dot(y.astype(MM_DTYPE), w1_ref[l],
                                preferred_element_type=jnp.float32) + b1_ref[l], 0.0)
        f = jnp.dot(f.astype(MM_DTYPE), w2_ref[l],
                    preferred_element_type=jnp.float32) + lnb[3:4]
        x = _layernorm(y + f, lnb[4:5], lnb[5:6])                   # residual + LayerNorm2

    # ---- head: mean over sequence + Linear(128 -> classes), lane-padded to 128 columns ----
    m = jnp.mean(x.reshape(TB, S, EMBED), axis=1)                   # (TB, 128) f32
    logits = jnp.dot(m.astype(MM_DTYPE), wfc_ref[...],
                     preferred_element_type=jnp.float32) + fb[2:3]
    o_ref[...] = logits.reshape(TB, 1, OUT_PAD)


# ------------------------------------ wrappers ------------------------------------
def _im2col(x):
    """(B, L, Cin) -> (B, L, KC_PAD) unfolded conv patches, zero-padded contraction dim."""
    B, L, C = x.shape
    pad = KSIZE // 2
    xp = jnp.pad(x, ((0, 0), (pad, pad), (0, 0)))
    cols = jnp.concatenate([xp[:, k:k + L, :] for k in range(KSIZE)], axis=-1)  # (B, L, K*C)
    return jnp.pad(cols, ((0, 0), (0, 0), (0, KC_PAD - KSIZE * C)))


def _num_parallel_cores():
    """2 when a 'parallel' grid axis maps to 2 TensorCores (v4/v5p/v7x), else 1."""
    try:
        kind = jax.devices()[0].device_kind.lower().replace(" ", "")
    except Exception:
        return 1
    if "lite" in kind or "v5e" in kind or "v6e" in kind:
        return 1
    if any(t in kind for t in ("v4", "v5p", "v7")):
        return 2
    return 1


def _choose_batch_tile(B, S):
    """One big block on single-TC chips (max MXU M); exactly 2 parallel blocks on 2-TC
    chips.  Rows per block capped (~2048) so the batched score buffers stay VMEM-friendly."""
    if B <= 1:
        return 1
    cores = _num_parallel_cores()
    tb = B if cores <= 1 else max(1, B // cores)
    tb = min(tb, max(1, 2048 // S))
    while B % tb:
        tb -= 1
    return tb


@jax.jit
def transformer_classifier_forward(x, params):
    (wc, wp, fb, pe_full, wqkv, bqkv, wo, w1, b1, w2, lnb, wfc) = params
    B, L, _ = x.shape
    assert L % 2 == 0, "MaxPool1d(kernel_size=2) requires an even sequence length"
    assert L <= MAX_LEN, "sequence length exceeds the positional-encoding table"
    S = L // 2
    TB = _choose_batch_tile(B, S)
    NB = B // TB

    xcol = _im2col(x).astype(MM_DTYPE)                   # (B, L, KC_PAD) bf16
    pe = pe_full[:S]                                     # (S, EMBED), shared by all blocks

    def rep(a):                                          # weight replicated across grid
        nd = a.ndim
        return pl.BlockSpec(a.shape, lambda b, _nd=nd: (0,) * _nd)

    weights = (wc, wp, fb, wqkv, bqkv, wo, w1, b1, w2, lnb, wfc)

    out = pl.pallas_call(
        fused_kernel,
        out_shape=jax.ShapeDtypeStruct((B, 1, OUT_PAD), jnp.float32),
        grid=(NB,),
        in_specs=[pl.BlockSpec((TB, L, KC_PAD), lambda b: (b, 0, 0)),
                  rep(pe)] + [rep(w) for w in weights],
        out_specs=pl.BlockSpec((TB, 1, OUT_PAD), lambda b: (b, 0, 0)),
        compiler_params=pltpu.CompilerParams(dimension_semantics=("parallel",)),
    )(xcol, pe, *weights)
    return out[:, 0, :NUM_CLASSES]


def positional_encoding(seq_len, d_model):
    position = jnp.arange(seq_len, dtype=jnp.float32)[:, None]
    div_term = jnp.exp(jnp.arange(0, d_model, 2, dtype=jnp.float32)
                       * (-math.log(10000.0) / d_model))
    pe = jnp.zeros((seq_len, d_model), jnp.float32)
    pe = pe.at[:, 0::2].set(jnp.sin(position * div_term))
    pe = pe.at[:, 1::2].set(jnp.cos(position * div_term))
    return pe


def init_params(key):
    def dense(k, fan_in, shape):
        return jax.random.normal(k, shape, jnp.float32) / math.sqrt(fan_in)

    keys = iter(jax.random.split(key, 64))

    # Conv1d weight (K, Cin, Cout) -> im2col rows (K*Cin, Cout), zero-padded to
    # (KC_PAD, CONV_PAD) so both the contraction and output-channel dims are lane-dense.
    wc_kcio = dense(next(keys), NUM_BASES * KSIZE, (KSIZE, NUM_BASES, CONV_OUT))
    wc = jnp.zeros((KC_PAD, CONV_PAD), jnp.float32).at[:KC, :CONV_OUT].set(
        wc_kcio.reshape(KC, CONV_OUT)).astype(MM_DTYPE)
    wp_real = dense(next(keys), CONV_OUT, (CONV_OUT, EMBED))
    wp = jnp.zeros((CONV_PAD, EMBED), jnp.float32).at[:CONV_OUT].set(wp_real).astype(MM_DTYPE)
    pe_full = positional_encoding(MAX_LEN // 2, EMBED)   # hoisted out of the forward pass

    scale = 1.0 / math.sqrt(HEAD_DIM)                    # folded into the Q weight columns
    wqkv_l, wo_l, w1_l, w2_l = [], [], [], []
    for _ in range(NUM_LAYERS):
        wq = dense(next(keys), EMBED, (EMBED, EMBED)) * scale
        wk = dense(next(keys), EMBED, (EMBED, EMBED))
        wv = dense(next(keys), EMBED, (EMBED, EMBED))
        wqkv_l.append(jnp.concatenate([wq, wk, wv], axis=1))          # fused (128, 384)
        wo_l.append(dense(next(keys), EMBED, (EMBED, EMBED)))
        w1_l.append(dense(next(keys), EMBED, (EMBED, FF)))
        w2_l.append(dense(next(keys), FF, (FF, EMBED)))
    wqkv = jnp.stack(wqkv_l).astype(MM_DTYPE)            # (NL, 128, 384)
    wo = jnp.stack(wo_l).astype(MM_DTYPE)                # (NL, 128, 128)
    w1 = jnp.stack(w1_l).astype(MM_DTYPE)                # (NL, 128, 256)
    w2 = jnp.stack(w2_l).astype(MM_DTYPE)                # (NL, 256, 128)
    bqkv = jnp.zeros((NUM_LAYERS, 1, 3 * EMBED), jnp.float32)  # Q third implicitly pre-scaled
    b1 = jnp.zeros((NUM_LAYERS, 1, FF), jnp.float32)

    # packed per-layer vectors: rows [bo, gamma1, beta1, b2, gamma2, beta2]
    ln_row = jnp.stack([jnp.zeros(EMBED), jnp.ones(EMBED), jnp.zeros(EMBED),
                        jnp.zeros(EMBED), jnp.ones(EMBED), jnp.zeros(EMBED)])
    lnb = jnp.tile(ln_row[None], (NUM_LAYERS, 1, 1)).astype(jnp.float32)   # (NL, 6, 128)

    wfc_real = dense(next(keys), EMBED, (EMBED, NUM_CLASSES))
    wfc = jnp.zeros((EMBED, OUT_PAD), jnp.float32).at[:, :NUM_CLASSES].set(
        wfc_real).astype(MM_DTYPE)                       # lane-dense padded fc weight
    fb = jnp.zeros((3, EMBED), jnp.float32)              # rows: [conv bias, proj bias, fc bias]

    return (wc, wp, fb, pe_full, wqkv, bqkv, wo, w1, b1, w2, lnb, wfc)


if __name__ == "__main__":
    key = jax.random.PRNGKey(0)
    pkey, xkey = jax.random.split(key)
    params = init_params(pkey)
    B, L = 2, 16                                         # input: (batch, seq_len, NUM_BASES)
    x = jax.random.normal(xkey, (B, L, NUM_BASES), jnp.float32)
    out = jax.block_until_ready(transformer_classifier_forward(x, params))
    assert out.shape == (B, NUM_CLASSES)
    assert bool(jnp.all(jnp.isfinite(out)))
    print("KERNEL_OK")
</pallas_src>

<mosaic_0001>
module attributes {stable_mosaic.version = 11 : i64} {
  func.func @fused_kernel(%arg0: i32, %arg1: memref<2x16x32xbf16, #tpu.memory_space<vmem>>, %arg2: memref<8x128xf32, #tpu.memory_space<vmem>>, %arg3: memref<32x128xbf16, #tpu.memory_space<vmem>>, %arg4: memref<128x128xbf16, #tpu.memory_space<vmem>>, %arg5: memref<3x128xf32, #tpu.memory_space<vmem>>, %arg6: memref<4x128x384xbf16, #tpu.memory_space<vmem>>, %arg7: memref<4x1x384xf32, #tpu.memory_space<vmem>>, %arg8: memref<4x128x128xbf16, #tpu.memory_space<vmem>>, %arg9: memref<4x128x256xbf16, #tpu.memory_space<vmem>>, %arg10: memref<4x1x256xf32, #tpu.memory_space<vmem>>, %arg11: memref<4x256x128xbf16, #tpu.memory_space<vmem>>, %arg12: memref<4x6x128xf32, #tpu.memory_space<vmem>>, %arg13: memref<128x128xbf16, #tpu.memory_space<vmem>>, %arg14: memref<2x1x128xf32, #tpu.memory_space<vmem>>) attributes {dimension_semantics = [#tpu.dimension_semantics<parallel>], iteration_bounds = array<i64: 1>, scalar_prefetch = 0 : i64, scratch_operands = 0 : i64, tpu.core_type = #tpu.core_type<tc>, window_params = [{transform_indices = @transform_0, window_bounds = array<i64: 2, 16, 32>}, {pipeline_mode = #tpu.pipeline_mode<synchronous>, transform_indices = @transform_1, window_bounds = array<i64: 8, 128>}, {pipeline_mode = #tpu.pipeline_mode<synchronous>, transform_indices = @transform_2, window_bounds = array<i64: 32, 128>}, {pipeline_mode = #tpu.pipeline_mode<synchronous>, transform_indices = @transform_3, window_bounds = array<i64: 128, 128>}, {pipeline_mode = #tpu.pipeline_mode<synchronous>, transform_indices = @transform_4, window_bounds = array<i64: 3, 128>}, {pipeline_mode = #tpu.pipeline_mode<synchronous>, transform_indices = @transform_5, window_bounds = array<i64: 4, 128, 384>}, {pipeline_mode = #tpu.pipeline_mode<synchronous>, transform_indices = @transform_6, window_bounds = array<i64: 4, 1, 384>}, {pipeline_mode = #tpu.pipeline_mode<synchronous>, transform_indices = @transform_7, window_bounds = array<i64: 4, 128, 128>}, {pipeline_mode = #tpu.pipeline_mode<synchronous>, transform_indices = @transform_8, window_bounds = array<i64: 4, 128, 256>}, {pipeline_mode = #tpu.pipeline_mode<synchronous>, transform_indices = @transform_9, window_bounds = array<i64: 4, 1, 256>}, {pipeline_mode = #tpu.pipeline_mode<synchronous>, transform_indices = @transform_10, window_bounds = array<i64: 4, 256, 128>}, {pipeline_mode = #tpu.pipeline_mode<synchronous>, transform_indices = @transform_11, window_bounds = array<i64: 4, 6, 128>}, {pipeline_mode = #tpu.pipeline_mode<synchronous>, transform_indices = @transform_12, window_bounds = array<i64: 128, 128>}, {transform_indices = @transform_13, window_bounds = array<i64: 2, 1, 128>}]} {
    %c0 = arith.constant 0 : index
    %c0_0 = arith.constant 0 : index
    %0 = vector.load %arg5[%c0, %c0_0] : memref<3x128xf32, #tpu.memory_space<vmem>>, vector<3x128xf32>
    %c0_1 = arith.constant 0 : index
    %c0_2 = arith.constant 0 : index
    %c0_3 = arith.constant 0 : index
    %1 = vector.load %arg1[%c0_1, %c0_2, %c0_3] : memref<2x16x32xbf16, #tpu.memory_space<vmem>>, vector<2x16x32xbf16>
    %2 = vector.shape_cast %1 : vector<2x16x32xbf16> to vector<32x32xbf16>
    %c0_4 = arith.constant 0 : index
    %c0_5 = arith.constant 0 : index
    %3 = vector.load %arg3[%c0_4, %c0_5] : memref<32x128xbf16, #tpu.memory_space<vmem>>, vector<32x128xbf16>
    %cst = arith.constant dense<0.000000e+00> : vector<32x128xf32>
    %4 = tpu.matmul %2, %3, %cst {dimension_numbers = #tpu.dot_dimension_numbers<[1], [0], [0], [1], [0, 0, 1, 1], [], []>} : vector<32x32xbf16>, vector<32x128xbf16>, vector<32x128xf32> -> vector<32x128xf32>
    %5 = vector.extract_strided_slice %0 {offsets = [0, 0], sizes = [1, 128], strides = [1, 1]} : vector<3x128xf32> to vector<1x128xf32>
    %6 = vector.broadcast %5 : vector<1x128xf32> to vector<32x128xf32>
    %7 = arith.addf %4, %6 : vector<32x128xf32>
    %cst_6 = arith.constant 0.000000e+00 : f32
    %8 = vector.broadcast %cst_6 : f32 to vector<32x128xf32>
    %9 = arith.maximumf %7, %8 : vector<32x128xf32>
    %10 = vector.shape_cast %9 : vector<32x128xf32> to vector<16x2x128xf32>
    %cst_7 = arith.constant dense<0xFF800000> : vector<16x128xf32>
    %11 = vector.multi_reduction <maximumf>, %10, %cst_7 [1] : vector<16x2x128xf32> to vector<16x128xf32>
    %12 = arith.truncf %11 : vector<16x128xf32> to vector<16x128xbf16>
    %c0_8 = arith.constant 0 : index
    %c0_9 = arith.constant 0 : index
    %13 = vector.load %arg4[%c0_8, %c0_9] : memref<128x128xbf16, #tpu.memory_space<vmem>>, vector<128x128xbf16>
    %cst_10 = arith.constant dense<0.000000e+00> : vector<16x128xf32>
    %14 = tpu.matmul %12, %13, %cst_10 {dimension_numbers = #tpu.dot_dimension_numbers<[1], [0], [0], [1], [0, 0, 1, 1], [], []>} : vector<16x128xbf16>, vector<128x128xbf16>, vector<16x128xf32> -> vector<16x128xf32>
    %15 = vector.extract_strided_slice %0 {offsets = [1, 0], sizes = [1, 128], strides = [1, 1]} : vector<3x128xf32> to vector<1x128xf32>
    %16 = vector.broadcast %15 : vector<1x128xf32> to vector<16x128xf32>
    %17 = arith.addf %14, %16 : vector<16x128xf32>
    %18 = vector.shape_cast %17 : vector<16x128xf32> to vector<2x8x128xf32>
    %c0_11 = arith.constant 0 : index
    %c0_12 = arith.constant 0 : index
    %19 = vector.load %arg2[%c0_11, %c0_12] : memref<8x128xf32, #tpu.memory_space<vmem>>, vector<8x128xf32>
    %20 = vector.shape_cast %19 : vector<8x128xf32> to vector<1x8x128xf32>
    %21 = vector.broadcast %20 : vector<1x8x128xf32> to vector<2x8x128xf32>
    %22 = arith.addf %18, %21 : vector<2x8x128xf32>
    %23 = vector.shape_cast %22 : vector<2x8x128xf32> to vector<16x128xf32>
    %c0_13 = arith.constant 0 : index
    %c0_14 = arith.constant 0 : index
    %c0_15 = arith.constant 0 : index
    %24 = vector.load %arg12[%c0_13, %c0_14, %c0_15] : memref<4x6x128xf32, #tpu.memory_space<vmem>>, vector<1x6x128xf32>
    %25 = vector.shape_cast %24 : vector<1x6x128xf32> to vector<6x128xf32>
    %26 = arith.truncf %23 : vector<16x128xf32> to vector<16x128xbf16>
    %c0_16 = arith.constant 0 : index
    %c0_17 = arith.constant 0 : index
    %c0_18 = arith.constant 0 : index
    %27 = vector.load %arg6[%c0_16, %c0_17, %c0_18] : memref<4x128x384xbf16, #tpu.memory_space<vmem>>, vector<1x128x384xbf16>
    %28 = vector.shape_cast %27 : vector<1x128x384xbf16> to vector<128x384xbf16>
    %cst_19 = arith.constant dense<0.000000e+00> : vector<16x384xf32>
    %29 = tpu.matmul %26, %28, %cst_19 {dimension_numbers = #tpu.dot_dimension_numbers<[1], [0], [0], [1], [0, 0, 1, 1], [], []>} : vector<16x128xbf16>, vector<128x384xbf16>, vector<16x384xf32> -> vector<16x384xf32>
    %c0_20 = arith.constant 0 : index
    %c0_21 = arith.constant 0 : index
    %c0_22 = arith.constant 0 : index
    %30 = vector.load %arg7[%c0_20, %c0_21, %c0_22] : memref<4x1x384xf32, #tpu.memory_space<vmem>>, vector<1x1x384xf32>
    %31 = vector.shape_cast %30 : vector<1x1x384xf32> to vector<1x384xf32>
    %32 = vector.broadcast %31 : vector<1x384xf32> to vector<16x384xf32>
    %33 = arith.addf %29, %32 : vector<16x384xf32>
    %34 = vector.shape_cast %33 : vector<16x384xf32> to vector<2x8x384xf32>
    %c0_23 = arith.constant 0 : index
    %c0_24 = arith.constant 0 : index
    %c0_25 = arith.constant 0 : index
    %35 = vector.load %arg8[%c0_23, %c0_24, %c0_25] : memref<4x128x128xbf16, #tpu.memory_space<vmem>>, vector<1x128x128xbf16>
    %36 = vector.shape_cast %35 : vector<1x128x128xbf16> to vector<128x128xbf16>
    %cst_26 = arith.constant 0.000000e+00 : f32
    %37 = vector.broadcast %cst_26 : f32 to vector<16x128xf32>
    %38 = vector.extract_strided_slice %34 {offsets = [0, 0, 0], sizes = [2, 8, 32], strides = [1, 1, 1]} : vector<2x8x384xf32> to vector<2x8x32xf32>
    %39 = arith.truncf %38 : vector<2x8x32xf32> to vector<2x8x32xbf16>
    %40 = vector.extract_strided_slice %34 {offsets = [0, 0, 128], sizes = [2, 8, 32], strides = [1, 1, 1]} : vector<2x8x384xf32> to vector<2x8x32xf32>
    %41 = arith.truncf %40 : vector<2x8x32xf32> to vector<2x8x32xbf16>
    %42 = vector.extract_strided_slice %34 {offsets = [0, 0, 256], sizes = [2, 8, 32], strides = [1, 1, 1]} : vector<2x8x384xf32> to vector<2x8x32xf32>
    %43 = arith.truncf %42 : vector<2x8x32xf32> to vector<2x8x32xbf16>
    "tpu.trace_start"() <{level = 10 : i32, message = "bqd,bkd->bqk"}> : () -> ()
    %cst_27 = arith.constant dense<0.000000e+00> : vector<2x8x8xf32>
    %44 = tpu.matmul %39, %41, %cst_27 {dimension_numbers = #tpu.dot_dimension_numbers<[2], [2], [1], [1], [0, 0, 0, 1, 1, 1], [0], [0]>} : vector<2x8x32xbf16>, vector<2x8x32xbf16>, vector<2x8x8xf32> -> vector<2x8x8xf32>
    "tpu.trace_stop"() : () -> ()
    %cst_28 = arith.constant dense<0xFF800000> : vector<2x8xf32>
    %45 = vector.multi_reduction <maximumf>, %44, %cst_28 [2] : vector<2x8x8xf32> to vector<2x8xf32>
    %46 = vector.shape_cast %45 : vector<2x8xf32> to vector<2x8x1xf32>
    %47 = vector.broadcast %46 : vector<2x8x1xf32> to vector<2x8x8xf32>
    %48 = arith.subf %44, %47 : vector<2x8x8xf32>
    %49 = math.exp %48 : vector<2x8x8xf32>
    %cst_29 = arith.constant dense<0.000000e+00> : vector<2x8xf32>
    %50 = vector.multi_reduction <add>, %49, %cst_29 [2] : vector<2x8x8xf32> to vector<2x8xf32>
    %51 = vector.shape_cast %50 : vector<2x8xf32> to vector<2x8x1xf32>
    %52 = tpu.reciprocal %51 {approx = true} : vector<2x8x1xf32> -> vector<2x8x1xf32>
    %53 = vector.broadcast %52 : vector<2x8x1xf32> to vector<2x8x8xf32>
    %54 = arith.mulf %49, %53 : vector<2x8x8xf32>
    %55 = arith.truncf %54 : vector<2x8x8xf32> to vector<2x8x8xbf16>
    "tpu.trace_start"() <{level = 10 : i32, message = "bqk,bkd->bqd"}> : () -> ()
    %cst_30 = arith.constant dense<0.000000e+00> : vector<2x8x32xf32>
    %56 = tpu.matmul %55, %43, %cst_30 {dimension_numbers = #tpu.dot_dimension_numbers<[2], [1], [1], [2], [0, 0, 0, 1, 1, 2], [0], [0]>} : vector<2x8x8xbf16>, vector<2x8x32xbf16>, vector<2x8x32xf32> -> vector<2x8x32xf32>
    "tpu.trace_stop"() : () -> ()
    %57 = vector.shape_cast %56 : vector<2x8x32xf32> to vector<16x32xf32>
    %58 = arith.truncf %57 : vector<16x32xf32> to vector<16x32xbf16>
    %59 = vector.extract_strided_slice %36 {offsets = [0, 0], sizes = [32, 128], strides = [1, 1]} : vector<128x128xbf16> to vector<32x128xbf16>
    %cst_31 = arith.constant dense<0.000000e+00> : vector<16x128xf32>
    %60 = tpu.matmul %58, %59, %cst_31 {dimension_numbers = #tpu.dot_dimension_numbers<[1], [0], [0], [1], [0, 0, 1, 1], [], []>} : vector<16x32xbf16>, vector<32x128xbf16>, vector<16x128xf32> -> vector<16x128xf32>
    %61 = arith.addf %37, %60 : vector<16x128xf32>
    %62 = vector.extract_strided_slice %34 {offsets = [0, 0, 32], sizes = [2, 8, 32], strides = [1, 1, 1]} : vector<2x8x384xf32> to vector<2x8x32xf32>
    %63 = arith.truncf %62 : vector<2x8x32xf32> to vector<2x8x32xbf16>
    %64 = vector.extract_strided_slice %34 {offsets = [0, 0, 160], sizes = [2, 8, 32], strides = [1, 1, 1]} : vector<2x8x384xf32> to vector<2x8x32xf32>
    %65 = arith.truncf %64 : vector<2x8x32xf32> to vector<2x8x32xbf16>
    %66 = vector.extract_strided_slice %34 {offsets = [0, 0, 288], sizes = [2, 8, 32], strides = [1, 1, 1]} : vector<2x8x384xf32> to vector<2x8x32xf32>
    %67 = arith.truncf %66 : vector<2x8x32xf32> to vector<2x8x32xbf16>
    "tpu.trace_start"() <{level = 10 : i32, message = "bqd,bkd->bqk"}> : () -> ()
    %cst_32 = arith.constant dense<0.000000e+00> : vector<2x8x8xf32>
    %68 = tpu.matmul %63, %65, %cst_32 {dimension_numbers = #tpu.dot_dimension_numbers<[2], [2], [1], [1], [0, 0, 0, 1, 1, 1], [0], [0]>} : vector<2x8x32xbf16>, vector<2x8x32xbf16>, vector<2x8x8xf32> -> vector<2x8x8xf32>
    "tpu.trace_stop"() : () -> ()
    %cst_33 = arith.constant dense<0xFF800000> : vector<2x8xf32>
    %69 = vector.multi_reduction <maximumf>, %68, %cst_33 [2] : vector<2x8x8xf32> to vector<2x8xf32>
    %70 = vector.shape_cast %69 : vector<2x8xf32> to vector<2x8x1xf32>
    %71 = vector.broadcast %70 : vector<2x8x1xf32> to vector<2x8x8xf32>
    %72 = arith.subf %68, %71 : vector<2x8x8xf32>
    %73 = math.exp %72 : vector<2x8x8xf32>
    %cst_34 = arith.constant dense<0.000000e+00> : vector<2x8xf32>
    %74 = vector.multi_reduction <add>, %73, %cst_34 [2] : vector<2x8x8xf32> to vector<2x8xf32>
    %75 = vector.shape_cast %74 : vector<2x8xf32> to vector<2x8x1xf32>
    %76 = tpu.reciprocal %75 {approx = true} : vector<2x8x1xf32> -> vector<2x8x1xf32>
    %77 = vector.broadcast %76 : vector<2x8x1xf32> to vector<2x8x8xf32>
    %78 = arith.mulf %73, %77 : vector<2x8x8xf32>
    %79 = arith.truncf %78 : vector<2x8x8xf32> to vector<2x8x8xbf16>
    "tpu.trace_start"() <{level = 10 : i32, message = "bqk,bkd->bqd"}> : () -> ()
    %cst_35 = arith.constant dense<0.000000e+00> : vector<2x8x32xf32>
    %80 = tpu.matmul %79, %67, %cst_35 {dimension_numbers = #tpu.dot_dimension_numbers<[2], [1], [1], [2], [0, 0, 0, 1, 1, 2], [0], [0]>} : vector<2x8x8xbf16>, vector<2x8x32xbf16>, vector<2x8x32xf32> -> vector<2x8x32xf32>
    "tpu.trace_stop"() : () -> ()
    %81 = vector.shape_cast %80 : vector<2x8x32xf32> to vector<16x32xf32>
    %82 = arith.truncf %81 : vector<16x32xf32> to vector<16x32xbf16>
    %83 = vector.extract_strided_slice %36 {offsets = [32, 0], sizes = [32, 128], strides = [1, 1]} : vector<128x128xbf16> to vector<32x128xbf16>
    %cst_36 = arith.constant dense<0.000000e+00> : vector<16x128xf32>
    %84 = tpu.matmul %82, %83, %cst_36 {dimension_numbers = #tpu.dot_dimension_numbers<[1], [0], [0], [1], [0, 0, 1, 1], [], []>} : vector<16x32xbf16>, vector<32x128xbf16>, vector<16x128xf32> -> vector<16x128xf32>
    %85 = arith.addf %61, %84 : vector<16x128xf32>
    %86 = vector.extract_strided_slice %34 {offsets = [0, 0, 64], sizes = [2, 8, 32], strides = [1, 1, 1]} : vector<2x8x384xf32> to vector<2x8x32xf32>
    %87 = arith.truncf %86 : vector<2x8x32xf32> to vector<2x8x32xbf16>
    %88 = vector.extract_strided_slice %34 {offsets = [0, 0, 192], sizes = [2, 8, 32], strides = [1, 1, 1]} : vector<2x8x384xf32> to vector<2x8x32xf32>
    %89 = arith.truncf %88 : vector<2x8x32xf32> to vector<2x8x32xbf16>
    %90 = vector.extract_strided_slice %34 {offsets = [0, 0, 320], sizes = [2, 8, 32], strides = [1, 1, 1]} : vector<2x8x384xf32> to vector<2x8x32xf32>
    %91 = arith.truncf %90 : vector<2x8x32xf32> to vector<2x8x32xbf16>
    "tpu.trace_start"() <{level = 10 : i32, message = "bqd,bkd->bqk"}> : () -> ()
    %cst_37 = arith.constant dense<0.000000e+00> : vector<2x8x8xf32>
    %92 = tpu.matmul %87, %89, %cst_37 {dimension_numbers = #tpu.dot_dimension_numbers<[2], [2], [1], [1], [0, 0, 0, 1, 1, 1], [0], [0]>} : vector<2x8x32xbf16>, vector<2x8x32xbf16>, vector<2x8x8xf32> -> vector<2x8x8xf32>
    "tpu.trace_stop"() : () -> ()
    %cst_38 = arith.constant dense<0xFF800000> : vector<2x8xf32>
    %93 = vector.multi_reduction <maximumf>, %92, %cst_38 [2] : vector<2x8x8xf32> to vector<2x8xf32>
    %94 = vector.shape_cast %93 : vector<2x8xf32> to vector<2x8x1xf32>
    %95 = vector.broadcast %94 : vector<2x8x1xf32> to vector<2x8x8xf32>
    %96 = arith.subf %92, %95 : vector<2x8x8xf32>
    %97 = math.exp %96 : vector<2x8x8xf32>
    %cst_39 = arith.constant dense<0.000000e+00> : vector<2x8xf32>
    %98 = vector.multi_reduction <add>, %97, %cst_39 [2] : vector<2x8x8xf32> to vector<2x8xf32>
    %99 = vector.shape_cast %98 : vector<2x8xf32> to vector<2x8x1xf32>
    %100 = tpu.reciprocal %99 {approx = true} : vector<2x8x1xf32> -> vector<2x8x1xf32>
    %101 = vector.broadcast %100 : vector<2x8x1xf32> to vector<2x8x8xf32>
    %102 = arith.mulf %97, %101 : vector<2x8x8xf32>
    %103 = arith.truncf %102 : vector<2x8x8xf32> to vector<2x8x8xbf16>
    "tpu.trace_start"() <{level = 10 : i32, message = "bqk,bkd->bqd"}> : () -> ()
    %cst_40 = arith.constant dense<0.000000e+00> : vector<2x8x32xf32>
    %104 = tpu.matmul %103, %91, %cst_40 {dimension_numbers = #tpu.dot_dimension_numbers<[2], [1], [1], [2], [0, 0, 0, 1, 1, 2], [0], [0]>} : vector<2x8x8xbf16>, vector<2x8x32xbf16>, vector<2x8x32xf32> -> vector<2x8x32xf32>
    "tpu.trace_stop"() : () -> ()
    %105 = vector.shape_cast %104 : vector<2x8x32xf32> to vector<16x32xf32>
    %106 = arith.truncf %105 : vector<16x32xf32> to vector<16x32xbf16>
    %107 = vector.extract_strided_slice %36 {offsets = [64, 0], sizes = [32, 128], strides = [1, 1]} : vector<128x128xbf16> to vector<32x128xbf16>
    %cst_41 = arith.constant dense<0.000000e+00> : vector<16x128xf32>
    %108 = tpu.matmul %106, %107, %cst_41 {dimension_numbers = #tpu.dot_dimension_numbers<[1], [0], [0], [1], [0, 0, 1, 1], [], []>} : vector<16x32xbf16>, vector<32x128xbf16>, vector<16x128xf32> -> vector<16x128xf32>
    %109 = arith.addf %85, %108 : vector<16x128xf32>
    %110 = vector.extract_strided_slice %34 {offsets = [0, 0, 96], sizes = [2, 8, 32], strides = [1, 1, 1]} : vector<2x8x384xf32> to vector<2x8x32xf32>
    %111 = arith.truncf %110 : vector<2x8x32xf32> to vector<2x8x32xbf16>
    %112 = vector.extract_strided_slice %34 {offsets = [0, 0, 224], sizes = [2, 8, 32], strides = [1, 1, 1]} : vector<2x8x384xf32> to vector<2x8x32xf32>
    %113 = arith.truncf %112 : vector<2x8x32xf32> to vector<2x8x32xbf16>
    %114 = vector.extract_strided_slice %34 {offsets = [0, 0, 352], sizes = [2, 8, 32], strides = [1, 1, 1]} : vector<2x8x384xf32> to vector<2x8x32xf32>
    %115 = arith.truncf %114 : vector<2x8x32xf32> to vector<2x8x32xbf16>
    "tpu.trace_start"() <{level = 10 : i32, message = "bqd,bkd->bqk"}> : () -> ()
    %cst_42 = arith.constant dense<0.000000e+00> : vector<2x8x8xf32>
    %116 = tpu.matmul %111, %113, %cst_42 {dimension_numbers = #tpu.dot_dimension_numbers<[2], [2], [1], [1], [0, 0, 0, 1, 1, 1], [0], [0]>} : vector<2x8x32xbf16>, vector<2x8x32xbf16>, vector<2x8x8xf32> -> vector<2x8x8xf32>
    "tpu.trace_stop"() : () -> ()
    %cst_43 = arith.constant dense<0xFF800000> : vector<2x8xf32>
    %117 = vector.multi_reduction <maximumf>, %116, %cst_43 [2] : vector<2x8x8xf32> to vector<2x8xf32>
    %118 = vector.shape_cast %117 : vector<2x8xf32> to vector<2x8x1xf32>
    %119 = vector.broadcast %118 : vector<2x8x1xf32> to vector<2x8x8xf32>
    %120 = arith.subf %116, %119 : vector<2x8x8xf32>
    %121 = math.exp %120 : vector<2x8x8xf32>
    %cst_44 = arith.constant dense<0.000000e+00> : vector<2x8xf32>
    %122 = vector.multi_reduction <add>, %121, %cst_44 [2] : vector<2x8x8xf32> to vector<2x8xf32>
    %123 = vector.shape_cast %122 : vector<2x8xf32> to vector<2x8x1xf32>
    %124 = tpu.reciprocal %123 {approx = true} : vector<2x8x1xf32> -> vector<2x8x1xf32>
    %125 = vector.broadcast %124 : vector<2x8x1xf32> to vector<2x8x8xf32>
    %126 = arith.mulf %121, %125 : vector<2x8x8xf32>
    %127 = arith.truncf %126 : vector<2x8x8xf32> to vector<2x8x8xbf16>
    "tpu.trace_start"() <{level = 10 : i32, message = "bqk,bkd->bqd"}> : () -> ()
    %cst_45 = arith.constant dense<0.000000e+00> : vector<2x8x32xf32>
    %128 = tpu.matmul %127, %115, %cst_45 {dimension_numbers = #tpu.dot_dimension_numbers<[2], [1], [1], [2], [0, 0, 0, 1, 1, 2], [0], [0]>} : vector<2x8x8xbf16>, vector<2x8x32xbf16>, vector<2x8x32xf32> -> vector<2x8x32xf32>
    "tpu.trace_stop"() : () -> ()
    %129 = vector.shape_cast %128 : vector<2x8x32xf32> to vector<16x32xf32>
    %130 = arith.truncf %129 : vector<16x32xf32> to vector<16x32xbf16>
    %131 = vector.extract_strided_slice %36 {offsets = [96, 0], sizes = [32, 128], strides = [1, 1]} : vector<128x128xbf16> to vector<32x128xbf16>
    %cst_46 = arith.constant dense<0.000000e+00> : vector<16x128xf32>
    %132 = tpu.matmul %130, %131, %cst_46 {dimension_numbers = #tpu.dot_dimension_numbers<[1], [0], [0], [1], [0, 0, 1, 1], [], []>} : vector<16x32xbf16>, vector<32x128xbf16>, vector<16x128xf32> -> vector<16x128xf32>
    %133 = arith.addf %109, %132 : vector<16x128xf32>
    %134 = vector.extract_strided_slice %25 {offsets = [0, 0], sizes = [1, 128], strides = [1, 1]} : vector<6x128xf32> to vector<1x128xf32>
    %135 = vector.broadcast %134 : vector<1x128xf32> to vector<16x128xf32>
    %136 = arith.addf %133, %135 : vector<16x128xf32>
    %137 = arith.addf %23, %136 : vector<16x128xf32>
    %138 = vector.extract_strided_slice %25 {offsets = [1, 0], sizes = [1, 128], strides = [1, 1]} : vector<6x128xf32> to vector<1x128xf32>
    %139 = vector.extract_strided_slice %25 {offsets = [2, 0], sizes = [1, 128], strides = [1, 1]} : vector<6x128xf32> to vector<1x128xf32>
    %cst_47 = arith.constant dense<0.000000e+00> : vector<16xf32>
    %140 = vector.multi_reduction <add>, %137, %cst_47 [1] : vector<16x128xf32> to vector<16xf32>
    %141 = vector.shape_cast %140 : vector<16xf32> to vector<16x1xf32>
    %cst_48 = arith.constant 1.280000e+02 : f32
    %142 = vector.broadcast %cst_48 : f32 to vector<16x1xf32>
    %143 = arith.divf %141, %142 : vector<16x1xf32>
    %144 = vector.broadcast %143 : vector<16x1xf32> to vector<16x128xf32>
    %145 = arith.subf %137, %144 : vector<16x128xf32>
    %146 = arith.mulf %145, %145 : vector<16x128xf32>
    %cst_49 = arith.constant dense<0.000000e+00> : vector<16xf32>
    %147 = vector.multi_reduction <add>, %146, %cst_49 [1] : vector<16x128xf32> to vector<16xf32>
    %148 = vector.shape_cast %147 : vector<16xf32> to vector<16x1xf32>
    %cst_50 = arith.constant 1.280000e+02 : f32
    %149 = vector.broadcast %cst_50 : f32 to vector<16x1xf32>
    %150 = arith.divf %148, %149 : vector<16x1xf32>
    %151 = vector.broadcast %143 : vector<16x1xf32> to vector<16x128xf32>
    %152 = arith.subf %137, %151 : vector<16x128xf32>
    %cst_51 = arith.constant 9.99999974E-6 : f32
    %153 = vector.broadcast %cst_51 : f32 to vector<16x1xf32>
    %154 = arith.addf %150, %153 : vector<16x1xf32>
    %155 = math.rsqrt %154 : vector<16x1xf32>
    %156 = vector.broadcast %155 : vector<16x1xf32> to vector<16x128xf32>
    %157 = arith.mulf %152, %156 : vector<16x128xf32>
    %158 = vector.broadcast %138 : vector<1x128xf32> to vector<16x128xf32>
    %159 = arith.mulf %157, %158 : vector<16x128xf32>
    %160 = vector.broadcast %139 : vector<1x128xf32> to vector<16x128xf32>
    %161 = arith.addf %159, %160 : vector<16x128xf32>
    %162 = arith.truncf %161 : vector<16x128xf32> to vector<16x128xbf16>
    %c0_52 = arith.constant 0 : index
    %c0_53 = arith.constant 0 : index
    %c0_54 = arith.constant 0 : index
    %163 = vector.load %arg9[%c0_52, %c0_53, %c0_54] : memref<4x128x256xbf16, #tpu.memory_space<vmem>>, vector<1x128x256xbf16>
    %164 = vector.shape_cast %163 : vector<1x128x256xbf16> to vector<128x256xbf16>
    %cst_55 = arith.constant dense<0.000000e+00> : vector<16x256xf32>
    %165 = tpu.matmul %162, %164, %cst_55 {dimension_numbers = #tpu.dot_dimension_numbers<[1], [0], [0], [1], [0, 0, 1, 1], [], []>} : vector<16x128xbf16>, vector<128x256xbf16>, vector<16x256xf32> -> vector<16x256xf32>
    %c0_56 = arith.constant 0 : index
    %c0_57 = arith.constant 0 : index
    %c0_58 = arith.constant 0 : index
    %166 = vector.load %arg10[%c0_56, %c0_57, %c0_58] : memref<4x1x256xf32, #tpu.memory_space<vmem>>, vector<1x1x256xf32>
    %167 = vector.shape_cast %166 : vector<1x1x256xf32> to vector<1x256xf32>
    %168 = vector.broadcast %167 : vector<1x256xf32> to vector<16x256xf32>
    %169 = arith.addf %165, %168 : vector<16x256xf32>
    %cst_59 = arith.constant 0.000000e+00 : f32
    %170 = vector.broadcast %cst_59 : f32 to vector<16x256xf32>
    %171 = arith.maximumf %169, %170 : vector<16x256xf32>
    %172 = arith.truncf %171 : vector<16x256xf32> to vector<16x256xbf16>
    %c0_60 = arith.constant 0 : index
    %c0_61 = arith.constant 0 : index
    %c0_62 = arith.constant 0 : index
    %173 = vector.load %arg11[%c0_60, %c0_61, %c0_62] : memref<4x256x128xbf16, #tpu.memory_space<vmem>>, vector<1x256x128xbf16>
    %174 = vector.shape_cast %173 : vector<1x256x128xbf16> to vector<256x128xbf16>
    %cst_63 = arith.constant dense<0.000000e+00> : vector<16x128xf32>
    %175 = tpu.matmul %172, %174, %cst_63 {dimension_numbers = #tpu.dot_dimension_numbers<[1], [0], [0], [1], [0, 0, 1, 1], [], []>} : vector<16x256xbf16>, vector<256x128xbf16>, vector<16x128xf32> -> vector<16x128xf32>
    %176 = vector.extract_strided_slice %25 {offsets = [3, 0], sizes = [1, 128], strides = [1, 1]} : vector<6x128xf32> to vector<1x128xf32>
    %177 = vector.broadcast %176 : vector<1x128xf32> to vector<16x128xf32>
    %178 = arith.addf %175, %177 : vector<16x128xf32>
    %179 = arith.addf %161, %178 : vector<16x128xf32>
    %180 = vector.extract_strided_slice %25 {offsets = [4, 0], sizes = [1, 128], strides = [1, 1]} : vector<6x128xf32> to vector<1x128xf32>
    %181 = vector.extract_strided_slice %25 {offsets = [5, 0], sizes = [1, 128], strides = [1, 1]} : vector<6x128xf32> to vector<1x128xf32>
    %cst_64 = arith.constant dense<0.000000e+00> : vector<16xf32>
    %182 = vector.multi_reduction <add>, %179, %cst_64 [1] : vector<16x128xf32> to vector<16xf32>
    %183 = vector.shape_cast %182 : vector<16xf32> to vector<16x1xf32>
    %cst_65 = arith.constant 1.280000e+02 : f32
    %184 = vector.broadcast %cst_65 : f32 to vector<16x1xf32>
    %185 = arith.divf %183, %184 : vector<16x1xf32>
    %186 = vector.broadcast %185 : vector<16x1xf32> to vector<16x128xf32>
    %187 = arith.subf %179, %186 : vector<16x128xf32>
    %188 = arith.mulf %187, %187 : vector<16x128xf32>
    %cst_66 = arith.constant dense<0.000000e+00> : vector<16xf32>
    %189 = vector.multi_reduction <add>, %188, %cst_66 [1] : vector<16x128xf32> to vector<16xf32>
    %190 = vector.shape_cast %189 : vector<16xf32> to vector<16x1xf32>
    %cst_67 = arith.constant 1.280000e+02 : f32
    %191 = vector.broadcast %cst_67 : f32 to vector<16x1xf32>
    %192 = arith.divf %190, %191 : vector<16x1xf32>
    %193 = vector.broadcast %185 : vector<16x1xf32> to vector<16x128xf32>
    %194 = arith.subf %179, %193 : vector<16x128xf32>
    %cst_68 = arith.constant 9.99999974E-6 : f32
    %195 = vector.broadcast %cst_68 : f32 to vector<16x1xf32>
    %196 = arith.addf %192, %195 : vector<16x1xf32>
    %197 = math.rsqrt %196 : vector<16x1xf32>
    %198 = vector.broadcast %197 : vector<16x1xf32> to vector<16x128xf32>
    %199 = arith.mulf %194, %198 : vector<16x128xf32>
    %200 = vector.broadcast %180 : vector<1x128xf32> to vector<16x128xf32>
    %201 = arith.mulf %199, %200 : vector<16x128xf32>
    %202 = vector.broadcast %181 : vector<1x128xf32> to vector<16x128xf32>
    %203 = arith.addf %201, %202 : vector<16x128xf32>
    %c1 = arith.constant 1 : index
    %c0_69 = arith.constant 0 : index
    %c0_70 = arith.constant 0 : index
    %204 = vector.load %arg12[%c1, %c0_69, %c0_70] : memref<4x6x128xf32, #tpu.memory_space<vmem>>, vector<1x6x128xf32>
    %205 = vector.shape_cast %204 : vector<1x6x128xf32> to vector<6x128xf32>
    %206 = arith.truncf %203 : vector<16x128xf32> to vector<16x128xbf16>
    %c1_71 = arith.constant 1 : index
    %c0_72 = arith.constant 0 : index
    %c0_73 = arith.constant 0 : index
    %207 = vector.load %arg6[%c1_71, %c0_72, %c0_73] : memref<4x128x384xbf16, #tpu.memory_space<vmem>>, vector<1x128x384xbf16>
    %208 = vector.shape_cast %207 : vector<1x128x384xbf16> to vector<128x384xbf16>
    %cst_74 = arith.constant dense<0.000000e+00> : vector<16x384xf32>
    %209 = tpu.matmul %206, %208, %cst_74 {dimension_numbers = #tpu.dot_dimension_numbers<[1], [0], [0], [1], [0, 0, 1, 1], [], []>} : vector<16x128xbf16>, vector<128x384xbf16>, vector<16x384xf32> -> vector<16x384xf32>
    %c1_75 = arith.constant 1 : index
    %c0_76 = arith.constant 0 : index
    %c0_77 = arith.constant 0 : index
    %210 = vector.load %arg7[%c1_75, %c0_76, %c0_77] : memref<4x1x384xf32, #tpu.memory_space<vmem>>, vector<1x1x384xf32>
    %211 = vector.shape_cast %210 : vector<1x1x384xf32> to vector<1x384xf32>
    %212 = vector.broadcast %211 : vector<1x384xf32> to vector<16x384xf32>
    %213 = arith.addf %209, %212 : vector<16x384xf32>
    %214 = vector.shape_cast %213 : vector<16x384xf32> to vector<2x8x384xf32>
    %c1_78 = arith.constant 1 : index
    %c0_79 = arith.constant 0 : index
    %c0_80 = arith.constant 0 : index
    %215 = vector.load %arg8[%c1_78, %c0_79, %c0_80] : memref<4x128x128xbf16, #tpu.memory_space<vmem>>, vector<1x128x128xbf16>
    %216 = vector.shape_cast %215 : vector<1x128x128xbf16> to vector<128x128xbf16>
    %cst_81 = arith.constant 0.000000e+00 : f32
    %217 = vector.broadcast %cst_81 : f32 to vector<16x128xf32>
    %218 = vector.extract_strided_slice %214 {offsets = [0, 0, 0], sizes = [2, 8, 32], strides = [1, 1, 1]} : vector<2x8x384xf32> to vector<2x8x32xf32>
    %219 = arith.truncf %218 : vector<2x8x32xf32> to vector<2x8x32xbf16>
    %220 = vector.extract_strided_slice %214 {offsets = [0, 0, 128], sizes = [2, 8, 32], strides = [1, 1, 1]} : vector<2x8x384xf32> to vector<2x8x32xf32>
    %221 = arith.truncf %220 : vector<2x8x32xf32> to vector<2x8x32xbf16>
    %222 = vector.extract_strided_slice %214 {offsets = [0, 0, 256], sizes = [2, 8, 32], strides = [1, 1, 1]} : vector<2x8x384xf32> to vector<2x8x32xf32>
    %223 = arith.truncf %222 : vector<2x8x32xf32> to vector<2x8x32xbf16>
    "tpu.trace_start"() <{level = 10 : i32, message = "bqd,bkd->bqk"}> : () -> ()
    %cst_82 = arith.constant dense<0.000000e+00> : vector<2x8x8xf32>
    %224 = tpu.matmul %219, %221, %cst_82 {dimension_numbers = #tpu.dot_dimension_numbers<[2], [2], [1], [1], [0, 0, 0, 1, 1, 1], [0], [0]>} : vector<2x8x32xbf16>, vector<2x8x32xbf16>, vector<2x8x8xf32> -> vector<2x8x8xf32>
    "tpu.trace_stop"() : () -> ()
    %cst_83 = arith.constant dense<0xFF800000> : vector<2x8xf32>
    %225 = vector.multi_reduction <maximumf>, %224, %cst_83 [2] : vector<2x8x8xf32> to vector<2x8xf32>
    %226 = vector.shape_cast %225 : vector<2x8xf32> to vector<2x8x1xf32>
    %227 = vector.broadcast %226 : vector<2x8x1xf32> to vector<2x8x8xf32>
    %228 = arith.subf %224, %227 : vector<2x8x8xf32>
    %229 = math.exp %228 : vector<2x8x8xf32>
    %cst_84 = arith.constant dense<0.000000e+00> : vector<2x8xf32>
    %230 = vector.multi_reduction <add>, %229, %cst_84 [2] : vector<2x8x8xf32> to vector<2x8xf32>
    %231 = vector.shape_cast %230 : vector<2x8xf32> to vector<2x8x1xf32>
    %232 = tpu.reciprocal %231 {approx = true} : vector<2x8x1xf32> -> vector<2x8x1xf32>
    %233 = vector.broadcast %232 : vector<2x8x1xf32> to vector<2x8x8xf32>
    %234 = arith.mulf %229, %233 : vector<2x8x8xf32>
    %235 = arith.truncf %234 : vector<2x8x8xf32> to vector<2x8x8xbf16>
    "tpu.trace_start"() <{level = 10 : i32, message = "bqk,bkd->bqd"}> : () -> ()
    %cst_85 = arith.constant dense<0.000000e+00> : vector<2x8x32xf32>
    %236 = tpu.matmul %235, %223, %cst_85 {dimension_numbers = #tpu.dot_dimension_numbers<[2], [1], [1], [2], [0, 0, 0, 1, 1, 2], [0], [0]>} : vector<2x8x8xbf16>, vector<2x8x32xbf16>, vector<2x8x32xf32> -> vector<2x8x32xf32>
    "tpu.trace_stop"() : () -> ()
    %237 = vector.shape_cast %236 : vector<2x8x32xf32> to vector<16x32xf32>
    %238 = arith.truncf %237 : vector<16x32xf32> to vector<16x32xbf16>
    %239 = vector.extract_strided_slice %216 {offsets = [0, 0], sizes = [32, 128], strides = [1, 1]} : vector<128x128xbf16> to vector<32x128xbf16>
    %cst_86 = arith.constant dense<0.000000e+00> : vector<16x128xf32>
    %240 = tpu.matmul %238, %239, %cst_86 {dimension_numbers = #tpu.dot_dimension_numbers<[1], [0], [0], [1], [0, 0, 1, 1], [], []>} : vector<16x32xbf16>, vector<32x128xbf16>, vector<16x128xf32> -> vector<16x128xf32>
    %241 = arith.addf %217, %240 : vector<16x128xf32>
    %242 = vector.extract_strided_slice %214 {offsets = [0, 0, 32], sizes = [2, 8, 32], strides = [1, 1, 1]} : vector<2x8x384xf32> to vector<2x8x32xf32>
    %243 = arith.truncf %242 : vector<2x8x32xf32> to vector<2x8x32xbf16>
    %244 = vector.extract_strided_slice %214 {offsets = [0, 0, 160], sizes = [2, 8, 32], strides = [1, 1, 1]} : vector<2x8x384xf32> to vector<2x8x32xf32>
    %245 = arith.truncf %244 : vector<2x8x32xf32> to vector<2x8x32xbf16>
    %246 = vector.extract_strided_slice %214 {offsets = [0, 0, 288], sizes = [2, 8, 32], strides = [1, 1, 1]} : vector<2x8x384xf32> to vector<2x8x32xf32>
    %247 = arith.truncf %246 : vector<2x8x32xf32> to vector<2x8x32xbf16>
    "tpu.trace_start"() <{level = 10 : i32, message = "bqd,bkd->bqk"}> : () -> ()
    %cst_87 = arith.constant dense<0.000000e+00> : vector<2x8x8xf32>
    %248 = tpu.matmul %243, %245, %cst_87 {dimension_numbers = #tpu.dot_dimension_numbers<[2], [2], [1], [1], [0, 0, 0, 1, 1, 1], [0], [0]>} : vector<2x8x32xbf16>, vector<2x8x32xbf16>, vector<2x8x8xf32> -> vector<2x8x8xf32>
    "tpu.trace_stop"() : () -> ()
    %cst_88 = arith.constant dense<0xFF800000> : vector<2x8xf32>
    %249 = vector.multi_reduction <maximumf>, %248, %cst_88 [2] : vector<2x8x8xf32> to vector<2x8xf32>
    %250 = vector.shape_cast %249 : vector<2x8xf32> to vector<2x8x1xf32>
    %251 = vector.broadcast %250 : vector<2x8x1xf32> to vector<2x8x8xf32>
    %252 = arith.subf %248, %251 : vector<2x8x8xf32>
    %253 = math.exp %252 : vector<2x8x8xf32>
    %cst_89 = arith.constant dense<0.000000e+00> : vector<2x8xf32>
    %254 = vector.multi_reduction <add>, %253, %cst_89 [2] : vector<2x8x8xf32> to vector<2x8xf32>
    %255 = vector.shape_cast %254 : vector<2x8xf32> to vector<2x8x1xf32>
    %256 = tpu.reciprocal %255 {approx = true} : vector<2x8x1xf32> -> vector<2x8x1xf32>
    %257 = vector.broadcast %256 : vector<2x8x1xf32> to vector<2x8x8xf32>
    %258 = arith.mulf %253, %257 : vector<2x8x8xf32>
    %259 = arith.truncf %258 : vector<2x8x8xf32> to vector<2x8x8xbf16>
    "tpu.trace_start"() <{level = 10 : i32, message = "bqk,bkd->bqd"}> : () -> ()
    %cst_90 = arith.constant dense<0.000000e+00> : vector<2x8x32xf32>
    %260 = tpu.matmul %259, %247, %cst_90 {dimension_numbers = #tpu.dot_dimension_numbers<[2], [1], [1], [2], [0, 0, 0, 1, 1, 2], [0], [0]>} : vector<2x8x8xbf16>, vector<2x8x32xbf16>, vector<2x8x32xf32> -> vector<2x8x32xf32>
    "tpu.trace_stop"() : () -> ()
    %261 = vector.shape_cast %260 : vector<2x8x32xf32> to vector<16x32xf32>
    %262 = arith.truncf %261 : vector<16x32xf32> to vector<16x32xbf16>
    %263 = vector.extract_strided_slice %216 {offsets = [32, 0], sizes = [32, 128], strides = [1, 1]} : vector<128x128xbf16> to vector<32x128xbf16>
    %cst_91 = arith.constant dense<0.000000e+00> : vector<16x128xf32>
    %264 = tpu.matmul %262, %263, %cst_91 {dimension_numbers = #tpu.dot_dimension_numbers<[1], [0], [0], [1], [0, 0, 1, 1], [], []>} : vector<16x32xbf16>, vector<32x128xbf16>, vector<16x128xf32> -> vector<16x128xf32>
    %265 = arith.addf %241, %264 : vector<16x128xf32>
    %266 = vector.extract_strided_slice %214 {offsets = [0, 0, 64], sizes = [2, 8, 32], strides = [1, 1, 1]} : vector<2x8x384xf32> to vector<2x8x32xf32>
    %267 = arith.truncf %266 : vector<2x8x32xf32> to vector<2x8x32xbf16>
    %268 = vector.extract_strided_slice %214 {offsets = [0, 0, 192], sizes = [2, 8, 32], strides = [1, 1, 1]} : vector<2x8x384xf32> to vector<2x8x32xf32>
    %269 = arith.truncf %268 : vector<2x8x32xf32> to vector<2x8x32xbf16>
    %270 = vector.extract_strided_slice %214 {offsets = [0, 0, 320], sizes = [2, 8, 32], strides = [1, 1, 1]} : vector<2x8x384xf32> to vector<2x8x32xf32>
    %271 = arith.truncf %270 : vector<2x8x32xf32> to vector<2x8x32xbf16>
    "tpu.trace_start"() <{level = 10 : i32, message = "bqd,bkd->bqk"}> : () -> ()
    %cst_92 = arith.constant dense<0.000000e+00> : vector<2x8x8xf32>
    %272 = tpu.matmul %267, %269, %cst_92 {dimension_numbers = #tpu.dot_dimension_numbers<[2], [2], [1], [1], [0, 0, 0, 1, 1, 1], [0], [0]>} : vector<2x8x32xbf16>, vector<2x8x32xbf16>, vector<2x8x8xf32> -> vector<2x8x8xf32>
    "tpu.trace_stop"() : () -> ()
    %cst_93 = arith.constant dense<0xFF800000> : vector<2x8xf32>
    %273 = vector.multi_reduction <maximumf>, %272, %cst_93 [2] : vector<2x8x8xf32> to vector<2x8xf32>
    %274 = vector.shape_cast %273 : vector<2x8xf32> to vector<2x8x1xf32>
    %275 = vector.broadcast %274 : vector<2x8x1xf32> to vector<2x8x8xf32>
    %276 = arith.subf %272, %275 : vector<2x8x8xf32>
    %277 = math.exp %276 : vector<2x8x8xf32>
    %cst_94 = arith.constant dense<0.000000e+00> : vector<2x8xf32>
    %278 = vector.multi_reduction <add>, %277, %cst_94 [2] : vector<2x8x8xf32> to vector<2x8xf32>
    %279 = vector.shape_cast %278 : vector<2x8xf32> to vector<2x8x1xf32>
    %280 = tpu.reciprocal %279 {approx = true} : vector<2x8x1xf32> -> vector<2x8x1xf32>
    %281 = vector.broadcast %280 : vector<2x8x1xf32> to vector<2x8x8xf32>
    %282 = arith.mulf %277, %281 : vector<2x8x8xf32>
    %283 = arith.truncf %282 : vector<2x8x8xf32> to vector<2x8x8xbf16>
    "tpu.trace_start"() <{level = 10 : i32, message = "bqk,bkd->bqd"}> : () -> ()
    %cst_95 = arith.constant dense<0.000000e+00> : vector<2x8x32xf32>
    %284 = tpu.matmul %283, %271, %cst_95 {dimension_numbers = #tpu.dot_dimension_numbers<[2], [1], [1], [2], [0, 0, 0, 1, 1, 2], [0], [0]>} : vector<2x8x8xbf16>, vector<2x8x32xbf16>, vector<2x8x32xf32> -> vector<2x8x32xf32>
    "tpu.trace_stop"() : () -> ()
    %285 = vector.shape_cast %284 : vector<2x8x32xf32> to vector<16x32xf32>
    %286 = arith.truncf %285 : vector<16x32xf32> to vector<16x32xbf16>
    %287 = vector.extract_strided_slice %216 {offsets = [64, 0], sizes = [32, 128], strides = [1, 1]} : vector<128x128xbf16> to vector<32x128xbf16>
    %cst_96 = arith.constant dense<0.000000e+00> : vector<16x128xf32>
    %288 = tpu.matmul %286, %287, %cst_96 {dimension_numbers = #tpu.dot_dimension_numbers<[1], [0], [0], [1], [0, 0, 1, 1], [], []>} : vector<16x32xbf16>, vector<32x128xbf16>, vector<16x128xf32> -> vector<16x128xf32>
    %289 = arith.addf %265, %288 : vector<16x128xf32>
    %290 = vector.extract_strided_slice %214 {offsets = [0, 0, 96], sizes = [2, 8, 32], strides = [1, 1, 1]} : vector<2x8x384xf32> to vector<2x8x32xf32>
    %291 = arith.truncf %290 : vector<2x8x32xf32> to vector<2x8x32xbf16>
    %292 = vector.extract_strided_slice %214 {offsets = [0, 0, 224], sizes = [2, 8, 32], strides = [1, 1, 1]} : vector<2x8x384xf32> to vector<2x8x32xf32>
    %293 = arith.truncf %292 : vector<2x8x32xf32> to vector<2x8x32xbf16>
    %294 = vector.extract_strided_slice %214 {offsets = [0, 0, 352], sizes = [2, 8, 32], strides = [1, 1, 1]} : vector<2x8x384xf32> to vector<2x8x32xf32>
    %295 = arith.truncf %294 : vector<2x8x32xf32> to vector<2x8x32xbf16>
    "tpu.trace_start"() <{level = 10 : i32, message = "bqd,bkd->bqk"}> : () -> ()
    %cst_97 = arith.constant dense<0.000000e+00> : vector<2x8x8xf32>
    %296 = tpu.matmul %291, %293, %cst_97 {dimension_numbers = #tpu.dot_dimension_numbers<[2], [2], [1], [1], [0, 0, 0, 1, 1, 1], [0], [0]>} : vector<2x8x32xbf16>, vector<2x8x32xbf16>, vector<2x8x8xf32> -> vector<2x8x8xf32>
    "tpu.trace_stop"() : () -> ()
    %cst_98 = arith.constant dense<0xFF800000> : vector<2x8xf32>
    %297 = vector.multi_reduction <maximumf>, %296, %cst_98 [2] : vector<2x8x8xf32> to vector<2x8xf32>
    %298 = vector.shape_cast %297 : vector<2x8xf32> to vector<2x8x1xf32>
    %299 = vector.broadcast %298 : vector<2x8x1xf32> to vector<2x8x8xf32>
    %300 = arith.subf %296, %299 : vector<2x8x8xf32>
    %301 = math.exp %300 : vector<2x8x8xf32>
    %cst_99 = arith.constant dense<0.000000e+00> : vector<2x8xf32>
    %302 = vector.multi_reduction <add>, %301, %cst_99 [2] : vector<2x8x8xf32> to vector<2x8xf32>
    %303 = vector.shape_cast %302 : vector<2x8xf32> to vector<2x8x1xf32>
    %304 = tpu.reciprocal %303 {approx = true} : vector<2x8x1xf32> -> vector<2x8x1xf32>
    %305 = vector.broadcast %304 : vector<2x8x1xf32> to vector<2x8x8xf32>
    %306 = arith.mulf %301, %305 : vector<2x8x8xf32>
    %307 = arith.truncf %306 : vector<2x8x8xf32> to vector<2x8x8xbf16>
    "tpu.trace_start"() <{level = 10 : i32, message = "bqk,bkd->bqd"}> : () -> ()
    %cst_100 = arith.constant dense<0.000000e+00> : vector<2x8x32xf32>
    %308 = tpu.matmul %307, %295, %cst_100 {dimension_numbers = #tpu.dot_dimension_numbers<[2], [1], [1], [2], [0, 0, 0, 1, 1, 2], [0], [0]>} : vector<2x8x8xbf16>, vector<2x8x32xbf16>, vector<2x8x32xf32> -> vector<2x8x32xf32>
    "tpu.trace_stop"() : () -> ()
    %309 = vector.shape_cast %308 : vector<2x8x32xf32> to vector<16x32xf32>
    %310 = arith.truncf %309 : vector<16x32xf32> to vector<16x32xbf16>
    %311 = vector.extract_strided_slice %216 {offsets = [96, 0], sizes = [32, 128], strides = [1, 1]} : vector<128x128xbf16> to vector<32x128xbf16>
    %cst_101 = arith.constant dense<0.000000e+00> : vector<16x128xf32>
    %312 = tpu.matmul %310, %311, %cst_101 {dimension_numbers = #tpu.dot_dimension_numbers<[1], [0], [0], [1], [0, 0, 1, 1], [], []>} : vector<16x32xbf16>, vector<32x128xbf16>, vector<16x128xf32> -> vector<16x128xf32>
    %313 = arith.addf %289, %312 : vector<16x128xf32>
    %314 = vector.extract_strided_slice %205 {offsets = [0, 0], sizes = [1, 128], strides = [1, 1]} : vector<6x128xf32> to vector<1x128xf32>
    %315 = vector.broadcast %314 : vector<1x128xf32> to vector<16x128xf32>
    %316 = arith.addf %313, %315 : vector<16x128xf32>
    %317 = arith.addf %203, %316 : vector<16x128xf32>
    %318 = vector.extract_strided_slice %205 {offsets = [1, 0], sizes = [1, 128], strides = [1, 1]} : vector<6x128xf32> to vector<1x128xf32>
    %319 = vector.extract_strided_slice %205 {offsets = [2, 0], sizes = [1, 128], strides = [1, 1]} : vector<6x128xf32> to vector<1x128xf32>
    %cst_102 = arith.constant dense<0.000000e+00> : vector<16xf32>
    %320 = vector.multi_reduction <add>, %317, %cst_102 [1] : vector<16x128xf32> to vector<16xf32>
    %321 = vector.shape_cast %320 : vector<16xf32> to vector<16x1xf32>
    %cst_103 = arith.constant 1.280000e+02 : f32
    %322 = vector.broadcast %cst_103 : f32 to vector<16x1xf32>
    %323 = arith.divf %321, %322 : vector<16x1xf32>
    %324 = vector.broadcast %323 : vector<16x1xf32> to vector<16x128xf32>
    %325 = arith.subf %317, %324 : vector<16x128xf32>
    %326 = arith.mulf %325, %325 : vector<16x128xf32>
    %cst_104 = arith.constant dense<0.000000e+00> : vector<16xf32>
    %327 = vector.multi_reduction <add>, %326, %cst_104 [1] : vector<16x128xf32> to vector<16xf32>
    %328 = vector.shape_cast %327 : vector<16xf32> to vector<16x1xf32>
    %cst_105 = arith.constant 1.280000e+02 : f32
    %329 = vector.broadcast %cst_105 : f32 to vector<16x1xf32>
    %330 = arith.divf %328, %329 : vector<16x1xf32>
    %331 = vector.broadcast %323 : vector<16x1xf32> to vector<16x128xf32>
    %332 = arith.subf %317, %331 : vector<16x128xf32>
    %cst_106 = arith.constant 9.99999974E-6 : f32
    %333 = vector.broadcast %cst_106 : f32 to vector<16x1xf32>
    %334 = arith.addf %330, %333 : vector<16x1xf32>
    %335 = math.rsqrt %334 : vector<16x1xf32>
    %336 = vector.broadcast %335 : vector<16x1xf32> to vector<16x128xf32>
    %337 = arith.mulf %332, %336 : vector<16x128xf32>
    %338 = vector.broadcast %318 : vector<1x128xf32> to vector<16x128xf32>
    %339 = arith.mulf %337, %338 : vector<16x128xf32>
    %340 = vector.broadcast %319 : vector<1x128xf32> to vector<16x128xf32>
    %341 = arith.addf %339, %340 : vector<16x128xf32>
    %342 = arith.truncf %341 : vector<16x128xf32> to vector<16x128xbf16>
    %c1_107 = arith.constant 1 : index
    %c0_108 = arith.constant 0 : index
    %c0_109 = arith.constant 0 : index
    %343 = vector.load %arg9[%c1_107, %c0_108, %c0_109] : memref<4x128x256xbf16, #tpu.memory_space<vmem>>, vector<1x128x256xbf16>
    %344 = vector.shape_cast %343 : vector<1x128x256xbf16> to vector<128x256xbf16>
    %cst_110 = arith.constant dense<0.000000e+00> : vector<16x256xf32>
    %345 = tpu.matmul %342, %344, %cst_110 {dimension_numbers = #tpu.dot_dimension_numbers<[1], [0], [0], [1], [0, 0, 1, 1], [], []>} : vector<16x128xbf16>, vector<128x256xbf16>, vector<16x256xf32> -> vector<16x256xf32>
    %c1_111 = arith.constant 1 : index
    %c0_112 = arith.constant 0 : index
    %c0_113 = arith.constant 0 : index
    %346 = vector.load %arg10[%c1_111, %c0_112, %c0_113] : memref<4x1x256xf32, #tpu.memory_space<vmem>>, vector<1x1x256xf32>
    %347 = vector.shape_cast %346 : vector<1x1x256xf32> to vector<1x256xf32>
    %348 = vector.broadcast %347 : vector<1x256xf32> to vector<16x256xf32>
    %349 = arith.addf %345, %348 : vector<16x256xf32>
    %cst_114 = arith.constant 0.000000e+00 : f32
    %350 = vector.broadcast %cst_114 : f32 to vector<16x256xf32>
    %351 = arith.maximumf %349, %350 : vector<16x256xf32>
    %352 = arith.truncf %351 : vector<16x256xf32> to vector<16x256xbf16>
    %c1_115 = arith.constant 1 : index
    %c0_116 = arith.constant 0 : index
    %c0_117 = arith.constant 0 : index
    %353 = vector.load %arg11[%c1_115, %c0_116, %c0_117] : memref<4x256x128xbf16, #tpu.memory_space<vmem>>, vector<1x256x128xbf16>
    %354 = vector.shape_cast %353 : vector<1x256x128xbf16> to vector<256x128xbf16>
    %cst_118 = arith.constant dense<0.000000e+00> : vector<16x128xf32>
    %355 = tpu.matmul %352, %354, %cst_118 {dimension_numbers = #tpu.dot_dimension_numbers<[1], [0], [0], [1], [0, 0, 1, 1], [], []>} : vector<16x256xbf16>, vector<256x128xbf16>, vector<16x128xf32> -> vector<16x128xf32>
    %356 = vector.extract_strided_slice %205 {offsets = [3, 0], sizes = [1, 128], strides = [1, 1]} : vector<6x128xf32> to vector<1x128xf32>
    %357 = vector.broadcast %356 : vector<1x128xf32> to vector<16x128xf32>
    %358 = arith.addf %355, %357 : vector<16x128xf32>
    %359 = arith.addf %341, %358 : vector<16x128xf32>
    %360 = vector.extract_strided_slice %205 {offsets = [4, 0], sizes = [1, 128], strides = [1, 1]} : vector<6x128xf32> to vector<1x128xf32>
    %361 = vector.extract_strided_slice %205 {offsets = [5, 0], sizes = [1, 128], strides = [1, 1]} : vector<6x128xf32> to vector<1x128xf32>
    %cst_119 = arith.constant dense<0.000000e+00> : vector<16xf32>
    %362 = vector.multi_reduction <add>, %359, %cst_119 [1] : vector<16x128xf32> to vector<16xf32>
    %363 = vector.shape_cast %362 : vector<16xf32> to vector<16x1xf32>
    %cst_120 = arith.constant 1.280000e+02 : f32
    %364 = vector.broadcast %cst_120 : f32 to vector<16x1xf32>
    %365 = arith.divf %363, %364 : vector<16x1xf32>
    %366 = vector.broadcast %365 : vector<16x1xf32> to vector<16x128xf32>
    %367 = arith.subf %359, %366 : vector<16x128xf32>
    %368 = arith.mulf %367, %367 : vector<16x128xf32>
    %cst_121 = arith.constant dense<0.000000e+00> : vector<16xf32>
    %369 = vector.multi_reduction <add>, %368, %cst_121 [1] : vector<16x128xf32> to vector<16xf32>
    %370 = vector.shape_cast %369 : vector<16xf32> to vector<16x1xf32>
    %cst_122 = arith.constant 1.280000e+02 : f32
    %371 = vector.broadcast %cst_122 : f32 to vector<16x1xf32>
    %372 = arith.divf %370, %371 : vector<16x1xf32>
    %373 = vector.broadcast %365 : vector<16x1xf32> to vector<16x128xf32>
    %374 = arith.subf %359, %373 : vector<16x128xf32>
    %cst_123 = arith.constant 9.99999974E-6 : f32
    %375 = vector.broadcast %cst_123 : f32 to vector<16x1xf32>
    %376 = arith.addf %372, %375 : vector<16x1xf32>
    %377 = math.rsqrt %376 : vector<16x1xf32>
    %378 = vector.broadcast %377 : vector<16x1xf32> to vector<16x128xf32>
    %379 = arith.mulf %374, %378 : vector<16x128xf32>
    %380 = vector.broadcast %360 : vector<1x128xf32> to vector<16x128xf32>
    %381 = arith.mulf %379, %380 : vector<16x128xf32>
    %382 = vector.broadcast %361 : vector<1x128xf32> to vector<16x128xf32>
    %383 = arith.addf %381, %382 : vector<16x128xf32>
    %c2 = arith.constant 2 : index
    %c0_124 = arith.constant 0 : index
    %c0_125 = arith.constant 0 : index
    %384 = vector.load %arg12[%c2, %c0_124, %c0_125] : memref<4x6x128xf32, #tpu.memory_space<vmem>>, vector<1x6x128xf32>
    %385 = vector.shape_cast %384 : vector<1x6x128xf32> to vector<6x128xf32>
    %386 = arith.truncf %383 : vector<16x128xf32> to vector<16x128xbf16>
    %c2_126 = arith.constant 2 : index
    %c0_127 = arith.constant 0 : index
    %c0_128 = arith.constant 0 : index
    %387 = vector.load %arg6[%c2_126, %c0_127, %c0_128] : memref<4x128x384xbf16, #tpu.memory_space<vmem>>, vector<1x128x384xbf16>
    %388 = vector.shape_cast %387 : vector<1x128x384xbf16> to vector<128x384xbf16>
    %cst_129 = arith.constant dense<0.000000e+00> : vector<16x384xf32>
    %389 = tpu.matmul %386, %388, %cst_129 {dimension_numbers = #tpu.dot_dimension_numbers<[1], [0], [0], [1], [0, 0, 1, 1], [], []>} : vector<16x128xbf16>, vector<128x384xbf16>, vector<16x384xf32> -> vector<16x384xf32>
    %c2_130 = arith.constant 2 : index
    %c0_131 = arith.constant 0 : index
    %c0_132 = arith.constant 0 : index
    %390 = vector.load %arg7[%c2_130, %c0_131, %c0_132] : memref<4x1x384xf32, #tpu.memory_space<vmem>>, vector<1x1x384xf32>
    %391 = vector.shape_cast %390 : vector<1x1x384xf32> to vector<1x384xf32>
    %392 = vector.broadcast %391 : vector<1x384xf32> to vector<16x384xf32>
    %393 = arith.addf %389, %392 : vector<16x384xf32>
    %394 = vector.shape_cast %393 : vector<16x384xf32> to vector<2x8x384xf32>
    %c2_133 = arith.constant 2 : index
    %c0_134 = arith.constant 0 : index
    %c0_135 = arith.constant 0 : index
    %395 = vector.load %arg8[%c2_133, %c0_134, %c0_135] : memref<4x128x128xbf16, #tpu.memory_space<vmem>>, vector<1x128x128xbf16>
    %396 = vector.shape_cast %395 : vector<1x128x128xbf16> to vector<128x128xbf16>
    %cst_136 = arith.constant 0.000000e+00 : f32
    %397 = vector.broadcast %cst_136 : f32 to vector<16x128xf32>
    %398 = vector.extract_strided_slice %394 {offsets = [0, 0, 0], sizes = [2, 8, 32], strides = [1, 1, 1]} : vector<2x8x384xf32> to vector<2x8x32xf32>
    %399 = arith.truncf %398 : vector<2x8x32xf32> to vector<2x8x32xbf16>
    %400 = vector.extract_strided_slice %394 {offsets = [0, 0, 128], sizes = [2, 8, 32], strides = [1, 1, 1]} : vector<2x8x384xf32> to vector<2x8x32xf32>
    %401 = arith.truncf %400 : vector<2x8x32xf32> to vector<2x8x32xbf16>
    %402 = vector.extract_strided_slice %394 {offsets = [0, 0, 256], sizes = [2, 8, 32], strides = [1, 1, 1]} : vector<2x8x384xf32> to vector<2x8x32xf32>
    %403 = arith.truncf %402 : vector<2x8x32xf32> to vector<2x8x32xbf16>
    "tpu.trace_start"() <{level = 10 : i32, message = "bqd,bkd->bqk"}> : () -> ()
    %cst_137 = arith.constant dense<0.000000e+00> : vector<2x8x8xf32>
    %404 = tpu.matmul %399, %401, %cst_137 {dimension_numbers = #tpu.dot_dimension_numbers<[2], [2], [1], [1], [0, 0, 0, 1, 1, 1], [0], [0]>} : vector<2x8x32xbf16>, vector<2x8x32xbf16>, vector<2x8x8xf32> -> vector<2x8x8xf32>
    "tpu.trace_stop"() : () -> ()
    %cst_138 = arith.constant dense<0xFF800000> : vector<2x8xf32>
    %405 = vector.multi_reduction <maximumf>, %404, %cst_138 [2] : vector<2x8x8xf32> to vector<2x8xf32>
    %406 = vector.shape_cast %405 : vector<2x8xf32> to vector<2x8x1xf32>
    %407 = vector.broadcast %406 : vector<2x8x1xf32> to vector<2x8x8xf32>
    %408 = arith.subf %404, %407 : vector<2x8x8xf32>
    %409 = math.exp %408 : vector<2x8x8xf32>
    %cst_139 = arith.constant dense<0.000000e+00> : vector<2x8xf32>
    %410 = vector.multi_reduction <add>, %409, %cst_139 [2] : vector<2x8x8xf32> to vector<2x8xf32>
    %411 = vector.shape_cast %410 : vector<2x8xf32> to vector<2x8x1xf32>
    %412 = tpu.reciprocal %411 {approx = true} : vector<2x8x1xf32> -> vector<2x8x1xf32>
    %413 = vector.broadcast %412 : vector<2x8x1xf32> to vector<2x8x8xf32>
    %414 = arith.mulf %409, %413 : vector<2x8x8xf32>
    %415 = arith.truncf %414 : vector<2x8x8xf32> to vector<2x8x8xbf16>
    "tpu.trace_start"() <{level = 10 : i32, message = "bqk,bkd->bqd"}> : () -> ()
    %cst_140 = arith.constant dense<0.000000e+00> : vector<2x8x32xf32>
    %416 = tpu.matmul %415, %403, %cst_140 {dimension_numbers = #tpu.dot_dimension_numbers<[2], [1], [1], [2], [0, 0, 0, 1, 1, 2], [0], [0]>} : vector<2x8x8xbf16>, vector<2x8x32xbf16>, vector<2x8x32xf32> -> vector<2x8x32xf32>
    "tpu.trace_stop"() : () -> ()
    %417 = vector.shape_cast %416 : vector<2x8x32xf32> to vector<16x32xf32>
    %418 = arith.truncf %417 : vector<16x32xf32> to vector<16x32xbf16>
    %419 = vector.extract_strided_slice %396 {offsets = [0, 0], sizes = [32, 128], strides = [1, 1]} : vector<128x128xbf16> to vector<32x128xbf16>
    %cst_141 = arith.constant dense<0.000000e+00> : vector<16x128xf32>
    %420 = tpu.matmul %418, %419, %cst_141 {dimension_numbers = #tpu.dot_dimension_numbers<[1], [0], [0], [1], [0, 0, 1, 1], [], []>} : vector<16x32xbf16>, vector<32x128xbf16>, vector<16x128xf32> -> vector<16x128xf32>
    %421 = arith.addf %397, %420 : vector<16x128xf32>
    %422 = vector.extract_strided_slice %394 {offsets = [0, 0, 32], sizes = [2, 8, 32], strides = [1, 1, 1]} : vector<2x8x384xf32> to vector<2x8x32xf32>
    %423 = arith.truncf %422 : vector<2x8x32xf32> to vector<2x8x32xbf16>
    %424 = vector.extract_strided_slice %394 {offsets = [0, 0, 160], sizes = [2, 8, 32], strides = [1, 1, 1]} : vector<2x8x384xf32> to vector<2x8x32xf32>
    %425 = arith.truncf %424 : vector<2x8x32xf32> to vector<2x8x32xbf16>
    %426 = vector.extract_strided_slice %394 {offsets = [0, 0, 288], sizes = [2, 8, 32], strides = [1, 1, 1]} : vector<2x8x384xf32> to vector<2x8x32xf32>
    %427 = arith.truncf %426 : vector<2x8x32xf32> to vector<2x8x32xbf16>
    "tpu.trace_start"() <{level = 10 : i32, message = "bqd,bkd->bqk"}> : () -> ()
    %cst_142 = arith.constant dense<0.000000e+00> : vector<2x8x8xf32>
    %428 = tpu.matmul %423, %425, %cst_142 {dimension_numbers = #tpu.dot_dimension_numbers<[2], [2], [1], [1], [0, 0, 0, 1, 1, 1], [0], [0]>} : vector<2x8x32xbf16>, vector<2x8x32xbf16>, vector<2x8x8xf32> -> vector<2x8x8xf32>
    "tpu.trace_stop"() : () -> ()
    %cst_143 = arith.constant dense<0xFF800000> : vector<2x8xf32>
    %429 = vector.multi_reduction <maximumf>, %428, %cst_143 [2] : vector<2x8x8xf32> to vector<2x8xf32>
    %430 = vector.shape_cast %429 : vector<2x8xf32> to vector<2x8x1xf32>
    %431 = vector.broadcast %430 : vector<2x8x1xf32> to vector<2x8x8xf32>
    %432 = arith.subf %428, %431 : vector<2x8x8xf32>
    %433 = math.exp %432 : vector<2x8x8xf32>
    %cst_144 = arith.constant dense<0.000000e+00> : vector<2x8xf32>
    %434 = vector.multi_reduction <add>, %433, %cst_144 [2] : vector<2x8x8xf32> to vector<2x8xf32>
    %435 = vector.shape_cast %434 : vector<2x8xf32> to vector<2x8x1xf32>
    %436 = tpu.reciprocal %435 {approx = true} : vector<2x8x1xf32> -> vector<2x8x1xf32>
    %437 = vector.broadcast %436 : vector<2x8x1xf32> to vector<2x8x8xf32>
    %438 = arith.mulf %433, %437 : vector<2x8x8xf32>
    %439 = arith.truncf %438 : vector<2x8x8xf32> to vector<2x8x8xbf16>
    "tpu.trace_start"() <{level = 10 : i32, message = "bqk,bkd->bqd"}> : () -> ()
    %cst_145 = arith.constant dense<0.000000e+00> : vector<2x8x32xf32>
    %440 = tpu.matmul %439, %427, %cst_145 {dimension_numbers = #tpu.dot_dimension_numbers<[2], [1], [1], [2], [0, 0, 0, 1, 1, 2], [0], [0]>} : vector<2x8x8xbf16>, vector<2x8x32xbf16>, vector<2x8x32xf32> -> vector<2x8x32xf32>
    "tpu.trace_stop"() : () -> ()
    %441 = vector.shape_cast %440 : vector<2x8x32xf32> to vector<16x32xf32>
    %442 = arith.truncf %441 : vector<16x32xf32> to vector<16x32xbf16>
    %443 = vector.extract_strided_slice %396 {offsets = [32, 0], sizes = [32, 128], strides = [1, 1]} : vector<128x128xbf16> to vector<32x128xbf16>
    %cst_146 = arith.constant dense<0.000000e+00> : vector<16x128xf32>
    %444 = tpu.matmul %442, %443, %cst_146 {dimension_numbers = #tpu.dot_dimension_numbers<[1], [0], [0], [1], [0, 0, 1, 1], [], []>} : vector<16x32xbf16>, vector<32x128xbf16>, vector<16x128xf32> -> vector<16x128xf32>
    %445 = arith.addf %421, %444 : vector<16x128xf32>
    %446 = vector.extract_strided_slice %394 {offsets = [0, 0, 64], sizes = [2, 8, 32], strides = [1, 1, 1]} : vector<2x8x384xf32> to vector<2x8x32xf32>
    %447 = arith.truncf %446 : vector<2x8x32xf32> to vector<2x8x32xbf16>
    %448 = vector.extract_strided_slice %394 {offsets = [0, 0, 192], sizes = [2, 8, 32], strides = [1, 1, 1]} : vector<2x8x384xf32> to vector<2x8x32xf32>
    %449 = arith.truncf %448 : vector<2x8x32xf32> to vector<2x8x32xbf16>
    %450 = vector.extract_strided_slice %394 {offsets = [0, 0, 320], sizes = [2, 8, 32], strides = [1, 1, 1]} : vector<2x8x384xf32> to vector<2x8x32xf32>
    %451 = arith.truncf %450 : vector<2x8x32xf32> to vector<2x8x32xbf16>
    "tpu.trace_start"() <{level = 10 : i32, message = "bqd,bkd->bqk"}> : () -> ()
    %cst_147 = arith.constant dense<0.000000e+00> : vector<2x8x8xf32>
    %452 = tpu.matmul %447, %449, %cst_147 {dimension_numbers = #tpu.dot_dimension_numbers<[2], [2], [1], [1], [0, 0, 0, 1, 1, 1], [0], [0]>} : vector<2x8x32xbf16>, vector<2x8x32xbf16>, vector<2x8x8xf32> -> vector<2x8x8xf32>
    "tpu.trace_stop"() : () -> ()
    %cst_148 = arith.constant dense<0xFF800000> : vector<2x8xf32>
    %453 = vector.multi_reduction <maximumf>, %452, %cst_148 [2] : vector<2x8x8xf32> to vector<2x8xf32>
    %454 = vector.shape_cast %453 : vector<2x8xf32> to vector<2x8x1xf32>
    %455 = vector.broadcast %454 : vector<2x8x1xf32> to vector<2x8x8xf32>
    %456 = arith.subf %452, %455 : vector<2x8x8xf32>
    %457 = math.exp %456 : vector<2x8x8xf32>
    %cst_149 = arith.constant dense<0.000000e+00> : vector<2x8xf32>
    %458 = vector.multi_reduction <add>, %457, %cst_149 [2] : vector<2x8x8xf32> to vector<2x8xf32>
    %459 = vector.shape_cast %458 : vector<2x8xf32> to vector<2x8x1xf32>
    %460 = tpu.reciprocal %459 {approx = true} : vector<2x8x1xf32> -> vector<2x8x1xf32>
    %461 = vector.broadcast %460 : vector<2x8x1xf32> to vector<2x8x8xf32>
    %462 = arith.mulf %457, %461 : vector<2x8x8xf32>
    %463 = arith.truncf %462 : vector<2x8x8xf32> to vector<2x8x8xbf16>
    "tpu.trace_start"() <{level = 10 : i32, message = "bqk,bkd->bqd"}> : () -> ()
    %cst_150 = arith.constant dense<0.000000e+00> : vector<2x8x32xf32>
    %464 = tpu.matmul %463, %451, %cst_150 {dimension_numbers = #tpu.dot_dimension_numbers<[2], [1], [1], [2], [0, 0, 0, 1, 1, 2], [0], [0]>} : vector<2x8x8xbf16>, vector<2x8x32xbf16>, vector<2x8x32xf32> -> vector<2x8x32xf32>
    "tpu.trace_stop"() : () -> ()
    %465 = vector.shape_cast %464 : vector<2x8x32xf32> to vector<16x32xf32>
    %466 = arith.truncf %465 : vector<16x32xf32> to vector<16x32xbf16>
    %467 = vector.extract_strided_slice %396 {offsets = [64, 0], sizes = [32, 128], strides = [1, 1]} : vector<128x128xbf16> to vector<32x128xbf16>
    %cst_151 = arith.constant dense<0.000000e+00> : vector<16x128xf32>
    %468 = tpu.matmul %466, %467, %cst_151 {dimension_numbers = #tpu.dot_dimension_numbers<[1], [0], [0], [1], [0, 0, 1, 1], [], []>} : vector<16x32xbf16>, vector<32x128xbf16>, vector<16x128xf32> -> vector<16x128xf32>
    %469 = arith.addf %445, %468 : vector<16x128xf32>
    %470 = vector.extract_strided_slice %394 {offsets = [0, 0, 96], sizes = [2, 8, 32], strides = [1, 1, 1]} : vector<2x8x384xf32> to vector<2x8x32xf32>
    %471 = arith.truncf %470 : vector<2x8x32xf32> to vector<2x8x32xbf16>
    %472 = vector.extract_strided_slice %394 {offsets = [0, 0, 224], sizes = [2, 8, 32], strides = [1, 1, 1]} : vector<2x8x384xf32> to vector<2x8x32xf32>
    %473 = arith.truncf %472 : vector<2x8x32xf32> to vector<2x8x32xbf16>
    %474 = vector.extract_strided_slice %394 {offsets = [0, 0, 352], sizes = [2, 8, 32], strides = [1, 1, 1]} : vector<2x8x384xf32> to vector<2x8x32xf32>
    %475 = arith.truncf %474 : vector<2x8x32xf32> to vector<2x8x32xbf16>
    "tpu.trace_start"() <{level = 10 : i32, message = "bqd,bkd->bqk"}> : () -> ()
    %cst_152 = arith.constant dense<0.000000e+00> : vector<2x8x8xf32>
    %476 = tpu.matmul %471, %473, %cst_152 {dimension_numbers = #tpu.dot_dimension_numbers<[2], [2], [1], [1], [0, 0, 0, 1, 1, 1], [0], [0]>} : vector<2x8x32xbf16>, vector<2x8x32xbf16>, vector<2x8x8xf32> -> vector<2x8x8xf32>
    "tpu.trace_stop"() : () -> ()
    %cst_153 = arith.constant dense<0xFF800000> : vector<2x8xf32>
    %477 = vector.multi_reduction <maximumf>, %476, %cst_153 [2] : vector<2x8x8xf32> to vector<2x8xf32>
    %478 = vector.shape_cast %477 : vector<2x8xf32> to vector<2x8x1xf32>
    %479 = vector.broadcast %478 : vector<2x8x1xf32> to vector<2x8x8xf32>
    %480 = arith.subf %476, %479 : vector<2x8x8xf32>
    %481 = math.exp %480 : vector<2x8x8xf32>
    %cst_154 = arith.constant dense<0.000000e+00> : vector<2x8xf32>
    %482 = vector.multi_reduction <add>, %481, %cst_154 [2] : vector<2x8x8xf32> to vector<2x8xf32>
    %483 = vector.shape_cast %482 : vector<2x8xf32> to vector<2x8x1xf32>
    %484 = tpu.reciprocal %483 {approx = true} : vector<2x8x1xf32> -> vector<2x8x1xf32>
    %485 = vector.broadcast %484 : vector<2x8x1xf32> to vector<2x8x8xf32>
    %486 = arith.mulf %481, %485 : vector<2x8x8xf32>
    %487 = arith.truncf %486 : vector<2x8x8xf32> to vector<2x8x8xbf16>
    "tpu.trace_start"() <{level = 10 : i32, message = "bqk,bkd->bqd"}> : () -> ()
    %cst_155 = arith.constant dense<0.000000e+00> : vector<2x8x32xf32>
    %488 = tpu.matmul %487, %475, %cst_155 {dimension_numbers = #tpu.dot_dimension_numbers<[2], [1], [1], [2], [0, 0, 0, 1, 1, 2], [0], [0]>} : vector<2x8x8xbf16>, vector<2x8x32xbf16>, vector<2x8x32xf32> -> vector<2x8x32xf32>
    "tpu.trace_stop"() : () -> ()
    %489 = vector.shape_cast %488 : vector<2x8x32xf32> to vector<16x32xf32>
    %490 = arith.truncf %489 : vector<16x32xf32> to vector<16x32xbf16>
    %491 = vector.extract_strided_slice %396 {offsets = [96, 0], sizes = [32, 128], strides = [1, 1]} : vector<128x128xbf16> to vector<32x128xbf16>
    %cst_156 = arith.constant dense<0.000000e+00> : vector<16x128xf32>
    %492 = tpu.matmul %490, %491, %cst_156 {dimension_numbers = #tpu.dot_dimension_numbers<[1], [0], [0], [1], [0, 0, 1, 1], [], []>} : vector<16x32xbf16>, vector<32x128xbf16>, vector<16x128xf32> -> vector<16x128xf32>
    %493 = arith.addf %469, %492 : vector<16x128xf32>
    %494 = vector.extract_strided_slice %385 {offsets = [0, 0], sizes = [1, 128], strides = [1, 1]} : vector<6x128xf32> to vector<1x128xf32>
    %495 = vector.broadcast %494 : vector<1x128xf32> to vector<16x128xf32>
    %496 = arith.addf %493, %495 : vector<16x128xf32>
    %497 = arith.addf %383, %496 : vector<16x128xf32>
    %498 = vector.extract_strided_slice %385 {offsets = [1, 0], sizes = [1, 128], strides = [1, 1]} : vector<6x128xf32> to vector<1x128xf32>
    %499 = vector.extract_strided_slice %385 {offsets = [2, 0], sizes = [1, 128], strides = [1, 1]} : vector<6x128xf32> to vector<1x128xf32>
    %cst_157 = arith.constant dense<0.000000e+00> : vector<16xf32>
    %500 = vector.multi_reduction <add>, %497, %cst_157 [1] : vector<16x128xf32> to vector<16xf32>
    %501 = vector.shape_cast %500 : vector<16xf32> to vector<16x1xf32>
    %cst_158 = arith.constant 1.280000e+02 : f32
    %502 = vector.broadcast %cst_158 : f32 to vector<16x1xf32>
    %503 = arith.divf %501, %502 : vector<16x1xf32>
    %504 = vector.broadcast %503 : vector<16x1xf32> to vector<16x128xf32>
    %505 = arith.subf %497, %504 : vector<16x128xf32>
    %506 = arith.mulf %505, %505 : vector<16x128xf32>
    %cst_159 = arith.constant dense<0.000000e+00> : vector<16xf32>
    %507 = vector.multi_reduction <add>, %506, %cst_159 [1] : vector<16x128xf32> to vector<16xf32>
    %508 = vector.shape_cast %507 : vector<16xf32> to vector<16x1xf32>
    %cst_160 = arith.constant 1.280000e+02 : f32
    %509 = vector.broadcast %cst_160 : f32 to vector<16x1xf32>
    %510 = arith.divf %508, %509 : vector<16x1xf32>
    %511 = vector.broadcast %503 : vector<16x1xf32> to vector<16x128xf32>
    %512 = arith.subf %497, %511 : vector<16x128xf32>
    %cst_161 = arith.constant 9.99999974E-6 : f32
    %513 = vector.broadcast %cst_161 : f32 to vector<16x1xf32>
    %514 = arith.addf %510, %513 : vector<16x1xf32>
    %515 = math.rsqrt %514 : vector<16x1xf32>
    %516 = vector.broadcast %515 : vector<16x1xf32> to vector<16x128xf32>
    %517 = arith.mulf %512, %516 : vector<16x128xf32>
    %518 = vector.broadcast %498 : vector<1x128xf32> to vector<16x128xf32>
    %519 = arith.mulf %517, %518 : vector<16x128xf32>
    %520 = vector.broadcast %499 : vector<1x128xf32> to vector<16x128xf32>
    %521 = arith.addf %519, %520 : vector<16x128xf32>
    %522 = arith.truncf %521 : vector<16x128xf32> to vector<16x128xbf16>
    %c2_162 = arith.constant 2 : index
    %c0_163 = arith.constant 0 : index
    %c0_164 = arith.constant 0 : index
    %523 = vector.load %arg9[%c2_162, %c0_163, %c0_164] : memref<4x128x256xbf16, #tpu.memory_space<vmem>>, vector<1x128x256xbf16>
    %524 = vector.shape_cast %523 : vector<1x128x256xbf16> to vector<128x256xbf16>
    %cst_165 = arith.constant dense<0.000000e+00> : vector<16x256xf32>
    %525 = tpu.matmul %522, %524, %cst_165 {dimension_numbers = #tpu.dot_dimension_numbers<[1], [0], [0], [1], [0, 0, 1, 1], [], []>} : vector<16x128xbf16>, vector<128x256xbf16>, vector<16x256xf32> -> vector<16x256xf32>
    %c2_166 = arith.constant 2 : index
    %c0_167 = arith.constant 0 : index
    %c0_168 = arith.constant 0 : index
    %526 = vector.load %arg10[%c2_166, %c0_167, %c0_168] : memref<4x1x256xf32, #tpu.memory_space<vmem>>, vector<1x1x256xf32>
    %527 = vector.shape_cast %526 : vector<1x1x256xf32> to vector<1x256xf32>
    %528 = vector.broadcast %527 : vector<1x256xf32> to vector<16x256xf32>
    %529 = arith.addf %525, %528 : vector<16x256xf32>
    %cst_169 = arith.constant 0.000000e+00 : f32
    %530 = vector.broadcast %cst_169 : f32 to vector<16x256xf32>
    %531 = arith.maximumf %529, %530 : vector<16x256xf32>
    %532 = arith.truncf %531 : vector<16x256xf32> to vector<16x256xbf16>
    %c2_170 = arith.constant 2 : index
    %c0_171 = arith.constant 0 : index
    %c0_172 = arith.constant 0 : index
    %533 = vector.load %arg11[%c2_170, %c0_171, %c0_172] : memref<4x256x128xbf16, #tpu.memory_space<vmem>>, vector<1x256x128xbf16>
    %534 = vector.shape_cast %533 : vector<1x256x128xbf16> to vector<256x128xbf16>
    %cst_173 = arith.constant dense<0.000000e+00> : vector<16x128xf32>
    %535 = tpu.matmul %532, %534, %cst_173 {dimension_numbers = #tpu.dot_dimension_numbers<[1], [0], [0], [1], [0, 0, 1, 1], [], []>} : vector<16x256xbf16>, vector<256x128xbf16>, vector<16x128xf32> -> vector<16x128xf32>
    %536 = vector.extract_strided_slice %385 {offsets = [3, 0], sizes = [1, 128], strides = [1, 1]} : vector<6x128xf32> to vector<1x128xf32>
    %537 = vector.broadcast %536 : vector<1x128xf32> to vector<16x128xf32>
    %538 = arith.addf %535, %537 : vector<16x128xf32>
    %539 = arith.addf %521, %538 : vector<16x128xf32>
    %540 = vector.extract_strided_slice %385 {offsets = [4, 0], sizes = [1, 128], strides = [1, 1]} : vector<6x128xf32> to vector<1x128xf32>
    %541 = vector.extract_strided_slice %385 {offsets = [5, 0], sizes = [1, 128], strides = [1, 1]} : vector<6x128xf32> to vector<1x128xf32>
    %cst_174 = arith.constant dense<0.000000e+00> : vector<16xf32>
    %542 = vector.multi_reduction <add>, %539, %cst_174 [1] : vector<16x128xf32> to vector<16xf32>
    %543 = vector.shape_cast %542 : vector<16xf32> to vector<16x1xf32>
    %cst_175 = arith.constant 1.280000e+02 : f32
    %544 = vector.broadcast %cst_175 : f32 to vector<16x1xf32>
    %545 = arith.divf %543, %544 : vector<16x1xf32>
    %546 = vector.broadcast %545 : vector<16x1xf32> to vector<16x128xf32>
    %547 = arith.subf %539, %546 : vector<16x128xf32>
    %548 = arith.mulf %547, %547 : vector<16x128xf32>
    %cst_176 = arith.constant dense<0.000000e+00> : vector<16xf32>
    %549 = vector.multi_reduction <add>, %548, %cst_176 [1] : vector<16x128xf32> to vector<16xf32>
    %550 = vector.shape_cast %549 : vector<16xf32> to vector<16x1xf32>
    %cst_177 = arith.constant 1.280000e+02 : f32
    %551 = vector.broadcast %cst_177 : f32 to vector<16x1xf32>
    %552 = arith.divf %550, %551 : vector<16x1xf32>
    %553 = vector.broadcast %545 : vector<16x1xf32> to vector<16x128xf32>
    %554 = arith.subf %539, %553 : vector<16x128xf32>
    %cst_178 = arith.constant 9.99999974E-6 : f32
    %555 = vector.broadcast %cst_178 : f32 to vector<16x1xf32>
    %556 = arith.addf %552, %555 : vector<16x1xf32>
    %557 = math.rsqrt %556 : vector<16x1xf32>
    %558 = vector.broadcast %557 : vector<16x1xf32> to vector<16x128xf32>
    %559 = arith.mulf %554, %558 : vector<16x128xf32>
    %560 = vector.broadcast %540 : vector<1x128xf32> to vector<16x128xf32>
    %561 = arith.mulf %559, %560 : vector<16x128xf32>
    %562 = vector.broadcast %541 : vector<1x128xf32> to vector<16x128xf32>
    %563 = arith.addf %561, %562 : vector<16x128xf32>
    %c3 = arith.constant 3 : index
    %c0_179 = arith.constant 0 : index
    %c0_180 = arith.constant 0 : index
    %564 = vector.load %arg12[%c3, %c0_179, %c0_180] : memref<4x6x128xf32, #tpu.memory_space<vmem>>, vector<1x6x128xf32>
    %565 = vector.shape_cast %564 : vector<1x6x128xf32> to vector<6x128xf32>
    %566 = arith.truncf %563 : vector<16x128xf32> to vector<16x128xbf16>
    %c3_181 = arith.constant 3 : index
    %c0_182 = arith.constant 0 : index
    %c0_183 = arith.constant 0 : index
    %567 = vector.load %arg6[%c3_181, %c0_182, %c0_183] : memref<4x128x384xbf16, #tpu.memory_space<vmem>>, vector<1x128x384xbf16>
    %568 = vector.shape_cast %567 : vector<1x128x384xbf16> to vector<128x384xbf16>
    %cst_184 = arith.constant dense<0.000000e+00> : vector<16x384xf32>
    %569 = tpu.matmul %566, %568, %cst_184 {dimension_numbers = #tpu.dot_dimension_numbers<[1], [0], [0], [1], [0, 0, 1, 1], [], []>} : vector<16x128xbf16>, vector<128x384xbf16>, vector<16x384xf32> -> vector<16x384xf32>
    %c3_185 = arith.constant 3 : index
    %c0_186 = arith.constant 0 : index
    %c0_187 = arith.constant 0 : index
    %570 = vector.load %arg7[%c3_185, %c0_186, %c0_187] : memref<4x1x384xf32, #tpu.memory_space<vmem>>, vector<1x1x384xf32>
    %571 = vector.shape_cast %570 : vector<1x1x384xf32> to vector<1x384xf32>
    %572 = vector.broadcast %571 : vector<1x384xf32> to vector<16x384xf32>
    %573 = arith.addf %569, %572 : vector<16x384xf32>
    %574 = vector.shape_cast %573 : vector<16x384xf32> to vector<2x8x384xf32>
    %c3_188 = arith.constant 3 : index
    %c0_189 = arith.constant 0 : index
    %c0_190 = arith.constant 0 : index
    %575 = vector.load %arg8[%c3_188, %c0_189, %c0_190] : memref<4x128x128xbf16, #tpu.memory_space<vmem>>, vector<1x128x128xbf16>
    %576 = vector.shape_cast %575 : vector<1x128x128xbf16> to vector<128x128xbf16>
    %cst_191 = arith.constant 0.000000e+00 : f32
    %577 = vector.broadcast %cst_191 : f32 to vector<16x128xf32>
    %578 = vector.extract_strided_slice %574 {offsets = [0, 0, 0], sizes = [2, 8, 32], strides = [1, 1, 1]} : vector<2x8x384xf32> to vector<2x8x32xf32>
    %579 = arith.truncf %578 : vector<2x8x32xf32> to vector<2x8x32xbf16>
    %580 = vector.extract_strided_slice %574 {offsets = [0, 0, 128], sizes = [2, 8, 32], strides = [1, 1, 1]} : vector<2x8x384xf32> to vector<2x8x32xf32>
    %581 = arith.truncf %580 : vector<2x8x32xf32> to vector<2x8x32xbf16>
    %582 = vector.extract_strided_slice %574 {offsets = [0, 0, 256], sizes = [2, 8, 32], strides = [1, 1, 1]} : vector<2x8x384xf32> to vector<2x8x32xf32>
    %583 = arith.truncf %582 : vector<2x8x32xf32> to vector<2x8x32xbf16>
    "tpu.trace_start"() <{level = 10 : i32, message = "bqd,bkd->bqk"}> : () -> ()
    %cst_192 = arith.constant dense<0.000000e+00> : vector<2x8x8xf32>
    %584 = tpu.matmul %579, %581, %cst_192 {dimension_numbers = #tpu.dot_dimension_numbers<[2], [2], [1], [1], [0, 0, 0, 1, 1, 1], [0], [0]>} : vector<2x8x32xbf16>, vector<2x8x32xbf16>, vector<2x8x8xf32> -> vector<2x8x8xf32>
    "tpu.trace_stop"() : () -> ()
    %cst_193 = arith.constant dense<0xFF800000> : vector<2x8xf32>
    %585 = vector.multi_reduction <maximumf>, %584, %cst_193 [2] : vector<2x8x8xf32> to vector<2x8xf32>
    %586 = vector.shape_cast %585 : vector<2x8xf32> to vector<2x8x1xf32>
    %587 = vector.broadcast %586 : vector<2x8x1xf32> to vector<2x8x8xf32>
    %588 = arith.subf %584, %587 : vector<2x8x8xf32>
    %589 = math.exp %588 : vector<2x8x8xf32>
    %cst_194 = arith.constant dense<0.000000e+00> : vector<2x8xf32>
    %590 = vector.multi_reduction <add>, %589, %cst_194 [2] : vector<2x8x8xf32> to vector<2x8xf32>
    %591 = vector.shape_cast %590 : vector<2x8xf32> to vector<2x8x1xf32>
    %592 = tpu.reciprocal %591 {approx = true} : vector<2x8x1xf32> -> vector<2x8x1xf32>
    %593 = vector.broadcast %592 : vector<2x8x1xf32> to vector<2x8x8xf32>
    %594 = arith.mulf %589, %593 : vector<2x8x8xf32>
    %595 = arith.truncf %594 : vector<2x8x8xf32> to vector<2x8x8xbf16>
    "tpu.trace_start"() <{level = 10 : i32, message = "bqk,bkd->bqd"}> : () -> ()
    %cst_195 = arith.constant dense<0.000000e+00> : vector<2x8x32xf32>
    %596 = tpu.matmul %595, %583, %cst_195 {dimension_numbers = #tpu.dot_dimension_numbers<[2], [1], [1], [2], [0, 0, 0, 1, 1, 2], [0], [0]>} : vector<2x8x8xbf16>, vector<2x8x32xbf16>, vector<2x8x32xf32> -> vector<2x8x32xf32>
    "tpu.trace_stop"() : () -> ()
    %597 = vector.shape_cast %596 : vector<2x8x32xf32> to vector<16x32xf32>
    %598 = arith.truncf %597 : vector<16x32xf32> to vector<16x32xbf16>
    %599 = vector.extract_strided_slice %576 {offsets = [0, 0], sizes = [32, 128], strides = [1, 1]} : vector<128x128xbf16> to vector<32x128xbf16>
    %cst_196 = arith.constant dense<0.000000e+00> : vector<16x128xf32>
    %600 = tpu.matmul %598, %599, %cst_196 {dimension_numbers = #tpu.dot_dimension_numbers<[1], [0], [0], [1], [0, 0, 1, 1], [], []>} : vector<16x32xbf16>, vector<32x128xbf16>, vector<16x128xf32> -> vector<16x128xf32>
    %601 = arith.addf %577, %600 : vector<16x128xf32>
    %602 = vector.extract_strided_slice %574 {offsets = [0, 0, 32], sizes = [2, 8, 32], strides = [1, 1, 1]} : vector<2x8x384xf32> to vector<2x8x32xf32>
    %603 = arith.truncf %602 : vector<2x8x32xf32> to vector<2x8x32xbf16>
    %604 = vector.extract_strided_slice %574 {offsets = [0, 0, 160], sizes = [2, 8, 32], strides = [1, 1, 1]} : vector<2x8x384xf32> to vector<2x8x32xf32>
    %605 = arith.truncf %604 : vector<2x8x32xf32> to vector<2x8x32xbf16>
    %606 = vector.extract_strided_slice %574 {offsets = [0, 0, 288], sizes = [2, 8, 32], strides = [1, 1, 1]} : vector<2x8x384xf32> to vector<2x8x32xf32>
    %607 = arith.truncf %606 : vector<2x8x32xf32> to vector<2x8x32xbf16>
    "tpu.trace_start"() <{level = 10 : i32, message = "bqd,bkd->bqk"}> : () -> ()
    %cst_197 = arith.constant dense<0.000000e+00> : vector<2x8x8xf32>
    %608 = tpu.matmul %603, %605, %cst_197 {dimension_numbers = #tpu.dot_dimension_numbers<[2], [2], [1], [1], [0, 0, 0, 1, 1, 1], [0], [0]>} : vector<2x8x32xbf16>, vector<2x8x32xbf16>, vector<2x8x8xf32> -> vector<2x8x8xf32>
    "tpu.trace_stop"() : () -> ()
    %cst_198 = arith.constant dense<0xFF800000> : vector<2x8xf32>
    %609 = vector.multi_reduction <maximumf>, %608, %cst_198 [2] : vector<2x8x8xf32> to vector<2x8xf32>
    %610 = vector.shape_cast %609 : vector<2x8xf32> to vector<2x8x1xf32>
    %611 = vector.broadcast %610 : vector<2x8x1xf32> to vector<2x8x8xf32>
    %612 = arith.subf %608, %611 : vector<2x8x8xf32>
    %613 = math.exp %612 : vector<2x8x8xf32>
    %cst_199 = arith.constant dense<0.000000e+00> : vector<2x8xf32>
    %614 = vector.multi_reduction <add>, %613, %cst_199 [2] : vector<2x8x8xf32> to vector<2x8xf32>
    %615 = vector.shape_cast %614 : vector<2x8xf32> to vector<2x8x1xf32>
    %616 = tpu.reciprocal %615 {approx = true} : vector<2x8x1xf32> -> vector<2x8x1xf32>
    %617 = vector.broadcast %616 : vector<2x8x1xf32> to vector<2x8x8xf32>
    %618 = arith.mulf %613, %617 : vector<2x8x8xf32>
    %619 = arith.truncf %618 : vector<2x8x8xf32> to vector<2x8x8xbf16>
    "tpu.trace_start"() <{level = 10 : i32, message = "bqk,bkd->bqd"}> : () -> ()
    %cst_200 = arith.constant dense<0.000000e+00> : vector<2x8x32xf32>
    %620 = tpu.matmul %619, %607, %cst_200 {dimension_numbers = #tpu.dot_dimension_numbers<[2], [1], [1], [2], [0, 0, 0, 1, 1, 2], [0], [0]>} : vector<2x8x8xbf16>, vector<2x8x32xbf16>, vector<2x8x32xf32> -> vector<2x8x32xf32>
    "tpu.trace_stop"() : () -> ()
    %621 = vector.shape_cast %620 : vector<2x8x32xf32> to vector<16x32xf32>
    %622 = arith.truncf %621 : vector<16x32xf32> to vector<16x32xbf16>
    %623 = vector.extract_strided_slice %576 {offsets = [32, 0], sizes = [32, 128], strides = [1, 1]} : vector<128x128xbf16> to vector<32x128xbf16>
    %cst_201 = arith.constant dense<0.000000e+00> : vector<16x128xf32>
    %624 = tpu.matmul %622, %623, %cst_201 {dimension_numbers = #tpu.dot_dimension_numbers<[1], [0], [0], [1], [0, 0, 1, 1], [], []>} : vector<16x32xbf16>, vector<32x128xbf16>, vector<16x128xf32> -> vector<16x128xf32>
    %625 = arith.addf %601, %624 : vector<16x128xf32>
    %626 = vector.extract_strided_slice %574 {offsets = [0, 0, 64], sizes = [2, 8, 32], strides = [1, 1, 1]} : vector<2x8x384xf32> to vector<2x8x32xf32>
    %627 = arith.truncf %626 : vector<2x8x32xf32> to vector<2x8x32xbf16>
    %628 = vector.extract_strided_slice %574 {offsets = [0, 0, 192], sizes = [2, 8, 32], strides = [1, 1, 1]} : vector<2x8x384xf32> to vector<2x8x32xf32>
    %629 = arith.truncf %628 : vector<2x8x32xf32> to vector<2x8x32xbf16>
    %630 = vector.extract_strided_slice %574 {offsets = [0, 0, 320], sizes = [2, 8, 32], strides = [1, 1, 1]} : vector<2x8x384xf32> to vector<2x8x32xf32>
    %631 = arith.truncf %630 : vector<2x8x32xf32> to vector<2x8x32xbf16>
    "tpu.trace_start"() <{level = 10 : i32, message = "bqd,bkd->bqk"}> : () -> ()
    %cst_202 = arith.constant dense<0.000000e+00> : vector<2x8x8xf32>
    %632 = tpu.matmul %627, %629, %cst_202 {dimension_numbers = #tpu.dot_dimension_numbers<[2], [2], [1], [1], [0, 0, 0, 1, 1, 1], [0], [0]>} : vector<2x8x32xbf16>, vector<2x8x32xbf16>, vector<2x8x8xf32> -> vector<2x8x8xf32>
    "tpu.trace_stop"() : () -> ()
    %cst_203 = arith.constant dense<0xFF800000> : vector<2x8xf32>
    %633 = vector.multi_reduction <maximumf>, %632, %cst_203 [2] : vector<2x8x8xf32> to vector<2x8xf32>
    %634 = vector.shape_cast %633 : vector<2x8xf32> to vector<2x8x1xf32>
    %635 = vector.broadcast %634 : vector<2x8x1xf32> to vector<2x8x8xf32>
    %636 = arith.subf %632, %635 : vector<2x8x8xf32>
    %637 = math.exp %636 : vector<2x8x8xf32>
    %cst_204 = arith.constant dense<0.000000e+00> : vector<2x8xf32>
    %638 = vector.multi_reduction <add>, %637, %cst_204 [2] : vector<2x8x8xf32> to vector<2x8xf32>
    %639 = vector.shape_cast %638 : vector<2x8xf32> to vector<2x8x1xf32>
    %640 = tpu.reciprocal %639 {approx = true} : vector<2x8x1xf32> -> vector<2x8x1xf32>
    %641 = vector.broadcast %640 : vector<2x8x1xf32> to vector<2x8x8xf32>
    %642 = arith.mulf %637, %641 : vector<2x8x8xf32>
    %643 = arith.truncf %642 : vector<2x8x8xf32> to vector<2x8x8xbf16>
    "tpu.trace_start"() <{level = 10 : i32, message = "bqk,bkd->bqd"}> : () -> ()
    %cst_205 = arith.constant dense<0.000000e+00> : vector<2x8x32xf32>
    %644 = tpu.matmul %643, %631, %cst_205 {dimension_numbers = #tpu.dot_dimension_numbers<[2], [1], [1], [2], [0, 0, 0, 1, 1, 2], [0], [0]>} : vector<2x8x8xbf16>, vector<2x8x32xbf16>, vector<2x8x32xf32> -> vector<2x8x32xf32>
    "tpu.trace_stop"() : () -> ()
    %645 = vector.shape_cast %644 : vector<2x8x32xf32> to vector<16x32xf32>
    %646 = arith.truncf %645 : vector<16x32xf32> to vector<16x32xbf16>
    %647 = vector.extract_strided_slice %576 {offsets = [64, 0], sizes = [32, 128], strides = [1, 1]} : vector<128x128xbf16> to vector<32x128xbf16>
    %cst_206 = arith.constant dense<0.000000e+00> : vector<16x128xf32>
    %648 = tpu.matmul %646, %647, %cst_206 {dimension_numbers = #tpu.dot_dimension_numbers<[1], [0], [0], [1], [0, 0, 1, 1], [], []>} : vector<16x32xbf16>, vector<32x128xbf16>, vector<16x128xf32> -> vector<16x128xf32>
    %649 = arith.addf %625, %648 : vector<16x128xf32>
    %650 = vector.extract_strided_slice %574 {offsets = [0, 0, 96], sizes = [2, 8, 32], strides = [1, 1, 1]} : vector<2x8x384xf32> to vector<2x8x32xf32>
    %651 = arith.truncf %650 : vector<2x8x32xf32> to vector<2x8x32xbf16>
    %652 = vector.extract_strided_slice %574 {offsets = [0, 0, 224], sizes = [2, 8, 32], strides = [1, 1, 1]} : vector<2x8x384xf32> to vector<2x8x32xf32>
    %653 = arith.truncf %652 : vector<2x8x32xf32> to vector<2x8x32xbf16>
    %654 = vector.extract_strided_slice %574 {offsets = [0, 0, 352], sizes = [2, 8, 32], strides = [1, 1, 1]} : vector<2x8x384xf32> to vector<2x8x32xf32>
    %655 = arith.truncf %654 : vector<2x8x32xf32> to vector<2x8x32xbf16>
    "tpu.trace_start"() <{level = 10 : i32, message = "bqd,bkd->bqk"}> : () -> ()
    %cst_207 = arith.constant dense<0.000000e+00> : vector<2x8x8xf32>
    %656 = tpu.matmul %651, %653, %cst_207 {dimension_numbers = #tpu.dot_dimension_numbers<[2], [2], [1], [1], [0, 0, 0, 1, 1, 1], [0], [0]>} : vector<2x8x32xbf16>, vector<2x8x32xbf16>, vector<2x8x8xf32> -> vector<2x8x8xf32>
    "tpu.trace_stop"() : () -> ()
    %cst_208 = arith.constant dense<0xFF800000> : vector<2x8xf32>
    %657 = vector.multi_reduction <maximumf>, %656, %cst_208 [2] : vector<2x8x8xf32> to vector<2x8xf32>
    %658 = vector.shape_cast %657 : vector<2x8xf32> to vector<2x8x1xf32>
    %659 = vector.broadcast %658 : vector<2x8x1xf32> to vector<2x8x8xf32>
    %660 = arith.subf %656, %659 : vector<2x8x8xf32>
    %661 = math.exp %660 : vector<2x8x8xf32>
    %cst_209 = arith.constant dense<0.000000e+00> : vector<2x8xf32>
    %662 = vector.multi_reduction <add>, %661, %cst_209 [2] : vector<2x8x8xf32> to vector<2x8xf32>
    %663 = vector.shape_cast %662 : vector<2x8xf32> to vector<2x8x1xf32>
    %664 = tpu.reciprocal %663 {approx = true} : vector<2x8x1xf32> -> vector<2x8x1xf32>
    %665 = vector.broadcast %664 : vector<2x8x1xf32> to vector<2x8x8xf32>
    %666 = arith.mulf %661, %665 : vector<2x8x8xf32>
    %667 = arith.truncf %666 : vector<2x8x8xf32> to vector<2x8x8xbf16>
    "tpu.trace_start"() <{level = 10 : i32, message = "bqk,bkd->bqd"}> : () -> ()
    %cst_210 = arith.constant dense<0.000000e+00> : vector<2x8x32xf32>
    %668 = tpu.matmul %667, %655, %cst_210 {dimension_numbers = #tpu.dot_dimension_numbers<[2], [1], [1], [2], [0, 0, 0, 1, 1, 2], [0], [0]>} : vector<2x8x8xbf16>, vector<2x8x32xbf16>, vector<2x8x32xf32> -> vector<2x8x32xf32>
    "tpu.trace_stop"() : () -> ()
    %669 = vector.shape_cast %668 : vector<2x8x32xf32> to vector<16x32xf32>
    %670 = arith.truncf %669 : vector<16x32xf32> to vector<16x32xbf16>
    %671 = vector.extract_strided_slice %576 {offsets = [96, 0], sizes = [32, 128], strides = [1, 1]} : vector<128x128xbf16> to vector<32x128xbf16>
    %cst_211 = arith.constant dense<0.000000e+00> : vector<16x128xf32>
    %672 = tpu.matmul %670, %671, %cst_211 {dimension_numbers = #tpu.dot_dimension_numbers<[1], [0], [0], [1], [0, 0, 1, 1], [], []>} : vector<16x32xbf16>, vector<32x128xbf16>, vector<16x128xf32> -> vector<16x128xf32>
    %673 = arith.addf %649, %672 : vector<16x128xf32>
    %674 = vector.extract_strided_slice %565 {offsets = [0, 0], sizes = [1, 128], strides = [1, 1]} : vector<6x128xf32> to vector<1x128xf32>
    %675 = vector.broadcast %674 : vector<1x128xf32> to vector<16x128xf32>
    %676 = arith.addf %673, %675 : vector<16x128xf32>
    %677 = arith.addf %563, %676 : vector<16x128xf32>
    %678 = vector.extract_strided_slice %565 {offsets = [1, 0], sizes = [1, 128], strides = [1, 1]} : vector<6x128xf32> to vector<1x128xf32>
    %679 = vector.extract_strided_slice %565 {offsets = [2, 0], sizes = [1, 128], strides = [1, 1]} : vector<6x128xf32> to vector<1x128xf32>
    %cst_212 = arith.constant dense<0.000000e+00> : vector<16xf32>
    %680 = vector.multi_reduction <add>, %677, %cst_212 [1] : vector<16x128xf32> to vector<16xf32>
    %681 = vector.shape_cast %680 : vector<16xf32> to vector<16x1xf32>
    %cst_213 = arith.constant 1.280000e+02 : f32
    %682 = vector.broadcast %cst_213 : f32 to vector<16x1xf32>
    %683 = arith.divf %681, %682 : vector<16x1xf32>
    %684 = vector.broadcast %683 : vector<16x1xf32> to vector<16x128xf32>
    %685 = arith.subf %677, %684 : vector<16x128xf32>
    %686 = arith.mulf %685, %685 : vector<16x128xf32>
    %cst_214 = arith.constant dense<0.000000e+00> : vector<16xf32>
    %687 = vector.multi_reduction <add>, %686, %cst_214 [1] : vector<16x128xf32> to vector<16xf32>
    %688 = vector.shape_cast %687 : vector<16xf32> to vector<16x1xf32>
    %cst_215 = arith.constant 1.280000e+02 : f32
    %689 = vector.broadcast %cst_215 : f32 to vector<16x1xf32>
    %690 = arith.divf %688, %689 : vector<16x1xf32>
    %691 = vector.broadcast %683 : vector<16x1xf32> to vector<16x128xf32>
    %692 = arith.subf %677, %691 : vector<16x128xf32>
    %cst_216 = arith.constant 9.99999974E-6 : f32
    %693 = vector.broadcast %cst_216 : f32 to vector<16x1xf32>
    %694 = arith.addf %690, %693 : vector<16x1xf32>
    %695 = math.rsqrt %694 : vector<16x1xf32>
    %696 = vector.broadcast %695 : vector<16x1xf32> to vector<16x128xf32>
    %697 = arith.mulf %692, %696 : vector<16x128xf32>
    %698 = vector.broadcast %678 : vector<1x128xf32> to vector<16x128xf32>
    %699 = arith.mulf %697, %698 : vector<16x128xf32>
    %700 = vector.broadcast %679 : vector<1x128xf32> to vector<16x128xf32>
    %701 = arith.addf %699, %700 : vector<16x128xf32>
    %702 = arith.truncf %701 : vector<16x128xf32> to vector<16x128xbf16>
    %c3_217 = arith.constant 3 : index
    %c0_218 = arith.constant 0 : index
    %c0_219 = arith.constant 0 : index
    %703 = vector.load %arg9[%c3_217, %c0_218, %c0_219] : memref<4x128x256xbf16, #tpu.memory_space<vmem>>, vector<1x128x256xbf16>
    %704 = vector.shape_cast %703 : vector<1x128x256xbf16> to vector<128x256xbf16>
    %cst_220 = arith.constant dense<0.000000e+00> : vector<16x256xf32>
    %705 = tpu.matmul %702, %704, %cst_220 {dimension_numbers = #tpu.dot_dimension_numbers<[1], [0], [0], [1], [0, 0, 1, 1], [], []>} : vector<16x128xbf16>, vector<128x256xbf16>, vector<16x256xf32> -> vector<16x256xf32>
    %c3_221 = arith.constant 3 : index
    %c0_222 = arith.constant 0 : index
    %c0_223 = arith.constant 0 : index
    %706 = vector.load %arg10[%c3_221, %c0_222, %c0_223] : memref<4x1x256xf32, #tpu.memory_space<vmem>>, vector<1x1x256xf32>
    %707 = vector.shape_cast %706 : vector<1x1x256xf32> to vector<1x256xf32>
    %708 = vector.broadcast %707 : vector<1x256xf32> to vector<16x256xf32>
    %709 = arith.addf %705, %708 : vector<16x256xf32>
    %cst_224 = arith.constant 0.000000e+00 : f32
    %710 = vector.broadcast %cst_224 : f32 to vector<16x256xf32>
    %711 = arith.maximumf %709, %710 : vector<16x256xf32>
    %712 = arith.truncf %711 : vector<16x256xf32> to vector<16x256xbf16>
    %c3_225 = arith.constant 3 : index
    %c0_226 = arith.constant 0 : index
    %c0_227 = arith.constant 0 : index
    %713 = vector.load %arg11[%c3_225, %c0_226, %c0_227] : memref<4x256x128xbf16, #tpu.memory_space<vmem>>, vector<1x256x128xbf16>
    %714 = vector.shape_cast %713 : vector<1x256x128xbf16> to vector<256x128xbf16>
    %cst_228 = arith.constant dense<0.000000e+00> : vector<16x128xf32>
    %715 = tpu.matmul %712, %714, %cst_228 {dimension_numbers = #tpu.dot_dimension_numbers<[1], [0], [0], [1], [0, 0, 1, 1], [], []>} : vector<16x256xbf16>, vector<256x128xbf16>, vector<16x128xf32> -> vector<16x128xf32>
    %716 = vector.extract_strided_slice %565 {offsets = [3, 0], sizes = [1, 128], strides = [1, 1]} : vector<6x128xf32> to vector<1x128xf32>
    %717 = vector.broadcast %716 : vector<1x128xf32> to vector<16x128xf32>
    %718 = arith.addf %715, %717 : vector<16x128xf32>
    %719 = arith.addf %701, %718 : vector<16x128xf32>
    %720 = vector.extract_strided_slice %565 {offsets = [4, 0], sizes = [1, 128], strides = [1, 1]} : vector<6x128xf32> to vector<1x128xf32>
    %721 = vector.extract_strided_slice %565 {offsets = [5, 0], sizes = [1, 128], strides = [1, 1]} : vector<6x128xf32> to vector<1x128xf32>
    %cst_229 = arith.constant dense<0.000000e+00> : vector<16xf32>
    %722 = vector.multi_reduction <add>, %719, %cst_229 [1] : vector<16x128xf32> to vector<16xf32>
    %723 = vector.shape_cast %722 : vector<16xf32> to vector<16x1xf32>
    %cst_230 = arith.constant 1.280000e+02 : f32
    %724 = vector.broadcast %cst_230 : f32 to vector<16x1xf32>
    %725 = arith.divf %723, %724 : vector<16x1xf32>
    %726 = vector.broadcast %725 : vector<16x1xf32> to vector<16x128xf32>
    %727 = arith.subf %719, %726 : vector<16x128xf32>
    %728 = arith.mulf %727, %727 : vector<16x128xf32>
    %cst_231 = arith.constant dense<0.000000e+00> : vector<16xf32>
    %729 = vector.multi_reduction <add>, %728, %cst_231 [1] : vector<16x128xf32> to vector<16xf32>
    %730 = vector.shape_cast %729 : vector<16xf32> to vector<16x1xf32>
    %cst_232 = arith.constant 1.280000e+02 : f32
    %731 = vector.broadcast %cst_232 : f32 to vector<16x1xf32>
    %732 = arith.divf %730, %731 : vector<16x1xf32>
    %733 = vector.broadcast %725 : vector<16x1xf32> to vector<16x128xf32>
    %734 = arith.subf %719, %733 : vector<16x128xf32>
    %cst_233 = arith.constant 9.99999974E-6 : f32
    %735 = vector.broadcast %cst_233 : f32 to vector<16x1xf32>
    %736 = arith.addf %732, %735 : vector<16x1xf32>
    %737 = math.rsqrt %736 : vector<16x1xf32>
    %738 = vector.broadcast %737 : vector<16x1xf32> to vector<16x128xf32>
    %739 = arith.mulf %734, %738 : vector<16x128xf32>
    %740 = vector.broadcast %720 : vector<1x128xf32> to vector<16x128xf32>
    %741 = arith.mulf %739, %740 : vector<16x128xf32>
    %742 = vector.broadcast %721 : vector<1x128xf32> to vector<16x128xf32>
    %743 = arith.addf %741, %742 : vector<16x128xf32>
    %744 = vector.shape_cast %743 : vector<16x128xf32> to vector<2x8x128xf32>
    %cst_234 = arith.constant dense<0.000000e+00> : vector<2x128xf32>
    %745 = vector.multi_reduction <add>, %744, %cst_234 [1] : vector<2x8x128xf32> to vector<2x128xf32>
    %cst_235 = arith.constant 8.000000e+00 : f32
    %746 = vector.broadcast %cst_235 : f32 to vector<2x128xf32>
    %747 = arith.divf %745, %746 : vector<2x128xf32>
    %748 = arith.truncf %747 : vector<2x128xf32> to vector<2x128xbf16>
    %c0_236 = arith.constant 0 : index
    %c0_237 = arith.constant 0 : index
    %749 = vector.load %arg13[%c0_236, %c0_237] : memref<128x128xbf16, #tpu.memory_space<vmem>>, vector<128x128xbf16>
    %cst_238 = arith.constant dense<0.000000e+00> : vector<2x128xf32>
    %750 = tpu.matmul %748, %749, %cst_238 {dimension_numbers = #tpu.dot_dimension_numbers<[1], [0], [0], [1], [0, 0, 1, 1], [], []>} : vector<2x128xbf16>, vector<128x128xbf16>, vector<2x128xf32> -> vector<2x128xf32>
    %751 = vector.extract_strided_slice %0 {offsets = [2, 0], sizes = [1, 128], strides = [1, 1]} : vector<3x128xf32> to vector<1x128xf32>
    %752 = vector.broadcast %751 : vector<1x128xf32> to vector<2x128xf32>
    %753 = arith.addf %750, %752 : vector<2x128xf32>
    %754 = vector.shape_cast %753 : vector<2x128xf32> to vector<2x1x128xf32>
    %c0_239 = arith.constant 0 : index
    %c0_240 = arith.constant 0 : index
    %c0_241 = arith.constant 0 : index
    %755 = vector.load %arg14[%c0_239, %c0_240, %c0_241] : memref<2x1x128xf32, #tpu.memory_space<vmem>>, vector<2x1x128xf32>
    tpu.vector_store %arg14[%c0_239, %c0_240, %c0_241], %754 {strides = array<i32>} : memref<2x1x128xf32, #tpu.memory_space<vmem>>, vector<2x1x128xf32>,
    return
  }
  func.func @transform_0(%arg0: i32) -> (i32, i32, i32) {
    %c0_i32 = arith.constant 0 : i32
    %c0_i32_0 = arith.constant 0 : i32
    %c0_i32_1 = arith.constant 0 : i32
    return %arg0, %c0_i32, %c0_i32_0 : i32, i32, i32
  }
  func.func @transform_1(%arg0: i32) -> (i32, i32) {
    %c0_i32 = arith.constant 0 : i32
    %c0_i32_0 = arith.constant 0 : i32
    %c0_i32_1 = arith.constant 0 : i32
    return %c0_i32, %c0_i32_0 : i32, i32
  }
  func.func @transform_2(%arg0: i32) -> (i32, i32) {
    %c0_i32 = arith.constant 0 : i32
    %c0_i32_0 = arith.constant 0 : i32
    %c0_i32_1 = arith.constant 0 : i32
    return %c0_i32, %c0_i32_0 : i32, i32
  }
  func.func @transform_3(%arg0: i32) -> (i32, i32) {
    %c0_i32 = arith.constant 0 : i32
    %c0_i32_0 = arith.constant 0 : i32
    %c0_i32_1 = arith.constant 0 : i32
    return %c0_i32, %c0_i32_0 : i32, i32
  }
  func.func @transform_4(%arg0: i32) -> (i32, i32) {
    %c0_i32 = arith.constant 0 : i32
    %c0_i32_0 = arith.constant 0 : i32
    %c0_i32_1 = arith.constant 0 : i32
    return %c0_i32, %c0_i32_0 : i32, i32
  }
  func.func @transform_5(%arg0: i32) -> (i32, i32, i32) {
    %c0_i32 = arith.constant 0 : i32
    %c0_i32_0 = arith.constant 0 : i32
    %c0_i32_1 = arith.constant 0 : i32
    %c0_i32_2 = arith.constant 0 : i32
    return %c0_i32, %c0_i32_0, %c0_i32_1 : i32, i32, i32
  }
  func.func @transform_6(%arg0: i32) -> (i32, i32, i32) {
    %c0_i32 = arith.constant 0 : i32
    %c0_i32_0 = arith.constant 0 : i32
    %c0_i32_1 = arith.constant 0 : i32
    %c0_i32_2 = arith.constant 0 : i32
    return %c0_i32, %c0_i32_0, %c0_i32_1 : i32, i32, i32
  }
  func.func @transform_7(%arg0: i32) -> (i32, i32, i32) {
    %c0_i32 = arith.constant 0 : i32
    %c0_i32_0 = arith.constant 0 : i32
    %c0_i32_1 = arith.constant 0 : i32
    %c0_i32_2 = arith.constant 0 : i32
    return %c0_i32, %c0_i32_0, %c0_i32_1 : i32, i32, i32
  }
  func.func @transform_8(%arg0: i32) -> (i32, i32, i32) {
    %c0_i32 = arith.constant 0 : i32
    %c0_i32_0 = arith.constant 0 : i32
    %c0_i32_1 = arith.constant 0 : i32
    %c0_i32_2 = arith.constant 0 : i32
    return %c0_i32, %c0_i32_0, %c0_i32_1 : i32, i32, i32
  }
  func.func @transform_9(%arg0: i32) -> (i32, i32, i32) {
    %c0_i32 = arith.constant 0 : i32
    %c0_i32_0 = arith.constant 0 : i32
    %c0_i32_1 = arith.constant 0 : i32
    %c0_i32_2 = arith.constant 0 : i32
    return %c0_i32, %c0_i32_0, %c0_i32_1 : i32, i32, i32
  }
  func.func @transform_10(%arg0: i32) -> (i32, i32, i32) {
    %c0_i32 = arith.constant 0 : i32
    %c0_i32_0 = arith.constant 0 : i32
    %c0_i32_1 = arith.constant 0 : i32
    %c0_i32_2 = arith.constant 0 : i32
    return %c0_i32, %c0_i32_0, %c0_i32_1 : i32, i32, i32
  }
  func.func @transform_11(%arg0: i32) -> (i32, i32, i32) {
    %c0_i32 = arith.constant 0 : i32
    %c0_i32_0 = arith.constant 0 : i32
    %c0_i32_1 = arith.constant 0 : i32
    %c0_i32_2 = arith.constant 0 : i32
    return %c0_i32, %c0_i32_0, %c0_i32_1 : i32, i32, i32
  }
  func.func @transform_12(%arg0: i32) -> (i32, i32) {
    %c0_i32 = arith.constant 0 : i32
    %c0_i32_0 = arith.constant 0 : i32
    %c0_i32_1 = arith.constant 0 : i32
    return %c0_i32, %c0_i32_0 : i32, i32
  }
  func.func @transform_13(%arg0: i32) -> (i32, i32, i32) {
    %c0_i32 = arith.constant 0 : i32
    %c0_i32_0 = arith.constant 0 : i32
    %c0_i32_1 = arith.constant 0 : i32
    return %arg0, %c0_i32, %c0_i32_0 : i32, i32, i32
  }
}

</mosaic_0001>

<llo_original>
// kernel: transformer_classifier_forward.1
$region0: #{transformer_classifier_forward.1}
  #allocation0 [shape = 'u32[]', space=smem, size = 0x4, offset = 0x4, fixed_abs, tag = 'smem constant byte address 0x4 - core index']
  #allocation1 [shape = 'u32[144,128]{1,0:T(1,128)}', space=vmem, size = 0x12000, scoped, tag = 'internal scratch']
  %s0 = inlined_call_operand.vmem [shape: bf16[2,16,32], index: 0, kind: input, shape index: {}]
  %s1 = inlined_call_operand.vmem [shape: f32[8,128], index: 1, kind: input, shape index: {}]
  %s2 = inlined_call_operand.vmem [shape: bf16[32,128], index: 2, kind: input, shape index: {}]
  %s3 = inlined_call_operand.vmem [shape: bf16[128,128], index: 3, kind: input, shape index: {}]
  %s4 = inlined_call_operand.vmem [shape: f32[3,128], index: 4, kind: input, shape index: {}]
  %s5 = inlined_call_operand.hbm [shape: bf16[4,128,384], index: 5, kind: input, shape index: {}]
  %s6 = inlined_call_operand.hbm [shape: f32[4,1,384], index: 6, kind: input, shape index: {}]
  %s7 = inlined_call_operand.vmem [shape: bf16[4,128,128], index: 7, kind: input, shape index: {}]
  %s8 = inlined_call_operand.hbm [shape: bf16[4,128,256], index: 8, kind: input, shape index: {}]
  %s9 = inlined_call_operand.hbm [shape: f32[4,1,256], index: 9, kind: input, shape index: {}]
  %s10 = inlined_call_operand.hbm [shape: bf16[4,256,128], index: 10, kind: input, shape index: {}]
  %s11 = inlined_call_operand.vmem [shape: f32[4,6,128], index: 11, kind: input, shape index: {}]
  %s12 = inlined_call_operand.vmem [shape: bf16[128,128], index: 12, kind: input, shape index: {}]
  %s13 = inlined_call_operand.hbm [shape: f32[2,1,128], index: 13, kind: output, shape index: {}]
  %s14 = sld [smem:[#allocation0]]
  $region82: #{transformer_classifier_forward.1} parent=0
    _
  %s16 = ssub.s32 1, %s14
  %s17 = scalar_select 0, %s16, %s14
  $region1: #{transformer_classifier_forward.1} parent=0
    #allocation2 [shape = 'u8[393216]{0}', space=vmem, size = 0x60000, scoped, tag = 'input window, operand 5, single buffered']
    #allocation3 [shape = 's32[1]{0}', space=sflag, size = 0x4, scoped, tag = 'scoped memory for transformer_classifier_forward.1']
    #allocation4 [shape = 's32[1]{0}', space=sflag, size = 0x4, scoped, tag = 'scoped memory for transformer_classifier_forward.1']
    #allocation5 [shape = 'u8[6144]{0}', space=vmem, size = 0x1800, scoped, tag = 'input window, operand 6, single buffered']
    #allocation6 [shape = 's32[1]{0}', space=sflag, size = 0x4, scoped, tag = 'scoped memory for transformer_classifier_forward.1']
    #allocation7 [shape = 'u8[262144]{0}', space=vmem, size = 0x40000, scoped, tag = 'input window, operand 8, single buffered']
    #allocation8 [shape = 'u8[4096]{0}', space=vmem, size = 0x1000, scoped, tag = 'input window, operand 9, single buffered']
    #allocation9 [shape = 's32[1]{0}', space=sflag, size = 0x4, scoped, tag = 'scoped memory for transformer_classifier_forward.1']
    #allocation10 [shape = 'u8[262144]{0}', space=vmem, size = 0x40000, scoped, tag = 'input window, operand 10, single buffered']
    #allocation11 [shape = 'u8[1024]{0}', space=vmem, size = 0x400, scoped, tag = 'output window, operand 0, single buffered']
    %18 = vsyncpa [#allocation3], 0
    %19 = vsyncpa [#allocation6], 0
    %20 = vsyncpa [#allocation9], 0
    %21 = vsyncpa [#allocation4], 0
    // Predicated region
    $region2: #{transformer_classifier_forward.1} parent=1 // pred_check
      _
    $region3: #{transformer_classifier_forward.1} parent=1 // pred_check_branch
      %23 = sbr.rel (0) target = $region5
    $region4: #{transformer_classifier_forward.1} parent=1 // pred_region
      _
    $region5: #{transformer_classifier_forward.1} parent=1 // pred_fallthru
      _
    // Predicated region
    $region6: #{transformer_classifier_forward.1} parent=1 // pred_check
      _
    $region7: #{transformer_classifier_forward.1} parent=1 // pred_check_branch
      %25 = sbr.rel (0) target = $region9
    $region8: #{transformer_classifier_forward.1} parent=1 // pred_region
      _
    $region9: #{transformer_classifier_forward.1} parent=1 // pred_fallthru
      _
    // Predicated region
    $region10: #{transformer_classifier_forward.1} parent=1 // pred_check
      _
    $region11: #{transformer_classifier_forward.1} parent=1 // pred_check_branch
      %27 = sbr.rel (0) target = $region13
    $region12: #{transformer_classifier_forward.1} parent=1 // pred_region
      _
    $region13: #{transformer_classifier_forward.1} parent=1 // pred_fallthru
      _
    // Predicated region
    $region14: #{transformer_classifier_forward.1} parent=1 // pred_check
      _
    $region15: #{transformer_classifier_forward.1} parent=1 // pred_check_branch
      %29 = sbr.rel (0) target = $region17
    $region16: #{transformer_classifier_forward.1} parent=1 // pred_region
      _
    $region17: #{transformer_classifier_forward.1} parent=1 // pred_fallthru
      _
    // Predicated region
    $region18: #{transformer_classifier_forward.1} parent=1 // pred_check
      _
    $region19: #{transformer_classifier_forward.1} parent=1 // pred_check_branch
      %31 = sbr.rel (0) target = $region21
    $region20: #{transformer_classifier_forward.1} parent=1 // pred_region
      _
    $region21: #{transformer_classifier_forward.1} parent=1 // pred_fallthru
      _
    // Predicated region
    $region22: #{transformer_classifier_forward.1} parent=1 // pred_check
      _
    $region23: #{transformer_classifier_forward.1} parent=1 // pred_check_branch
      %33 = sbr.rel (0) target = $region25
    $region24: #{transformer_classifier_forward.1} parent=1 // pred_region
      %s35 = ssub.s32 12288, 12288
      %36 = vsyncadd [#allocation3], %s35
      %s37 = sshll.u32 [#allocation2], 4
      %s38 = int_to_ptr.vmem [resolvable:$true] %s37
      %43 = dma.hbm_to_vmem [thread:$0]  %s5, 12288, %s38, [#allocation3], 192, 192, 12
    $region25: #{transformer_classifier_forward.1} parent=1 // pred_fallthru
      _
    // Predicated region
    $region26: #{transformer_classifier_forward.1} parent=1 // pred_check
      _
    $region27: #{transformer_classifier_forward.1} parent=1 // pred_check_branch
      %45 = sbr.rel (0) target = $region29
    $region28: #{transformer_classifier_forward.1} parent=1 // pred_region
      %s47 = ssub.s32 192, 192
      %48 = vsyncadd [#allocation6], %s47
      %s49 = sshll.u32 [#allocation5], 4
      %s50 = int_to_ptr.vmem [resolvable:$true] %s49
      %55 = dma.hbm_to_vmem [thread:$0]  %s6, 192, %s50, [#allocation6], 48, 48, 3
    $region29: #{transformer_classifier_forward.1} parent=1 // pred_fallthru
      _
    // Predicated region
    $region30: #{transformer_classifier_forward.1} parent=1 // pred_check
      _
    $region31: #{transformer_classifier_forward.1} parent=1 // pred_check_branch
      %57 = sbr.rel (0) target = $region33
    $region32: #{transformer_classifier_forward.1} parent=1 // pred_region
      _
    $region33: #{transformer_classifier_forward.1} parent=1 // pred_fallthru
      _
    // Predicated region
    $region34: #{transformer_classifier_forward.1} parent=1 // pred_check
      _
    $region35: #{transformer_classifier_forward.1} parent=1 // pred_check_branch
      %59 = sbr.rel (0) target = $region37
    $region36: #{transformer_classifier_forward.1} parent=1 // pred_region
      %s61 = ssub.s32 8192, 8192
      %62 = vsyncadd [#allocation6], %s61
      %s63 = sshll.u32 [#allocation7], 4
      %s64 = int_to_ptr.vmem [resolvable:$true] %s63
      %69 = dma.hbm_to_vmem [thread:$0]  %s8, 8192, %s64, [#allocation6], 128, 128, 8
    $region37: #{transformer_classifier_forward.1} parent=1 // pred_fallthru
      _
    // Predicated region
    $region38: #{transformer_classifier_forward.1} parent=1 // pred_check
      _
    $region39: #{transformer_classifier_forward.1} parent=1 // pred_check_branch
      %71 = sbr.rel (0) target = $region41
    $region40: #{transformer_classifier_forward.1} parent=1 // pred_region
      %s73 = ssub.s32 128, 128
      %74 = vsyncadd [#allocation9], %s73
      %s75 = sshll.u32 [#allocation8], 4
      %s76 = int_to_ptr.vmem [resolvable:$true] %s75
      %81 = dma.hbm_to_vmem [thread:$0]  %s9, 128, %s76, [#allocation9], 32, 32, 2
    $region41: #{transformer_classifier_forward.1} parent=1 // pred_fallthru
      _
    // Predicated region
    $region42: #{transformer_classifier_forward.1} parent=1 // pred_check
      _
    $region43: #{transformer_classifier_forward.1} parent=1 // pred_check_branch
      %83 = sbr.rel (0) target = $region45
    $region44: #{transformer_classifier_forward.1} parent=1 // pred_region
      %s85 = ssub.s32 8192, 8192
      %86 = vsyncadd [#allocation9], %s85
      %s87 = sshll.u32 [#allocation10], 4
      %s88 = int_to_ptr.vmem [resolvable:$true] %s87
      %93 = dma.hbm_to_vmem [thread:$0]  %s10, 8192, %s88, [#allocation9], 64, 64, 4
    $region45: #{transformer_classifier_forward.1} parent=1 // pred_fallthru
      _
    // Predicated region
    $region46: #{transformer_classifier_forward.1} parent=1 // pred_check
      _
    $region47: #{transformer_classifier_forward.1} parent=1 // pred_check_branch
      %95 = sbr.rel (0) target = $region49
    $region48: #{transformer_classifier_forward.1} parent=1 // pred_region
      _
    $region49: #{transformer_classifier_forward.1} parent=1 // pred_fallthru
      _
    // Predicated region
    $region50: #{transformer_classifier_forward.1} parent=1 // pred_check
      _
    $region51: #{transformer_classifier_forward.1} parent=1 // pred_check_branch
      %97 = sbr.rel (0) target = $region53
    $region52: #{transformer_classifier_forward.1} parent=1 // pred_region
      _
    $region53: #{transformer_classifier_forward.1} parent=1 // pred_fallthru
      _
    // Predicated region
    $region54: #{transformer_classifier_forward.1} parent=1 // pred_check
      _
    $region55: #{transformer_classifier_forward.1} parent=1 // pred_check_branch
      %99 = sbr.rel (0) target = $region57
    $region56: #{transformer_classifier_forward.1} parent=1 // pred_region
      %100 = dma.done [#allocation3], 12288
    $region57: #{transformer_classifier_forward.1} parent=1 // pred_fallthru
      _
    // Predicated region
    $region58: #{transformer_classifier_forward.1} parent=1 // pred_check
      _
    $region59: #{transformer_classifier_forward.1} parent=1 // pred_check_branch
      %102 = sbr.rel (0) target = $region61
    $region60: #{transformer_classifier_forward.1} parent=1 // pred_region
      %103 = dma.done [#allocation6], 192
    $region61: #{transformer_classifier_forward.1} parent=1 // pred_fallthru
      _
    // Predicated region
    $region62: #{transformer_classifier_forward.1} parent=1 // pred_check
      _
    $region63: #{transformer_classifier_forward.1} parent=1 // pred_check_branch
      %105 = sbr.rel (0) target = $region65
    $region64: #{transformer_classifier_forward.1} parent=1 // pred_region
      %106 = dma.done [#allocation6], 8192
    $region65: #{transformer_classifier_forward.1} parent=1 // pred_fallthru
      _
    // Predicated region
    $region66: #{transformer_classifier_forward.1} parent=1 // pred_check
      _
    $region67: #{transformer_classifier_forward.1} parent=1 // pred_check_branch
      %108 = sbr.rel (0) target = $region69
    $region68: #{transformer_classifier_forward.1} parent=1 // pred_region
      %109 = dma.done [#allocation9], 128
    $region69: #{transformer_classifier_forward.1} parent=1 // pred_fallthru
      _
    // Predicated region
    $region70: #{transformer_classifier_forward.1} parent=1 // pred_check
      _
    $region71: #{transformer_classifier_forward.1} parent=1 // pred_check_branch
      %111 = sbr.rel (0) target = $region73
    $region72: #{transformer_classifier_forward.1} parent=1 // pred_region
      %112 = dma.done [#allocation9], 8192
    $region73: #{transformer_classifier_forward.1} parent=1 // pred_fallthru
      _
    %v114 = vld [vmem:[%s4] sm:$0x7]
    %v115 = vld [vmem:[%s0] sm:$0xf]
    %v116 = vld [vmem:[%s0 + $0x4] sm:$0xf]
    %v117 = vld [vmem:[%s0 + $0x8] sm:$0xf]
    %v118 = vld [vmem:[%s0 + $0xc] sm:$0xf]
    %v119 = vld [vmem:[%s2] sm:$0xf]
    %v120 = vld [vmem:[%s2 + $0x4] sm:$0xf]
    %v121 = vld [vmem:[%s2 + $0x8] sm:$0xf]
    %v122 = vld [vmem:[%s2 + $0xc] sm:$0xf]
    %v123 = vlaneseq
    %v124 = vshrl.u32 %v123, 7
    %v125 = vsub.s32 0, %v124
    %v126 = vrot.slane %v114, %v125
    %v131 = vunpack.c.l.b16 %v115
    %v132 = vunpack.c.l.b16 %v116
    %v133 = vunpack.c.l.b16 %v117
    %v134 = vunpack.c.l.b16 %v118
    %v135 = vpack.c.b16 %v132, %v131
    %v136 = vpack.c.b16 %v134, %v133
    %v141 = vunpack.c.l.b16 %v119
    %v142 = vunpack.c.l.b16 %v120
    %v143 = vunpack.c.l.b16 %v121
    %v144 = vunpack.c.l.b16 %v122
    %v145 = vpack.c.b16 %v142, %v141
    %v146 = vpack.c.b16 %v144, %v143
    %vm149 = vcmask 261120
    %v151 = vsel %vm149, %v135, 0
    %v154 = vsel %vm149, %v136, 0
    %156 = vmatprep.subr.bf16.mxu0 0
    %157 = vmatpush1.bf16.msra.mxu0 0
    %158 = vmatprep.subr.bf16.mxu0 0
    %159 = vmatpush1.bf16.msra.mxu0 0
    %160 = vmatprep.subr.bf16.mxu0 0
    %161 = vmatpush1.bf16.msra.mxu0 0
    %162 = vmatprep.subr.bf16.mxu0 0
    %163 = vmatpush1.bf16.msra.mxu0 0
    %164 = vmatprep.subr.bf16.mxu0 0
    %165 = vmatpush1.bf16.msra.mxu0 0
    %166 = vmatprep.subr.bf16.mxu0 0
    %167 = vmatpush1.bf16.msra.mxu0 0
    %168 = vmatprep.subr.bf16.mxu0 0
    %169 = vmatpush1.bf16.msra.mxu0 %v146
    %170 = vmatprep.subr.bf16.mxu0 0
    %171 = vmatpush1.bf16.msra.mxu0 %v145
    %172 = vmatprep.subr.bf16.mxu0 0
    %173 = vmatpush2.bf16.msra.mxu0 0
    %174 = vmatprep.subr.bf16.mxu0 0
    %175 = vmatpush2.bf16.msra.mxu0 0
    %176 = vmatprep.subr.bf16.mxu0 0
    %177 = vmatpush2.bf16.msra.mxu0 0
    %178 = vmatprep.subr.bf16.mxu0 0
    %179 = vmatpush2.bf16.msra.mxu0 0
    %180 = vmatprep.subr.bf16.mxu0 0
    %181 = vmatpush2.bf16.msra.mxu0 0
    %182 = vmatprep.subr.bf16.mxu0 0
    %183 = vmatpush2.bf16.msra.mxu0 0
    %184 = vmatprep.subr.bf16.mxu0 0
    %185 = vmatpush2.bf16.msra.mxu0 0
    %186 = vmatprep.subr.bf16.mxu0 0
    %187 = vmatpush2.bf16.msra.mxu0 0
    %188 = vmatprep.mubr.bf16.mxu0 0
    %189 = vmatmul.mubr.bf16.gmra.mxu0 %v151
    %v190 = vpop.f32.mrf.mxu0
    %v191 = vadd.f32 %v126, %v190
    %v192 = vpop.f32.mrf.mxu0
    %v193 = vpop.f32.mrf.mxu0
    %v194 = vadd.f32 %v126, %v193
    %v195 = vpop.f32.mrf.mxu0
    %196 = vmatprep.mubr.bf16.mxu0 0
    %197 = vmatmul.mubr.bf16.gmra.mxu0 %v154
    %v198 = vpop.f32.mrf.mxu0
    %v199 = vadd.f32 %v126, %v198
    %v200 = vpop.f32.mrf.mxu0
    %v201 = vpop.f32.mrf.mxu0
    %v202 = vadd.f32 %v126, %v201
    %v203 = vpop.f32.mrf.mxu0
    %204 = vdwg.mxu0
    %v205 = vmax.f32 %v191, 0.0
    %v206 = vmax.f32 %v194, 0.0
    %v207 = vmax.f32 %v199, 0.0
    %v208 = vmax.f32 %v202, 0.0
    %v213 = vcombine.high %v205, %v205
    %v215 = vunpack.c.l.s4 1983009808
    %v216 = vunpack.c.0.s8 %v215
    %v217 = vlaneseq
    %v218 = vshrl.u32 %v217, 7
    %v219 = vsub.s32 %v216, %v218
    %v220 = vrot.slane %v205, %v219
    %v222 = vunpack.c.l.s4 1983009808
    %v223 = vunpack.c.0.s8 %v222
    %v224 = vlaneseq
    %v225 = vshrl.u32 %v224, 7
    %v226 = vsub.s32 %v223, %v225
    %v227 = vrot.slane %v213, %v226
    %v228 = vcombine.high %v220, %v220
    %v229 = vcombine.high %v227, %v227
    %v230 = vcombine.high %v206, %v206
    %v232 = vunpack.c.l.s4 1983009808
    %v233 = vunpack.c.0.s8 %v232
    %v234 = vlaneseq
    %v235 = vshrl.u32 %v234, 7
    %v236 = vsub.s32 %v233, %v235
    %v237 = vrot.slane %v206, %v236
    %v239 = vunpack.c.l.s4 1983009808
    %v240 = vunpack.c.0.s8 %v239
    %v241 = vlaneseq
    %v242 = vshrl.u32 %v241, 7
    %v243 = vsub.s32 %v240, %v242
    %v244 = vrot.slane %v230, %v243
    %v245 = vcombine.high %v237, %v237
    %v246 = vcombine.high %v244, %v244
    %v247 = vcombine.high %v207, %v207
    %v249 = vunpack.c.l.s4 1983009808
    %v250 = vunpack.c.0.s8 %v249
    %v251 = vlaneseq
    %v252 = vshrl.u32 %v251, 7
    %v253 = vsub.s32 %v250, %v252
    %v254 = vrot.slane %v207, %v253
    %v256 = vunpack.c.l.s4 1983009808
    %v257 = vunpack.c.0.s8 %v256
    %v258 = vlaneseq
    %v259 = vshrl.u32 %v258, 7
    %v260 = vsub.s32 %v257, %v259
    %v261 = vrot.slane %v247, %v260
    %v262 = vcombine.high %v254, %v254
    %v263 = vcombine.high %v261, %v261
    %v264 = vcombine.high %v208, %v208
    %v266 = vunpack.c.l.s4 1983009808
    %v267 = vunpack.c.0.s8 %v266
    %v268 = vlaneseq
    %v269 = vshrl.u32 %v268, 7
    %v270 = vsub.s32 %v267, %v269
    %v271 = vrot.slane %v208, %v270
    %v273 = vunpack.c.l.s4 1983009808
    %v274 = vunpack.c.0.s8 %v273
    %v275 = vlaneseq
    %v276 = vshrl.u32 %v275, 7
    %v277 = vsub.s32 %v274, %v276
    %v278 = vrot.slane %v264, %v277
    %v279 = vcombine.high %v271, %v271
    %v280 = vcombine.high %v278, %v278
    %vm297 = vcmask 1041408
    %v298 = vsel %vm297, %v220, -inf
    %v299 = vrot.slane %v298, 4
    %v300 = vmax.f32 %v298, %v299
    %v301 = vrot.slane %v300, 2
    %v302 = vmax.f32 %v300, %v301
    %v303 = vrot.slane %v302, 1
    %v304 = vmax.f32 %v302, %v303
    %v305 = vsel %vm297, %v228, -inf
    %v306 = vrot.slane %v305, 4
    %v307 = vmax.f32 %v305, %v306
    %v308 = vrot.slane %v307, 2
    %v309 = vmax.f32 %v307, %v308
    %v310 = vrot.slane %v309, 1
    %v311 = vmax.f32 %v309, %v310
    %v312 = vsel %vm297, %v227, -inf
    %v313 = vrot.slane %v312, 4
    %v314 = vmax.f32 %v312, %v313
    %v315 = vrot.slane %v314, 2
    %v316 = vmax.f32 %v314, %v315
    %v317 = vrot.slane %v316, 1
    %v318 = vmax.f32 %v316, %v317
    %v319 = vsel %vm297, %v229, -inf
    %v320 = vrot.slane %v319, 4
    %v321 = vmax.f32 %v319, %v320
    %v322 = vrot.slane %v321, 2
    %v323 = vmax.f32 %v321, %v322
    %v324 = vrot.slane %v323, 1
    %v325 = vmax.f32 %v323, %v324
    %v326 = vsel %vm297, %v237, -inf
    %v327 = vrot.slane %v326, 4
    %v328 = vmax.f32 %v326, %v327
    %v329 = vrot.slane %v328, 2
    %v330 = vmax.f32 %v328, %v329
    %v331 = vrot.slane %v330, 1
    %v332 = vmax.f32 %v330, %v331
    %v333 = vsel %vm297, %v245, -inf
    %v334 = vrot.slane %v333, 4
    %v335 = vmax.f32 %v333, %v334
    %v336 = vrot.slane %v335, 2
    %v337 = vmax.f32 %v335, %v336
    %v338 = vrot.slane %v337, 1
    %v339 = vmax.f32 %v337, %v338
    %v340 = vsel %vm297, %v244, -inf
    %v341 = vrot.slane %v340, 4
    %v342 = vmax.f32 %v340, %v341
    %v343 = vrot.slane %v342, 2
    %v344 = vmax.f32 %v342, %v343
    %v345 = vrot.slane %v344, 1
    %v346 = vmax.f32 %v344, %v345
    %v347 = vsel %vm297, %v246, -inf
    %v348 = vrot.slane %v347, 4
    %v349 = vmax.f32 %v347, %v348
    %v350 = vrot.slane %v349, 2
    %v351 = vmax.f32 %v349, %v350
    %v352 = vrot.slane %v351, 1
    %v353 = vmax.f32 %v351, %v352
    %v354 = vsel %vm297, %v254, -inf
    %v355 = vrot.slane %v354, 4
    %v356 = vmax.f32 %v354, %v355
    %v357 = vrot.slane %v356, 2
    %v358 = vmax.f32 %v356, %v357
    %v359 = vrot.slane %v358, 1
    %v360 = vmax.f32 %v358, %v359
    %v361 = vsel %vm297, %v262, -inf
    %v362 = vrot.slane %v361, 4
    %v363 = vmax.f32 %v361, %v362
    %v364 = vrot.slane %v363, 2
    %v365 = vmax.f32 %v363, %v364
    %v366 = vrot.slane %v365, 1
    %v367 = vmax.f32 %v365, %v366
    %v368 = vsel %vm297, %v261, -inf
    %v369 = vrot.slane %v368, 4
    %v370 = vmax.f32 %v368, %v369
    %v371 = vrot.slane %v370, 2
    %v372 = vmax.f32 %v370, %v371
    %v373 = vrot.slane %v372, 1
    %v374 = vmax.f32 %v372, %v373
    %v375 = vsel %vm297, %v263, -inf
    %v376 = vrot.slane %v375, 4
    %v377 = vmax.f32 %v375, %v376
    %v378 = vrot.slane %v377, 2
    %v379 = vmax.f32 %v377, %v378
    %v380 = vrot.slane %v379, 1
    %v381 = vmax.f32 %v379, %v380
    %v382 = vsel %vm297, %v271, -inf
    %v383 = vrot.slane %v382, 4
    %v384 = vmax.f32 %v382, %v383
    %v385 = vrot.slane %v384, 2
    %v386 = vmax.f32 %v384, %v385
    %v387 = vrot.slane %v386, 1
    %v388 = vmax.f32 %v386, %v387
    %v389 = vsel %vm297, %v279, -inf
    %v390 = vrot.slane %v389, 4
    %v391 = vmax.f32 %v389, %v390
    %v392 = vrot.slane %v391, 2
    %v393 = vmax.f32 %v391, %v392
    %v394 = vrot.slane %v393, 1
    %v395 = vmax.f32 %v393, %v394
    %v396 = vsel %vm297, %v278, -inf
    %v397 = vrot.slane %v396, 4
    %v398 = vmax.f32 %v396, %v397
    %v399 = vrot.slane %v398, 2
    %v400 = vmax.f32 %v398, %v399
    %v401 = vrot.slane %v400, 1
    %v402 = vmax.f32 %v400, %v401
    %v403 = vsel %vm297, %v280, -inf
    %v404 = vrot.slane %v403, 4
    %v405 = vmax.f32 %v403, %v404
    %v406 = vrot.slane %v405, 2
    %v407 = vmax.f32 %v405, %v406
    %v408 = vrot.slane %v407, 1
    %v409 = vmax.f32 %v407, %v408
    %v410 = vpack.c.bf16 %v304, %v304
    %v411 = vpack.c.bf16 %v311, %v311
    %v412 = vpack.c.bf16 %v318, %v318
    %v413 = vpack.c.bf16 %v325, %v325
    %v414 = vpack.c.bf16 %v332, %v332
    %v415 = vpack.c.bf16 %v339, %v339
    %v416 = vpack.c.bf16 %v346, %v346
    %v417 = vpack.c.bf16 %v353, %v353
    %v418 = vpack.c.bf16 %v360, %v360
    %v419 = vpack.c.bf16 %v367, %v367
    %v420 = vpack.c.bf16 %v374, %v374
    %v421 = vpack.c.bf16 %v381, %v381
    %v422 = vpack.c.bf16 %v388, %v388
    %v423 = vpack.c.bf16 %v395, %v395
    %v424 = vpack.c.bf16 %v402, %v402
    %v425 = vpack.c.bf16 %v409, %v409
    %v426 = vld [vmem:[%s3] sm:$0xf]
    %v427 = vld [vmem:[%s3 + $0x4] sm:$0xf]
    %v428 = vld [vmem:[%s3 + $0x8] sm:$0xf]
    %v429 = vld [vmem:[%s3 + $0xc] sm:$0xf]
    %v430 = vld [vmem:[%s3 + $0x10] sm:$0xf]
    %v431 = vld [vmem:[%s3 + $0x14] sm:$0xf]
    %v432 = vld [vmem:[%s3 + $0x18] sm:$0xf]
    %v433 = vld [vmem:[%s3 + $0x1c] sm:$0xf]
    %v434 = vld [vmem:[%s3 + $0x20] sm:$0xf]
    %v435 = vld [vmem:[%s3 + $0x24] sm:$0xf]
    %v436 = vld [vmem:[%s3 + $0x28] sm:$0xf]
    %v437 = vld [vmem:[%s3 + $0x2c] sm:$0xf]
    %v438 = vld [vmem:[%s3 + $0x30] sm:$0xf]
    %v439 = vld [vmem:[%s3 + $0x34] sm:$0xf]
    %v440 = vld [vmem:[%s3 + $0x38] sm:$0xf]
    %v441 = vld [vmem:[%s3 + $0x3c] sm:$0xf]
    %v442 = vlaneseq
    %v443 = vshrl.u32 %v442, 7
    %v444 = vsub.s32 1, %v443
    %v445 = vrot.slane %v114, %v444
    %v462 = vunpack.c.l.b16 %v410
    %v463 = vunpack.c.l.b16 %v411
    %v464 = vunpack.c.l.b16 %v412
    %v465 = vunpack.c.l.b16 %v413
    %v466 = vunpack.c.l.b16 %v414
    %v467 = vunpack.c.l.b16 %v415
    %v468 = vunpack.c.l.b16 %v416
    %v469 = vunpack.c.l.b16 %v417
    %v470 = vunpack.c.l.b16 %v418
    %v471 = vunpack.c.l.b16 %v419
    %v472 = vunpack.c.l.b16 %v420
    %v473 = vunpack.c.l.b16 %v421
    %v474 = vunpack.c.l.b16 %v422
    %v475 = vunpack.c.l.b16 %v423
    %v476 = vunpack.c.l.b16 %v424
    %v477 = vunpack.c.l.b16 %v425
    %vm478 = vcmask 1041409
    %v479 = vsel %vm478, %v463, %v462
    %vm480 = vcmask 1042434
    %v481 = vsel %vm480, %v464, %v479
    %vm482 = vcmask 1043459
    %v483 = vsel %vm482, %v465, %v481
    %vm484 = vcmask 1044484
    %v485 = vsel %vm484, %v466, %v483
    %vm486 = vcmask 1045509
    %v487 = vsel %vm486, %v467, %v485
    %vm488 = vcmask 1046534
    %v489 = vsel %vm488, %v468, %v487
    %vm490 = vcmask 1047559
    %v491 = vsel %vm490, %v469, %v489
    %v492 = vsel %vm478, %v471, %v470
    %v493 = vsel %vm480, %v472, %v492
    %v494 = vsel %vm482, %v473, %v493
    %v495 = vsel %vm484, %v474, %v494
    %v496 = vsel %vm486, %v475, %v495
    %v497 = vsel %vm488, %v476, %v496
    %v498 = vsel %vm490, %v477, %v497
    %v499 = vpack.c.b16 %v498, %v491
    %v517 = vunpack.c.l.b16 %v426
    %v518 = vunpack.c.l.b16 %v427
    %v519 = vunpack.c.l.b16 %v428
    %v520 = vunpack.c.l.b16 %v429
    %v521 = vunpack.c.l.b16 %v430
    %v522 = vunpack.c.l.b16 %v431
    %v523 = vunpack.c.l.b16 %v432
    %v524 = vunpack.c.l.b16 %v433
    %v525 = vunpack.c.l.b16 %v434
    %v526 = vunpack.c.l.b16 %v435
    %v527 = vunpack.c.l.b16 %v436
    %v528 = vunpack.c.l.b16 %v437
    %v529 = vunpack.c.l.b16 %v438
    %v530 = vunpack.c.l.b16 %v439
    %v531 = vunpack.c.l.b16 %v440
    %v532 = vunpack.c.l.b16 %v441
    %v533 = vpack.c.b16 %v518, %v517
    %v534 = vpack.c.b16 %v520, %v519
    %v535 = vpack.c.b16 %v522, %v521
    %v536 = vpack.c.b16 %v524, %v523
    %v537 = vpack.c.b16 %v526, %v525
    %v538 = vpack.c.b16 %v528, %v527
    %v539 = vpack.c.b16 %v530, %v529
    %v540 = vpack.c.b16 %v532, %v531
    %549 = vmatprep.subr.bf16.mxu0 0
    %550 = vmatpush1.bf16.msra.mxu0 %v540
    %551 = vmatprep.subr.bf16.mxu0 0
    %552 = vmatpush1.bf16.msra.mxu0 %v539
    %553 = vmatprep.subr.bf16.mxu0 0
    %554 = vmatpush1.bf16.msra.mxu0 %v538
    %555 = vmatprep.subr.bf16.mxu0 0
    %556 = vmatpush1.bf16.msra.mxu0 %v537
    %557 = vmatprep.subr.bf16.mxu0 0
    %558 = vmatpush1.bf16.msra.mxu0 %v536
    %559 = vmatprep.subr.bf16.mxu0 0
    %560 = vmatpush1.bf16.msra.mxu0 %v535
    %561 = vmatprep.subr.bf16.mxu0 0
    %562 = vmatpush1.bf16.msra.mxu0 %v534
    %563 = vmatprep.subr.bf16.mxu0 0
    %564 = vmatpush1.bf16.msra.mxu0 %v533
    %565 = vmatprep.subr.bf16.mxu0 0
    %566 = vmatpush2.bf16.msra.mxu0 0
    %567 = vmatprep.subr.bf16.mxu0 0
    %568 = vmatpush2.bf16.msra.mxu0 0
    %569 = vmatprep.subr.bf16.mxu0 0
    %570 = vmatpush2.bf16.msra.mxu0 0
    %571 = vmatprep.subr.bf16.mxu0 0
    %572 = vmatpush2.bf16.msra.mxu0 0
    %573 = vmatprep.subr.bf16.mxu0 0
    %574 = vmatpush2.bf16.msra.mxu0 0
    %575 = vmatprep.subr.bf16.mxu0 0
    %576 = vmatpush2.bf16.msra.mxu0 0
    %577 = vmatprep.subr.bf16.mxu0 0
    %578 = vmatpush2.bf16.msra.mxu0 0
    %579 = vmatprep.subr.bf16.mxu0 0
    %580 = vmatpush2.bf16.msra.mxu0 0
    %581 = vmatprep.mubr.bf16.mxu0 0
    %582 = vmatmul.mubr.bf16.gmra.mxu0 %v499
    %v583 = vpop.f32.mrf.mxu0
    %v584 = vadd.f32 %v445, %v583
    %v585 = vpop.f32.mrf.mxu0
    %v586 = vpop.f32.mrf.mxu0
    %v587 = vadd.f32 %v445, %v586
    %v588 = vpop.f32.mrf.mxu0
    %589 = vdwg.mxu0
    %v590 = vld [vmem:[%s1] sm:$0xff]
    %v591 = vadd.f32 %v584, %v590
    %v592 = vadd.f32 %v587, %v590
    %v593 = vld [vmem:[%s11] sm:$0x3f]
    %v594 = vpack.c.bf16 %v592, %v591
    %v595 = vld [vmem:[#allocation2] sm:$0xff]
    %v596 = vld [vmem:[#allocation2 + $0x8] sm:$0xf]
    %v597 = vld [vmem:[#allocation2 + $0xc] sm:$0xff]
    %v598 = vld [vmem:[#allocation2 + $0x14] sm:$0xf]
    %v599 = vld [vmem:[#allocation2 + $0x18] sm:$0xff]
    %v600 = vld [vmem:[#allocation2 + $0x20] sm:$0xf]
    %v601 = vld [vmem:[#allocation2 + $0x24] sm:$0xff]
    %v602 = vld [vmem:[#allocation2 + $0x2c] sm:$0xf]
    %v603 = vld [vmem:[#allocation2 + $0x30] sm:$0xff]
    %v604 = vld [vmem:[#allocation2 + $0x38] sm:$0xf]
    %v605 = vld [vmem:[#allocation2 + $0x3c] sm:$0xff]
    %v606 = vld [vmem:[#allocation2 + $0x44] sm:$0xf]
    %v607 = vld [vmem:[#allocation2 + $0x48] sm:$0xff]
    %v608 = vld [vmem:[#allocation2 + $0x50] sm:$0xf]
    %v609 = vld [vmem:[#allocation2 + $0x54] sm:$0xff]
    %v610 = vld [vmem:[#allocation2 + $0x5c] sm:$0xf]
    %v611 = vld [vmem:[#allocation2 + $0x60] sm:$0xff]
    %v612 = vld [vmem:[#allocation2 + $0x68] sm:$0xf]
    %v613 = vld [vmem:[#allocation2 + $0x6c] sm:$0xff]
    %v614 = vld [vmem:[#allocation2 + $0x74] sm:$0xf]
    %v615 = vld [vmem:[#allocation2 + $0x78] sm:$0xff]
    %v616 = vld [vmem:[#allocation2 + $0x80] sm:$0xf]
    %v617 = vld [vmem:[#allocation2 + $0x84] sm:$0xff]
    %v618 = vld [vmem:[#allocation2 + $0x8c] sm:$0xf]
    %v619 = vld [vmem:[#allocation2 + $0x90] sm:$0xff]
    %v620 = vld [vmem:[#allocation2 + $0x98] sm:$0xf]
    %v621 = vld [vmem:[#allocation2 + $0x9c] sm:$0xff]
    %v622 = vld [vmem:[#allocation2 + $0xa4] sm:$0xf]
    %v623 = vld [vmem:[#allocation2 + $0xa8] sm:$0xff]
    %v624 = vld [vmem:[#allocation2 + $0xb0] sm:$0xf]
    %v625 = vld [vmem:[#allocation2 + $0xb4] sm:$0xff]
    %v626 = vld [vmem:[#allocation2 + $0xbc] sm:$0xf]
    %v627 = vld [vmem:[#allocation5] sm:$0x7]
    %v629 = vlaneseq
    %v630 = vshrl.u32 %v629, 7
    %v631 = vsub.s32 0, %v630
    %v632 = vrot.slane %v627, %v631
    %v633 = vlaneseq
    %v634 = vshrl.u32 %v633, 7
    %v635 = vsub.s32 1, %v634
    %v636 = vrot.slane %v627, %v635
    %v637 = vlaneseq
    %v638 = vshrl.u32 %v637, 7
    %v639 = vsub.s32 2, %v638
    %v640 = vrot.slane %v627, %v639
    %v676 = vunpack.c.l.b16 %v595
    %v677 = vunpack.c.h.b16 %v595
    %v678 = vunpack.c.l.b16 %v596
    %v679 = vunpack.c.l.b16 %v597
    %v680 = vunpack.c.h.b16 %v597
    %v681 = vunpack.c.l.b16 %v598
    %v682 = vunpack.c.l.b16 %v599
    %v683 = vunpack.c.h.b16 %v599
    %v684 = vunpack.c.l.b16 %v600
    %v685 = vunpack.c.l.b16 %v601
    %v686 = vunpack.c.h.b16 %v601
    %v687 = vunpack.c.l.b16 %v602
    %v688 = vunpack.c.l.b16 %v603
    %v689 = vunpack.c.h.b16 %v603
    %v690 = vunpack.c.l.b16 %v604
    %v691 = vunpack.c.l.b16 %v605
    %v692 = vunpack.c.h.b16 %v605
    %v693 = vunpack.c.l.b16 %v606
    %v694 = vunpack.c.l.b16 %v607
    %v695 = vunpack.c.h.b16 %v607
    %v696 = vunpack.c.l.b16 %v608
    %v697 = vunpack.c.l.b16 %v609
    %v698 = vunpack.c.h.b16 %v609
    %v699 = vunpack.c.l.b16 %v610
    %v700 = vunpack.c.l.b16 %v611
    %v701 = vunpack.c.h.b16 %v611
    %v702 = vunpack.c.l.b16 %v612
    %v703 = vunpack.c.l.b16 %v613
    %v704 = vunpack.c.h.b16 %v613
    %v705 = vunpack.c.l.b16 %v614
    %v706 = vunpack.c.l.b16 %v615
    %v707 = vunpack.c.h.b16 %v615
    %v708 = vunpack.c.l.b16 %v616
    %v709 = vunpack.c.l.b16 %v617
    %v710 = vunpack.c.h.b16 %v617
    %v711 = vunpack.c.l.b16 %v618
    %v712 = vunpack.c.l.b16 %v619
    %v713 = vunpack.c.h.b16 %v619
    %v714 = vunpack.c.l.b16 %v620
    %v715 = vunpack.c.l.b16 %v621
    %v716 = vunpack.c.h.b16 %v621
    %v717 = vunpack.c.l.b16 %v622
    %v718 = vunpack.c.l.b16 %v623
    %v719 = vunpack.c.h.b16 %v623
    %v720 = vunpack.c.l.b16 %v624
    %v721 = vunpack.c.l.b16 %v625
    %v722 = vunpack.c.h.b16 %v625
    %v723 = vunpack.c.l.b16 %v626
    %v724 = vpack.c.b16 %v679, %v676
    %v725 = vpack.c.b16 %v680, %v677
    %v726 = vpack.c.b16 %v681, %v678
    %v727 = vpack.c.b16 %v685, %v682
    %v728 = vpack.c.b16 %v686, %v683
    %v729 = vpack.c.b16 %v687, %v684
    %v730 = vpack.c.b16 %v691, %v688
    %v731 = vpack.c.b16 %v692, %v689
    %v732 = vpack.c.b16 %v693, %v690
    %v733 = vpack.c.b16 %v697, %v694
    %v734 = vpack.c.b16 %v698, %v695
    %v735 = vpack.c.b16 %v699, %v696
    %v736 = vpack.c.b16 %v703, %v700
    %v737 = vpack.c.b16 %v704, %v701
    %v738 = vpack.c.b16 %v705, %v702
    %v739 = vpack.c.b16 %v709, %v706
    %v740 = vpack.c.b16 %v710, %v707
    %v741 = vpack.c.b16 %v711, %v708
    %v742 = vpack.c.b16 %v715, %v712
    %v743 = vpack.c.b16 %v716, %v713
    %v744 = vpack.c.b16 %v717, %v714
    %v745 = vpack.c.b16 %v721, %v718
    %v746 = vpack.c.b16 %v722, %v719
    %v747 = vpack.c.b16 %v723, %v720
    %772 = vmatprep.subr.bf16.mxu0 %v746
    %773 = vmatpush1.bf16.msra.mxu0 %v745
    %774 = vmatprep.subr.bf16.mxu0 %v743
    %775 = vmatpush1.bf16.msra.mxu0 %v742
    %776 = vmatprep.subr.bf16.mxu0 %v740
    %777 = vmatpush1.bf16.msra.mxu0 %v739
    %778 = vmatprep.subr.bf16.mxu0 %v737
    %779 = vmatpush1.bf16.msra.mxu0 %v736
    %780 = vmatprep.subr.bf16.mxu0 %v734
    %781 = vmatpush1.bf16.msra.mxu0 %v733
    %782 = vmatprep.subr.bf16.mxu0 %v731
    %783 = vmatpush1.bf16.msra.mxu0 %v730
    %784 = vmatprep.subr.bf16.mxu0 %v728
    %785 = vmatpush1.bf16.msra.mxu0 %v727
    %786 = vmatprep.subr.bf16.mxu0 %v725
    %787 = vmatpush1.bf16.msra.mxu0 %v724
    %788 = vmatprep.subr.bf16.mxu0 0
    %789 = vmatpush2.bf16.msra.mxu0 0
    %790 = vmatprep.subr.bf16.mxu0 0
    %791 = vmatpush2.bf16.msra.mxu0 0
    %792 = vmatprep.subr.bf16.mxu0 0
    %793 = vmatpush2.bf16.msra.mxu0 0
    %794 = vmatprep.subr.bf16.mxu0 0
    %795 = vmatpush2.bf16.msra.mxu0 0
    %796 = vmatprep.subr.bf16.mxu0 0
    %797 = vmatpush2.bf16.msra.mxu0 0
    %798 = vmatprep.subr.bf16.mxu0 0
    %799 = vmatpush2.bf16.msra.mxu0 0
    %800 = vmatprep.subr.bf16.mxu0 0
    %801 = vmatpush2.bf16.msra.mxu0 0
    %802 = vmatprep.subr.bf16.mxu0 0
    %803 = vmatpush2.bf16.msra.mxu0 0
    %804 = vmatprep.mubr.bf16.mxu0 0
    %805 = vmatmul.mubr.bf16.gmra.mxu0 %v594
    %v806 = vpop.f32.mrf.mxu0
    %v807 = vadd.f32 %v632, %v806
    %v808 = vpop.f32.mrf.mxu0
    %v809 = vadd.f32 %v636, %v808
    %v810 = vpop.f32.mrf.mxu0
    %v811 = vadd.f32 %v632, %v810
    %v812 = vpop.f32.mrf.mxu0
    %v813 = vadd.f32 %v636, %v812
    %814 = vdwg.mxu0
    %815 = vmatprep.subr.bf16.mxu0 0
    %816 = vmatpush1.bf16.msra.mxu0 %v747
    %817 = vmatprep.subr.bf16.mxu0 0
    %818 = vmatpush1.bf16.msra.mxu0 %v744
    %819 = vmatprep.subr.bf16.mxu0 0
    %820 = vmatpush1.bf16.msra.mxu0 %v741
    %821 = vmatprep.subr.bf16.mxu0 0
    %822 = vmatpush1.bf16.msra.mxu0 %v738
    %823 = vmatprep.subr.bf16.mxu0 0
    %824 = vmatpush1.bf16.msra.mxu0 %v735
    %825 = vmatprep.subr.bf16.mxu0 0
    %826 = vmatpush1.bf16.msra.mxu0 %v732
    %827 = vmatprep.subr.bf16.mxu0 0
    %828 = vmatpush1.bf16.msra.mxu0 %v729
    %829 = vmatprep.subr.bf16.mxu0 0
    %830 = vmatpush1.bf16.msra.mxu0 %v726
    %831 = vmatprep.subr.bf16.mxu0 0
    %832 = vmatpush2.bf16.msra.mxu0 0
    %833 = vmatprep.subr.bf16.mxu0 0
    %834 = vmatpush2.bf16.msra.mxu0 0
    %835 = vmatprep.subr.bf16.mxu0 0
    %836 = vmatpush2.bf16.msra.mxu0 0
    %837 = vmatprep.subr.bf16.mxu0 0
    %838 = vmatpush2.bf16.msra.mxu0 0
    %839 = vmatprep.subr.bf16.mxu0 0
    %840 = vmatpush2.bf16.msra.mxu0 0
    %841 = vmatprep.subr.bf16.mxu0 0
    %842 = vmatpush2.bf16.msra.mxu0 0
    %843 = vmatprep.subr.bf16.mxu0 0
    %844 = vmatpush2.bf16.msra.mxu0 0
    %845 = vmatprep.subr.bf16.mxu0 0
    %846 = vmatpush2.bf16.msra.mxu0 0
    %847 = vmatprep.mubr.bf16.mxu0 0
    %848 = vmatmul.mubr.bf16.gmra.mxu0 %v594
    %v849 = vpop.f32.mrf.mxu0
    %v850 = vadd.f32 %v640, %v849
    %v851 = vpop.f32.mrf.mxu0
    %v852 = vpop.f32.mrf.mxu0
    %v853 = vadd.f32 %v640, %v852
    %v854 = vpop.f32.mrf.mxu0
    %855 = vdwg.mxu0
    %v856 = vld [vmem:[%s7] sm:$0xf]
    %v857 = vld [vmem:[%s7 + $0x4] sm:$0xf]
    %v858 = vld [vmem:[%s7 + $0x8] sm:$0xf]
    %v859 = vld [vmem:[%s7 + $0xc] sm:$0xf]
    %v860 = vld [vmem:[%s7 + $0x10] sm:$0xf]
    %v861 = vld [vmem:[%s7 + $0x14] sm:$0xf]
    %v862 = vld [vmem:[%s7 + $0x18] sm:$0xf]
    %v863 = vld [vmem:[%s7 + $0x1c] sm:$0xf]
    %v864 = vld [vmem:[%s7 + $0x20] sm:$0xf]
    %v865 = vld [vmem:[%s7 + $0x24] sm:$0xf]
    %v866 = vld [vmem:[%s7 + $0x28] sm:$0xf]
    %v867 = vld [vmem:[%s7 + $0x2c] sm:$0xf]
    %v868 = vld [vmem:[%s7 + $0x30] sm:$0xf]
    %v869 = vld [vmem:[%s7 + $0x34] sm:$0xf]
    %v870 = vld [vmem:[%s7 + $0x38] sm:$0xf]
    %v871 = vld [vmem:[%s7 + $0x3c] sm:$0xf]
    %v872 = vpack.c.bf16 %v807, %v807
    %v873 = vpack.c.bf16 %v811, %v811
    %v874 = vpack.c.bf16 %v809, %v809
    %v875 = vpack.c.bf16 %v813, %v813
    %v876 = vpack.c.bf16 %v850, %v850
    %v877 = vpack.c.bf16 %v853, %v853
    %v879 = vsel %vm149, %v872, 0
    %v882 = vsel %vm149, %v874, 0
    %884 = vmatprep.subr.bf16.mxu0 0
    %885 = vmatpush1.bf16.xpose.msra.mxu0 0
    %886 = vmatprep.subr.bf16.mxu0 0
    %887 = vmatpush1.bf16.xpose.msra.mxu0 0
    %888 = vmatprep.subr.bf16.mxu0 0
    %889 = vmatpush1.bf16.xpose.msra.mxu0 0
    %890 = vmatprep.subr.bf16.mxu0 0
    %891 = vmatpush1.bf16.xpose.msra.mxu0 0
    %892 = vmatprep.subr.bf16.mxu0 0
    %893 = vmatpush1.bf16.xpose.msra.mxu0 0
    %894 = vmatprep.subr.bf16.mxu0 0
    %895 = vmatpush1.bf16.xpose.msra.mxu0 0
    %896 = vmatprep.subr.bf16.mxu0 0
    %897 = vmatpush1.bf16.xpose.msra.mxu0 0
    %898 = vmatprep.subr.bf16.mxu0 0
    %899 = vmatpush1.bf16.xpose.msra.mxu0 %v882
    %900 = vmatprep.subr.bf16.mxu0 0
    %901 = vmatpush2.bf16.xpose.msra.mxu0 0
    %902 = vmatprep.subr.bf16.mxu0 0
    %903 = vmatpush2.bf16.xpose.msra.mxu0 0
    %904 = vmatprep.subr.bf16.mxu0 0
    %905 = vmatpush2.bf16.xpose.msra.mxu0 0
    %906 = vmatprep.subr.bf16.mxu0 0
    %907 = vmatpush2.bf16.xpose.msra.mxu0 0
    %908 = vmatprep.subr.bf16.mxu0 0
    %909 = vmatpush2.bf16.xpose.msra.mxu0 0
    %910 = vmatprep.subr.bf16.mxu0 0
    %911 = vmatpush2.bf16.xpose.msra.mxu0 0
    %912 = vmatprep.subr.bf16.mxu0 0
    %913 = vmatpush2.bf16.xpose.msra.mxu0 0
    %914 = vmatprep.subr.bf16.mxu0 0
    %915 = vmatpush2.bf16.xpose.msra.mxu0 0
    %916 = vmatprep.mubr.bf16.mxu0 0
    %917 = vmatmul.mubr.bf16.gmra.mxu0 %v879
    %v918 = vpop.f32.mrf.mxu0
    %v919 = vadd.f32 0.0, %v918
    %v920 = vpop.f32.mrf.mxu0
    %v921 = vpop.f32.mrf.mxu0
    %v922 = vpop.f32.mrf.mxu0
    %923 = vdwg.mxu0
    %v925 = vsel %vm149, %v873, 0
    %v928 = vsel %vm149, %v875, 0
    %930 = vmatprep.subr.bf16.mxu0 0
    %931 = vmatpush1.bf16.xpose.msra.mxu0 0
    %932 = vmatprep.subr.bf16.mxu0 0
    %933 = vmatpush1.bf16.xpose.msra.mxu0 0
    %934 = vmatprep.subr.bf16.mxu0 0
    %935 = vmatpush1.bf16.xpose.msra.mxu0 0
    %936 = vmatprep.subr.bf16.mxu0 0
    %937 = vmatpush1.bf16.xpose.msra.mxu0 0
    %938 = vmatprep.subr.bf16.mxu0 0
    %939 = vmatpush1.bf16.xpose.msra.mxu0 0
    %940 = vmatprep.subr.bf16.mxu0 0
    %941 = vmatpush1.bf16.xpose.msra.mxu0 0
    %942 = vmatprep.subr.bf16.mxu0 0
    %943 = vmatpush1.bf16.xpose.msra.mxu0 0
    %944 = vmatprep.subr.bf16.mxu0 0
    %945 = vmatpush1.bf16.xpose.msra.mxu0 %v928
    %946 = vmatprep.subr.bf16.mxu0 0
    %947 = vmatpush2.bf16.xpose.msra.mxu0 0
    %948 = vmatprep.subr.bf16.mxu0 0
    %949 = vmatpush2.bf16.xpose.msra.mxu0 0
    %950 = vmatprep.subr.bf16.mxu0 0
    %951 = vmatpush2.bf16.xpose.msra.mxu0 0
    %952 = vmatprep.subr.bf16.mxu0 0
    %953 = vmatpush2.bf16.xpose.msra.mxu0 0
    %954 = vmatprep.subr.bf16.mxu0 0
    %955 = vmatpush2.bf16.xpose.msra.mxu0 0
    %956 = vmatprep.subr.bf16.mxu0 0
    %957 = vmatpush2.bf16.xpose.msra.mxu0 0
    %958 = vmatprep.subr.bf16.mxu0 0
    %959 = vmatpush2.bf16.xpose.msra.mxu0 0
    %960 = vmatprep.subr.bf16.mxu0 0
    %961 = vmatpush2.bf16.xpose.msra.mxu0 0
    %962 = vmatprep.mubr.bf16.mxu0 0
    %963 = vmatmul.mubr.bf16.gmra.mxu0 %v925
    %v964 = vpop.f32.mrf.mxu0
    %v965 = vadd.f32 0.0, %v964
    %v966 = vpop.f32.mrf.mxu0
    %v967 = vpop.f32.mrf.mxu0
    %v968 = vpop.f32.mrf.mxu0
    %969 = vdwg.mxu0
    %vm970 = vcmask 64512
    %v971 = vsel %vm970, %v919, -inf
    %972 = vmax.xlane.f32.xlu0 %v971
    %v973 = vpop.xlane.xlu0 %972
    %v974 = vsel %vm970, %v965, -inf
    %975 = vmax.xlane.f32.xlu0 %v974
    %v976 = vpop.xlane.xlu0 %975
    %v977 = vsub.f32 %v919, %v973
    %v978 = vsub.f32 %v965, %v976
    %v979 = vmul.f32 %v977, 1.442695
    %v980 = vpow.pop %v979
    %v981 = vmul.f32 %v978, 1.442695
    %v982 = vpow.pop %v981
    %v983 = vsel %vm970, %v980, 0.0
    %984 = vadd.xlane.f32.xlu0 %v983
    %v985 = vpop.xlane.xlu0 %984
    %v986 = vsel %vm970, %v982, 0.0
    %987 = vadd.xlane.f32.xlu0 %v986
    %v988 = vpop.xlane.xlu0 %987
    %v989 = vrcp.pop %v985
    %v990 = vrcp.pop %v988
    %v991 = vmul.f32 %v980, %v989
    %v992 = vmul.f32 %v982, %v990
    %v993 = vpack.c.bf16 %v991, %v991
    %v994 = vpack.c.bf16 %v992, %v992
    %v996 = vsel %vm970, %v993, 0
    %vm998 = vcmask 1043456
    %v1000 = vsel %vm998, %v876, 0
    %1002 = vmatprep.subr.bf16.mxu0 0
    %1003 = vmatpush1.bf16.msra.mxu0 0
    %1004 = vmatprep.subr.bf16.mxu0 0
    %1005 = vmatpush1.bf16.msra.mxu0 0
    %1006 = vmatprep.subr.bf16.mxu0 0
    %1007 = vmatpush1.bf16.msra.mxu0 0
    %1008 = vmatprep.subr.bf16.mxu0 0
    %1009 = vmatpush1.bf16.msra.mxu0 0
    %1010 = vmatprep.subr.bf16.mxu0 0
    %1011 = vmatpush1.bf16.msra.mxu0 0
    %1012 = vmatprep.subr.bf16.mxu0 0
    %1013 = vmatpush1.bf16.msra.mxu0 0
    %1014 = vmatprep.subr.bf16.mxu0 0
    %1015 = vmatpush1.bf16.msra.mxu0 0
    %1016 = vmatprep.subr.bf16.mxu0 0
    %1017 = vmatpush1.bf16.msra.mxu0 %v1000
    %1018 = vmatprep.subr.bf16.mxu0 0
    %1019 = vmatpush2.bf16.msra.mxu0 0
    %1020 = vmatprep.subr.bf16.mxu0 0
    %1021 = vmatpush2.bf16.msra.mxu0 0
    %1022 = vmatprep.subr.bf16.mxu0 0
    %1023 = vmatpush2.bf16.msra.mxu0 0
    %1024 = vmatprep.subr.bf16.mxu0 0
    %1025 = vmatpush2.bf16.msra.mxu0 0
    %1026 = vmatprep.subr.bf16.mxu0 0
    %1027 = vmatpush2.bf16.msra.mxu0 0
    %1028 = vmatprep.subr.bf16.mxu0 0
    %1029 = vmatpush2.bf16.msra.mxu0 0
    %1030 = vmatprep.subr.bf16.mxu0 0
    %1031 = vmatpush2.bf16.msra.mxu0 0
    %1032 = vmatprep.subr.bf16.mxu0 0
    %1033 = vmatpush2.bf16.msra.mxu0 0
    %1034 = vmatprep.mubr.bf16.mxu0 0
    %1035 = vmatmul.mubr.bf16.gmra.mxu0 %v996
    %v1036 = vpop.f32.mrf.mxu0
    %v1037 = vadd.f32 0.0, %v1036
    %v1038 = vpop.f32.mrf.mxu0
    %v1039 = vpop.f32.mrf.mxu0
    %v1040 = vpop.f32.mrf.mxu0
    %1041 = vdwg.mxu0
    %v1043 = vsel %vm970, %v994, 0
    %v1046 = vsel %vm998, %v877, 0
    %1048 = vmatprep.subr.bf16.mxu0 0
    %1049 = vmatpush1.bf16.msra.mxu0 0
    %1050 = vmatprep.subr.bf16.mxu0 0
    %1051 = vmatpush1.bf16.msra.mxu0 0
    %1052 = vmatprep.subr.bf16.mxu0 0
    %1053 = vmatpush1.bf16.msra.mxu0 0
    %1054 = vmatprep.subr.bf16.mxu0 0
    %1055 = vmatpush1.bf16.msra.mxu0 0
    %1056 = vmatprep.subr.bf16.mxu0 0
    %1057 = vmatpush1.bf16.msra.mxu0 0
    %1058 = vmatprep.subr.bf16.mxu0 0
    %1059 = vmatpush1.bf16.msra.mxu0 0
    %1060 = vmatprep.subr.bf16.mxu0 0
    %1061 = vmatpush1.bf16.msra.mxu0 0
    %1062 = vmatprep.subr.bf16.mxu0 0
    %1063 = vmatpush1.bf16.msra.mxu0 %v1046
    %1064 = vmatprep.subr.bf16.mxu0 0
    %1065 = vmatpush2.bf16.msra.mxu0 0
    %1066 = vmatprep.subr.bf16.mxu0 0
    %1067 = vmatpush2.bf16.msra.mxu0 0
    %1068 = vmatprep.subr.bf16.mxu0 0
    %1069 = vmatpush2.bf16.msra.mxu0 0
    %1070 = vmatprep.subr.bf16.mxu0 0
    %1071 = vmatpush2.bf16.msra.mxu0 0
    %1072 = vmatprep.subr.bf16.mxu0 0
    %1073 = vmatpush2.bf16.msra.mxu0 0
    %1074 = vmatprep.subr.bf16.mxu0 0
    %1075 = vmatpush2.bf16.msra.mxu0 0
    %1076 = vmatprep.subr.bf16.mxu0 0
    %1077 = vmatpush2.bf16.msra.mxu0 0
    %1078 = vmatprep.subr.bf16.mxu0 0
    %1079 = vmatpush2.bf16.msra.mxu0 0
    %1080 = vmatprep.mubr.bf16.mxu0 0
    %1081 = vmatmul.mubr.bf16.gmra.mxu0 %v1043
    %v1082 = vpop.f32.mrf.mxu0
    %v1083 = vadd.f32 0.0, %v1082
    %v1084 = vpop.f32.mrf.mxu0
    %v1085 = vpop.f32.mrf.mxu0
    %v1086 = vpop.f32.mrf.mxu0
    %1087 = vdwg.mxu0
    %v1088 = vpack.c.bf16 %v1083, %v1037
    %1090 = vrot.lane.b32.xlu0 %v872, 96
    %v1091 = vpop.permute.xlu0 %1090
    %1093 = vrot.lane.b32.xlu0 %v874, 96
    %v1094 = vpop.permute.xlu0 %1093
    %v1096 = vsel %vm149, %v1091, 0
    %v1099 = vsel %vm149, %v1094, 0
    %1101 = vmatprep.subr.bf16.mxu0 0
    %1102 = vmatpush1.bf16.xpose.msra.mxu0 0
    %1103 = vmatprep.subr.bf16.mxu0 0
    %1104 = vmatpush1.bf16.xpose.msra.mxu0 0
    %1105 = vmatprep.subr.bf16.mxu0 0
    %1106 = vmatpush1.bf16.xpose.msra.mxu0 0
    %1107 = vmatprep.subr.bf16.mxu0 0
    %1108 = vmatpush1.bf16.xpose.msra.mxu0 0
    %1109 = vmatprep.subr.bf16.mxu0 0
    %1110 = vmatpush1.bf16.xpose.msra.mxu0 0
    %1111 = vmatprep.subr.bf16.mxu0 0
    %1112 = vmatpush1.bf16.xpose.msra.mxu0 0
    %1113 = vmatprep.subr.bf16.mxu0 0
    %1114 = vmatpush1.bf16.xpose.msra.mxu0 0
    %1115 = vmatprep.subr.bf16.mxu0 0
    %1116 = vmatpush1.bf16.xpose.msra.mxu0 %v1099
    %1117 = vmatprep.subr.bf16.mxu0 0
    %1118 = vmatpush2.bf16.xpose.msra.mxu0 0
    %1119 = vmatprep.subr.bf16.mxu0 0
    %1120 = vmatpush2.bf16.xpose.msra.mxu0 0
    %1121 = vmatprep.subr.bf16.mxu0 0
    %1122 = vmatpush2.bf16.xpose.msra.mxu0 0
    %1123 = vmatprep.subr.bf16.mxu0 0
    %1124 = vmatpush2.bf16.xpose.msra.mxu0 0
    %1125 = vmatprep.subr.bf16.mxu0 0
    %1126 = vmatpush2.bf16.xpose.msra.mxu0 0
    %1127 = vmatprep.subr.bf16.mxu0 0
    %1128 = vmatpush2.bf16.xpose.msra.mxu0 0
    %1129 = vmatprep.subr.bf16.mxu0 0
    %1130 = vmatpush2.bf16.xpose.msra.mxu0 0
    %1131 = vmatprep.subr.bf16.mxu0 0
    %1132 = vmatpush2.bf16.xpose.msra.mxu0 0
    %1133 = vmatprep.mubr.bf16.mxu0 0
    %1134 = vmatmul.mubr.bf16.gmra.mxu0 %v1096
    %v1135 = vpop.f32.mrf.mxu0
    %v1136 = vadd.f32 0.0, %v1135
    %v1137 = vpop.f32.mrf.mxu0
    %v1138 = vpop.f32.mrf.mxu0
    %v1139 = vpop.f32.mrf.mxu0
    %1140 = vdwg.mxu0
    %1142 = vrot.lane.b32.xlu0 %v873, 96
    %v1143 = vpop.permute.xlu0 %1142
    %1145 = vrot.lane.b32.xlu0 %v875, 96
    %v1146 = vpop.permute.xlu0 %1145
    %v1148 = vsel %vm149, %v1143, 0
    %v1151 = vsel %vm149, %v1146, 0
    %1153 = vmatprep.subr.bf16.mxu0 0
    %1154 = vmatpush1.bf16.xpose.msra.mxu0 0
    %1155 = vmatprep.subr.bf16.mxu0 0
    %1156 = vmatpush1.bf16.xpose.msra.mxu0 0
    %1157 = vmatprep.subr.bf16.mxu0 0
    %1158 = vmatpush1.bf16.xpose.msra.mxu0 0
    %1159 = vmatprep.subr.bf16.mxu0 0
    %1160 = vmatpush1.bf16.xpose.msra.mxu0 0
    %1161 = vmatprep.subr.bf16.mxu0 0
    %1162 = vmatpush1.bf16.xpose.msra.mxu0 0
    %1163 = vmatprep.subr.bf16.mxu0 0
    %1164 = vmatpush1.bf16.xpose.msra.mxu0 0
    %1165 = vmatprep.subr.bf16.mxu0 0
    %1166 = vmatpush1.bf16.xpose.msra.mxu0 0
    %1167 = vmatprep.subr.bf16.mxu0 0
    %1168 = vmatpush1.bf16.xpose.msra.mxu0 %v1151
    %1169 = vmatprep.subr.bf16.mxu0 0
    %1170 = vmatpush2.bf16.xpose.msra.mxu0 0
    %1171 = vmatprep.subr.bf16.mxu0 0
    %1172 = vmatpush2.bf16.xpose.msra.mxu0 0
    %1173 = vmatprep.subr.bf16.mxu0 0
    %1174 = vmatpush2.bf16.xpose.msra.mxu0 0
    %1175 = vmatprep.subr.bf16.mxu0 0
    %1176 = vmatpush2.bf16.xpose.msra.mxu0 0
    %1177 = vmatprep.subr.bf16.mxu0 0
    %1178 = vmatpush2.bf16.xpose.msra.mxu0 0
    %1179 = vmatprep.subr.bf16.mxu0 0
    %1180 = vmatpush2.bf16.xpose.msra.mxu0 0
    %1181 = vmatprep.subr.bf16.mxu0 0
    %1182 = vmatpush2.bf16.xpose.msra.mxu0 0
    %1183 = vmatprep.subr.bf16.mxu0 0
    %1184 = vmatpush2.bf16.xpose.msra.mxu0 0
    %1185 = vmatprep.mubr.bf16.mxu0 0
    %1186 = vmatmul.mubr.bf16.gmra.mxu0 %v1148
    %v1187 = vpop.f32.mrf.mxu0
    %v1188 = vadd.f32 0.0, %v1187
    %v1189 = vpop.f32.mrf.mxu0
    %v1190 = vpop.f32.mrf.mxu0
    %v1191 = vpop.f32.mrf.mxu0
    %1192 = vdwg.mxu0
    %v1193 = vsel %vm970, %v1136, -inf
    %1194 = vmax.xlane.f32.xlu0 %v1193
    %v1195 = vpop.xlane.xlu0 %1194
    %v1196 = vsel %vm970, %v1188, -inf
    %1197 = vmax.xlane.f32.xlu0 %v1196
    %v1198 = vpop.xlane.xlu0 %1197
    %v1199 = vsub.f32 %v1136, %v1195
    %v1200 = vsub.f32 %v1188, %v1198
    %v1201 = vmul.f32 %v1199, 1.442695
    %v1202 = vpow.pop %v1201
    %v1203 = vmul.f32 %v1200, 1.442695
    %v1204 = vpow.pop %v1203
    %v1205 = vsel %vm970, %v1202, 0.0
    %1206 = vadd.xlane.f32.xlu0 %v1205
    %v1207 = vpop.xlane.xlu0 %1206
    %v1208 = vsel %vm970, %v1204, 0.0
    %1209 = vadd.xlane.f32.xlu0 %v1208
    %v1210 = vpop.xlane.xlu0 %1209
    %v1211 = vrcp.pop %v1207
    %v1212 = vrcp.pop %v1210
    %v1213 = vmul.f32 %v1202, %v1211
    %v1214 = vmul.f32 %v1204, %v1212
    %v1215 = vpack.c.bf16 %v1213, %v1213
    %v1216 = vpack.c.bf16 %v1214, %v1214
    %1218 = vrot.lane.b32.xlu0 %v876, 96
    %v1219 = vpop.permute.xlu0 %1218
    %v1221 = vsel %vm970, %v1215, 0
    %v1224 = vsel %vm998, %v1219, 0
    %1226 = vmatprep.subr.bf16.mxu0 0
    %1227 = vmatpush1.bf16.msra.mxu0 0
    %1228 = vmatprep.subr.bf16.mxu0 0
    %1229 = vmatpush1.bf16.msra.mxu0 0
    %1230 = vmatprep.subr.bf16.mxu0 0
    %1231 = vmatpush1.bf16.msra.mxu0 0
    %1232 = vmatprep.subr.bf16.mxu0 0
    %1233 = vmatpush1.bf16.msra.mxu0 0
    %1234 = vmatprep.subr.bf16.mxu0 0
    %1235 = vmatpush1.bf16.msra.mxu0 0
    %1236 = vmatprep.subr.bf16.mxu0 0
    %1237 = vmatpush1.bf16.msra.mxu0 0
    %1238 = vmatprep.subr.bf16.mxu0 0
    %1239 = vmatpush1.bf16.msra.mxu0 0
    %1240 = vmatprep.subr.bf16.mxu0 0
    %1241 = vmatpush1.bf16.msra.mxu0 %v1224
    %1242 = vmatprep.subr.bf16.mxu0 0
    %1243 = vmatpush2.bf16.msra.mxu0 0
    %1244 = vmatprep.subr.bf16.mxu0 0
    %1245 = vmatpush2.bf16.msra.mxu0 0
    %1246 = vmatprep.subr.bf16.mxu0 0
    %1247 = vmatpush2.bf16.msra.mxu0 0
    %1248 = vmatprep.subr.bf16.mxu0 0
    %1249 = vmatpush2.bf16.msra.mxu0 0
    %1250 = vmatprep.subr.bf16.mxu0 0
    %1251 = vmatpush2.bf16.msra.mxu0 0
    %1252 = vmatprep.subr.bf16.mxu0 0
    %1253 = vmatpush2.bf16.msra.mxu0 0
    %1254 = vmatprep.subr.bf16.mxu0 0
    %1255 = vmatpush2.bf16.msra.mxu0 0
    %1256 = vmatprep.subr.bf16.mxu0 0
    %1257 = vmatpush2.bf16.msra.mxu0 0
    %1258 = vmatprep.mubr.bf16.mxu0 0
    %1259 = vmatmul.mubr.bf16.gmra.mxu0 %v1221
    %v1260 = vpop.f32.mrf.mxu0
    %v1261 = vadd.f32 0.0, %v1260
    %v1262 = vpop.f32.mrf.mxu0
    %v1263 = vpop.f32.mrf.mxu0
    %v1264 = vpop.f32.mrf.mxu0
    %1265 = vdwg.mxu0
    %1267 = vrot.lane.b32.xlu0 %v877, 96
    %v1268 = vpop.permute.xlu0 %1267
    %v1270 = vsel %vm970, %v1216, 0
    %v1273 = vsel %vm998, %v1268, 0
    %1275 = vmatprep.subr.bf16.mxu0 0
    %1276 = vmatpush1.bf16.msra.mxu0 0
    %1277 = vmatprep.subr.bf16.mxu0 0
    %1278 = vmatpush1.bf16.msra.mxu0 0
    %1279 = vmatprep.subr.bf16.mxu0 0
    %1280 = vmatpush1.bf16.msra.mxu0 0
    %1281 = vmatprep.subr.bf16.mxu0 0
    %1282 = vmatpush1.bf16.msra.mxu0 0
    %1283 = vmatprep.subr.bf16.mxu0 0
    %1284 = vmatpush1.bf16.msra.mxu0 0
    %1285 = vmatprep.subr.bf16.mxu0 0
    %1286 = vmatpush1.bf16.msra.mxu0 0
    %1287 = vmatprep.subr.bf16.mxu0 0
    %1288 = vmatpush1.bf16.msra.mxu0 0
    %1289 = vmatprep.subr.bf16.mxu0 0
    %1290 = vmatpush1.bf16.msra.mxu0 %v1273
    %1291 = vmatprep.subr.bf16.mxu0 0
    %1292 = vmatpush2.bf16.msra.mxu0 0
    %1293 = vmatprep.subr.bf16.mxu0 0
    %1294 = vmatpush2.bf16.msra.mxu0 0
    %1295 = vmatprep.subr.bf16.mxu0 0
    %1296 = vmatpush2.bf16.msra.mxu0 0
    %1297 = vmatprep.subr.bf16.mxu0 0
    %1298 = vmatpush2.bf16.msra.mxu0 0
    %1299 = vmatprep.subr.bf16.mxu0 0
    %1300 = vmatpush2.bf16.msra.mxu0 0
    %1301 = vmatprep.subr.bf16.mxu0 0
    %1302 = vmatpush2.bf16.msra.mxu0 0
    %1303 = vmatprep.subr.bf16.mxu0 0
    %1304 = vmatpush2.bf16.msra.mxu0 0
    %1305 = vmatprep.subr.bf16.mxu0 0
    %1306 = vmatpush2.bf16.msra.mxu0 0
    %1307 = vmatprep.mubr.bf16.mxu0 0
    %1308 = vmatmul.mubr.bf16.gmra.mxu0 %v1270
    %v1309 = vpop.f32.mrf.mxu0
    %v1310 = vadd.f32 0.0, %v1309
    %v1311 = vpop.f32.mrf.mxu0
    %v1312 = vpop.f32.mrf.mxu0
    %v1313 = vpop.f32.mrf.mxu0
    %1314 = vdwg.mxu0
    %v1315 = vpack.c.bf16 %v1310, %v1261
    %v1320 = vunpack.c.l.b16 %v860
    %v1321 = vunpack.c.l.b16 %v861
    %v1322 = vunpack.c.l.b16 %v862
    %v1323 = vunpack.c.l.b16 %v863
    %v1324 = vpack.c.b16 %v1321, %v1320
    %v1325 = vpack.c.b16 %v1323, %v1322
    %v1329 = vsel %vm149, %v1315, 0
    %1331 = vmatprep.subr.bf16.mxu0 0
    %1332 = vmatpush1.bf16.msra.mxu0 0
    %1333 = vmatprep.subr.bf16.mxu0 0
    %1334 = vmatpush1.bf16.msra.mxu0 0
    %1335 = vmatprep.subr.bf16.mxu0 0
    %1336 = vmatpush1.bf16.msra.mxu0 0
    %1337 = vmatprep.subr.bf16.mxu0 0
    %1338 = vmatpush1.bf16.msra.mxu0 0
    %1339 = vmatprep.subr.bf16.mxu0 0
    %1340 = vmatpush1.bf16.msra.mxu0 0
    %1341 = vmatprep.subr.bf16.mxu0 0
    %1342 = vmatpush1.bf16.msra.mxu0 0
    %1343 = vmatprep.subr.bf16.mxu0 0
    %1344 = vmatpush1.bf16.msra.mxu0 %v1325
    %1345 = vmatprep.subr.bf16.mxu0 0
    %1346 = vmatpush1.bf16.msra.mxu0 %v1324
    %1347 = vmatprep.subr.bf16.mxu0 0
    %1348 = vmatpush2.bf16.msra.mxu0 0
    %1349 = vmatprep.subr.bf16.mxu0 0
    %1350 = vmatpush2.bf16.msra.mxu0 0
    %1351 = vmatprep.subr.bf16.mxu0 0
    %1352 = vmatpush2.bf16.msra.mxu0 0
    %1353 = vmatprep.subr.bf16.mxu0 0
    %1354 = vmatpush2.bf16.msra.mxu0 0
    %1355 = vmatprep.subr.bf16.mxu0 0
    %1356 = vmatpush2.bf16.msra.mxu0 0
    %1357 = vmatprep.subr.bf16.mxu0 0
    %1358 = vmatpush2.bf16.msra.mxu0 0
    %1359 = vmatprep.subr.bf16.mxu0 0
    %1360 = vmatpush2.bf16.msra.mxu0 0
    %1361 = vmatprep.subr.bf16.mxu0 0
    %1362 = vmatpush2.bf16.msra.mxu0 0
    %1363 = vmatprep.mubr.bf16.mxu0 0
    %1364 = vmatmul.mubr.bf16.gmra.mxu0 %v1329
    %v1365 = vpop.f32.mrf.mxu0
    %v1366 = vadd.f32 0.0, %v1365
    %v1367 = vpop.f32.mrf.mxu0
    %v1368 = vpop.f32.mrf.mxu0
    %v1369 = vadd.f32 0.0, %v1368
    %v1370 = vpop.f32.mrf.mxu0
    %1371 = vdwg.mxu0
    %v1376 = vunpack.c.l.b16 %v856
    %v1377 = vunpack.c.l.b16 %v857
    %v1378 = vunpack.c.l.b16 %v858
    %v1379 = vunpack.c.l.b16 %v859
    %v1380 = vpack.c.b16 %v1377, %v1376
    %v1381 = vpack.c.b16 %v1379, %v1378
    %v1385 = vsel %vm149, %v1088, 0
    %1387 = vmatprep.subr.bf16.mxu0 0
    %1388 = vmatpush1.bf16.msra.mxu0 0
    %1389 = vmatprep.subr.bf16.mxu0 0
    %1390 = vmatpush1.bf16.msra.mxu0 0
    %1391 = vmatprep.subr.bf16.mxu0 0
    %1392 = vmatpush1.bf16.msra.mxu0 0
    %1393 = vmatprep.subr.bf16.mxu0 0
    %1394 = vmatpush1.bf16.msra.mxu0 0
    %1395 = vmatprep.subr.bf16.mxu0 0
    %1396 = vmatpush1.bf16.msra.mxu0 0
    %1397 = vmatprep.subr.bf16.mxu0 0
    %1398 = vmatpush1.bf16.msra.mxu0 0
    %1399 = vmatprep.subr.bf16.mxu0 0
    %1400 = vmatpush1.bf16.msra.mxu0 %v1381
    %1401 = vmatprep.subr.bf16.mxu0 0
    %1402 = vmatpush1.bf16.msra.mxu0 %v1380
    %1403 = vmatprep.subr.bf16.mxu0 0
    %1404 = vmatpush2.bf16.msra.mxu0 0
    %1405 = vmatprep.subr.bf16.mxu0 0
    %1406 = vmatpush2.bf16.msra.mxu0 0
    %1407 = vmatprep.subr.bf16.mxu0 0
    %1408 = vmatpush2.bf16.msra.mxu0 0
    %1409 = vmatprep.subr.bf16.mxu0 0
    %1410 = vmatpush2.bf16.msra.mxu0 0
    %1411 = vmatprep.subr.bf16.mxu0 0
    %1412 = vmatpush2.bf16.msra.mxu0 0
    %1413 = vmatprep.subr.bf16.mxu0 0
    %1414 = vmatpush2.bf16.msra.mxu0 0
    %1415 = vmatprep.subr.bf16.mxu0 0
    %1416 = vmatpush2.bf16.msra.mxu0 0
    %1417 = vmatprep.subr.bf16.mxu0 0
    %1418 = vmatpush2.bf16.msra.mxu0 0
    %1419 = vmatprep.mubr.bf16.mxu0 0
    %1420 = vmatmul.mubr.bf16.gmra.mxu0 %v1385
    %v1421 = vpop.f32.mrf.mxu0
    %v1422 = vadd.f32 %v1366, %v1421
    %v1423 = vpop.f32.mrf.mxu0
    %v1424 = vpop.f32.mrf.mxu0
    %v1425 = vadd.f32 %v1369, %v1424
    %v1426 = vpop.f32.mrf.mxu0
    %1427 = vdwg.mxu0
    %1428 = vrot.lane.b32.xlu0 %v872, 64
    %v1429 = vpop.permute.xlu0 %1428
    %1430 = vrot.lane.b32.xlu0 %v874, 64
    %v1431 = vpop.permute.xlu0 %1430
    %v1433 = vsel %vm149, %v1429, 0
    %v1436 = vsel %vm149, %v1431, 0
    %1438 = vmatprep.subr.bf16.mxu0 0
    %1439 = vmatpush1.bf16.xpose.msra.mxu0 0
    %1440 = vmatprep.subr.bf16.mxu0 0
    %1441 = vmatpush1.bf16.xpose.msra.mxu0 0
    %1442 = vmatprep.subr.bf16.mxu0 0
    %1443 = vmatpush1.bf16.xpose.msra.mxu0 0
    %1444 = vmatprep.subr.bf16.mxu0 0
    %1445 = vmatpush1.bf16.xpose.msra.mxu0 0
    %1446 = vmatprep.subr.bf16.mxu0 0
    %1447 = vmatpush1.bf16.xpose.msra.mxu0 0
    %1448 = vmatprep.subr.bf16.mxu0 0
    %1449 = vmatpush1.bf16.xpose.msra.mxu0 0
    %1450 = vmatprep.subr.bf16.mxu0 0
    %1451 = vmatpush1.bf16.xpose.msra.mxu0 0
    %1452 = vmatprep.subr.bf16.mxu0 0
    %1453 = vmatpush1.bf16.xpose.msra.mxu0 %v1436
    %1454 = vmatprep.subr.bf16.mxu0 0
    %1455 = vmatpush2.bf16.xpose.msra.mxu0 0
    %1456 = vmatprep.subr.bf16.mxu0 0
    %1457 = vmatpush2.bf16.xpose.msra.mxu0 0
    %1458 = vmatprep.subr.bf16.mxu0 0
    %1459 = vmatpush2.bf16.xpose.msra.mxu0 0
    %1460 = vmatprep.subr.bf16.mxu0 0
    %1461 = vmatpush2.bf16.xpose.msra.mxu0 0
    %1462 = vmatprep.subr.bf16.mxu0 0
    %1463 = vmatpush2.bf16.xpose.msra.mxu0 0
    %1464 = vmatprep.subr.bf16.mxu0 0
    %1465 = vmatpush2.bf16.xpose.msra.mxu0 0
    %1466 = vmatprep.subr.bf16.mxu0 0
    %1467 = vmatpush2.bf16.xpose.msra.mxu0 0
    %1468 = vmatprep.subr.bf16.mxu0 0
    %1469 = vmatpush2.bf16.xpose.msra.mxu0 0
    %1470 = vmatprep.mubr.bf16.mxu0 0
    %1471 = vmatmul.mubr.bf16.gmra.mxu0 %v1433
    %v1472 = vpop.f32.mrf.mxu0
    %v1473 = vadd.f32 0.0, %v1472
    %v1474 = vpop.f32.mrf.mxu0
    %v1475 = vpop.f32.mrf.mxu0
    %v1476 = vpop.f32.mrf.mxu0
    %1477 = vdwg.mxu0
    %1478 = vrot.lane.b32.xlu0 %v873, 64
    %v1479 = vpop.permute.xlu0 %1478
    %1480 = vrot.lane.b32.xlu0 %v875, 64
    %v1481 = vpop.permute.xlu0 %1480
    %v1483 = vsel %vm149, %v1479, 0
    %v1486 = vsel %vm149, %v1481, 0
    %1488 = vmatprep.subr.bf16.mxu0 0
    %1489 = vmatpush1.bf16.xpose.msra.mxu0 0
    %1490 = vmatprep.subr.bf16.mxu0 0
    %1491 = vmatpush1.bf16.xpose.msra.mxu0 0
    %1492 = vmatprep.subr.bf16.mxu0 0
    %1493 = vmatpush1.bf16.xpose.msra.mxu0 0
    %1494 = vmatprep.subr.bf16.mxu0 0
    %1495 = vmatpush1.bf16.xpose.msra.mxu0 0
    %1496 = vmatprep.subr.bf16.mxu0 0
    %1497 = vmatpush1.bf16.xpose.msra.mxu0 0
    %1498 = vmatprep.subr.bf16.mxu0 0
    %1499 = vmatpush1.bf16.xpose.msra.mxu0 0
    %1500 = vmatprep.subr.bf16.mxu0 0
    %1501 = vmatpush1.bf16.xpose.msra.mxu0 0
    %1502 = vmatprep.subr.bf16.mxu0 0
    %1503 = vmatpush1.bf16.xpose.msra.mxu0 %v1486
    %1504 = vmatprep.subr.bf16.mxu0 0
    %1505 = vmatpush2.bf16.xpose.msra.mxu0 0
    %1506 = vmatprep.subr.bf16.mxu0 0
    %1507 = vmatpush2.bf16.xpose.msra.mxu0 0
    %1508 = vmatprep.subr.bf16.mxu0 0
    %1509 = vmatpush2.bf16.xpose.msra.mxu0 0
    %1510 = vmatprep.subr.bf16.mxu0 0
    %1511 = vmatpush2.bf16.xpose.msra.mxu0 0
    %1512 = vmatprep.subr.bf16.mxu0 0
    %1513 = vmatpush2.bf16.xpose.msra.mxu0 0
    %1514 = vmatprep.subr.bf16.mxu0 0
    %1515 = vmatpush2.bf16.xpose.msra.mxu0 0
    %1516 = vmatprep.subr.bf16.mxu0 0
    %1517 = vmatpush2.bf16.xpose.msra.mxu0 0
    %1518 = vmatprep.subr.bf16.mxu0 0
    %1519 = vmatpush2.bf16.xpose.msra.mxu0 0
    %1520 = vmatprep.mubr.bf16.mxu0 0
    %1521 = vmatmul.mubr.bf16.gmra.mxu0 %v1483
    %v1522 = vpop.f32.mrf.mxu0
    %v1523 = vadd.f32 0.0, %v1522
    %v1524 = vpop.f32.mrf.mxu0
    %v1525 = vpop.f32.mrf.mxu0
    %v1526 = vpop.f32.mrf.mxu0
    %1527 = vdwg.mxu0
    %v1528 = vsel %vm970, %v1473, -inf
    %1529 = vmax.xlane.f32.xlu0 %v1528
    %v1530 = vpop.xlane.xlu0 %1529
    %v1531 = vsel %vm970, %v1523, -inf
    %1532 = vmax.xlane.f32.xlu0 %v1531
    %v1533 = vpop.xlane.xlu0 %1532
    %v1534 = vsub.f32 %v1473, %v1530
    %v1535 = vsub.f32 %v1523, %v1533
    %v1536 = vmul.f32 %v1534, 1.442695
    %v1537 = vpow.pop %v1536
    %v1538 = vmul.f32 %v1535, 1.442695
    %v1539 = vpow.pop %v1538
    %v1540 = vsel %vm970, %v1537, 0.0
    %1541 = vadd.xlane.f32.xlu0 %v1540
    %v1542 = vpop.xlane.xlu0 %1541
    %v1543 = vsel %vm970, %v1539, 0.0
    %1544 = vadd.xlane.f32.xlu0 %v1543
    %v1545 = vpop.xlane.xlu0 %1544
    %v1546 = vrcp.pop %v1542
    %v1547 = vrcp.pop %v1545
    %v1548 = vmul.f32 %v1537, %v1546
    %v1549 = vmul.f32 %v1539, %v1547
    %v1550 = vpack.c.bf16 %v1548, %v1548
    %v1551 = vpack.c.bf16 %v1549, %v1549
    %1552 = vrot.lane.b32.xlu0 %v876, 64
    %v1553 = vpop.permute.xlu0 %1552
    %v1555 = vsel %vm970, %v1550, 0
    %v1558 = vsel %vm998, %v1553, 0
    %1560 = vmatprep.subr.bf16.mxu0 0
    %1561 = vmatpush1.bf16.msra.mxu0 0
    %1562 = vmatprep.subr.bf16.mxu0 0
    %1563 = vmatpush1.bf16.msra.mxu0 0
    %1564 = vmatprep.subr.bf16.mxu0 0
    %1565 = vmatpush1.bf16.msra.mxu0 0
    %1566 = vmatprep.subr.bf16.mxu0 0
    %1567 = vmatpush1.bf16.msra.mxu0 0
    %1568 = vmatprep.subr.bf16.mxu0 0
    %1569 = vmatpush1.bf16.msra.mxu0 0
    %1570 = vmatprep.subr.bf16.mxu0 0
    %1571 = vmatpush1.bf16.msra.mxu0 0
    %1572 = vmatprep.subr.bf16.mxu0 0
    %1573 = vmatpush1.bf16.msra.mxu0 0
    %1574 = vmatprep.subr.bf16.mxu0 0
    %1575 = vmatpush1.bf16.msra.mxu0 %v1558
    %1576 = vmatprep.subr.bf16.mxu0 0
    %1577 = vmatpush2.bf16.msra.mxu0 0
    %1578 = vmatprep.subr.bf16.mxu0 0
    %1579 = vmatpush2.bf16.msra.mxu0 0
    %1580 = vmatprep.subr.bf16.mxu0 0
    %1581 = vmatpush2.bf16.msra.mxu0 0
    %1582 = vmatprep.subr.bf16.mxu0 0
    %1583 = vmatpush2.bf16.msra.mxu0 0
    %1584 = vmatprep.subr.bf16.mxu0 0
    %1585 = vmatpush2.bf16.msra.mxu0 0
    %1586 = vmatprep.subr.bf16.mxu0 0
    %1587 = vmatpush2.bf16.msra.mxu0 0
    %1588 = vmatprep.subr.bf16.mxu0 0
    %1589 = vmatpush2.bf16.msra.mxu0 0
    %1590 = vmatprep.subr.bf16.mxu0 0
    %1591 = vmatpush2.bf16.msra.mxu0 0
    %1592 = vmatprep.mubr.bf16.mxu0 0
    %1593 = vmatmul.mubr.bf16.gmra.mxu0 %v1555
    %v1594 = vpop.f32.mrf.mxu0
    %v1595 = vadd.f32 0.0, %v1594
    %v1596 = vpop.f32.mrf.mxu0
    %v1597 = vpop.f32.mrf.mxu0
    %v1598 = vpop.f32.mrf.mxu0
    %1599 = vdwg.mxu0
    %1600 = vrot.lane.b32.xlu0 %v877, 64
    %v1601 = vpop.permute.xlu0 %1600
    %v1603 = vsel %vm970, %v1551, 0
    %v1606 = vsel %vm998, %v1601, 0
    %1608 = vmatprep.subr.bf16.mxu0 0
    %1609 = vmatpush1.bf16.msra.mxu0 0
    %1610 = vmatprep.subr.bf16.mxu0 0
    %1611 = vmatpush1.bf16.msra.mxu0 0
    %1612 = vmatprep.subr.bf16.mxu0 0
    %1613 = vmatpush1.bf16.msra.mxu0 0
    %1614 = vmatprep.subr.bf16.mxu0 0
    %1615 = vmatpush1.bf16.msra.mxu0 0
    %1616 = vmatprep.subr.bf16.mxu0 0
    %1617 = vmatpush1.bf16.msra.mxu0 0
    %1618 = vmatprep.subr.bf16.mxu0 0
    %1619 = vmatpush1.bf16.msra.mxu0 0
    %1620 = vmatprep.subr.bf16.mxu0 0
    %1621 = vmatpush1.bf16.msra.mxu0 0
    %1622 = vmatprep.subr.bf16.mxu0 0
    %1623 = vmatpush1.bf16.msra.mxu0 %v1606
    %1624 = vmatprep.subr.bf16.mxu0 0
    %1625 = vmatpush2.bf16.msra.mxu0 0
    %1626 = vmatprep.subr.bf16.mxu0 0
    %1627 = vmatpush2.bf16.msra.mxu0 0
    %1628 = vmatprep.subr.bf16.mxu0 0
    %1629 = vmatpush2.bf16.msra.mxu0 0
    %1630 = vmatprep.subr.bf16.mxu0 0
    %1631 = vmatpush2.bf16.msra.mxu0 0
    %1632 = vmatprep.subr.bf16.mxu0 0
    %1633 = vmatpush2.bf16.msra.mxu0 0
    %1634 = vmatprep.subr.bf16.mxu0 0
    %1635 = vmatpush2.bf16.msra.mxu0 0
    %1636 = vmatprep.subr.bf16.mxu0 0
    %1637 = vmatpush2.bf16.msra.mxu0 0
    %1638 = vmatprep.subr.bf16.mxu0 0
    %1639 = vmatpush2.bf16.msra.mxu0 0
    %1640 = vmatprep.mubr.bf16.mxu0 0
    %1641 = vmatmul.mubr.bf16.gmra.mxu0 %v1603
    %v1642 = vpop.f32.mrf.mxu0
    %v1643 = vadd.f32 0.0, %v1642
    %v1644 = vpop.f32.mrf.mxu0
    %v1645 = vpop.f32.mrf.mxu0
    %v1646 = vpop.f32.mrf.mxu0
    %1647 = vdwg.mxu0
    %v1648 = vpack.c.bf16 %v1643, %v1595
    %v1653 = vunpack.c.l.b16 %v864
    %v1654 = vunpack.c.l.b16 %v865
    %v1655 = vunpack.c.l.b16 %v866
    %v1656 = vunpack.c.l.b16 %v867
    %v1657 = vpack.c.b16 %v1654, %v1653
    %v1658 = vpack.c.b16 %v1656, %v1655
    %v1662 = vsel %vm149, %v1648, 0
    %1664 = vmatprep.subr.bf16.mxu0 0
    %1665 = vmatpush1.bf16.msra.mxu0 0
    %1666 = vmatprep.subr.bf16.mxu0 0
    %1667 = vmatpush1.bf16.msra.mxu0 0
    %1668 = vmatprep.subr.bf16.mxu0 0
    %1669 = vmatpush1.bf16.msra.mxu0 0
    %1670 = vmatprep.subr.bf16.mxu0 0
    %1671 = vmatpush1.bf16.msra.mxu0 0
    %1672 = vmatprep.subr.bf16.mxu0 0
    %1673 = vmatpush1.bf16.msra.mxu0 0
    %1674 = vmatprep.subr.bf16.mxu0 0
    %1675 = vmatpush1.bf16.msra.mxu0 0
    %1676 = vmatprep.subr.bf16.mxu0 0
    %1677 = vmatpush1.bf16.msra.mxu0 %v1658
    %1678 = vmatprep.subr.bf16.mxu0 0
    %1679 = vmatpush1.bf16.msra.mxu0 %v1657
    %1680 = vmatprep.subr.bf16.mxu0 0
    %1681 = vmatpush2.bf16.msra.mxu0 0
    %1682 = vmatprep.subr.bf16.mxu0 0
    %1683 = vmatpush2.bf16.msra.mxu0 0
    %1684 = vmatprep.subr.bf16.mxu0 0
    %1685 = vmatpush2.bf16.msra.mxu0 0
    %1686 = vmatprep.subr.bf16.mxu0 0
    %1687 = vmatpush2.bf16.msra.mxu0 0
    %1688 = vmatprep.subr.bf16.mxu0 0
    %1689 = vmatpush2.bf16.msra.mxu0 0
    %1690 = vmatprep.subr.bf16.mxu0 0
    %1691 = vmatpush2.bf16.msra.mxu0 0
    %1692 = vmatprep.subr.bf16.mxu0 0
    %1693 = vmatpush2.bf16.msra.mxu0 0
    %1694 = vmatprep.subr.bf16.mxu0 0
    %1695 = vmatpush2.bf16.msra.mxu0 0
    %1696 = vmatprep.mubr.bf16.mxu0 0
    %1697 = vmatmul.mubr.bf16.gmra.mxu0 %v1662
    %v1698 = vpop.f32.mrf.mxu0
    %v1699 = vadd.f32 0.0, %v1698
    %v1700 = vpop.f32.mrf.mxu0
    %v1701 = vpop.f32.mrf.mxu0
    %v1702 = vadd.f32 0.0, %v1701
    %v1703 = vpop.f32.mrf.mxu0
    %1704 = vdwg.mxu0
    %v1705 = vadd.f32 %v1422, %v1699
    %v1706 = vadd.f32 %v1425, %v1702
    %1707 = vrot.lane.b32.xlu0 %v872, 32
    %v1708 = vpop.permute.xlu0 %1707
    %1709 = vrot.lane.b32.xlu0 %v874, 32
    %v1710 = vpop.permute.xlu0 %1709
    %v1712 = vsel %vm149, %v1708, 0
    %v1715 = vsel %vm149, %v1710, 0
    %1717 = vmatprep.subr.bf16.mxu0 0
    %1718 = vmatpush1.bf16.xpose.msra.mxu0 0
    %1719 = vmatprep.subr.bf16.mxu0 0
    %1720 = vmatpush1.bf16.xpose.msra.mxu0 0
    %1721 = vmatprep.subr.bf16.mxu0 0
    %1722 = vmatpush1.bf16.xpose.msra.mxu0 0
    %1723 = vmatprep.subr.bf16.mxu0 0
    %1724 = vmatpush1.bf16.xpose.msra.mxu0 0
    %1725 = vmatprep.subr.bf16.mxu0 0
    %1726 = vmatpush1.bf16.xpose.msra.mxu0 0
    %1727 = vmatprep.subr.bf16.mxu0 0
    %1728 = vmatpush1.bf16.xpose.msra.mxu0 0
    %1729 = vmatprep.subr.bf16.mxu0 0
    %1730 = vmatpush1.bf16.xpose.msra.mxu0 0
    %1731 = vmatprep.subr.bf16.mxu0 0
    %1732 = vmatpush1.bf16.xpose.msra.mxu0 %v1715
    %1733 = vmatprep.subr.bf16.mxu0 0
    %1734 = vmatpush2.bf16.xpose.msra.mxu0 0
    %1735 = vmatprep.subr.bf16.mxu0 0
    %1736 = vmatpush2.bf16.xpose.msra.mxu0 0
    %1737 = vmatprep.subr.bf16.mxu0 0
    %1738 = vmatpush2.bf16.xpose.msra.mxu0 0
    %1739 = vmatprep.subr.bf16.mxu0 0
    %1740 = vmatpush2.bf16.xpose.msra.mxu0 0
    %1741 = vmatprep.subr.bf16.mxu0 0
    %1742 = vmatpush2.bf16.xpose.msra.mxu0 0
    %1743 = vmatprep.subr.bf16.mxu0 0
    %1744 = vmatpush2.bf16.xpose.msra.mxu0 0
    %1745 = vmatprep.subr.bf16.mxu0 0
    %1746 = vmatpush2.bf16.xpose.msra.mxu0 0
    %1747 = vmatprep.subr.bf16.mxu0 0
    %1748 = vmatpush2.bf16.xpose.msra.mxu0 0
    %1749 = vmatprep.mubr.bf16.mxu0 0
    %1750 = vmatmul.mubr.bf16.gmra.mxu0 %v1712
    %v1751 = vpop.f32.mrf.mxu0
    %v1752 = vadd.f32 0.0, %v1751
    %v1753 = vpop.f32.mrf.mxu0
    %v1754 = vpop.f32.mrf.mxu0
    %v1755 = vpop.f32.mrf.mxu0
    %1756 = vdwg.mxu0
    %1757 = vrot.lane.b32.xlu0 %v873, 32
    %v1758 = vpop.permute.xlu0 %1757
    %1759 = vrot.lane.b32.xlu0 %v875, 32
    %v1760 = vpop.permute.xlu0 %1759
    %v1762 = vsel %vm149, %v1758, 0
    %v1765 = vsel %vm149, %v1760, 0
    %1767 = vmatprep.subr.bf16.mxu0 0
    %1768 = vmatpush1.bf16.xpose.msra.mxu0 0
    %1769 = vmatprep.subr.bf16.mxu0 0
    %1770 = vmatpush1.bf16.xpose.msra.mxu0 0
    %1771 = vmatprep.subr.bf16.mxu0 0
    %1772 = vmatpush1.bf16.xpose.msra.mxu0 0
    %1773 = vmatprep.subr.bf16.mxu0 0
    %1774 = vmatpush1.bf16.xpose.msra.mxu0 0
    %1775 = vmatprep.subr.bf16.mxu0 0
    %1776 = vmatpush1.bf16.xpose.msra.mxu0 0
    %1777 = vmatprep.subr.bf16.mxu0 0
    %1778 = vmatpush1.bf16.xpose.msra.mxu0 0
    %1779 = vmatprep.subr.bf16.mxu0 0
    %1780 = vmatpush1.bf16.xpose.msra.mxu0 0
    %1781 = vmatprep.subr.bf16.mxu0 0
    %1782 = vmatpush1.bf16.xpose.msra.mxu0 %v1765
    %1783 = vmatprep.subr.bf16.mxu0 0
    %1784 = vmatpush2.bf16.xpose.msra.mxu0 0
    %1785 = vmatprep.subr.bf16.mxu0 0
    %1786 = vmatpush2.bf16.xpose.msra.mxu0 0
    %1787 = vmatprep.subr.bf16.mxu0 0
    %1788 = vmatpush2.bf16.xpose.msra.mxu0 0
    %1789 = vmatprep.subr.bf16.mxu0 0
    %1790 = vmatpush2.bf16.xpose.msra.mxu0 0
    %1791 = vmatprep.subr.bf16.mxu0 0
    %1792 = vmatpush2.bf16.xpose.msra.mxu0 0
    %1793 = vmatprep.subr.bf16.mxu0 0
    %1794 = vmatpush2.bf16.xpose.msra.mxu0 0
    %1795 = vmatprep.subr.bf16.mxu0 0
    %1796 = vmatpush2.bf16.xpose.msra.mxu0 0
    %1797 = vmatprep.subr.bf16.mxu0 0
    %1798 = vmatpush2.bf16.xpose.msra.mxu0 0
    %1799 = vmatprep.mubr.bf16.mxu0 0
    %1800 = vmatmul.mubr.bf16.gmra.mxu0 %v1762
    %v1801 = vpop.f32.mrf.mxu0
    %v1802 = vadd.f32 0.0, %v1801
    %v1803 = vpop.f32.mrf.mxu0
    %v1804 = vpop.f32.mrf.mxu0
    %v1805 = vpop.f32.mrf.mxu0
    %1806 = vdwg.mxu0
    %v1807 = vsel %vm970, %v1752, -inf
    %1808 = vmax.xlane.f32.xlu0 %v1807
    %v1809 = vpop.xlane.xlu0 %1808
    %v1810 = vsel %vm970, %v1802, -inf
    %1811 = vmax.xlane.f32.xlu0 %v1810
    %v1812 = vpop.xlane.xlu0 %1811
    %v1813 = vsub.f32 %v1752, %v1809
    %v1814 = vsub.f32 %v1802, %v1812
    %v1815 = vmul.f32 %v1813, 1.442695
    %v1816 = vpow.pop %v1815
    %v1817 = vmul.f32 %v1814, 1.442695
    %v1818 = vpow.pop %v1817
    %v1819 = vsel %vm970, %v1816, 0.0
    %1820 = vadd.xlane.f32.xlu0 %v1819
    %v1821 = vpop.xlane.xlu0 %1820
    %v1822 = vsel %vm970, %v1818, 0.0
    %1823 = vadd.xlane.f32.xlu0 %v1822
    %v1824 = vpop.xlane.xlu0 %1823
    %v1825 = vrcp.pop %v1821
    %v1826 = vrcp.pop %v1824
    %v1827 = vmul.f32 %v1816, %v1825
    %v1828 = vmul.f32 %v1818, %v1826
    %v1829 = vpack.c.bf16 %v1827, %v1827
    %v1830 = vpack.c.bf16 %v1828, %v1828
    %1831 = vrot.lane.b32.xlu0 %v876, 32
    %v1832 = vpop.permute.xlu0 %1831
    %v1834 = vsel %vm970, %v1829, 0
    %v1837 = vsel %vm998, %v1832, 0
    %1839 = vmatprep.subr.bf16.mxu0 0
    %1840 = vmatpush1.bf16.msra.mxu0 0
    %1841 = vmatprep.subr.bf16.mxu0 0
    %1842 = vmatpush1.bf16.msra.mxu0 0
    %1843 = vmatprep.subr.bf16.mxu0 0
    %1844 = vmatpush1.bf16.msra.mxu0 0
    %1845 = vmatprep.subr.bf16.mxu0 0
    %1846 = vmatpush1.bf16.msra.mxu0 0
    %1847 = vmatprep.subr.bf16.mxu0 0
    %1848 = vmatpush1.bf16.msra.mxu0 0
    %1849 = vmatprep.subr.bf16.mxu0 0
    %1850 = vmatpush1.bf16.msra.mxu0 0
    %1851 = vmatprep.subr.bf16.mxu0 0
    %1852 = vmatpush1.bf16.msra.mxu0 0
    %1853 = vmatprep.subr.bf16.mxu0 0
    %1854 = vmatpush1.bf16.msra.mxu0 %v1837
    %1855 = vmatprep.subr.bf16.mxu0 0
    %1856 = vmatpush2.bf16.msra.mxu0 0
    %1857 = vmatprep.subr.bf16.mxu0 0
    %1858 = vmatpush2.bf16.msra.mxu0 0
    %1859 = vmatprep.subr.bf16.mxu0 0
    %1860 = vmatpush2.bf16.msra.mxu0 0
    %1861 = vmatprep.subr.bf16.mxu0 0
    %1862 = vmatpush2.bf16.msra.mxu0 0
    %1863 = vmatprep.subr.bf16.mxu0 0
    %1864 = vmatpush2.bf16.msra.mxu0 0
    %1865 = vmatprep.subr.bf16.mxu0 0
    %1866 = vmatpush2.bf16.msra.mxu0 0
    %1867 = vmatprep.subr.bf16.mxu0 0
    %1868 = vmatpush2.bf16.msra.mxu0 0
    %1869 = vmatprep.subr.bf16.mxu0 0
    %1870 = vmatpush2.bf16.msra.mxu0 0
    %1871 = vmatprep.mubr.bf16.mxu0 0
    %1872 = vmatmul.mubr.bf16.gmra.mxu0 %v1834
    %v1873 = vpop.f32.mrf.mxu0
    %v1874 = vadd.f32 0.0, %v1873
    %v1875 = vpop.f32.mrf.mxu0
    %v1876 = vpop.f32.mrf.mxu0
    %v1877 = vpop.f32.mrf.mxu0
    %1878 = vdwg.mxu0
    %1879 = vrot.lane.b32.xlu0 %v877, 32
    %v1880 = vpop.permute.xlu0 %1879
    %v1882 = vsel %vm970, %v1830, 0
    %v1885 = vsel %vm998, %v1880, 0
    %1887 = vmatprep.subr.bf16.mxu0 0
    %1888 = vmatpush1.bf16.msra.mxu0 0
    %1889 = vmatprep.subr.bf16.mxu0 0
    %1890 = vmatpush1.bf16.msra.mxu0 0
    %1891 = vmatprep.subr.bf16.mxu0 0
    %1892 = vmatpush1.bf16.msra.mxu0 0
    %1893 = vmatprep.subr.bf16.mxu0 0
    %1894 = vmatpush1.bf16.msra.mxu0 0
    %1895 = vmatprep.subr.bf16.mxu0 0
    %1896 = vmatpush1.bf16.msra.mxu0 0
    %1897 = vmatprep.subr.bf16.mxu0 0
    %1898 = vmatpush1.bf16.msra.mxu0 0
    %1899 = vmatprep.subr.bf16.mxu0 0
    %1900 = vmatpush1.bf16.msra.mxu0 0
    %1901 = vmatprep.subr.bf16.mxu0 0
    %1902 = vmatpush1.bf16.msra.mxu0 %v1885
    %1903 = vmatprep.subr.bf16.mxu0 0
    %1904 = vmatpush2.bf16.msra.mxu0 0
    %1905 = vmatprep.subr.bf16.mxu0 0
    %1906 = vmatpush2.bf16.msra.mxu0 0
    %1907 = vmatprep.subr.bf16.mxu0 0
    %1908 = vmatpush2.bf16.msra.mxu0 0
    %1909 = vmatprep.subr.bf16.mxu0 0
    %1910 = vmatpush2.bf16.msra.mxu0 0
    %1911 = vmatprep.subr.bf16.mxu0 0
    %1912 = vmatpush2.bf16.msra.mxu0 0
    %1913 = vmatprep.subr.bf16.mxu0 0
    %1914 = vmatpush2.bf16.msra.mxu0 0
    %1915 = vmatprep.subr.bf16.mxu0 0
    %1916 = vmatpush2.bf16.msra.mxu0 0
    %1917 = vmatprep.subr.bf16.mxu0 0
    %1918 = vmatpush2.bf16.msra.mxu0 0
    %1919 = vmatprep.mubr.bf16.mxu0 0
    %1920 = vmatmul.mubr.bf16.gmra.mxu0 %v1882
    %v1921 = vpop.f32.mrf.mxu0
    %v1922 = vadd.f32 0.0, %v1921
    %v1923 = vpop.f32.mrf.mxu0
    %v1924 = vpop.f32.mrf.mxu0
    %v1925 = vpop.f32.mrf.mxu0
    %1926 = vdwg.mxu0
    %v1927 = vpack.c.bf16 %v1922, %v1874
    %v1932 = vunpack.c.l.b16 %v868
    %v1933 = vunpack.c.l.b16 %v869
    %v1934 = vunpack.c.l.b16 %v870
    %v1935 = vunpack.c.l.b16 %v871
    %v1936 = vpack.c.b16 %v1933, %v1932
    %v1937 = vpack.c.b16 %v1935, %v1934
    %v1941 = vsel %vm149, %v1927, 0
    %1943 = vmatprep.subr.bf16.mxu0 0
    %1944 = vmatpush1.bf16.msra.mxu0 0
    %1945 = vmatprep.subr.bf16.mxu0 0
    %1946 = vmatpush1.bf16.msra.mxu0 0
    %1947 = vmatprep.subr.bf16.mxu0 0
    %1948 = vmatpush1.bf16.msra.mxu0 0
    %1949 = vmatprep.subr.bf16.mxu0 0
    %1950 = vmatpush1.bf16.msra.mxu0 0
    %1951 = vmatprep.subr.bf16.mxu0 0
    %1952 = vmatpush1.bf16.msra.mxu0 0
    %1953 = vmatprep.subr.bf16.mxu0 0
    %1954 = vmatpush1.bf16.msra.mxu0 0
    %1955 = vmatprep.subr.bf16.mxu0 0
    %1956 = vmatpush1.bf16.msra.mxu0 %v1937
    %1957 = vmatprep.subr.bf16.mxu0 0
    %1958 = vmatpush1.bf16.msra.mxu0 %v1936
    %1959 = vmatprep.subr.bf16.mxu0 0
    %1960 = vmatpush2.bf16.msra.mxu0 0
    %1961 = vmatprep.subr.bf16.mxu0 0
    %1962 = vmatpush2.bf16.msra.mxu0 0
    %1963 = vmatprep.subr.bf16.mxu0 0
    %1964 = vmatpush2.bf16.msra.mxu0 0
    %1965 = vmatprep.subr.bf16.mxu0 0
    %1966 = vmatpush2.bf16.msra.mxu0 0
    %1967 = vmatprep.subr.bf16.mxu0 0
    %1968 = vmatpush2.bf16.msra.mxu0 0
    %1969 = vmatprep.subr.bf16.mxu0 0
    %1970 = vmatpush2.bf16.msra.mxu0 0
    %1971 = vmatprep.subr.bf16.mxu0 0
    %1972 = vmatpush2.bf16.msra.mxu0 0
    %1973 = vmatprep.subr.bf16.mxu0 0
    %1974 = vmatpush2.bf16.msra.mxu0 0
    %1975 = vmatprep.mubr.bf16.mxu0 0
    %1976 = vmatmul.mubr.bf16.gmra.mxu0 %v1941
    %v1977 = vpop.f32.mrf.mxu0
    %v1978 = vadd.f32 0.0, %v1977
    %v1979 = vpop.f32.mrf.mxu0
    %v1980 = vpop.f32.mrf.mxu0
    %v1981 = vadd.f32 0.0, %v1980
    %v1982 = vpop.f32.mrf.mxu0
    %1983 = vdwg.mxu0
    %v1984 = vadd.f32 %v1705, %v1978
    %v1985 = vadd.f32 %v1706, %v1981
    %v1986 = vlaneseq
    %v1987 = vshrl.u32 %v1986, 7
    %v1988 = vsub.s32 0, %v1987
    %v1989 = vrot.slane %v593, %v1988
    %v1990 = vadd.f32 %v1984, %v1989
    %v1991 = vadd.f32 %v1985, %v1989
    %v1992 = vadd.f32 %v591, %v1990
    %v1993 = vadd.f32 %v592, %v1991
    %1994 = vadd.xlane.f32.xlu0 %v1992
    %v1995 = vpop.xlane.xlu0 %1994
    %1996 = vadd.xlane.f32.xlu0 %v1993
    %v1997 = vpop.xlane.xlu0 %1996
    %v1998 = vrcp.pop 128.0
    %v1999 = vmul.f32 %v1995, %v1998
    %v2000 = vmul.f32 %v1997, %v1998
    %v2001 = vsub.f32 %v1992, %v1999
    %v2002 = vsub.f32 %v1993, %v2000
    %v2003 = vmul.f32 %v2001, %v2001
    %v2004 = vmul.f32 %v2002, %v2002
    %2005 = vadd.xlane.f32.xlu0 %v2003
    %v2006 = vpop.xlane.xlu0 %2005
    %2007 = vadd.xlane.f32.xlu0 %v2004
    %v2008 = vpop.xlane.xlu0 %2007
    %v2009 = vmul.f32 %v2006, %v1998
    %v2010 = vmul.f32 %v2008, %v1998
    %v2011 = vadd.f32 %v2009, 1e-05
    %v2012 = vadd.f32 %v2010, 1e-05
    %v2013 = vrsqrt.pop %v2011
    %v2014 = vrsqrt.pop %v2012
    %v2015 = vmul.f32 %v2001, %v2013
    %v2016 = vmul.f32 %v2002, %v2014
    %v2017 = vlaneseq
    %v2018 = vshrl.u32 %v2017, 7
    %v2019 = vsub.s32 1, %v2018
    %v2020 = vrot.slane %v593, %v2019
    %v2021 = vmul.f32 %v2015, %v2020
    %v2022 = vmul.f32 %v2016, %v2020
    %v2023 = vlaneseq
    %v2024 = vshrl.u32 %v2023, 7
    %v2025 = vsub.s32 2, %v2024
    %v2026 = vrot.slane %v593, %v2025
    %v2027 = vadd.f32 %v2021, %v2026
    %v2028 = vadd.f32 %v2022, %v2026
    %v2029 = vpack.c.bf16 %v2028, %v2027
    %v2030 = vld [vmem:[#allocation7] sm:$0xff]
    %v2031 = vld [vmem:[#allocation7 + $0x8] sm:$0xff]
    %v2032 = vld [vmem:[#allocation7 + $0x10] sm:$0xff]
    %v2033 = vld [vmem:[#allocation7 + $0x18] sm:$0xff]
    %v2034 = vld [vmem:[#allocation7 + $0x20] sm:$0xff]
    %v2035 = vld [vmem:[#allocation7 + $0x28] sm:$0xff]
    %v2036 = vld [vmem:[#allocation7 + $0x30] sm:$0xff]
    %v2037 = vld [vmem:[#allocation7 + $0x38] sm:$0xff]
    %v2038 = vld [vmem:[#allocation7 + $0x40] sm:$0xff]
    %v2039 = vld [vmem:[#allocation7 + $0x48] sm:$0xff]
    %v2040 = vld [vmem:[#allocation7 + $0x50] sm:$0xff]
    %v2041 = vld [vmem:[#allocation7 + $0x58] sm:$0xff]
    %v2042 = vld [vmem:[#allocation7 + $0x60] sm:$0xff]
    %v2043 = vld [vmem:[#allocation7 + $0x68] sm:$0xff]
    %v2044 = vld [vmem:[#allocation7 + $0x70] sm:$0xff]
    %v2045 = vld [vmem:[#allocation7 + $0x78] sm:$0xff]
    %v2046 = vld [vmem:[#allocation8] sm:$0x3]
    %v2048 = vlaneseq
    %v2049 = vshrl.u32 %v2048, 7
    %v2050 = vsub.s32 0, %v2049
    %v2051 = vrot.slane %v2046, %v2050
    %v2052 = vlaneseq
    %v2053 = vshrl.u32 %v2052, 7
    %v2054 = vsub.s32 1, %v2053
    %v2055 = vrot.slane %v2046, %v2054
    %v2074 = vunpack.c.l.b16 %v2030
    %v2075 = vunpack.c.h.b16 %v2030
    %v2076 = vunpack.c.l.b16 %v2031
    %v2077 = vunpack.c.h.b16 %v2031
    %v2078 = vunpack.c.l.b16 %v2032
    %v2079 = vunpack.c.h.b16 %v2032
    %v2080 = vunpack.c.l.b16 %v2033
    %v2081 = vunpack.c.h.b16 %v2033
    %v2082 = vunpack.c.l.b16 %v2034
    %v2083 = vunpack.c.h.b16 %v2034
    %v2084 = vunpack.c.l.b16 %v2035
    %v2085 = vunpack.c.h.b16 %v2035
    %v2086 = vunpack.c.l.b16 %v2036
    %v2087 = vunpack.c.h.b16 %v2036
    %v2088 = vunpack.c.l.b16 %v2037
    %v2089 = vunpack.c.h.b16 %v2037
    %v2090 = vunpack.c.l.b16 %v2038
    %v2091 = vunpack.c.h.b16 %v2038
    %v2092 = vunpack.c.l.b16 %v2039
    %v2093 = vunpack.c.h.b16 %v2039
    %v2094 = vunpack.c.l.b16 %v2040
    %v2095 = vunpack.c.h.b16 %v2040
    %v2096 = vunpack.c.l.b16 %v2041
    %v2097 = vunpack.c.h.b16 %v2041
    %v2098 = vunpack.c.l.b16 %v2042
    %v2099 = vunpack.c.h.b16 %v2042
    %v2100 = vunpack.c.l.b16 %v2043
    %v2101 = vunpack.c.h.b16 %v2043
    %v2102 = vunpack.c.l.b16 %v2044
    %v2103 = vunpack.c.h.b16 %v2044
    %v2104 = vunpack.c.l.b16 %v2045
    %v2105 = vunpack.c.h.b16 %v2045
    %v2106 = vpack.c.b16 %v2076, %v2074
    %v2107 = vpack.c.b16 %v2077, %v2075
    %v2108 = vpack.c.b16 %v2080, %v2078
    %v2109 = vpack.c.b16 %v2081, %v2079
    %v2110 = vpack.c.b16 %v2084, %v2082
    %v2111 = vpack.c.b16 %v2085, %v2083
    %v2112 = vpack.c.b16 %v2088, %v2086
    %v2113 = vpack.c.b16 %v2089, %v2087
    %v2114 = vpack.c.b16 %v2092, %v2090
    %v2115 = vpack.c.b16 %v2093, %v2091
    %v2116 = vpack.c.b16 %v2096, %v2094
    %v2117 = vpack.c.b16 %v2097, %v2095
    %v2118 = vpack.c.b16 %v2100, %v2098
    %v2119 = vpack.c.b16 %v2101, %v2099
    %v2120 = vpack.c.b16 %v2104, %v2102
    %v2121 = vpack.c.b16 %v2105, %v2103
    %2138 = vmatprep.subr.bf16.mxu0 %v2121
    %2139 = vmatpush1.bf16.msra.mxu0 %v2120
    %2140 = vmatprep.subr.bf16.mxu0 %v2119
    %2141 = vmatpush1.bf16.msra.mxu0 %v2118
    %2142 = vmatprep.subr.bf16.mxu0 %v2117
    %2143 = vmatpush1.bf16.msra.mxu0 %v2116
    %2144 = vmatprep.subr.bf16.mxu0 %v2115
    %2145 = vmatpush1.bf16.msra.mxu0 %v2114
    %2146 = vmatprep.subr.bf16.mxu0 %v2113
    %2147 = vmatpush1.bf16.msra.mxu0 %v2112
    %2148 = vmatprep.subr.bf16.mxu0 %v2111
    %2149 = vmatpush1.bf16.msra.mxu0 %v2110
    %2150 = vmatprep.subr.bf16.mxu0 %v2109
    %2151 = vmatpush1.bf16.msra.mxu0 %v2108
    %2152 = vmatprep.subr.bf16.mxu0 %v2107
    %2153 = vmatpush1.bf16.msra.mxu0 %v2106
    %2154 = vmatprep.subr.bf16.mxu0 0
    %2155 = vmatpush2.bf16.msra.mxu0 0
    %2156 = vmatprep.subr.bf16.mxu0 0
    %2157 = vmatpush2.bf16.msra.mxu0 0
    %2158 = vmatprep.subr.bf16.mxu0 0
    %2159 = vmatpush2.bf16.msra.mxu0 0
    %2160 = vmatprep.subr.bf16.mxu0 0
    %2161 = vmatpush2.bf16.msra.mxu0 0
    %2162 = vmatprep.subr.bf16.mxu0 0
    %2163 = vmatpush2.bf16.msra.mxu0 0
    %2164 = vmatprep.subr.bf16.mxu0 0
    %2165 = vmatpush2.bf16.msra.mxu0 0
    %2166 = vmatprep.subr.bf16.mxu0 0
    %2167 = vmatpush2.bf16.msra.mxu0 0
    %2168 = vmatprep.subr.bf16.mxu0 0
    %2169 = vmatpush2.bf16.msra.mxu0 0
    %2170 = vmatprep.mubr.bf16.mxu0 0
    %2171 = vmatmul.mubr.bf16.gmra.mxu0 %v2029
    %v2172 = vpop.f32.mrf.mxu0
    %v2173 = vadd.f32 %v2051, %v2172
    %v2174 = vpop.f32.mrf.mxu0
    %v2175 = vadd.f32 %v2055, %v2174
    %v2176 = vpop.f32.mrf.mxu0
    %v2177 = vadd.f32 %v2051, %v2176
    %v2178 = vpop.f32.mrf.mxu0
    %v2179 = vadd.f32 %v2055, %v2178
    %2180 = vdwg.mxu0
    %v2181 = vmax.f32 %v2173, 0.0
    %v2182 = vmax.f32 %v2175, 0.0
    %v2183 = vmax.f32 %v2177, 0.0
    %v2184 = vmax.f32 %v2179, 0.0
    %v2185 = vpack.c.bf16 %v2183, %v2181
    %v2186 = vpack.c.bf16 %v2184, %v2182
    %v2187 = vld [vmem:[#allocation10] sm:$0xf]
    %v2188 = vld [vmem:[#allocation10 + $0x4] sm:$0xf]
    %v2189 = vld [vmem:[#allocation10 + $0x8] sm:$0xf]
    %v2190 = vld [vmem:[#allocation10 + $0xc] sm:$0xf]
    %v2191 = vld [vmem:[#allocation10 + $0x10] sm:$0xf]
    %v2192 = vld [vmem:[#allocation10 + $0x14] sm:$0xf]
    %v2193 = vld [vmem:[#allocation10 + $0x18] sm:$0xf]
    %v2194 = vld [vmem:[#allocation10 + $0x1c] sm:$0xf]
    %v2195 = vld [vmem:[#allocation10 + $0x20] sm:$0xf]
    %v2196 = vld [vmem:[#allocation10 + $0x24] sm:$0xf]
    %v2197 = vld [vmem:[#allocation10 + $0x28] sm:$0xf]
    %v2198 = vld [vmem:[#allocation10 + $0x2c] sm:$0xf]
    %v2199 = vld [vmem:[#allocation10 + $0x30] sm:$0xf]
    %v2200 = vld [vmem:[#allocation10 + $0x34] sm:$0xf]
    %v2201 = vld [vmem:[#allocation10 + $0x38] sm:$0xf]
    %v2202 = vld [vmem:[#allocation10 + $0x3c] sm:$0xf]
    %v2203 = vld [vmem:[#allocation10 + $0x40] sm:$0xf]
    %v2204 = vld [vmem:[#allocation10 + $0x44] sm:$0xf]
    %v2205 = vld [vmem:[#allocation10 + $0x48] sm:$0xf]
    %v2206 = vld [vmem:[#allocation10 + $0x4c] sm:$0xf]
    %v2207 = vld [vmem:[#allocation10 + $0x50] sm:$0xf]
    %v2208 = vld [vmem:[#allocation10 + $0x54] sm:$0xf]
    %v2209 = vld [vmem:[#allocation10 + $0x58] sm:$0xf]
    %v2210 = vld [vmem:[#allocation10 + $0x5c] sm:$0xf]
    %v2211 = vld [vmem:[#allocation10 + $0x60] sm:$0xf]
    %v2212 = vld [vmem:[#allocation10 + $0x64] sm:$0xf]
    %v2213 = vld [vmem:[#allocation10 + $0x68] sm:$0xf]
    %v2214 = vld [vmem:[#allocation10 + $0x6c] sm:$0xf]
    %v2215 = vld [vmem:[#allocation10 + $0x70] sm:$0xf]
    %v2216 = vld [vmem:[#allocation10 + $0x74] sm:$0xf]
    %v2217 = vld [vmem:[#allocation10 + $0x78] sm:$0xf]
    %v2218 = vld [vmem:[#allocation10 + $0x7c] sm:$0xf]
    %v2219 = vlaneseq
    %v2220 = vshrl.u32 %v2219, 7
    %v2221 = vsub.s32 3, %v2220
    %v2222 = vrot.slane %v593, %v2221
    %v2255 = vunpack.c.l.b16 %v2187
    %v2256 = vunpack.c.l.b16 %v2188
    %v2257 = vunpack.c.l.b16 %v2189
    %v2258 = vunpack.c.l.b16 %v2190
    %v2259 = vunpack.c.l.b16 %v2191
    %v2260 = vunpack.c.l.b16 %v2192
    %v2261 = vunpack.c.l.b16 %v2193
    %v2262 = vunpack.c.l.b16 %v2194
    %v2263 = vunpack.c.l.b16 %v2195
    %v2264 = vunpack.c.l.b16 %v2196
    %v2265 = vunpack.c.l.b16 %v2197
    %v2266 = vunpack.c.l.b16 %v2198
    %v2267 = vunpack.c.l.b16 %v2199
    %v2268 = vunpack.c.l.b16 %v2200
    %v2269 = vunpack.c.l.b16 %v2201
    %v2270 = vunpack.c.l.b16 %v2202
    %v2271 = vunpack.c.l.b16 %v2203
    %v2272 = vunpack.c.l.b16 %v2204
    %v2273 = vunpack.c.l.b16 %v2205
    %v2274 = vunpack.c.l.b16 %v2206
    %v2275 = vunpack.c.l.b16 %v2207
    %v2276 = vunpack.c.l.b16 %v2208
    %v2277 = vunpack.c.l.b16 %v2209
    %v2278 = vunpack.c.l.b16 %v2210
    %v2279 = vunpack.c.l.b16 %v2211
    %v2280 = vunpack.c.l.b16 %v2212
    %v2281 = vunpack.c.l.b16 %v2213
    %v2282 = vunpack.c.l.b16 %v2214
    %v2283 = vunpack.c.l.b16 %v2215
    %v2284 = vunpack.c.l.b16 %v2216
    %v2285 = vunpack.c.l.b16 %v2217
    %v2286 = vunpack.c.l.b16 %v2218
    %v2287 = vpack.c.b16 %v2256, %v2255
    %v2288 = vpack.c.b16 %v2258, %v2257
    %v2289 = vpack.c.b16 %v2260, %v2259
    %v2290 = vpack.c.b16 %v2262, %v2261
    %v2291 = vpack.c.b16 %v2264, %v2263
    %v2292 = vpack.c.b16 %v2266, %v2265
    %v2293 = vpack.c.b16 %v2268, %v2267
    %v2294 = vpack.c.b16 %v2270, %v2269
    %v2295 = vpack.c.b16 %v2272, %v2271
    %v2296 = vpack.c.b16 %v2274, %v2273
    %v2297 = vpack.c.b16 %v2276, %v2275
    %v2298 = vpack.c.b16 %v2278, %v2277
    %v2299 = vpack.c.b16 %v2280, %v2279
    %v2300 = vpack.c.b16 %v2282, %v2281
    %v2301 = vpack.c.b16 %v2284, %v2283
    %v2302 = vpack.c.b16 %v2286, %v2285
    %2319 = vmatprep.subr.bf16.mxu0 0
    %2320 = vmatpush1.bf16.msra.mxu0 %v2294
    %2321 = vmatprep.subr.bf16.mxu0 0
    %2322 = vmatpush1.bf16.msra.mxu0 %v2293
    %2323 = vmatprep.subr.bf16.mxu0 0
    %2324 = vmatpush1.bf16.msra.mxu0 %v2292
    %2325 = vmatprep.subr.bf16.mxu0 0
    %2326 = vmatpush1.bf16.msra.mxu0 %v2291
    %2327 = vmatprep.subr.bf16.mxu0 0
    %2328 = vmatpush1.bf16.msra.mxu0 %v2290
    %2329 = vmatprep.subr.bf16.mxu0 0
    %2330 = vmatpush1.bf16.msra.mxu0 %v2289
    %2331 = vmatprep.subr.bf16.mxu0 0
    %2332 = vmatpush1.bf16.msra.mxu0 %v2288
    %2333 = vmatprep.subr.bf16.mxu0 0
    %2334 = vmatpush1.bf16.msra.mxu0 %v2287
    %2335 = vmatprep.subr.bf16.mxu0 0
    %2336 = vmatpush2.bf16.msra.mxu0 %v2302
    %2337 = vmatprep.subr.bf16.mxu0 0
    %2338 = vmatpush2.bf16.msra.mxu0 %v2301
    %2339 = vmatprep.subr.bf16.mxu0 0
    %2340 = vmatpush2.bf16.msra.mxu0 %v2300
    %2341 = vmatprep.subr.bf16.mxu0 0
    %2342 = vmatpush2.bf16.msra.mxu0 %v2299
    %2343 = vmatprep.subr.bf16.mxu0 0
    %2344 = vmatpush2.bf16.msra.mxu0 %v2298
    %2345 = vmatprep.subr.bf16.mxu0 0
    %2346 = vmatpush2.bf16.msra.mxu0 %v2297
    %2347 = vmatprep.subr.bf16.mxu0 0
    %2348 = vmatpush2.bf16.msra.mxu0 %v2296
    %2349 = vmatprep.subr.bf16.mxu0 0
    %2350 = vmatpush2.bf16.msra.mxu0 %v2295
    %2351 = vmatprep.mubr.bf16.mxu0 %v2186
    %2352 = vmatmul.mubr.bf16.gmra.mxu0 %v2185
    %v2353 = vpop.f32.mrf.mxu0
    %v2354 = vadd.f32 %v2222, %v2353
    %v2355 = vpop.f32.mrf.mxu0
    %v2356 = vpop.f32.mrf.mxu0
    %v2357 = vadd.f32 %v2222, %v2356
    %v2358 = vpop.f32.mrf.mxu0
    %2359 = vdwg.mxu0
    %v2360 = vadd.f32 %v2027, %v2354
    %v2361 = vadd.f32 %v2028, %v2357
    %2362 = vadd.xlane.f32.xlu0 %v2360
    %v2363 = vpop.xlane.xlu0 %2362
    %2364 = vadd.xlane.f32.xlu0 %v2361
    %v2365 = vpop.xlane.xlu0 %2364
    %v2366 = vmul.f32 %v2363, %v1998
    %v2367 = vmul.f32 %v2365, %v1998
    %v2368 = vsub.f32 %v2360, %v2366
    %v2369 = vsub.f32 %v2361, %v2367
    %v2370 = vmul.f32 %v2368, %v2368
    %v2371 = vmul.f32 %v2369, %v2369
    %2372 = vadd.xlane.f32.xlu0 %v2370
    %v2373 = vpop.xlane.xlu0 %2372
    %2374 = vadd.xlane.f32.xlu0 %v2371
    %v2375 = vpop.xlane.xlu0 %2374
    %v2376 = vmul.f32 %v2373, %v1998
    %v2377 = vmul.f32 %v2375, %v1998
    %v2378 = vadd.f32 %v2376, 1e-05
    %v2379 = vadd.f32 %v2377, 1e-05
    %v2380 = vrsqrt.pop %v2378
    %v2381 = vrsqrt.pop %v2379
    %v2382 = vmul.f32 %v2368, %v2380
    %v2383 = vmul.f32 %v2369, %v2381
    %v2384 = vlaneseq
    %v2385 = vshrl.u32 %v2384, 7
    %v2386 = vsub.s32 4, %v2385
    %v2387 = vrot.slane %v593, %v2386
    %v2388 = vmul.f32 %v2382, %v2387
    %v2389 = vmul.f32 %v2383, %v2387
    %v2390 = vlaneseq
    %v2391 = vshrl.u32 %v2390, 7
    %v2392 = vsub.s32 5, %v2391
    %v2393 = vrot.slane %v593, %v2392
    %v2394 = vadd.f32 %v2388, %v2393
    %v2395 = vadd.f32 %v2389, %v2393
    %s2396 = scalar_lea.vmem %s11, 8
    %v2397 = vld [vmem:[%s2396] sm:$0x3f]
    %v2398 = vpack.c.bf16 %v2395, %v2394
    %s2399 = scalar_lea.vmem [#allocation2], 192
    %v2400 = vld [vmem:[%s2399] sm:$0xff]
    %v2401 = vld [vmem:[%s2399 + $0x8] sm:$0xf]
    %v2402 = vld [vmem:[%s2399 + $0xc] sm:$0xff]
    %v2403 = vld [vmem:[%s2399 + $0x14] sm:$0xf]
    %v2404 = vld [vmem:[%s2399 + $0x18] sm:$0xff]
    %v2405 = vld [vmem:[%s2399 + $0x20] sm:$0xf]
    %v2406 = vld [vmem:[%s2399 + $0x24] sm:$0xff]
    %v2407 = vld [vmem:[%s2399 + $0x2c] sm:$0xf]
    %v2408 = vld [vmem:[%s2399 + $0x30] sm:$0xff]
    %v2409 = vld [vmem:[%s2399 + $0x38] sm:$0xf]
    %v2410 = vld [vmem:[%s2399 + $0x3c] sm:$0xff]
    %v2411 = vld [vmem:[%s2399 + $0x44] sm:$0xf]
    %v2412 = vld [vmem:[%s2399 + $0x48] sm:$0xff]
    %v2413 = vld [vmem:[%s2399 + $0x50] sm:$0xf]
    %v2414 = vld [vmem:[%s2399 + $0x54] sm:$0xff]
    %v2415 = vld [vmem:[%s2399 + $0x5c] sm:$0xf]
    %v2416 = vld [vmem:[%s2399 + $0x60] sm:$0xff]
    %v2417 = vld [vmem:[%s2399 + $0x68] sm:$0xf]
    %v2418 = vld [vmem:[%s2399 + $0x6c] sm:$0xff]
    %v2419 = vld [vmem:[%s2399 + $0x74] sm:$0xf]
    %v2420 = vld [vmem:[%s2399 + $0x78] sm:$0xff]
    %v2421 = vld [vmem:[%s2399 + $0x80] sm:$0xf]
    %v2422 = vld [vmem:[%s2399 + $0x84] sm:$0xff]
    %v2423 = vld [vmem:[%s2399 + $0x8c] sm:$0xf]
    %v2424 = vld [vmem:[%s2399 + $0x90] sm:$0xff]
    %v2425 = vld [vmem:[%s2399 + $0x98] sm:$0xf]
    %v2426 = vld [vmem:[%s2399 + $0x9c] sm:$0xff]
    %v2427 = vld [vmem:[%s2399 + $0xa4] sm:$0xf]
    %v2428 = vld [vmem:[%s2399 + $0xa8] sm:$0xff]
    %v2429 = vld [vmem:[%s2399 + $0xb0] sm:$0xf]
    %v2430 = vld [vmem:[%s2399 + $0xb4] sm:$0xff]
    %v2431 = vld [vmem:[%s2399 + $0xbc] sm:$0xf]
    %s2432 = scalar_lea.vmem [#allocation5], 3
    %v2433 = vld [vmem:[%s2432] sm:$0x7]
    %v2435 = vlaneseq
    %v2436 = vshrl.u32 %v2435, 7
    %v2437 = vsub.s32 0, %v2436
    %v2438 = vrot.slane %v2433, %v2437
    %v2439 = vlaneseq
    %v2440 = vshrl.u32 %v2439, 7
    %v2441 = vsub.s32 1, %v2440
    %v2442 = vrot.slane %v2433, %v2441
    %v2443 = vlaneseq
    %v2444 = vshrl.u32 %v2443, 7
    %v2445 = vsub.s32 2, %v2444
    %v2446 = vrot.slane %v2433, %v2445
    %v2482 = vunpack.c.l.b16 %v2400
    %v2483 = vunpack.c.h.b16 %v2400
    %v2484 = vunpack.c.l.b16 %v2401
    %v2485 = vunpack.c.l.b16 %v2402
    %v2486 = vunpack.c.h.b16 %v2402
    %v2487 = vunpack.c.l.b16 %v2403
    %v2488 = vunpack.c.l.b16 %v2404
    %v2489 = vunpack.c.h.b16 %v2404
    %v2490 = vunpack.c.l.b16 %v2405
    %v2491 = vunpack.c.l.b16 %v2406
    %v2492 = vunpack.c.h.b16 %v2406
    %v2493 = vunpack.c.l.b16 %v2407
    %v2494 = vunpack.c.l.b16 %v2408
    %v2495 = vunpack.c.h.b16 %v2408
    %v2496 = vunpack.c.l.b16 %v2409
    %v2497 = vunpack.c.l.b16 %v2410
    %v2498 = vunpack.c.h.b16 %v2410
    %v2499 = vunpack.c.l.b16 %v2411
    %v2500 = vunpack.c.l.b16 %v2412
    %v2501 = vunpack.c.h.b16 %v2412
    %v2502 = vunpack.c.l.b16 %v2413
    %v2503 = vunpack.c.l.b16 %v2414
    %v2504 = vunpack.c.h.b16 %v2414
    %v2505 = vunpack.c.l.b16 %v2415
    %v2506 = vunpack.c.l.b16 %v2416
    %v2507 = vunpack.c.h.b16 %v2416
    %v2508 = vunpack.c.l.b16 %v2417
    %v2509 = vunpack.c.l.b16 %v2418
    %v2510 = vunpack.c.h.b16 %v2418
    %v2511 = vunpack.c.l.b16 %v2419
    %v2512 = vunpack.c.l.b16 %v2420
    %v2513 = vunpack.c.h.b16 %v2420
    %v2514 = vunpack.c.l.b16 %v2421
    %v2515 = vunpack.c.l.b16 %v2422
    %v2516 = vunpack.c.h.b16 %v2422
    %v2517 = vunpack.c.l.b16 %v2423
    %v2518 = vunpack.c.l.b16 %v2424
    %v2519 = vunpack.c.h.b16 %v2424
    %v2520 = vunpack.c.l.b16 %v2425
    %v2521 = vunpack.c.l.b16 %v2426
    %v2522 = vunpack.c.h.b16 %v2426
    %v2523 = vunpack.c.l.b16 %v2427
    %v2524 = vunpack.c.l.b16 %v2428
    %v2525 = vunpack.c.h.b16 %v2428
    %v2526 = vunpack.c.l.b16 %v2429
    %v2527 = vunpack.c.l.b16 %v2430
    %v2528 = vunpack.c.h.b16 %v2430
    %v2529 = vunpack.c.l.b16 %v2431
    %v2530 = vpack.c.b16 %v2485, %v2482
    %v2531 = vpack.c.b16 %v2486, %v2483
    %v2532 = vpack.c.b16 %v2487, %v2484
    %v2533 = vpack.c.b16 %v2491, %v2488
    %v2534 = vpack.c.b16 %v2492, %v2489
    %v2535 = vpack.c.b16 %v2493, %v2490
    %v2536 = vpack.c.b16 %v2497, %v2494
    %v2537 = vpack.c.b16 %v2498, %v2495
    %v2538 = vpack.c.b16 %v2499, %v2496
    %v2539 = vpack.c.b16 %v2503, %v2500
    %v2540 = vpack.c.b16 %v2504, %v2501
    %v2541 = vpack.c.b16 %v2505, %v2502
    %v2542 = vpack.c.b16 %v2509, %v2506
    %v2543 = vpack.c.b16 %v2510, %v2507
    %v2544 = vpack.c.b16 %v2511, %v2508
    %v2545 = vpack.c.b16 %v2515, %v2512
    %v2546 = vpack.c.b16 %v2516, %v2513
    %v2547 = vpack.c.b16 %v2517, %v2514
    %v2548 = vpack.c.b16 %v2521, %v2518
    %v2549 = vpack.c.b16 %v2522, %v2519
    %v2550 = vpack.c.b16 %v2523, %v2520
    %v2551 = vpack.c.b16 %v2527, %v2524
    %v2552 = vpack.c.b16 %v2528, %v2525
    %v2553 = vpack.c.b16 %v2529, %v2526
    %2578 = vmatprep.subr.bf16.mxu0 %v2552
    %2579 = vmatpush1.bf16.msra.mxu0 %v2551
    %2580 = vmatprep.subr.bf16.mxu0 %v2549
    %2581 = vmatpush1.bf16.msra.mxu0 %v2548
    %2582 = vmatprep.subr.bf16.mxu0 %v2546
    %2583 = vmatpush1.bf16.msra.mxu0 %v2545
    %2584 = vmatprep.subr.bf16.mxu0 %v2543
    %2585 = vmatpush1.bf16.msra.mxu0 %v2542
    %2586 = vmatprep.subr.bf16.mxu0 %v2540
    %2587 = vmatpush1.bf16.msra.mxu0 %v2539
    %2588 = vmatprep.subr.bf16.mxu0 %v2537
    %2589 = vmatpush1.bf16.msra.mxu0 %v2536
    %2590 = vmatprep.subr.bf16.mxu0 %v2534
    %2591 = vmatpush1.bf16.msra.mxu0 %v2533
    %2592 = vmatprep.subr.bf16.mxu0 %v2531
    %2593 = vmatpush1.bf16.msra.mxu0 %v2530
    %2594 = vmatprep.subr.bf16.mxu0 0
    %2595 = vmatpush2.bf16.msra.mxu0 0
    %2596 = vmatprep.subr.bf16.mxu0 0
    %2597 = vmatpush2.bf16.msra.mxu0 0
    %2598 = vmatprep.subr.bf16.mxu0 0
    %2599 = vmatpush2.bf16.msra.mxu0 0
    %2600 = vmatprep.subr.bf16.mxu0 0
    %2601 = vmatpush2.bf16.msra.mxu0 0
    %2602 = vmatprep.subr.bf16.mxu0 0
    %2603 = vmatpush2.bf16.msra.mxu0 0
    %2604 = vmatprep.subr.bf16.mxu0 0
    %2605 = vmatpush2.bf16.msra.mxu0 0
    %2606 = vmatprep.subr.bf16.mxu0 0
    %2607 = vmatpush2.bf16.msra.mxu0 0
    %2608 = vmatprep.subr.bf16.mxu0 0
    %2609 = vmatpush2.bf16.msra.mxu0 0
    %2610 = vmatprep.mubr.bf16.mxu0 0
    %2611 = vmatmul.mubr.bf16.gmra.mxu0 %v2398
    %v2612 = vpop.f32.mrf.mxu0
    %v2613 = vadd.f32 %v2438, %v2612
    %v2614 = vpop.f32.mrf.mxu0
    %v2615 = vadd.f32 %v2442, %v2614
    %v2616 = vpop.f32.mrf.mxu0
    %v2617 = vadd.f32 %v2438, %v2616
    %v2618 = vpop.f32.mrf.mxu0
    %v2619 = vadd.f32 %v2442, %v2618
    %2620 = vdwg.mxu0
    %2621 = vmatprep.subr.bf16.mxu0 0
    %2622 = vmatpush1.bf16.msra.mxu0 %v2553
    %2623 = vmatprep.subr.bf16.mxu0 0
    %2624 = vmatpush1.bf16.msra.mxu0 %v2550
    %2625 = vmatprep.subr.bf16.mxu0 0
    %2626 = vmatpush1.bf16.msra.mxu0 %v2547
    %2627 = vmatprep.subr.bf16.mxu0 0
    %2628 = vmatpush1.bf16.msra.mxu0 %v2544
    %2629 = vmatprep.subr.bf16.mxu0 0
    %2630 = vmatpush1.bf16.msra.mxu0 %v2541
    %2631 = vmatprep.subr.bf16.mxu0 0
    %2632 = vmatpush1.bf16.msra.mxu0 %v2538
    %2633 = vmatprep.subr.bf16.mxu0 0
    %2634 = vmatpush1.bf16.msra.mxu0 %v2535
    %2635 = vmatprep.subr.bf16.mxu0 0
    %2636 = vmatpush1.bf16.msra.mxu0 %v2532
    %2637 = vmatprep.subr.bf16.mxu0 0
    %2638 = vmatpush2.bf16.msra.mxu0 0
    %2639 = vmatprep.subr.bf16.mxu0 0
    %2640 = vmatpush2.bf16.msra.mxu0 0
    %2641 = vmatprep.subr.bf16.mxu0 0
    %2642 = vmatpush2.bf16.msra.mxu0 0
    %2643 = vmatprep.subr.bf16.mxu0 0
    %2644 = vmatpush2.bf16.msra.mxu0 0
    %2645 = vmatprep.subr.bf16.mxu0 0
    %2646 = vmatpush2.bf16.msra.mxu0 0
    %2647 = vmatprep.subr.bf16.mxu0 0
    %2648 = vmatpush2.bf16.msra.mxu0 0
    %2649 = vmatprep.subr.bf16.mxu0 0
    %2650 = vmatpush2.bf16.msra.mxu0 0
    %2651 = vmatprep.subr.bf16.mxu0 0
    %2652 = vmatpush2.bf16.msra.mxu0 0
    %2653 = vmatprep.mubr.bf16.mxu0 0
    %2654 = vmatmul.mubr.bf16.gmra.mxu0 %v2398
    %v2655 = vpop.f32.mrf.mxu0
    %v2656 = vadd.f32 %v2446, %v2655
    %v2657 = vpop.f32.mrf.mxu0
    %v2658 = vpop.f32.mrf.mxu0
    %v2659 = vadd.f32 %v2446, %v2658
    %v2660 = vpop.f32.mrf.mxu0
    %2661 = vdwg.mxu0
    %s2662 = scalar_lea.vmem %s7, 64
    %v2663 = vld [vmem:[%s2662] sm:$0xf]
    %v2664 = vld [vmem:[%s2662 + $0x4] sm:$0xf]
    %v2665 = vld [vmem:[%s2662 + $0x8] sm:$0xf]
    %v2666 = vld [vmem:[%s2662 + $0xc] sm:$0xf]
    %v2667 = vld [vmem:[%s2662 + $0x10] sm:$0xf]
    %v2668 = vld [vmem:[%s2662 + $0x14] sm:$0xf]
    %v2669 = vld [vmem:[%s2662 + $0x18] sm:$0xf]
    %v2670 = vld [vmem:[%s2662 + $0x1c] sm:$0xf]
    %v2671 = vld [vmem:[%s2662 + $0x20] sm:$0xf]
    %v2672 = vld [vmem:[%s2662 + $0x24] sm:$0xf]
    %v2673 = vld [vmem:[%s2662 + $0x28] sm:$0xf]
    %v2674 = vld [vmem:[%s2662 + $0x2c] sm:$0xf]
    %v2675 = vld [vmem:[%s2662 + $0x30] sm:$0xf]
    %v2676 = vld [vmem:[%s2662 + $0x34] sm:$0xf]
    %v2677 = vld [vmem:[%s2662 + $0x38] sm:$0xf]
    %v2678 = vld [vmem:[%s2662 + $0x3c] sm:$0xf]
    %v2679 = vpack.c.bf16 %v2613, %v2613
    %v2680 = vpack.c.bf16 %v2617, %v2617
    %v2681 = vpack.c.bf16 %v2615, %v2615
    %v2682 = vpack.c.bf16 %v2619, %v2619
    %v2683 = vpack.c.bf16 %v2656, %v2656
    %v2684 = vpack.c.bf16 %v2659, %v2659
    %v2686 = vsel %vm149, %v2679, 0
    %v2689 = vsel %vm149, %v2681, 0
    %2691 = vmatprep.subr.bf16.mxu0 0
    %2692 = vmatpush1.bf16.xpose.msra.mxu0 0
    %2693 = vmatprep.subr.bf16.mxu0 0
    %2694 = vmatpush1.bf16.xpose.msra.mxu0 0
    %2695 = vmatprep.subr.bf16.mxu0 0
    %2696 = vmatpush1.bf16.xpose.msra.mxu0 0
    %2697 = vmatprep.subr.bf16.mxu0 0
    %2698 = vmatpush1.bf16.xpose.msra.mxu0 0
    %2699 = vmatprep.subr.bf16.mxu0 0
    %2700 = vmatpush1.bf16.xpose.msra.mxu0 0
    %2701 = vmatprep.subr.bf16.mxu0 0
    %2702 = vmatpush1.bf16.xpose.msra.mxu0 0
    %2703 = vmatprep.subr.bf16.mxu0 0
    %2704 = vmatpush1.bf16.xpose.msra.mxu0 0
    %2705 = vmatprep.subr.bf16.mxu0 0
    %2706 = vmatpush1.bf16.xpose.msra.mxu0 %v2689
    %2707 = vmatprep.subr.bf16.mxu0 0
    %2708 = vmatpush2.bf16.xpose.msra.mxu0 0
    %2709 = vmatprep.subr.bf16.mxu0 0
    %2710 = vmatpush2.bf16.xpose.msra.mxu0 0
    %2711 = vmatprep.subr.bf16.mxu0 0
    %2712 = vmatpush2.bf16.xpose.msra.mxu0 0
    %2713 = vmatprep.subr.bf16.mxu0 0
    %2714 = vmatpush2.bf16.xpose.msra.mxu0 0
    %2715 = vmatprep.subr.bf16.mxu0 0
    %2716 = vmatpush2.bf16.xpose.msra.mxu0 0
    %2717 = vmatprep.subr.bf16.mxu0 0
    %2718 = vmatpush2.bf16.xpose.msra.mxu0 0
    %2719 = vmatprep.subr.bf16.mxu0 0
    %2720 = vmatpush2.bf16.xpose.msra.mxu0 0
    %2721 = vmatprep.subr.bf16.mxu0 0
    %2722 = vmatpush2.bf16.xpose.msra.mxu0 0
    %2723 = vmatprep.mubr.bf16.mxu0 0
    %2724 = vmatmul.mubr.bf16.gmra.mxu0 %v2686
    %v2725 = vpop.f32.mrf.mxu0
    %v2726 = vadd.f32 0.0, %v2725
    %v2727 = vpop.f32.mrf.mxu0
    %v2728 = vpop.f32.mrf.mxu0
    %v2729 = vpop.f32.mrf.mxu0
    %2730 = vdwg.mxu0
    %v2732 = vsel %vm149, %v2680, 0
    %v2735 = vsel %vm149, %v2682, 0
    %2737 = vmatprep.subr.bf16.mxu0 0
    %2738 = vmatpush1.bf16.xpose.msra.mxu0 0
    %2739 = vmatprep.subr.bf16.mxu0 0
    %2740 = vmatpush1.bf16.xpose.msra.mxu0 0
    %2741 = vmatprep.subr.bf16.mxu0 0
    %2742 = vmatpush1.bf16.xpose.msra.mxu0 0
    %2743 = vmatprep.subr.bf16.mxu0 0
    %2744 = vmatpush1.bf16.xpose.msra.mxu0 0
    %2745 = vmatprep.subr.bf16.mxu0 0
    %2746 = vmatpush1.bf16.xpose.msra.mxu0 0
    %2747 = vmatprep.subr.bf16.mxu0 0
    %2748 = vmatpush1.bf16.xpose.msra.mxu0 0
    %2749 = vmatprep.subr.bf16.mxu0 0
    %2750 = vmatpush1.bf16.xpose.msra.mxu0 0
    %2751 = vmatprep.subr.bf16.mxu0 0
    %2752 = vmatpush1.bf16.xpose.msra.mxu0 %v2735
    %2753 = vmatprep.subr.bf16.mxu0 0
    %2754 = vmatpush2.bf16.xpose.msra.mxu0 0
    %2755 = vmatprep.subr.bf16.mxu0 0
    %2756 = vmatpush2.bf16.xpose.msra.mxu0 0
    %2757 = vmatprep.subr.bf16.mxu0 0
    %2758 = vmatpush2.bf16.xpose.msra.mxu0 0
    %2759 = vmatprep.subr.bf16.mxu0 0
    %2760 = vmatpush2.bf16.xpose.msra.mxu0 0
    %2761 = vmatprep.subr.bf16.mxu0 0
    %2762 = vmatpush2.bf16.xpose.msra.mxu0 0
    %2763 = vmatprep.subr.bf16.mxu0 0
    %2764 = vmatpush2.bf16.xpose.msra.mxu0 0
    %2765 = vmatprep.subr.bf16.mxu0 0
    %2766 = vmatpush2.bf16.xpose.msra.mxu0 0
    %2767 = vmatprep.subr.bf16.mxu0 0
    %2768 = vmatpush2.bf16.xpose.msra.mxu0 0
    %2769 = vmatprep.mubr.bf16.mxu0 0
    %2770 = vmatmul.mubr.bf16.gmra.mxu0 %v2732
    %v2771 = vpop.f32.mrf.mxu0
    %v2772 = vadd.f32 0.0, %v2771
    %v2773 = vpop.f32.mrf.mxu0
    %v2774 = vpop.f32.mrf.mxu0
    %v2775 = vpop.f32.mrf.mxu0
    %2776 = vdwg.mxu0
    %v2777 = vsel %vm970, %v2726, -inf
    %2778 = vmax.xlane.f32.xlu0 %v2777
    %v2779 = vpop.xlane.xlu0 %2778
    %v2780 = vsel %vm970, %v2772, -inf
    %2781 = vmax.xlane.f32.xlu0 %v2780
    %v2782 = vpop.xlane.xlu0 %2781
    %v2783 = vsub.f32 %v2726, %v2779
    %v2784 = vsub.f32 %v2772, %v2782
    %v2785 = vmul.f32 %v2783, 1.442695
    %v2786 = vpow.pop %v2785
    %v2787 = vmul.f32 %v2784, 1.442695
    %v2788 = vpow.pop %v2787
    %v2789 = vsel %vm970, %v2786, 0.0
    %2790 = vadd.xlane.f32.xlu0 %v2789
    %v2791 = vpop.xlane.xlu0 %2790
    %v2792 = vsel %vm970, %v2788, 0.0
    %2793 = vadd.xlane.f32.xlu0 %v2792
    %v2794 = vpop.xlane.xlu0 %2793
    %v2795 = vrcp.pop %v2791
    %v2796 = vrcp.pop %v2794
    %v2797 = vmul.f32 %v2786, %v2795
    %v2798 = vmul.f32 %v2788, %v2796
    %v2799 = vpack.c.bf16 %v2797, %v2797
    %v2800 = vpack.c.bf16 %v2798, %v2798
    %v2802 = vsel %vm970, %v2799, 0
    %v2805 = vsel %vm998, %v2683, 0
    %2807 = vmatprep.subr.bf16.mxu0 0
    %2808 = vmatpush1.bf16.msra.mxu0 0
    %2809 = vmatprep.subr.bf16.mxu0 0
    %2810 = vmatpush1.bf16.msra.mxu0 0
    %2811 = vmatprep.subr.bf16.mxu0 0
    %2812 = vmatpush1.bf16.msra.mxu0 0
    %2813 = vmatprep.subr.bf16.mxu0 0
    %2814 = vmatpush1.bf16.msra.mxu0 0
    %2815 = vmatprep.subr.bf16.mxu0 0
    %2816 = vmatpush1.bf16.msra.mxu0 0
    %2817 = vmatprep.subr.bf16.mxu0 0
    %2818 = vmatpush1.bf16.msra.mxu0 0
    %2819 = vmatprep.subr.bf16.mxu0 0
    %2820 = vmatpush1.bf16.msra.mxu0 0
    %2821 = vmatprep.subr.bf16.mxu0 0
    %2822 = vmatpush1.bf16.msra.mxu0 %v2805
    %2823 = vmatprep.subr.bf16.mxu0 0
    %2824 = vmatpush2.bf16.msra.mxu0 0
    %2825 = vmatprep.subr.bf16.mxu0 0
    %2826 = vmatpush2.bf16.msra.mxu0 0
    %2827 = vmatprep.subr.bf16.mxu0 0
    %2828 = vmatpush2.bf16.msra.mxu0 0
    %2829 = vmatprep.subr.bf16.mxu0 0
    %2830 = vmatpush2.bf16.msra.mxu0 0
    %2831 = vmatprep.subr.bf16.mxu0 0
    %2832 = vmatpush2.bf16.msra.mxu0 0
    %2833 = vmatprep.subr.bf16.mxu0 0
    %2834 = vmatpush2.bf16.msra.mxu0 0
    %2835 = vmatprep.subr.bf16.mxu0 0
    %2836 = vmatpush2.bf16.msra.mxu0 0
    %2837 = vmatprep.subr.bf16.mxu0 0
    %2838 = vmatpush2.bf16.msra.mxu0 0
    %2839 = vmatprep.mubr.bf16.mxu0 0
    %2840 = vmatmul.mubr.bf16.gmra.mxu0 %v2802
    %v2841 = vpop.f32.mrf.mxu0
    %v2842 = vadd.f32 0.0, %v2841
    %v2843 = vpop.f32.mrf.mxu0
    %v2844 = vpop.f32.mrf.mxu0
    %v2845 = vpop.f32.mrf.mxu0
    %2846 = vdwg.mxu0
    %v2848 = vsel %vm970, %v2800, 0
    %v2851 = vsel %vm998, %v2684, 0
    %2853 = vmatprep.subr.bf16.mxu0 0
    %2854 = vmatpush1.bf16.msra.mxu0 0
    %2855 = vmatprep.subr.bf16.mxu0 0
    %2856 = vmatpush1.bf16.msra.mxu0 0
    %2857 = vmatprep.subr.bf16.mxu0 0
    %2858 = vmatpush1.bf16.msra.mxu0 0
    %2859 = vmatprep.subr.bf16.mxu0 0
    %2860 = vmatpush1.bf16.msra.mxu0 0
    %2861 = vmatprep.subr.bf16.mxu0 0
    %2862 = vmatpush1.bf16.msra.mxu0 0
    %2863 = vmatprep.subr.bf16.mxu0 0
    %2864 = vmatpush1.bf16.msra.mxu0 0
    %2865 = vmatprep.subr.bf16.mxu0 0
    %2866 = vmatpush1.bf16.msra.mxu0 0
    %2867 = vmatprep.subr.bf16.mxu0 0
    %2868 = vmatpush1.bf16.msra.mxu0 %v2851
    %2869 = vmatprep.subr.bf16.mxu0 0
    %2870 = vmatpush2.bf16.msra.mxu0 0
    %2871 = vmatprep.subr.bf16.mxu0 0
    %2872 = vmatpush2.bf16.msra.mxu0 0
    %2873 = vmatprep.subr.bf16.mxu0 0
    %2874 = vmatpush2.bf16.msra.mxu0 0
    %2875 = vmatprep.subr.bf16.mxu0 0
    %2876 = vmatpush2.bf16.msra.mxu0 0
    %2877 = vmatprep.subr.bf16.mxu0 0
    %2878 = vmatpush2.bf16.msra.mxu0 0
    %2879 = vmatprep.subr.bf16.mxu0 0
    %2880 = vmatpush2.bf16.msra.mxu0 0
    %2881 = vmatprep.subr.bf16.mxu0 0
    %2882 = vmatpush2.bf16.msra.mxu0 0
    %2883 = vmatprep.subr.bf16.mxu0 0
    %2884 = vmatpush2.bf16.msra.mxu0 0
    %2885 = vmatprep.mubr.bf16.mxu0 0
    %2886 = vmatmul.mubr.bf16.gmra.mxu0 %v2848
    %v2887 = vpop.f32.mrf.mxu0
    %v2888 = vadd.f32 0.0, %v2887
    %v2889 = vpop.f32.mrf.mxu0
    %v2890 = vpop.f32.mrf.mxu0
    %v2891 = vpop.f32.mrf.mxu0
    %2892 = vdwg.mxu0
    %v2893 = vpack.c.bf16 %v2888, %v2842
    %2895 = vrot.lane.b32.xlu0 %v2679, 96
    %v2896 = vpop.permute.xlu0 %2895
    %2898 = vrot.lane.b32.xlu0 %v2681, 96
    %v2899 = vpop.permute.xlu0 %2898
    %v2901 = vsel %vm149, %v2896, 0
    %v2904 = vsel %vm149, %v2899, 0
    %2906 = vmatprep.subr.bf16.mxu0 0
    %2907 = vmatpush1.bf16.xpose.msra.mxu0 0
    %2908 = vmatprep.subr.bf16.mxu0 0
    %2909 = vmatpush1.bf16.xpose.msra.mxu0 0
    %2910 = vmatprep.subr.bf16.mxu0 0
    %2911 = vmatpush1.bf16.xpose.msra.mxu0 0
    %2912 = vmatprep.subr.bf16.mxu0 0
    %2913 = vmatpush1.bf16.xpose.msra.mxu0 0
    %2914 = vmatprep.subr.bf16.mxu0 0
    %2915 = vmatpush1.bf16.xpose.msra.mxu0 0
    %2916 = vmatprep.subr.bf16.mxu0 0
    %2917 = vmatpush1.bf16.xpose.msra.mxu0 0
    %2918 = vmatprep.subr.bf16.mxu0 0
    %2919 = vmatpush1.bf16.xpose.msra.mxu0 0
    %2920 = vmatprep.subr.bf16.mxu0 0
    %2921 = vmatpush1.bf16.xpose.msra.mxu0 %v2904
    %2922 = vmatprep.subr.bf16.mxu0 0
    %2923 = vmatpush2.bf16.xpose.msra.mxu0 0
    %2924 = vmatprep.subr.bf16.mxu0 0
    %2925 = vmatpush2.bf16.xpose.msra.mxu0 0
    %2926 = vmatprep.subr.bf16.mxu0 0
    %2927 = vmatpush2.bf16.xpose.msra.mxu0 0
    %2928 = vmatprep.subr.bf16.mxu0 0
    %2929 = vmatpush2.bf16.xpose.msra.mxu0 0
    %2930 = vmatprep.subr.bf16.mxu0 0
    %2931 = vmatpush2.bf16.xpose.msra.mxu0 0
    %2932 = vmatprep.subr.bf16.mxu0 0
    %2933 = vmatpush2.bf16.xpose.msra.mxu0 0
    %2934 = vmatprep.subr.bf16.mxu0 0
    %2935 = vmatpush2.bf16.xpose.msra.mxu0 0
    %2936 = vmatprep.subr.bf16.mxu0 0
    %2937 = vmatpush2.bf16.xpose.msra.mxu0 0
    %2938 = vmatprep.mubr.bf16.mxu0 0
    %2939 = vmatmul.mubr.bf16.gmra.mxu0 %v2901
    %v2940 = vpop.f32.mrf.mxu0
    %v2941 = vadd.f32 0.0, %v2940
    %v2942 = vpop.f32.mrf.mxu0
    %v2943 = vpop.f32.mrf.mxu0
    %v2944 = vpop.f32.mrf.mxu0
    %2945 = vdwg.mxu0
    %2947 = vrot.lane.b32.xlu0 %v2680, 96
    %v2948 = vpop.permute.xlu0 %2947
    %2950 = vrot.lane.b32.xlu0 %v2682, 96
    %v2951 = vpop.permute.xlu0 %2950
    %v2953 = vsel %vm149, %v2948, 0
    %v2956 = vsel %vm149, %v2951, 0
    %2958 = vmatprep.subr.bf16.mxu0 0
    %2959 = vmatpush1.bf16.xpose.msra.mxu0 0
    %2960 = vmatprep.subr.bf16.mxu0 0
    %2961 = vmatpush1.bf16.xpose.msra.mxu0 0
    %2962 = vmatprep.subr.bf16.mxu0 0
    %2963 = vmatpush1.bf16.xpose.msra.mxu0 0
    %2964 = vmatprep.subr.bf16.mxu0 0
    %2965 = vmatpush1.bf16.xpose.msra.mxu0 0
    %2966 = vmatprep.subr.bf16.mxu0 0
    %2967 = vmatpush1.bf16.xpose.msra.mxu0 0
    %2968 = vmatprep.subr.bf16.mxu0 0
    %2969 = vmatpush1.bf16.xpose.msra.mxu0 0
    %2970 = vmatprep.subr.bf16.mxu0 0
    %2971 = vmatpush1.bf16.xpose.msra.mxu0 0
    %2972 = vmatprep.subr.bf16.mxu0 0
    %2973 = vmatpush1.bf16.xpose.msra.mxu0 %v2956
    %2974 = vmatprep.subr.bf16.mxu0 0
    %2975 = vmatpush2.bf16.xpose.msra.mxu0 0
    %2976 = vmatprep.subr.bf16.mxu0 0
    %2977 = vmatpush2.bf16.xpose.msra.mxu0 0
    %2978 = vmatprep.subr.bf16.mxu0 0
    %2979 = vmatpush2.bf16.xpose.msra.mxu0 0
    %2980 = vmatprep.subr.bf16.mxu0 0
    %2981 = vmatpush2.bf16.xpose.msra.mxu0 0
    %2982 = vmatprep.subr.bf16.mxu0 0
    %2983 = vmatpush2.bf16.xpose.msra.mxu0 0
    %2984 = vmatprep.subr.bf16.mxu0 0
    %2985 = vmatpush2.bf16.xpose.msra.mxu0 0
    %2986 = vmatprep.subr.bf16.mxu0 0
    %2987 = vmatpush2.bf16.xpose.msra.mxu0 0
    %2988 = vmatprep.subr.bf16.mxu0 0
    %2989 = vmatpush2.bf16.xpose.msra.mxu0 0
    %2990 = vmatprep.mubr.bf16.mxu0 0
    %2991 = vmatmul.mubr.bf16.gmra.mxu0 %v2953
    %v2992 = vpop.f32.mrf.mxu0
    %v2993 = vadd.f32 0.0, %v2992
    %v2994 = vpop.f32.mrf.mxu0
    %v2995 = vpop.f32.mrf.mxu0
    %v2996 = vpop.f32.mrf.mxu0
    %2997 = vdwg.mxu0
    %v2998 = vsel %vm970, %v2941, -inf
    %2999 = vmax.xlane.f32.xlu0 %v2998
    %v3000 = vpop.xlane.xlu0 %2999
    %v3001 = vsel %vm970, %v2993, -inf
    %3002 = vmax.xlane.f32.xlu0 %v3001
    %v3003 = vpop.xlane.xlu0 %3002
    %v3004 = vsub.f32 %v2941, %v3000
    %v3005 = vsub.f32 %v2993, %v3003
    %v3006 = vmul.f32 %v3004, 1.442695
    %v3007 = vpow.pop %v3006
    %v3008 = vmul.f32 %v3005, 1.442695
    %v3009 = vpow.pop %v3008
    %v3010 = vsel %vm970, %v3007, 0.0
    %3011 = vadd.xlane.f32.xlu0 %v3010
    %v3012 = vpop.xlane.xlu0 %3011
    %v3013 = vsel %vm970, %v3009, 0.0
    %3014 = vadd.xlane.f32.xlu0 %v3013
    %v3015 = vpop.xlane.xlu0 %3014
    %v3016 = vrcp.pop %v3012
    %v3017 = vrcp.pop %v3015
    %v3018 = vmul.f32 %v3007, %v3016
    %v3019 = vmul.f32 %v3009, %v3017
    %v3020 = vpack.c.bf16 %v3018, %v3018
    %v3021 = vpack.c.bf16 %v3019, %v3019
    %3023 = vrot.lane.b32.xlu0 %v2683, 96
    %v3024 = vpop.permute.xlu0 %3023
    %v3026 = vsel %vm970, %v3020, 0
    %v3029 = vsel %vm998, %v3024, 0
    %3031 = vmatprep.subr.bf16.mxu0 0
    %3032 = vmatpush1.bf16.msra.mxu0 0
    %3033 = vmatprep.subr.bf16.mxu0 0
    %3034 = vmatpush1.bf16.msra.mxu0 0
    %3035 = vmatprep.subr.bf16.mxu0 0
    %3036 = vmatpush1.bf16.msra.mxu0 0
    %3037 = vmatprep.subr.bf16.mxu0 0
    %3038 = vmatpush1.bf16.msra.mxu0 0
    %3039 = vmatprep.subr.bf16.mxu0 0
    %3040 = vmatpush1.bf16.msra.mxu0 0
    %3041 = vmatprep.subr.bf16.mxu0 0
    %3042 = vmatpush1.bf16.msra.mxu0 0
    %3043 = vmatprep.subr.bf16.mxu0 0
    %3044 = vmatpush1.bf16.msra.mxu0 0
    %3045 = vmatprep.subr.bf16.mxu0 0
    %3046 = vmatpush1.bf16.msra.mxu0 %v3029
    %3047 = vmatprep.subr.bf16.mxu0 0
    %3048 = vmatpush2.bf16.msra.mxu0 0
    %3049 = vmatprep.subr.bf16.mxu0 0
    %3050 = vmatpush2.bf16.msra.mxu0 0
    %3051 = vmatprep.subr.bf16.mxu0 0
    %3052 = vmatpush2.bf16.msra.mxu0 0
    %3053 = vmatprep.subr.bf16.mxu0 0
    %3054 = vmatpush2.bf16.msra.mxu0 0
    %3055 = vmatprep.subr.bf16.mxu0 0
    %3056 = vmatpush2.bf16.msra.mxu0 0
    %3057 = vmatprep.subr.bf16.mxu0 0
    %3058 = vmatpush2.bf16.msra.mxu0 0
    %3059 = vmatprep.subr.bf16.mxu0 0
    %3060 = vmatpush2.bf16.msra.mxu0 0
    %3061 = vmatprep.subr.bf16.mxu0 0
    %3062 = vmatpush2.bf16.msra.mxu0 0
    %3063 = vmatprep.mubr.bf16.mxu0 0
    %3064 = vmatmul.mubr.bf16.gmra.mxu0 %v3026
    %v3065 = vpop.f32.mrf.mxu0
    %v3066 = vadd.f32 0.0, %v3065
    %v3067 = vpop.f32.mrf.mxu0
    %v3068 = vpop.f32.mrf.mxu0
    %v3069 = vpop.f32.mrf.mxu0
    %3070 = vdwg.mxu0
    %3072 = vrot.lane.b32.xlu0 %v2684, 96
    %v3073 = vpop.permute.xlu0 %3072
    %v3075 = vsel %vm970, %v3021, 0
    %v3078 = vsel %vm998, %v3073, 0
    %3080 = vmatprep.subr.bf16.mxu0 0
    %3081 = vmatpush1.bf16.msra.mxu0 0
    %3082 = vmatprep.subr.bf16.mxu0 0
    %3083 = vmatpush1.bf16.msra.mxu0 0
    %3084 = vmatprep.subr.bf16.mxu0 0
    %3085 = vmatpush1.bf16.msra.mxu0 0
    %3086 = vmatprep.subr.bf16.mxu0 0
    %3087 = vmatpush1.bf16.msra.mxu0 0
    %3088 = vmatprep.subr.bf16.mxu0 0
    %3089 = vmatpush1.bf16.msra.mxu0 0
    %3090 = vmatprep.subr.bf16.mxu0 0
    %3091 = vmatpush1.bf16.msra.mxu0 0
    %3092 = vmatprep.subr.bf16.mxu0 0
    %3093 = vmatpush1.bf16.msra.mxu0 0
    %3094 = vmatprep.subr.bf16.mxu0 0
    %3095 = vmatpush1.bf16.msra.mxu0 %v3078
    %3096 = vmatprep.subr.bf16.mxu0 0
    %3097 = vmatpush2.bf16.msra.mxu0 0
    %3098 = vmatprep.subr.bf16.mxu0 0
    %3099 = vmatpush2.bf16.msra.mxu0 0
    %3100 = vmatprep.subr.bf16.mxu0 0
    %3101 = vmatpush2.bf16.msra.mxu0 0
    %3102 = vmatprep.subr.bf16.mxu0 0
    %3103 = vmatpush2.bf16.msra.mxu0 0
    %3104 = vmatprep.subr.bf16.mxu0 0
    %3105 = vmatpush2.bf16.msra.mxu0 0
    %3106 = vmatprep.subr.bf16.mxu0 0
    %3107 = vmatpush2.bf16.msra.mxu0 0
    %3108 = vmatprep.subr.bf16.mxu0 0
    %3109 = vmatpush2.bf16.msra.mxu0 0
    %3110 = vmatprep.subr.bf16.mxu0 0
    %3111 = vmatpush2.bf16.msra.mxu0 0
    %3112 = vmatprep.mubr.bf16.mxu0 0
    %3113 = vmatmul.mubr.bf16.gmra.mxu0 %v3075
    %v3114 = vpop.f32.mrf.mxu0
    %v3115 = vadd.f32 0.0, %v3114
    %v3116 = vpop.f32.mrf.mxu0
    %v3117 = vpop.f32.mrf.mxu0
    %v3118 = vpop.f32.mrf.mxu0
    %3119 = vdwg.mxu0
    %v3120 = vpack.c.bf16 %v3115, %v3066
    %v3125 = vunpack.c.l.b16 %v2667
    %v3126 = vunpack.c.l.b16 %v2668
    %v3127 = vunpack.c.l.b16 %v2669
    %v3128 = vunpack.c.l.b16 %v2670
    %v3129 = vpack.c.b16 %v3126, %v3125
    %v3130 = vpack.c.b16 %v3128, %v3127
    %v3134 = vsel %vm149, %v3120, 0
    %3136 = vmatprep.subr.bf16.mxu0 0
    %3137 = vmatpush1.bf16.msra.mxu0 0
    %3138 = vmatprep.subr.bf16.mxu0 0
    %3139 = vmatpush1.bf16.msra.mxu0 0
    %3140 = vmatprep.subr.bf16.mxu0 0
    %3141 = vmatpush1.bf16.msra.mxu0 0
    %3142 = vmatprep.subr.bf16.mxu0 0
    %3143 = vmatpush1.bf16.msra.mxu0 0
    %3144 = vmatprep.subr.bf16.mxu0 0
    %3145 = vmatpush1.bf16.msra.mxu0 0
    %3146 = vmatprep.subr.bf16.mxu0 0
    %3147 = vmatpush1.bf16.msra.mxu0 0
    %3148 = vmatprep.subr.bf16.mxu0 0
    %3149 = vmatpush1.bf16.msra.mxu0 %v3130
    %3150 = vmatprep.subr.bf16.mxu0 0
    %3151 = vmatpush1.bf16.msra.mxu0 %v3129
    %3152 = vmatprep.subr.bf16.mxu0 0
    %3153 = vmatpush2.bf16.msra.mxu0 0
    %3154 = vmatprep.subr.bf16.mxu0 0
    %3155 = vmatpush2.bf16.msra.mxu0 0
    %3156 = vmatprep.subr.bf16.mxu0 0
    %3157 = vmatpush2.bf16.msra.mxu0 0
    %3158 = vmatprep.subr.bf16.mxu0 0
    %3159 = vmatpush2.bf16.msra.mxu0 0
    %3160 = vmatprep.subr.bf16.mxu0 0
    %3161 = vmatpush2.bf16.msra.mxu0 0
    %3162 = vmatprep.subr.bf16.mxu0 0
    %3163 = vmatpush2.bf16.msra.mxu0 0
    %3164 = vmatprep.subr.bf16.mxu0 0
    %3165 = vmatpush2.bf16.msra.mxu0 0
    %3166 = vmatprep.subr.bf16.mxu0 0
    %3167 = vmatpush2.bf16.msra.mxu0 0
    %3168 = vmatprep.mubr.bf16.mxu0 0
    %3169 = vmatmul.mubr.bf16.gmra.mxu0 %v3134
    %v3170 = vpop.f32.mrf.mxu0
    %v3171 = vadd.f32 0.0, %v3170
    %v3172 = vpop.f32.mrf.mxu0
    %v3173 = vpop.f32.mrf.mxu0
    %v3174 = vadd.f32 0.0, %v3173
    %v3175 = vpop.f32.mrf.mxu0
    %3176 = vdwg.mxu0
    %v3181 = vunpack.c.l.b16 %v2663
    %v3182 = vunpack.c.l.b16 %v2664
    %v3183 = vunpack.c.l.b16 %v2665
    %v3184 = vunpack.c.l.b16 %v2666
    %v3185 = vpack.c.b16 %v3182, %v3181
    %v3186 = vpack.c.b16 %v3184, %v3183
    %v3190 = vsel %vm149, %v2893, 0
    %3192 = vmatprep.subr.bf16.mxu0 0
    %3193 = vmatpush1.bf16.msra.mxu0 0
    %3194 = vmatprep.subr.bf16.mxu0 0
    %3195 = vmatpush1.bf16.msra.mxu0 0
    %3196 = vmatprep.subr.bf16.mxu0 0
    %3197 = vmatpush1.bf16.msra.mxu0 0
    %3198 = vmatprep.subr.bf16.mxu0 0
    %3199 = vmatpush1.bf16.msra.mxu0 0
    %3200 = vmatprep.subr.bf16.mxu0 0
    %3201 = vmatpush1.bf16.msra.mxu0 0
    %3202 = vmatprep.subr.bf16.mxu0 0
    %3203 = vmatpush1.bf16.msra.mxu0 0
    %3204 = vmatprep.subr.bf16.mxu0 0
    %3205 = vmatpush1.bf16.msra.mxu0 %v3186
    %3206 = vmatprep.subr.bf16.mxu0 0
    %3207 = vmatpush1.bf16.msra.mxu0 %v3185
    %3208 = vmatprep.subr.bf16.mxu0 0
    %3209 = vmatpush2.bf16.msra.mxu0 0
    %3210 = vmatprep.subr.bf16.mxu0 0
    %3211 = vmatpush2.bf16.msra.mxu0 0
    %3212 = vmatprep.subr.bf16.mxu0 0
    %3213 = vmatpush2.bf16.msra.mxu0 0
    %3214 = vmatprep.subr.bf16.mxu0 0
    %3215 = vmatpush2.bf16.msra.mxu0 0
    %3216 = vmatprep.subr.bf16.mxu0 0
    %3217 = vmatpush2.bf16.msra.mxu0 0
    %3218 = vmatprep.subr.bf16.mxu0 0
    %3219 = vmatpush2.bf16.msra.mxu0 0
    %3220 = vmatprep.subr.bf16.mxu0 0
    %3221 = vmatpush2.bf16.msra.mxu0 0
    %3222 = vmatprep.subr.bf16.mxu0 0
    %3223 = vmatpush2.bf16.msra.mxu0 0
    %3224 = vmatprep.mubr.bf16.mxu0 0
    %3225 = vmatmul.mubr.bf16.gmra.mxu0 %v3190
    %v3226 = vpop.f32.mrf.mxu0
    %v3227 = vadd.f32 %v3171, %v3226
    %v3228 = vpop.f32.mrf.mxu0
    %v3229 = vpop.f32.mrf.mxu0
    %v3230 = vadd.f32 %v3174, %v3229
    %v3231 = vpop.f32.mrf.mxu0
    %3232 = vdwg.mxu0
    %3233 = vrot.lane.b32.xlu0 %v2679, 64
    %v3234 = vpop.permute.xlu0 %3233
    %3235 = vrot.lane.b32.xlu0 %v2681, 64
    %v3236 = vpop.permute.xlu0 %3235
    %v3238 = vsel %vm149, %v3234, 0
    %v3241 = vsel %vm149, %v3236, 0
    %3243 = vmatprep.subr.bf16.mxu0 0
    %3244 = vmatpush1.bf16.xpose.msra.mxu0 0
    %3245 = vmatprep.subr.bf16.mxu0 0
    %3246 = vmatpush1.bf16.xpose.msra.mxu0 0
    %3247 = vmatprep.subr.bf16.mxu0 0
    %3248 = vmatpush1.bf16.xpose.msra.mxu0 0
    %3249 = vmatprep.subr.bf16.mxu0 0
    %3250 = vmatpush1.bf16.xpose.msra.mxu0 0
    %3251 = vmatprep.subr.bf16.mxu0 0
    %3252 = vmatpush1.bf16.xpose.msra.mxu0 0
    %3253 = vmatprep.subr.bf16.mxu0 0
    %3254 = vmatpush1.bf16.xpose.msra.mxu0 0
    %3255 = vmatprep.subr.bf16.mxu0 0
    %3256 = vmatpush1.bf16.xpose.msra.mxu0 0
    %3257 = vmatprep.subr.bf16.mxu0 0
    %3258 = vmatpush1.bf16.xpose.msra.mxu0 %v3241
    %3259 = vmatprep.subr.bf16.mxu0 0
    %3260 = vmatpush2.bf16.xpose.msra.mxu0 0
    %3261 = vmatprep.subr.bf16.mxu0 0
    %3262 = vmatpush2.bf16.xpose.msra.mxu0 0
    %3263 = vmatprep.subr.bf16.mxu0 0
    %3264 = vmatpush2.bf16.xpose.msra.mxu0 0
    %3265 = vmatprep.subr.bf16.mxu0 0
    %3266 = vmatpush2.bf16.xpose.msra.mxu0 0
    %3267 = vmatprep.subr.bf16.mxu0 0
    %3268 = vmatpush2.bf16.xpose.msra.mxu0 0
    %3269 = vmatprep.subr.bf16.mxu0 0
    %3270 = vmatpush2.bf16.xpose.msra.mxu0 0
    %3271 = vmatprep.subr.bf16.mxu0 0
    %3272 = vmatpush2.bf16.xpose.msra.mxu0 0
    %3273 = vmatprep.subr.bf16.mxu0 0
    %3274 = vmatpush2.bf16.xpose.msra.mxu0 0
    %3275 = vmatprep.mubr.bf16.mxu0 0
    %3276 = vmatmul.mubr.bf16.gmra.mxu0 %v3238
    %v3277 = vpop.f32.mrf.mxu0
    %v3278 = vadd.f32 0.0, %v3277
    %v3279 = vpop.f32.mrf.mxu0
    %v3280 = vpop.f32.mrf.mxu0
    %v3281 = vpop.f32.mrf.mxu0
    %3282 = vdwg.mxu0
    %3283 = vrot.lane.b32.xlu0 %v2680, 64
    %v3284 = vpop.permute.xlu0 %3283
    %3285 = vrot.lane.b32.xlu0 %v2682, 64
    %v3286 = vpop.permute.xlu0 %3285
    %v3288 = vsel %vm149, %v3284, 0
    %v3291 = vsel %vm149, %v3286, 0
    %3293 = vmatprep.subr.bf16.mxu0 0
    %3294 = vmatpush1.bf16.xpose.msra.mxu0 0
    %3295 = vmatprep.subr.bf16.mxu0 0
    %3296 = vmatpush1.bf16.xpose.msra.mxu0 0
    %3297 = vmatprep.subr.bf16.mxu0 0
    %3298 = vmatpush1.bf16.xpose.msra.mxu0 0
    %3299 = vmatprep.subr.bf16.mxu0 0
    %3300 = vmatpush1.bf16.xpose.msra.mxu0 0
    %3301 = vmatprep.subr.bf16.mxu0 0
    %3302 = vmatpush1.bf16.xpose.msra.mxu0 0
    %3303 = vmatprep.subr.bf16.mxu0 0
    %3304 = vmatpush1.bf16.xpose.msra.mxu0 0
    %3305 = vmatprep.subr.bf16.mxu0 0
    %3306 = vmatpush1.bf16.xpose.msra.mxu0 0
    %3307 = vmatprep.subr.bf16.mxu0 0
    %3308 = vmatpush1.bf16.xpose.msra.mxu0 %v3291
    %3309 = vmatprep.subr.bf16.mxu0 0
    %3310 = vmatpush2.bf16.xpose.msra.mxu0 0
    %3311 = vmatprep.subr.bf16.mxu0 0
    %3312 = vmatpush2.bf16.xpose.msra.mxu0 0
    %3313 = vmatprep.subr.bf16.mxu0 0
    %3314 = vmatpush2.bf16.xpose.msra.mxu0 0
    %3315 = vmatprep.subr.bf16.mxu0 0
    %3316 = vmatpush2.bf16.xpose.msra.mxu0 0
    %3317 = vmatprep.subr.bf16.mxu0 0
    %3318 = vmatpush2.bf16.xpose.msra.mxu0 0
    %3319 = vmatprep.subr.bf16.mxu0 0
    %3320 = vmatpush2.bf16.xpose.msra.mxu0 0
    %3321 = vmatprep.subr.bf16.mxu0 0
    %3322 = vmatpush2.bf16.xpose.msra.mxu0 0
    %3323 = vmatprep.subr.bf16.mxu0 0
    %3324 = vmatpush2.bf16.xpose.msra.mxu0 0
    %3325 = vmatprep.mubr.bf16.mxu0 0
    %3326 = vmatmul.mubr.bf16.gmra.mxu0 %v3288
    %v3327 = vpop.f32.mrf.mxu0
    %v3328 = vadd.f32 0.0, %v3327
    %v3329 = vpop.f32.mrf.mxu0
    %v3330 = vpop.f32.mrf.mxu0
    %v3331 = vpop.f32.mrf.mxu0
    %3332 = vdwg.mxu0
    %v3333 = vsel %vm970, %v3278, -inf
    %3334 = vmax.xlane.f32.xlu0 %v3333
    %v3335 = vpop.xlane.xlu0 %3334
    %v3336 = vsel %vm970, %v3328, -inf
    %3337 = vmax.xlane.f32.xlu0 %v3336
    %v3338 = vpop.xlane.xlu0 %3337
    %v3339 = vsub.f32 %v3278, %v3335
    %v3340 = vsub.f32 %v3328, %v3338
    %v3341 = vmul.f32 %v3339, 1.442695
    %v3342 = vpow.pop %v3341
    %v3343 = vmul.f32 %v3340, 1.442695
    %v3344 = vpow.pop %v3343
    %v3345 = vsel %vm970, %v3342, 0.0
    %3346 = vadd.xlane.f32.xlu0 %v3345
    %v3347 = vpop.xlane.xlu0 %3346
    %v3348 = vsel %vm970, %v3344, 0.0
    %3349 = vadd.xlane.f32.xlu0 %v3348
    %v3350 = vpop.xlane.xlu0 %3349
    %v3351 = vrcp.pop %v3347
    %v3352 = vrcp.pop %v3350
    %v3353 = vmul.f32 %v3342, %v3351
    %v3354 = vmul.f32 %v3344, %v3352
    %v3355 = vpack.c.bf16 %v3353, %v3353
    %v3356 = vpack.c.bf16 %v3354, %v3354
    %3357 = vrot.lane.b32.xlu0 %v2683, 64
    %v3358 = vpop.permute.xlu0 %3357
    %v3360 = vsel %vm970, %v3355, 0
    %v3363 = vsel %vm998, %v3358, 0
    %3365 = vmatprep.subr.bf16.mxu0 0
    %3366 = vmatpush1.bf16.msra.mxu0 0
    %3367 = vmatprep.subr.bf16.mxu0 0
    %3368 = vmatpush1.bf16.msra.mxu0 0
    %3369 = vmatprep.subr.bf16.mxu0 0
    %3370 = vmatpush1.bf16.msra.mxu0 0
    %3371 = vmatprep.subr.bf16.mxu0 0
    %3372 = vmatpush1.bf16.msra.mxu0 0
    %3373 = vmatprep.subr.bf16.mxu0 0
    %3374 = vmatpush1.bf16.msra.mxu0 0
    %3375 = vmatprep.subr.bf16.mxu0 0
    %3376 = vmatpush1.bf16.msra.mxu0 0
    %3377 = vmatprep.subr.bf16.mxu0 0
    %3378 = vmatpush1.bf16.msra.mxu0 0
    %3379 = vmatprep.subr.bf16.mxu0 0
    %3380 = vmatpush1.bf16.msra.mxu0 %v3363
    %3381 = vmatprep.subr.bf16.mxu0 0
    %3382 = vmatpush2.bf16.msra.mxu0 0
    %3383 = vmatprep.subr.bf16.mxu0 0
    %3384 = vmatpush2.bf16.msra.mxu0 0
    %3385 = vmatprep.subr.bf16.mxu0 0
    %3386 = vmatpush2.bf16.msra.mxu0 0
    %3387 = vmatprep.subr.bf16.mxu0 0
    %3388 = vmatpush2.bf16.msra.mxu0 0
    %3389 = vmatprep.subr.bf16.mxu0 0
    %3390 = vmatpush2.bf16.msra.mxu0 0
    %3391 = vmatprep.subr.bf16.mxu0 0
    %3392 = vmatpush2.bf16.msra.mxu0 0
    %3393 = vmatprep.subr.bf16.mxu0 0
    %3394 = vmatpush2.bf16.msra.mxu0 0
    %3395 = vmatprep.subr.bf16.mxu0 0
    %3396 = vmatpush2.bf16.msra.mxu0 0
    %3397 = vmatprep.mubr.bf16.mxu0 0
    %3398 = vmatmul.mubr.bf16.gmra.mxu0 %v3360
    %v3399 = vpop.f32.mrf.mxu0
    %v3400 = vadd.f32 0.0, %v3399
    %v3401 = vpop.f32.mrf.mxu0
    %v3402 = vpop.f32.mrf.mxu0
    %v3403 = vpop.f32.mrf.mxu0
    %3404 = vdwg.mxu0
    %3405 = vrot.lane.b32.xlu0 %v2684, 64
    %v3406 = vpop.permute.xlu0 %3405
    %v3408 = vsel %vm970, %v3356, 0
    %v3411 = vsel %vm998, %v3406, 0
    %3413 = vmatprep.subr.bf16.mxu0 0
    %3414 = vmatpush1.bf16.msra.mxu0 0
    %3415 = vmatprep.subr.bf16.mxu0 0
    %3416 = vmatpush1.bf16.msra.mxu0 0
    %3417 = vmatprep.subr.bf16.mxu0 0
    %3418 = vmatpush1.bf16.msra.mxu0 0
    %3419 = vmatprep.subr.bf16.mxu0 0
    %3420 = vmatpush1.bf16.msra.mxu0 0
    %3421 = vmatprep.subr.bf16.mxu0 0
    %3422 = vmatpush1.bf16.msra.mxu0 0
    %3423 = vmatprep.subr.bf16.mxu0 0
    %3424 = vmatpush1.bf16.msra.mxu0 0
    %3425 = vmatprep.subr.bf16.mxu0 0
    %3426 = vmatpush1.bf16.msra.mxu0 0
    %3427 = vmatprep.subr.bf16.mxu0 0
    %3428 = vmatpush1.bf16.msra.mxu0 %v3411
    %3429 = vmatprep.subr.bf16.mxu0 0
    %3430 = vmatpush2.bf16.msra.mxu0 0
    %3431 = vmatprep.subr.bf16.mxu0 0
    %3432 = vmatpush2.bf16.msra.mxu0 0
    %3433 = vmatprep.subr.bf16.mxu0 0
    %3434 = vmatpush2.bf16.msra.mxu0 0
    %3435 = vmatprep.subr.bf16.mxu0 0
    %3436 = vmatpush2.bf16.msra.mxu0 0
    %3437 = vmatprep.subr.bf16.mxu0 0
    %3438 = vmatpush2.bf16.msra.mxu0 0
    %3439 = vmatprep.subr.bf16.mxu0 0
    %3440 = vmatpush2.bf16.msra.mxu0 0
    %3441 = vmatprep.subr.bf16.mxu0 0
    %3442 = vmatpush2.bf16.msra.mxu0 0
    %3443 = vmatprep.subr.bf16.mxu0 0
    %3444 = vmatpush2.bf16.msra.mxu0 0
    %3445 = vmatprep.mubr.bf16.mxu0 0
    %3446 = vmatmul.mubr.bf16.gmra.mxu0 %v3408
    %v3447 = vpop.f32.mrf.mxu0
    %v3448 = vadd.f32 0.0, %v3447
    %v3449 = vpop.f32.mrf.mxu0
    %v3450 = vpop.f32.mrf.mxu0
    %v3451 = vpop.f32.mrf.mxu0
    %3452 = vdwg.mxu0
    %v3453 = vpack.c.bf16 %v3448, %v3400
    %v3458 = vunpack.c.l.b16 %v2671
    %v3459 = vunpack.c.l.b16 %v2672
    %v3460 = vunpack.c.l.b16 %v2673
    %v3461 = vunpack.c.l.b16 %v2674
    %v3462 = vpack.c.b16 %v3459, %v3458
    %v3463 = vpack.c.b16 %v3461, %v3460
    %v3467 = vsel %vm149, %v3453, 0
    %3469 = vmatprep.subr.bf16.mxu0 0
    %3470 = vmatpush1.bf16.msra.mxu0 0
    %3471 = vmatprep.subr.bf16.mxu0 0
    %3472 = vmatpush1.bf16.msra.mxu0 0
    %3473 = vmatprep.subr.bf16.mxu0 0
    %3474 = vmatpush1.bf16.msra.mxu0 0
    %3475 = vmatprep.subr.bf16.mxu0 0
    %3476 = vmatpush1.bf16.msra.mxu0 0
    %3477 = vmatprep.subr.bf16.mxu0 0
    %3478 = vmatpush1.bf16.msra.mxu0 0
    %3479 = vmatprep.subr.bf16.mxu0 0
    %3480 = vmatpush1.bf16.msra.mxu0 0
    %3481 = vmatprep.subr.bf16.mxu0 0
    %3482 = vmatpush1.bf16.msra.mxu0 %v3463
    %3483 = vmatprep.subr.bf16.mxu0 0
    %3484 = vmatpush1.bf16.msra.mxu0 %v3462
    %3485 = vmatprep.subr.bf16.mxu0 0
    %3486 = vmatpush2.bf16.msra.mxu0 0
    %3487 = vmatprep.subr.bf16.mxu0 0
    %3488 = vmatpush2.bf16.msra.mxu0 0
    %3489 = vmatprep.subr.bf16.mxu0 0
    %3490 = vmatpush2.bf16.msra.mxu0 0
    %3491 = vmatprep.subr.bf16.mxu0 0
    %3492 = vmatpush2.bf16.msra.mxu0 0
    %3493 = vmatprep.subr.bf16.mxu0 0
    %3494 = vmatpush2.bf16.msra.mxu0 0
    %3495 = vmatprep.subr.bf16.mxu0 0
    %3496 = vmatpush2.bf16.msra.mxu0 0
    %3497 = vmatprep.subr.bf16.mxu0 0
    %3498 = vmatpush2.bf16.msra.mxu0 0
    %3499 = vmatprep.subr.bf16.mxu0 0
    %3500 = vmatpush2.bf16.msra.mxu0 0
    %3501 = vmatprep.mubr.bf16.mxu0 0
    %3502 = vmatmul.mubr.bf16.gmra.mxu0 %v3467
    %v3503 = vpop.f32.mrf.mxu0
    %v3504 = vadd.f32 0.0, %v3503
    %v3505 = vpop.f32.mrf.mxu0
    %v3506 = vpop.f32.mrf.mxu0
    %v3507 = vadd.f32 0.0, %v3506
    %v3508 = vpop.f32.mrf.mxu0
    %3509 = vdwg.mxu0
    %v3510 = vadd.f32 %v3227, %v3504
    %v3511 = vadd.f32 %v3230, %v3507
    %3512 = vrot.lane.b32.xlu0 %v2679, 32
    %v3513 = vpop.permute.xlu0 %3512
    %3514 = vrot.lane.b32.xlu0 %v2681, 32
    %v3515 = vpop.permute.xlu0 %3514
    %v3517 = vsel %vm149, %v3513, 0
    %v3520 = vsel %vm149, %v3515, 0
    %3522 = vmatprep.subr.bf16.mxu0 0
    %3523 = vmatpush1.bf16.xpose.msra.mxu0 0
    %3524 = vmatprep.subr.bf16.mxu0 0
    %3525 = vmatpush1.bf16.xpose.msra.mxu0 0
    %3526 = vmatprep.subr.bf16.mxu0 0
    %3527 = vmatpush1.bf16.xpose.msra.mxu0 0
    %3528 = vmatprep.subr.bf16.mxu0 0
    %3529 = vmatpush1.bf16.xpose.msra.mxu0 0
    %3530 = vmatprep.subr.bf16.mxu0 0
    %3531 = vmatpush1.bf16.xpose.msra.mxu0 0
    %3532 = vmatprep.subr.bf16.mxu0 0
    %3533 = vmatpush1.bf16.xpose.msra.mxu0 0
    %3534 = vmatprep.subr.bf16.mxu0 0
    %3535 = vmatpush1.bf16.xpose.msra.mxu0 0
    %3536 = vmatprep.subr.bf16.mxu0 0
    %3537 = vmatpush1.bf16.xpose.msra.mxu0 %v3520
    %3538 = vmatprep.subr.bf16.mxu0 0
    %3539 = vmatpush2.bf16.xpose.msra.mxu0 0
    %3540 = vmatprep.subr.bf16.mxu0 0
    %3541 = vmatpush2.bf16.xpose.msra.mxu0 0
    %3542 = vmatprep.subr.bf16.mxu0 0
    %3543 = vmatpush2.bf16.xpose.msra.mxu0 0
    %3544 = vmatprep.subr.bf16.mxu0 0
    %3545 = vmatpush2.bf16.xpose.msra.mxu0 0
    %3546 = vmatprep.subr.bf16.mxu0 0
    %3547 = vmatpush2.bf16.xpose.msra.mxu0 0
    %3548 = vmatprep.subr.bf16.mxu0 0
    %3549 = vmatpush2.bf16.xpose.msra.mxu0 0
    %3550 = vmatprep.subr.bf16.mxu0 0
    %3551 = vmatpush2.bf16.xpose.msra.mxu0 0
    %3552 = vmatprep.subr.bf16.mxu0 0
    %3553 = vmatpush2.bf16.xpose.msra.mxu0 0
    %3554 = vmatprep.mubr.bf16.mxu0 0
    %3555 = vmatmul.mubr.bf16.gmra.mxu0 %v3517
    %v3556 = vpop.f32.mrf.mxu0
    %v3557 = vadd.f32 0.0, %v3556
    %v3558 = vpop.f32.mrf.mxu0
    %v3559 = vpop.f32.mrf.mxu0
    %v3560 = vpop.f32.mrf.mxu0
    %3561 = vdwg.mxu0
    %3562 = vrot.lane.b32.xlu0 %v2680, 32
    %v3563 = vpop.permute.xlu0 %3562
    %3564 = vrot.lane.b32.xlu0 %v2682, 32
    %v3565 = vpop.permute.xlu0 %3564
    %v3567 = vsel %vm149, %v3563, 0
    %v3570 = vsel %vm149, %v3565, 0
    %3572 = vmatprep.subr.bf16.mxu0 0
    %3573 = vmatpush1.bf16.xpose.msra.mxu0 0
    %3574 = vmatprep.subr.bf16.mxu0 0
    %3575 = vmatpush1.bf16.xpose.msra.mxu0 0
    %3576 = vmatprep.subr.bf16.mxu0 0
    %3577 = vmatpush1.bf16.xpose.msra.mxu0 0
    %3578 = vmatprep.subr.bf16.mxu0 0
    %3579 = vmatpush1.bf16.xpose.msra.mxu0 0
    %3580 = vmatprep.subr.bf16.mxu0 0
    %3581 = vmatpush1.bf16.xpose.msra.mxu0 0
    %3582 = vmatprep.subr.bf16.mxu0 0
    %3583 = vmatpush1.bf16.xpose.msra.mxu0 0
    %3584 = vmatprep.subr.bf16.mxu0 0
    %3585 = vmatpush1.bf16.xpose.msra.mxu0 0
    %3586 = vmatprep.subr.bf16.mxu0 0
    %3587 = vmatpush1.bf16.xpose.msra.mxu0 %v3570
    %3588 = vmatprep.subr.bf16.mxu0 0
    %3589 = vmatpush2.bf16.xpose.msra.mxu0 0
    %3590 = vmatprep.subr.bf16.mxu0 0
    %3591 = vmatpush2.bf16.xpose.msra.mxu0 0
    %3592 = vmatprep.subr.bf16.mxu0 0
    %3593 = vmatpush2.bf16.xpose.msra.mxu0 0
    %3594 = vmatprep.subr.bf16.mxu0 0
    %3595 = vmatpush2.bf16.xpose.msra.mxu0 0
    %3596 = vmatprep.subr.bf16.mxu0 0
    %3597 = vmatpush2.bf16.xpose.msra.mxu0 0
    %3598 = vmatprep.subr.bf16.mxu0 0
    %3599 = vmatpush2.bf16.xpose.msra.mxu0 0
    %3600 = vmatprep.subr.bf16.mxu0 0
    %3601 = vmatpush2.bf16.xpose.msra.mxu0 0
    %3602 = vmatprep.subr.bf16.mxu0 0
    %3603 = vmatpush2.bf16.xpose.msra.mxu0 0
    %3604 = vmatprep.mubr.bf16.mxu0 0
    %3605 = vmatmul.mubr.bf16.gmra.mxu0 %v3567
    %v3606 = vpop.f32.mrf.mxu0
    %v3607 = vadd.f32 0.0, %v3606
    %v3608 = vpop.f32.mrf.mxu0
    %v3609 = vpop.f32.mrf.mxu0
    %v3610 = vpop.f32.mrf.mxu0
    %3611 = vdwg.mxu0
    %v3612 = vsel %vm970, %v3557, -inf
    %3613 = vmax.xlane.f32.xlu0 %v3612
    %v3614 = vpop.xlane.xlu0 %3613
    %v3615 = vsel %vm970, %v3607, -inf
    %3616 = vmax.xlane.f32.xlu0 %v3615
    %v3617 = vpop.xlane.xlu0 %3616
    %v3618 = vsub.f32 %v3557, %v3614
    %v3619 = vsub.f32 %v3607, %v3617
    %v3620 = vmul.f32 %v3618, 1.442695
    %v3621 = vpow.pop %v3620
    %v3622 = vmul.f32 %v3619, 1.442695
    %v3623 = vpow.pop %v3622
    %v3624 = vsel %vm970, %v3621, 0.0
    %3625 = vadd.xlane.f32.xlu0 %v3624
    %v3626 = vpop.xlane.xlu0 %3625
    %v3627 = vsel %vm970, %v3623, 0.0
    %3628 = vadd.xlane.f32.xlu0 %v3627
    %v3629 = vpop.xlane.xlu0 %3628
    %v3630 = vrcp.pop %v3626
    %v3631 = vrcp.pop %v3629
    %v3632 = vmul.f32 %v3621, %v3630
    %v3633 = vmul.f32 %v3623, %v3631
    %v3634 = vpack.c.bf16 %v3632, %v3632
    %v3635 = vpack.c.bf16 %v3633, %v3633
    %3636 = vrot.lane.b32.xlu0 %v2683, 32
    %v3637 = vpop.permute.xlu0 %3636
    %v3639 = vsel %vm970, %v3634, 0
    %v3642 = vsel %vm998, %v3637, 0
    %3644 = vmatprep.subr.bf16.mxu0 0
    %3645 = vmatpush1.bf16.msra.mxu0 0
    %3646 = vmatprep.subr.bf16.mxu0 0
    %3647 = vmatpush1.bf16.msra.mxu0 0
    %3648 = vmatprep.subr.bf16.mxu0 0
    %3649 = vmatpush1.bf16.msra.mxu0 0
    %3650 = vmatprep.subr.bf16.mxu0 0
    %3651 = vmatpush1.bf16.msra.mxu0 0
    %3652 = vmatprep.subr.bf16.mxu0 0
    %3653 = vmatpush1.bf16.msra.mxu0 0
    %3654 = vmatprep.subr.bf16.mxu0 0
    %3655 = vmatpush1.bf16.msra.mxu0 0
    %3656 = vmatprep.subr.bf16.mxu0 0
    %3657 = vmatpush1.bf16.msra.mxu0 0
    %3658 = vmatprep.subr.bf16.mxu0 0
    %3659 = vmatpush1.bf16.msra.mxu0 %v3642
    %3660 = vmatprep.subr.bf16.mxu0 0
    %3661 = vmatpush2.bf16.msra.mxu0 0
    %3662 = vmatprep.subr.bf16.mxu0 0
    %3663 = vmatpush2.bf16.msra.mxu0 0
    %3664 = vmatprep.subr.bf16.mxu0 0
    %3665 = vmatpush2.bf16.msra.mxu0 0
    %3666 = vmatprep.subr.bf16.mxu0 0
    %3667 = vmatpush2.bf16.msra.mxu0 0
    %3668 = vmatprep.subr.bf16.mxu0 0
    %3669 = vmatpush2.bf16.msra.mxu0 0
    %3670 = vmatprep.subr.bf16.mxu0 0
    %3671 = vmatpush2.bf16.msra.mxu0 0
    %3672 = vmatprep.subr.bf16.mxu0 0
    %3673 = vmatpush2.bf16.msra.mxu0 0
    %3674 = vmatprep.subr.bf16.mxu0 0
    %3675 = vmatpush2.bf16.msra.mxu0 0
    %3676 = vmatprep.mubr.bf16.mxu0 0
    %3677 = vmatmul.mubr.bf16.gmra.mxu0 %v3639
    %v3678 = vpop.f32.mrf.mxu0
    %v3679 = vadd.f32 0.0, %v3678
    %v3680 = vpop.f32.mrf.mxu0
    %v3681 = vpop.f32.mrf.mxu0
    %v3682 = vpop.f32.mrf.mxu0
    %3683 = vdwg.mxu0
    %3684 = vrot.lane.b32.xlu0 %v2684, 32
    %v3685 = vpop.permute.xlu0 %3684
    %v3687 = vsel %vm970, %v3635, 0
    %v3690 = vsel %vm998, %v3685, 0
    %3692 = vmatprep.subr.bf16.mxu0 0
    %3693 = vmatpush1.bf16.msra.mxu0 0
    %3694 = vmatprep.subr.bf16.mxu0 0
    %3695 = vmatpush1.bf16.msra.mxu0 0
    %3696 = vmatprep.subr.bf16.mxu0 0
    %3697 = vmatpush1.bf16.msra.mxu0 0
    %3698 = vmatprep.subr.bf16.mxu0 0
    %3699 = vmatpush1.bf16.msra.mxu0 0
    %3700 = vmatprep.subr.bf16.mxu0 0
    %3701 = vmatpush1.bf16.msra.mxu0 0
    %3702 = vmatprep.subr.bf16.mxu0 0
    %3703 = vmatpush1.bf16.msra.mxu0 0
    %3704 = vmatprep.subr.bf16.mxu0 0
    %3705 = vmatpush1.bf16.msra.mxu0 0
    %3706 = vmatprep.subr.bf16.mxu0 0
    %3707 = vmatpush1.bf16.msra.mxu0 %v3690
    %3708 = vmatprep.subr.bf16.mxu0 0
    %3709 = vmatpush2.bf16.msra.mxu0 0
    %3710 = vmatprep.subr.bf16.mxu0 0
    %3711 = vmatpush2.bf16.msra.mxu0 0
    %3712 = vmatprep.subr.bf16.mxu0 0
    %3713 = vmatpush2.bf16.msra.mxu0 0
    %3714 = vmatprep.subr.bf16.mxu0 0
    %3715 = vmatpush2.bf16.msra.mxu0 0
    %3716 = vmatprep.subr.bf16.mxu0 0
    %3717 = vmatpush2.bf16.msra.mxu0 0
    %3718 = vmatprep.subr.bf16.mxu0 0
    %3719 = vmatpush2.bf16.msra.mxu0 0
    %3720 = vmatprep.subr.bf16.mxu0 0
    %3721 = vmatpush2.bf16.msra.mxu0 0
    %3722 = vmatprep.subr.bf16.mxu0 0
    %3723 = vmatpush2.bf16.msra.mxu0 0
    %3724 = vmatprep.mubr.bf16.mxu0 0
    %3725 = vmatmul.mubr.bf16.gmra.mxu0 %v3687
    %v3726 = vpop.f32.mrf.mxu0
    %v3727 = vadd.f32 0.0, %v3726
    %v3728 = vpop.f32.mrf.mxu0
    %v3729 = vpop.f32.mrf.mxu0
    %v3730 = vpop.f32.mrf.mxu0
    %3731 = vdwg.mxu0
    %v3732 = vpack.c.bf16 %v3727, %v3679
    %v3737 = vunpack.c.l.b16 %v2675
    %v3738 = vunpack.c.l.b16 %v2676
    %v3739 = vunpack.c.l.b16 %v2677
    %v3740 = vunpack.c.l.b16 %v2678
    %v3741 = vpack.c.b16 %v3738, %v3737
    %v3742 = vpack.c.b16 %v3740, %v3739
    %v3746 = vsel %vm149, %v3732, 0
    %3748 = vmatprep.subr.bf16.mxu0 0
    %3749 = vmatpush1.bf16.msra.mxu0 0
    %3750 = vmatprep.subr.bf16.mxu0 0
    %3751 = vmatpush1.bf16.msra.mxu0 0
    %3752 = vmatprep.subr.bf16.mxu0 0
    %3753 = vmatpush1.bf16.msra.mxu0 0
    %3754 = vmatprep.subr.bf16.mxu0 0
    %3755 = vmatpush1.bf16.msra.mxu0 0
    %3756 = vmatprep.subr.bf16.mxu0 0
    %3757 = vmatpush1.bf16.msra.mxu0 0
    %3758 = vmatprep.subr.bf16.mxu0 0
    %3759 = vmatpush1.bf16.msra.mxu0 0
    %3760 = vmatprep.subr.bf16.mxu0 0
    %3761 = vmatpush1.bf16.msra.mxu0 %v3742
    %3762 = vmatprep.subr.bf16.mxu0 0
    %3763 = vmatpush1.bf16.msra.mxu0 %v3741
    %3764 = vmatprep.subr.bf16.mxu0 0
    %3765 = vmatpush2.bf16.msra.mxu0 0
    %3766 = vmatprep.subr.bf16.mxu0 0
    %3767 = vmatpush2.bf16.msra.mxu0 0
    %3768 = vmatprep.subr.bf16.mxu0 0
    %3769 = vmatpush2.bf16.msra.mxu0 0
    %3770 = vmatprep.subr.bf16.mxu0 0
    %3771 = vmatpush2.bf16.msra.mxu0 0
    %3772 = vmatprep.subr.bf16.mxu0 0
    %3773 = vmatpush2.bf16.msra.mxu0 0
    %3774 = vmatprep.subr.bf16.mxu0 0
    %3775 = vmatpush2.bf16.msra.mxu0 0
    %3776 = vmatprep.subr.bf16.mxu0 0
    %3777 = vmatpush2.bf16.msra.mxu0 0
    %3778 = vmatprep.subr.bf16.mxu0 0
    %3779 = vmatpush2.bf16.msra.mxu0 0
    %3780 = vmatprep.mubr.bf16.mxu0 0
    %3781 = vmatmul.mubr.bf16.gmra.mxu0 %v3746
    %v3782 = vpop.f32.mrf.mxu0
    %v3783 = vadd.f32 0.0, %v3782
    %v3784 = vpop.f32.mrf.mxu0
    %v3785 = vpop.f32.mrf.mxu0
    %v3786 = vadd.f32 0.0, %v3785
    %v3787 = vpop.f32.mrf.mxu0
    %3788 = vdwg.mxu0
    %v3789 = vadd.f32 %v3510, %v3783
    %v3790 = vadd.f32 %v3511, %v3786
    %v3791 = vlaneseq
    %v3792 = vshrl.u32 %v3791, 7
    %v3793 = vsub.s32 0, %v3792
    %v3794 = vrot.slane %v2397, %v3793
    %v3795 = vadd.f32 %v3789, %v3794
    %v3796 = vadd.f32 %v3790, %v3794
    %v3797 = vadd.f32 %v2394, %v3795
    %v3798 = vadd.f32 %v2395, %v3796
    %3799 = vadd.xlane.f32.xlu0 %v3797
    %v3800 = vpop.xlane.xlu0 %3799
    %3801 = vadd.xlane.f32.xlu0 %v3798
    %v3802 = vpop.xlane.xlu0 %3801
    %v3803 = vmul.f32 %v3800, %v1998
    %v3804 = vmul.f32 %v3802, %v1998
    %v3805 = vsub.f32 %v3797, %v3803
    %v3806 = vsub.f32 %v3798, %v3804
    %v3807 = vmul.f32 %v3805, %v3805
    %v3808 = vmul.f32 %v3806, %v3806
    %3809 = vadd.xlane.f32.xlu0 %v3807
    %v3810 = vpop.xlane.xlu0 %3809
    %3811 = vadd.xlane.f32.xlu0 %v3808
    %v3812 = vpop.xlane.xlu0 %3811
    %v3813 = vmul.f32 %v3810, %v1998
    %v3814 = vmul.f32 %v3812, %v1998
    %v3815 = vadd.f32 %v3813, 1e-05
    %v3816 = vadd.f32 %v3814, 1e-05
    %v3817 = vrsqrt.pop %v3815
    %v3818 = vrsqrt.pop %v3816
    %v3819 = vmul.f32 %v3805, %v3817
    %v3820 = vmul.f32 %v3806, %v3818
    %v3821 = vlaneseq
    %v3822 = vshrl.u32 %v3821, 7
    %v3823 = vsub.s32 1, %v3822
    %v3824 = vrot.slane %v2397, %v3823
    %v3825 = vmul.f32 %v3819, %v3824
    %v3826 = vmul.f32 %v3820, %v3824
    %v3827 = vlaneseq
    %v3828 = vshrl.u32 %v3827, 7
    %v3829 = vsub.s32 2, %v3828
    %v3830 = vrot.slane %v2397, %v3829
    %v3831 = vadd.f32 %v3825, %v3830
    %v3832 = vadd.f32 %v3826, %v3830
    %v3833 = vpack.c.bf16 %v3832, %v3831
    %s3834 = scalar_lea.vmem [#allocation7], 128
    %v3835 = vld [vmem:[%s3834] sm:$0xff]
    %v3836 = vld [vmem:[%s3834 + $0x8] sm:$0xff]
    %v3837 = vld [vmem:[%s3834 + $0x10] sm:$0xff]
    %v3838 = vld [vmem:[%s3834 + $0x18] sm:$0xff]
    %v3839 = vld [vmem:[%s3834 + $0x20] sm:$0xff]
    %v3840 = vld [vmem:[%s3834 + $0x28] sm:$0xff]
    %v3841 = vld [vmem:[%s3834 + $0x30] sm:$0xff]
    %v3842 = vld [vmem:[%s3834 + $0x38] sm:$0xff]
    %v3843 = vld [vmem:[%s3834 + $0x40] sm:$0xff]
    %v3844 = vld [vmem:[%s3834 + $0x48] sm:$0xff]
    %v3845 = vld [vmem:[%s3834 + $0x50] sm:$0xff]
    %v3846 = vld [vmem:[%s3834 + $0x58] sm:$0xff]
    %v3847 = vld [vmem:[%s3834 + $0x60] sm:$0xff]
    %v3848 = vld [vmem:[%s3834 + $0x68] sm:$0xff]
    %v3849 = vld [vmem:[%s3834 + $0x70] sm:$0xff]
    %v3850 = vld [vmem:[%s3834 + $0x78] sm:$0xff]
    %s3851 = scalar_lea.vmem [#allocation8], 2
    %v3852 = vld [vmem:[%s3851] sm:$0x3]
    %v3854 = vlaneseq
    %v3855 = vshrl.u32 %v3854, 7
    %v3856 = vsub.s32 0, %v3855
    %v3857 = vrot.slane %v3852, %v3856
    %v3858 = vlaneseq
    %v3859 = vshrl.u32 %v3858, 7
    %v3860 = vsub.s32 1, %v3859
    %v3861 = vrot.slane %v3852, %v3860
    %v3880 = vunpack.c.l.b16 %v3835
    %v3881 = vunpack.c.h.b16 %v3835
    %v3882 = vunpack.c.l.b16 %v3836
    %v3883 = vunpack.c.h.b16 %v3836
    %v3884 = vunpack.c.l.b16 %v3837
    %v3885 = vunpack.c.h.b16 %v3837
    %v3886 = vunpack.c.l.b16 %v3838
    %v3887 = vunpack.c.h.b16 %v3838
    %v3888 = vunpack.c.l.b16 %v3839
    %v3889 = vunpack.c.h.b16 %v3839
    %v3890 = vunpack.c.l.b16 %v3840
    %v3891 = vunpack.c.h.b16 %v3840
    %v3892 = vunpack.c.l.b16 %v3841
    %v3893 = vunpack.c.h.b16 %v3841
    %v3894 = vunpack.c.l.b16 %v3842
    %v3895 = vunpack.c.h.b16 %v3842
    %v3896 = vunpack.c.l.b16 %v3843
    %v3897 = vunpack.c.h.b16 %v3843
    %v3898 = vunpack.c.l.b16 %v3844
    %v3899 = vunpack.c.h.b16 %v3844
    %v3900 = vunpack.c.l.b16 %v3845
    %v3901 = vunpack.c.h.b16 %v3845
    %v3902 = vunpack.c.l.b16 %v3846
    %v3903 = vunpack.c.h.b16 %v3846
    %v3904 = vunpack.c.l.b16 %v3847
    %v3905 = vunpack.c.h.b16 %v3847
    %v3906 = vunpack.c.l.b16 %v3848
    %v3907 = vunpack.c.h.b16 %v3848
    %v3908 = vunpack.c.l.b16 %v3849
    %v3909 = vunpack.c.h.b16 %v3849
    %v3910 = vunpack.c.l.b16 %v3850
    %v3911 = vunpack.c.h.b16 %v3850
    %v3912 = vpack.c.b16 %v3882, %v3880
    %v3913 = vpack.c.b16 %v3883, %v3881
    %v3914 = vpack.c.b16 %v3886, %v3884
    %v3915 = vpack.c.b16 %v3887, %v3885
    %v3916 = vpack.c.b16 %v3890, %v3888
    %v3917 = vpack.c.b16 %v3891, %v3889
    %v3918 = vpack.c.b16 %v3894, %v3892
    %v3919 = vpack.c.b16 %v3895, %v3893
    %v3920 = vpack.c.b16 %v3898, %v3896
    %v3921 = vpack.c.b16 %v3899, %v3897
    %v3922 = vpack.c.b16 %v3902, %v3900
    %v3923 = vpack.c.b16 %v3903, %v3901
    %v3924 = vpack.c.b16 %v3906, %v3904
    %v3925 = vpack.c.b16 %v3907, %v3905
    %v3926 = vpack.c.b16 %v3910, %v3908
    %v3927 = vpack.c.b16 %v3911, %v3909
    %3944 = vmatprep.subr.bf16.mxu0 %v3927
    %3945 = vmatpush1.bf16.msra.mxu0 %v3926
    %3946 = vmatprep.subr.bf16.mxu0 %v3925
    %3947 = vmatpush1.bf16.msra.mxu0 %v3924
    %3948 = vmatprep.subr.bf16.mxu0 %v3923
    %3949 = vmatpush1.bf16.msra.mxu0 %v3922
    %3950 = vmatprep.subr.bf16.mxu0 %v3921
    %3951 = vmatpush1.bf16.msra.mxu0 %v3920
    %3952 = vmatprep.subr.bf16.mxu0 %v3919
    %3953 = vmatpush1.bf16.msra.mxu0 %v3918
    %3954 = vmatprep.subr.bf16.mxu0 %v3917
    %3955 = vmatpush1.bf16.msra.mxu0 %v3916
    %3956 = vmatprep.subr.bf16.mxu0 %v3915
    %3957 = vmatpush1.bf16.msra.mxu0 %v3914
    %3958 = vmatprep.subr.bf16.mxu0 %v3913
    %3959 = vmatpush1.bf16.msra.mxu0 %v3912
    %3960 = vmatprep.subr.bf16.mxu0 0
    %3961 = vmatpush2.bf16.msra.mxu0 0
    %3962 = vmatprep.subr.bf16.mxu0 0
    %3963 = vmatpush2.bf16.msra.mxu0 0
    %3964 = vmatprep.subr.bf16.mxu0 0
    %3965 = vmatpush2.bf16.msra.mxu0 0
    %3966 = vmatprep.subr.bf16.mxu0 0
    %3967 = vmatpush2.bf16.msra.mxu0 0
    %3968 = vmatprep.subr.bf16.mxu0 0
    %3969 = vmatpush2.bf16.msra.mxu0 0
    %3970 = vmatprep.subr.bf16.mxu0 0
    %3971 = vmatpush2.bf16.msra.mxu0 0
    %3972 = vmatprep.subr.bf16.mxu0 0
    %3973 = vmatpush2.bf16.msra.mxu0 0
    %3974 = vmatprep.subr.bf16.mxu0 0
    %3975 = vmatpush2.bf16.msra.mxu0 0
    %3976 = vmatprep.mubr.bf16.mxu0 0
    %3977 = vmatmul.mubr.bf16.gmra.mxu0 %v3833
    %v3978 = vpop.f32.mrf.mxu0
    %v3979 = vadd.f32 %v3857, %v3978
    %v3980 = vpop.f32.mrf.mxu0
    %v3981 = vadd.f32 %v3861, %v3980
    %v3982 = vpop.f32.mrf.mxu0
    %v3983 = vadd.f32 %v3857, %v3982
    %v3984 = vpop.f32.mrf.mxu0
    %v3985 = vadd.f32 %v3861, %v3984
    %3986 = vdwg.mxu0
    %v3987 = vmax.f32 %v3979, 0.0
    %v3988 = vmax.f32 %v3981, 0.0
    %v3989 = vmax.f32 %v3983, 0.0
    %v3990 = vmax.f32 %v3985, 0.0
    %v3991 = vpack.c.bf16 %v3989, %v3987
    %v3992 = vpack.c.bf16 %v3990, %v3988
    %s3993 = scalar_lea.vmem [#allocation10], 128
    %v3994 = vld [vmem:[%s3993] sm:$0xf]
    %v3995 = vld [vmem:[%s3993 + $0x4] sm:$0xf]
    %v3996 = vld [vmem:[%s3993 + $0x8] sm:$0xf]
    %v3997 = vld [vmem:[%s3993 + $0xc] sm:$0xf]
    %v3998 = vld [vmem:[%s3993 + $0x10] sm:$0xf]
    %v3999 = vld [vmem:[%s3993 + $0x14] sm:$0xf]
    %v4000 = vld [vmem:[%s3993 + $0x18] sm:$0xf]
    %v4001 = vld [vmem:[%s3993 + $0x1c] sm:$0xf]
    %v4002 = vld [vmem:[%s3993 + $0x20] sm:$0xf]
    %v4003 = vld [vmem:[%s3993 + $0x24] sm:$0xf]
    %v4004 = vld [vmem:[%s3993 + $0x28] sm:$0xf]
    %v4005 = vld [vmem:[%s3993 + $0x2c] sm:$0xf]
    %v4006 = vld [vmem:[%s3993 + $0x30] sm:$0xf]
    %v4007 = vld [vmem:[%s3993 + $0x34] sm:$0xf]
    %v4008 = vld [vmem:[%s3993 + $0x38] sm:$0xf]
    %v4009 = vld [vmem:[%s3993 + $0x3c] sm:$0xf]
    %v4010 = vld [vmem:[%s3993 + $0x40] sm:$0xf]
    %v4011 = vld [vmem:[%s3993 + $0x44] sm:$0xf]
    %v4012 = vld [vmem:[%s3993 + $0x48] sm:$0xf]
    %v4013 = vld [vmem:[%s3993 + $0x4c] sm:$0xf]
    %v4014 = vld [vmem:[%s3993 + $0x50] sm:$0xf]
    %v4015 = vld [vmem:[%s3993 + $0x54] sm:$0xf]
    %v4016 = vld [vmem:[%s3993 + $0x58] sm:$0xf]
    %v4017 = vld [vmem:[%s3993 + $0x5c] sm:$0xf]
    %v4018 = vld [vmem:[%s3993 + $0x60] sm:$0xf]
    %v4019 = vld [vmem:[%s3993 + $0x64] sm:$0xf]
    %v4020 = vld [vmem:[%s3993 + $0x68] sm:$0xf]
    %v4021 = vld [vmem:[%s3993 + $0x6c] sm:$0xf]
    %v4022 = vld [vmem:[%s3993 + $0x70] sm:$0xf]
    %v4023 = vld [vmem:[%s3993 + $0x74] sm:$0xf]
    %v4024 = vld [vmem:[%s3993 + $0x78] sm:$0xf]
    %v4025 = vld [vmem:[%s3993 + $0x7c] sm:$0xf]
    %v4026 = vlaneseq
    %v4027 = vshrl.u32 %v4026, 7
    %v4028 = vsub.s32 3, %v4027
    %v4029 = vrot.slane %v2397, %v4028
    %v4062 = vunpack.c.l.b16 %v3994
    %v4063 = vunpack.c.l.b16 %v3995
    %v4064 = vunpack.c.l.b16 %v3996
    %v4065 = vunpack.c.l.b16 %v3997
    %v4066 = vunpack.c.l.b16 %v3998
    %v4067 = vunpack.c.l.b16 %v3999
    %v4068 = vunpack.c.l.b16 %v4000
    %v4069 = vunpack.c.l.b16 %v4001
    %v4070 = vunpack.c.l.b16 %v4002
    %v4071 = vunpack.c.l.b16 %v4003
    %v4072 = vunpack.c.l.b16 %v4004
    %v4073 = vunpack.c.l.b16 %v4005
    %v4074 = vunpack.c.l.b16 %v4006
    %v4075 = vunpack.c.l.b16 %v4007
    %v4076 = vunpack.c.l.b16 %v4008
    %v4077 = vunpack.c.l.b16 %v4009
    %v4078 = vunpack.c.l.b16 %v4010
    %v4079 = vunpack.c.l.b16 %v4011
    %v4080 = vunpack.c.l.b16 %v4012
    %v4081 = vunpack.c.l.b16 %v4013
    %v4082 = vunpack.c.l.b16 %v4014
    %v4083 = vunpack.c.l.b16 %v4015
    %v4084 = vunpack.c.l.b16 %v4016
    %v4085 = vunpack.c.l.b16 %v4017
    %v4086 = vunpack.c.l.b16 %v4018
    %v4087 = vunpack.c.l.b16 %v4019
    %v4088 = vunpack.c.l.b16 %v4020
    %v4089 = vunpack.c.l.b16 %v4021
    %v4090 = vunpack.c.l.b16 %v4022
    %v4091 = vunpack.c.l.b16 %v4023
    %v4092 = vunpack.c.l.b16 %v4024
    %v4093 = vunpack.c.l.b16 %v4025
    %v4094 = vpack.c.b16 %v4063, %v4062
    %v4095 = vpack.c.b16 %v4065, %v4064
    %v4096 = vpack.c.b16 %v4067, %v4066
    %v4097 = vpack.c.b16 %v4069, %v4068
    %v4098 = vpack.c.b16 %v4071, %v4070
    %v4099 = vpack.c.b16 %v4073, %v4072
    %v4100 = vpack.c.b16 %v4075, %v4074
    %v4101 = vpack.c.b16 %v4077, %v4076
    %v4102 = vpack.c.b16 %v4079, %v4078
    %v4103 = vpack.c.b16 %v4081, %v4080
    %v4104 = vpack.c.b16 %v4083, %v4082
    %v4105 = vpack.c.b16 %v4085, %v4084
    %v4106 = vpack.c.b16 %v4087, %v4086
    %v4107 = vpack.c.b16 %v4089, %v4088
    %v4108 = vpack.c.b16 %v4091, %v4090
    %v4109 = vpack.c.b16 %v4093, %v4092
    %4126 = vmatprep.subr.bf16.mxu0 0
    %4127 = vmatpush1.bf16.msra.mxu0 %v4101
    %4128 = vmatprep.subr.bf16.mxu0 0
    %4129 = vmatpush1.bf16.msra.mxu0 %v4100
    %4130 = vmatprep.subr.bf16.mxu0 0
    %4131 = vmatpush1.bf16.msra.mxu0 %v4099
    %4132 = vmatprep.subr.bf16.mxu0 0
    %4133 = vmatpush1.bf16.msra.mxu0 %v4098
    %4134 = vmatprep.subr.bf16.mxu0 0
    %4135 = vmatpush1.bf16.msra.mxu0 %v4097
    %4136 = vmatprep.subr.bf16.mxu0 0
    %4137 = vmatpush1.bf16.msra.mxu0 %v4096
    %4138 = vmatprep.subr.bf16.mxu0 0
    %4139 = vmatpush1.bf16.msra.mxu0 %v4095
    %4140 = vmatprep.subr.bf16.mxu0 0
    %4141 = vmatpush1.bf16.msra.mxu0 %v4094
    %4142 = vmatprep.subr.bf16.mxu0 0
    %4143 = vmatpush2.bf16.msra.mxu0 %v4109
    %4144 = vmatprep.subr.bf16.mxu0 0
    %4145 = vmatpush2.bf16.msra.mxu0 %v4108
    %4146 = vmatprep.subr.bf16.mxu0 0
    %4147 = vmatpush2.bf16.msra.mxu0 %v4107
    %4148 = vmatprep.subr.bf16.mxu0 0
    %4149 = vmatpush2.bf16.msra.mxu0 %v4106
    %4150 = vmatprep.subr.bf16.mxu0 0
    %4151 = vmatpush2.bf16.msra.mxu0 %v4105
    %4152 = vmatprep.subr.bf16.mxu0 0
    %4153 = vmatpush2.bf16.msra.mxu0 %v4104
    %4154 = vmatprep.subr.bf16.mxu0 0
    %4155 = vmatpush2.bf16.msra.mxu0 %v4103
    %4156 = vmatprep.subr.bf16.mxu0 0
    %4157 = vmatpush2.bf16.msra.mxu0 %v4102
    %4158 = vmatprep.mubr.bf16.mxu0 %v3992
    %4159 = vmatmul.mubr.bf16.gmra.mxu0 %v3991
    %v4160 = vpop.f32.mrf.mxu0
    %v4161 = vadd.f32 %v4029, %v4160
    %v4162 = vpop.f32.mrf.mxu0
    %v4163 = vpop.f32.mrf.mxu0
    %v4164 = vadd.f32 %v4029, %v4163
    %v4165 = vpop.f32.mrf.mxu0
    %4166 = vdwg.mxu0
    %v4167 = vadd.f32 %v3831, %v4161
    %v4168 = vadd.f32 %v3832, %v4164
    %4169 = vadd.xlane.f32.xlu0 %v4167
    %v4170 = vpop.xlane.xlu0 %4169
    %4171 = vadd.xlane.f32.xlu0 %v4168
    %v4172 = vpop.xlane.xlu0 %4171
    %v4173 = vmul.f32 %v4170, %v1998
    %v4174 = vmul.f32 %v4172, %v1998
    %v4175 = vsub.f32 %v4167, %v4173
    %v4176 = vsub.f32 %v4168, %v4174
    %v4177 = vmul.f32 %v4175, %v4175
    %v4178 = vmul.f32 %v4176, %v4176
    %4179 = vadd.xlane.f32.xlu0 %v4177
    %v4180 = vpop.xlane.xlu0 %4179
    %4181 = vadd.xlane.f32.xlu0 %v4178
    %v4182 = vpop.xlane.xlu0 %4181
    %v4183 = vmul.f32 %v4180, %v1998
    %v4184 = vmul.f32 %v4182, %v1998
    %v4185 = vadd.f32 %v4183, 1e-05
    %v4186 = vadd.f32 %v4184, 1e-05
    %v4187 = vrsqrt.pop %v4185
    %v4188 = vrsqrt.pop %v4186
    %v4189 = vmul.f32 %v4175, %v4187
    %v4190 = vmul.f32 %v4176, %v4188
    %v4191 = vlaneseq
    %v4192 = vshrl.u32 %v4191, 7
    %v4193 = vsub.s32 4, %v4192
    %v4194 = vrot.slane %v2397, %v4193
    %v4195 = vmul.f32 %v4189, %v4194
    %v4196 = vmul.f32 %v4190, %v4194
    %v4197 = vlaneseq
    %v4198 = vshrl.u32 %v4197, 7
    %v4199 = vsub.s32 5, %v4198
    %v4200 = vrot.slane %v2397, %v4199
    %v4201 = vadd.f32 %v4195, %v4200
    %v4202 = vadd.f32 %v4196, %v4200
    %s4203 = scalar_lea.vmem %s11, 16
    %v4204 = vld [vmem:[%s4203] sm:$0x3f]
    %v4205 = vpack.c.bf16 %v4202, %v4201
    %s4206 = scalar_lea.vmem [#allocation2], 384
    %v4207 = vld [vmem:[%s4206] sm:$0xff]
    %v4208 = vld [vmem:[%s4206 + $0x8] sm:$0xf]
    %v4209 = vld [vmem:[%s4206 + $0xc] sm:$0xff]
    %v4210 = vld [vmem:[%s4206 + $0x14] sm:$0xf]
    %v4211 = vld [vmem:[%s4206 + $0x18] sm:$0xff]
    %v4212 = vld [vmem:[%s4206 + $0x20] sm:$0xf]
    %v4213 = vld [vmem:[%s4206 + $0x24] sm:$0xff]
    %v4214 = vld [vmem:[%s4206 + $0x2c] sm:$0xf]
    %v4215 = vld [vmem:[%s4206 + $0x30] sm:$0xff]
    %v4216 = vld [vmem:[%s4206 + $0x38] sm:$0xf]
    %v4217 = vld [vmem:[%s4206 + $0x3c] sm:$0xff]
    %v4218 = vld [vmem:[%s4206 + $0x44] sm:$0xf]
    %v4219 = vld [vmem:[%s4206 + $0x48] sm:$0xff]
    %v4220 = vld [vmem:[%s4206 + $0x50] sm:$0xf]
    %v4221 = vld [vmem:[%s4206 + $0x54] sm:$0xff]
    %v4222 = vld [vmem:[%s4206 + $0x5c] sm:$0xf]
    %v4223 = vld [vmem:[%s4206 + $0x60] sm:$0xff]
    %v4224 = vld [vmem:[%s4206 + $0x68] sm:$0xf]
    %v4225 = vld [vmem:[%s4206 + $0x6c] sm:$0xff]
    %v4226 = vld [vmem:[%s4206 + $0x74] sm:$0xf]
    %v4227 = vld [vmem:[%s4206 + $0x78] sm:$0xff]
    %v4228 = vld [vmem:[%s4206 + $0x80] sm:$0xf]
    %v4229 = vld [vmem:[%s4206 + $0x84] sm:$0xff]
    %v4230 = vld [vmem:[%s4206 + $0x8c] sm:$0xf]
    %v4231 = vld [vmem:[%s4206 + $0x90] sm:$0xff]
    %v4232 = vld [vmem:[%s4206 + $0x98] sm:$0xf]
    %v4233 = vld [vmem:[%s4206 + $0x9c] sm:$0xff]
    %v4234 = vld [vmem:[%s4206 + $0xa4] sm:$0xf]
    %v4235 = vld [vmem:[%s4206 + $0xa8] sm:$0xff]
    %v4236 = vld [vmem:[%s4206 + $0xb0] sm:$0xf]
    %v4237 = vld [vmem:[%s4206 + $0xb4] sm:$0xff]
    %v4238 = vld [vmem:[%s4206 + $0xbc] sm:$0xf]
    %s4239 = scalar_lea.vmem [#allocation5], 6
    %v4240 = vld [vmem:[%s4239] sm:$0x7]
    %v4242 = vlaneseq
    %v4243 = vshrl.u32 %v4242, 7
    %v4244 = vsub.s32 0, %v4243
    %v4245 = vrot.slane %v4240, %v4244
    %v4246 = vlaneseq
    %v4247 = vshrl.u32 %v4246, 7
    %v4248 = vsub.s32 1, %v4247
    %v4249 = vrot.slane %v4240, %v4248
    %v4250 = vlaneseq
    %v4251 = vshrl.u32 %v4250, 7
    %v4252 = vsub.s32 2, %v4251
    %v4253 = vrot.slane %v4240, %v4252
    %v4289 = vunpack.c.l.b16 %v4207
    %v4290 = vunpack.c.h.b16 %v4207
    %v4291 = vunpack.c.l.b16 %v4208
    %v4292 = vunpack.c.l.b16 %v4209
    %v4293 = vunpack.c.h.b16 %v4209
    %v4294 = vunpack.c.l.b16 %v4210
    %v4295 = vunpack.c.l.b16 %v4211
    %v4296 = vunpack.c.h.b16 %v4211
    %v4297 = vunpack.c.l.b16 %v4212
    %v4298 = vunpack.c.l.b16 %v4213
    %v4299 = vunpack.c.h.b16 %v4213
    %v4300 = vunpack.c.l.b16 %v4214
    %v4301 = vunpack.c.l.b16 %v4215
    %v4302 = vunpack.c.h.b16 %v4215
    %v4303 = vunpack.c.l.b16 %v4216
    %v4304 = vunpack.c.l.b16 %v4217
    %v4305 = vunpack.c.h.b16 %v4217
    %v4306 = vunpack.c.l.b16 %v4218
    %v4307 = vunpack.c.l.b16 %v4219
    %v4308 = vunpack.c.h.b16 %v4219
    %v4309 = vunpack.c.l.b16 %v4220
    %v4310 = vunpack.c.l.b16 %v4221
    %v4311 = vunpack.c.h.b16 %v4221
    %v4312 = vunpack.c.l.b16 %v4222
    %v4313 = vunpack.c.l.b16 %v4223
    %v4314 = vunpack.c.h.b16 %v4223
    %v4315 = vunpack.c.l.b16 %v4224
    %v4316 = vunpack.c.l.b16 %v4225
    %v4317 = vunpack.c.h.b16 %v4225
    %v4318 = vunpack.c.l.b16 %v4226
    %v4319 = vunpack.c.l.b16 %v4227
    %v4320 = vunpack.c.h.b16 %v4227
    %v4321 = vunpack.c.l.b16 %v4228
    %v4322 = vunpack.c.l.b16 %v4229
    %v4323 = vunpack.c.h.b16 %v4229
    %v4324 = vunpack.c.l.b16 %v4230
    %v4325 = vunpack.c.l.b16 %v4231
    %v4326 = vunpack.c.h.b16 %v4231
    %v4327 = vunpack.c.l.b16 %v4232
    %v4328 = vunpack.c.l.b16 %v4233
    %v4329 = vunpack.c.h.b16 %v4233
    %v4330 = vunpack.c.l.b16 %v4234
    %v4331 = vunpack.c.l.b16 %v4235
    %v4332 = vunpack.c.h.b16 %v4235
    %v4333 = vunpack.c.l.b16 %v4236
    %v4334 = vunpack.c.l.b16 %v4237
    %v4335 = vunpack.c.h.b16 %v4237
    %v4336 = vunpack.c.l.b16 %v4238
    %v4337 = vpack.c.b16 %v4292, %v4289
    %v4338 = vpack.c.b16 %v4293, %v4290
    %v4339 = vpack.c.b16 %v4294, %v4291
    %v4340 = vpack.c.b16 %v4298, %v4295
    %v4341 = vpack.c.b16 %v4299, %v4296
    %v4342 = vpack.c.b16 %v4300, %v4297
    %v4343 = vpack.c.b16 %v4304, %v4301
    %v4344 = vpack.c.b16 %v4305, %v4302
    %v4345 = vpack.c.b16 %v4306, %v4303
    %v4346 = vpack.c.b16 %v4310, %v4307
    %v4347 = vpack.c.b16 %v4311, %v4308
    %v4348 = vpack.c.b16 %v4312, %v4309
    %v4349 = vpack.c.b16 %v4316, %v4313
    %v4350 = vpack.c.b16 %v4317, %v4314
    %v4351 = vpack.c.b16 %v4318, %v4315
    %v4352 = vpack.c.b16 %v4322, %v4319
    %v4353 = vpack.c.b16 %v4323, %v4320
    %v4354 = vpack.c.b16 %v4324, %v4321
    %v4355 = vpack.c.b16 %v4328, %v4325
    %v4356 = vpack.c.b16 %v4329, %v4326
    %v4357 = vpack.c.b16 %v4330, %v4327
    %v4358 = vpack.c.b16 %v4334, %v4331
    %v4359 = vpack.c.b16 %v4335, %v4332
    %v4360 = vpack.c.b16 %v4336, %v4333
    %4385 = vmatprep.subr.bf16.mxu0 %v4359
    %4386 = vmatpush1.bf16.msra.mxu0 %v4358
    %4387 = vmatprep.subr.bf16.mxu0 %v4356
    %4388 = vmatpush1.bf16.msra.mxu0 %v4355
    %4389 = vmatprep.subr.bf16.mxu0 %v4353
    %4390 = vmatpush1.bf16.msra.mxu0 %v4352
    %4391 = vmatprep.subr.bf16.mxu0 %v4350
    %4392 = vmatpush1.bf16.msra.mxu0 %v4349
    %4393 = vmatprep.subr.bf16.mxu0 %v4347
    %4394 = vmatpush1.bf16.msra.mxu0 %v4346
    %4395 = vmatprep.subr.bf16.mxu0 %v4344
    %4396 = vmatpush1.bf16.msra.mxu0 %v4343
    %4397 = vmatprep.subr.bf16.mxu0 %v4341
    %4398 = vmatpush1.bf16.msra.mxu0 %v4340
    %4399 = vmatprep.subr.bf16.mxu0 %v4338
    %4400 = vmatpush1.bf16.msra.mxu0 %v4337
    %4401 = vmatprep.subr.bf16.mxu0 0
    %4402 = vmatpush2.bf16.msra.mxu0 0
    %4403 = vmatprep.subr.bf16.mxu0 0
    %4404 = vmatpush2.bf16.msra.mxu0 0
    %4405 = vmatprep.subr.bf16.mxu0 0
    %4406 = vmatpush2.bf16.msra.mxu0 0
    %4407 = vmatprep.subr.bf16.mxu0 0
    %4408 = vmatpush2.bf16.msra.mxu0 0
    %4409 = vmatprep.subr.bf16.mxu0 0
    %4410 = vmatpush2.bf16.msra.mxu0 0
    %4411 = vmatprep.subr.bf16.mxu0 0
    %4412 = vmatpush2.bf16.msra.mxu0 0
    %4413 = vmatprep.subr.bf16.mxu0 0
    %4414 = vmatpush2.bf16.msra.mxu0 0
    %4415 = vmatprep.subr.bf16.mxu0 0
    %4416 = vmatpush2.bf16.msra.mxu0 0
    %4417 = vmatprep.mubr.bf16.mxu0 0
    %4418 = vmatmul.mubr.bf16.gmra.mxu0 %v4205
    %v4419 = vpop.f32.mrf.mxu0
    %v4420 = vadd.f32 %v4245, %v4419
    %v4421 = vpop.f32.mrf.mxu0
    %v4422 = vadd.f32 %v4249, %v4421
    %v4423 = vpop.f32.mrf.mxu0
    %v4424 = vadd.f32 %v4245, %v4423
    %v4425 = vpop.f32.mrf.mxu0
    %v4426 = vadd.f32 %v4249, %v4425
    %4427 = vdwg.mxu0
    %4428 = vmatprep.subr.bf16.mxu0 0
    %4429 = vmatpush1.bf16.msra.mxu0 %v4360
    %4430 = vmatprep.subr.bf16.mxu0 0
    %4431 = vmatpush1.bf16.msra.mxu0 %v4357
    %4432 = vmatprep.subr.bf16.mxu0 0
    %4433 = vmatpush1.bf16.msra.mxu0 %v4354
    %4434 = vmatprep.subr.bf16.mxu0 0
    %4435 = vmatpush1.bf16.msra.mxu0 %v4351
    %4436 = vmatprep.subr.bf16.mxu0 0
    %4437 = vmatpush1.bf16.msra.mxu0 %v4348
    %4438 = vmatprep.subr.bf16.mxu0 0
    %4439 = vmatpush1.bf16.msra.mxu0 %v4345
    %4440 = vmatprep.subr.bf16.mxu0 0
    %4441 = vmatpush1.bf16.msra.mxu0 %v4342
    %4442 = vmatprep.subr.bf16.mxu0 0
    %4443 = vmatpush1.bf16.msra.mxu0 %v4339
    %4444 = vmatprep.subr.bf16.mxu0 0
    %4445 = vmatpush2.bf16.msra.mxu0 0
    %4446 = vmatprep.subr.bf16.mxu0 0
    %4447 = vmatpush2.bf16.msra.mxu0 0
    %4448 = vmatprep.subr.bf16.mxu0 0
    %4449 = vmatpush2.bf16.msra.mxu0 0
    %4450 = vmatprep.subr.bf16.mxu0 0
    %4451 = vmatpush2.bf16.msra.mxu0 0
    %4452 = vmatprep.subr.bf16.mxu0 0
    %4453 = vmatpush2.bf16.msra.mxu0 0
    %4454 = vmatprep.subr.bf16.mxu0 0
    %4455 = vmatpush2.bf16.msra.mxu0 0
    %4456 = vmatprep.subr.bf16.mxu0 0
    %4457 = vmatpush2.bf16.msra.mxu0 0
    %4458 = vmatprep.subr.bf16.mxu0 0
    %4459 = vmatpush2.bf16.msra.mxu0 0
    %4460 = vmatprep.mubr.bf16.mxu0 0
    %4461 = vmatmul.mubr.bf16.gmra.mxu0 %v4205
    %v4462 = vpop.f32.mrf.mxu0
    %v4463 = vadd.f32 %v4253, %v4462
    %v4464 = vpop.f32.mrf.mxu0
    %v4465 = vpop.f32.mrf.mxu0
    %v4466 = vadd.f32 %v4253, %v4465
    %v4467 = vpop.f32.mrf.mxu0
    %4468 = vdwg.mxu0
    %s4469 = scalar_lea.vmem %s7, 128
    %v4470 = vld [vmem:[%s4469] sm:$0xf]
    %v4471 = vld [vmem:[%s4469 + $0x4] sm:$0xf]
    %v4472 = vld [vmem:[%s4469 + $0x8] sm:$0xf]
    %v4473 = vld [vmem:[%s4469 + $0xc] sm:$0xf]
    %v4474 = vld [vmem:[%s4469 + $0x10] sm:$0xf]
    %v4475 = vld [vmem:[%s4469 + $0x14] sm:$0xf]
    %v4476 = vld [vmem:[%s4469 + $0x18] sm:$0xf]
    %v4477 = vld [vmem:[%s4469 + $0x1c] sm:$0xf]
    %v4478 = vld [vmem:[%s4469 + $0x20] sm:$0xf]
    %v4479 = vld [vmem:[%s4469 + $0x24] sm:$0xf]
    %v4480 = vld [vmem:[%s4469 + $0x28] sm:$0xf]
    %v4481 = vld [vmem:[%s4469 + $0x2c] sm:$0xf]
    %v4482 = vld [vmem:[%s4469 + $0x30] sm:$0xf]
    %v4483 = vld [vmem:[%s4469 + $0x34] sm:$0xf]
    %v4484 = vld [vmem:[%s4469 + $0x38] sm:$0xf]
    %v4485 = vld [vmem:[%s4469 + $0x3c] sm:$0xf]
    %v4486 = vpack.c.bf16 %v4420, %v4420
    %v4487 = vpack.c.bf16 %v4424, %v4424
    %v4488 = vpack.c.bf16 %v4422, %v4422
    %v4489 = vpack.c.bf16 %v4426, %v4426
    %v4490 = vpack.c.bf16 %v4463, %v4463
    %v4491 = vpack.c.bf16 %v4466, %v4466
    %v4493 = vsel %vm149, %v4486, 0
    %v4496 = vsel %vm149, %v4488, 0
    %4498 = vmatprep.subr.bf16.mxu0 0
    %4499 = vmatpush1.bf16.xpose.msra.mxu0 0
    %4500 = vmatprep.subr.bf16.mxu0 0
    %4501 = vmatpush1.bf16.xpose.msra.mxu0 0
    %4502 = vmatprep.subr.bf16.mxu0 0
    %4503 = vmatpush1.bf16.xpose.msra.mxu0 0
    %4504 = vmatprep.subr.bf16.mxu0 0
    %4505 = vmatpush1.bf16.xpose.msra.mxu0 0
    %4506 = vmatprep.subr.bf16.mxu0 0
    %4507 = vmatpush1.bf16.xpose.msra.mxu0 0
    %4508 = vmatprep.subr.bf16.mxu0 0
    %4509 = vmatpush1.bf16.xpose.msra.mxu0 0
    %4510 = vmatprep.subr.bf16.mxu0 0
    %4511 = vmatpush1.bf16.xpose.msra.mxu0 0
    %4512 = vmatprep.subr.bf16.mxu0 0
    %4513 = vmatpush1.bf16.xpose.msra.mxu0 %v4496
    %4514 = vmatprep.subr.bf16.mxu0 0
    %4515 = vmatpush2.bf16.xpose.msra.mxu0 0
    %4516 = vmatprep.subr.bf16.mxu0 0
    %4517 = vmatpush2.bf16.xpose.msra.mxu0 0
    %4518 = vmatprep.subr.bf16.mxu0 0
    %4519 = vmatpush2.bf16.xpose.msra.mxu0 0
    %4520 = vmatprep.subr.bf16.mxu0 0
    %4521 = vmatpush2.bf16.xpose.msra.mxu0 0
    %4522 = vmatprep.subr.bf16.mxu0 0
    %4523 = vmatpush2.bf16.xpose.msra.mxu0 0
    %4524 = vmatprep.subr.bf16.mxu0 0
    %4525 = vmatpush2.bf16.xpose.msra.mxu0 0
    %4526 = vmatprep.subr.bf16.mxu0 0
    %4527 = vmatpush2.bf16.xpose.msra.mxu0 0
    %4528 = vmatprep.subr.bf16.mxu0 0
    %4529 = vmatpush2.bf16.xpose.msra.mxu0 0
    %4530 = vmatprep.mubr.bf16.mxu0 0
    %4531 = vmatmul.mubr.bf16.gmra.mxu0 %v4493
    %v4532 = vpop.f32.mrf.mxu0
    %v4533 = vadd.f32 0.0, %v4532
    %v4534 = vpop.f32.mrf.mxu0
    %v4535 = vpop.f32.mrf.mxu0
    %v4536 = vpop.f32.mrf.mxu0
    %4537 = vdwg.mxu0
    %v4539 = vsel %vm149, %v4487, 0
    %v4542 = vsel %vm149, %v4489, 0
    %4544 = vmatprep.subr.bf16.mxu0 0
    %4545 = vmatpush1.bf16.xpose.msra.mxu0 0
    %4546 = vmatprep.subr.bf16.mxu0 0
    %4547 = vmatpush1.bf16.xpose.msra.mxu0 0
    %4548 = vmatprep.subr.bf16.mxu0 0
    %4549 = vmatpush1.bf16.xpose.msra.mxu0 0
    %4550 = vmatprep.subr.bf16.mxu0 0
    %4551 = vmatpush1.bf16.xpose.msra.mxu0 0
    %4552 = vmatprep.subr.bf16.mxu0 0
    %4553 = vmatpush1.bf16.xpose.msra.mxu0 0
    %4554 = vmatprep.subr.bf16.mxu0 0
    %4555 = vmatpush1.bf16.xpose.msra.mxu0 0
    %4556 = vmatprep.subr.bf16.mxu0 0
    %4557 = vmatpush1.bf16.xpose.msra.mxu0 0
    %4558 = vmatprep.subr.bf16.mxu0 0
    %4559 = vmatpush1.bf16.xpose.msra.mxu0 %v4542
    %4560 = vmatprep.subr.bf16.mxu0 0
    %4561 = vmatpush2.bf16.xpose.msra.mxu0 0
    %4562 = vmatprep.subr.bf16.mxu0 0
    %4563 = vmatpush2.bf16.xpose.msra.mxu0 0
    %4564 = vmatprep.subr.bf16.mxu0 0
    %4565 = vmatpush2.bf16.xpose.msra.mxu0 0
    %4566 = vmatprep.subr.bf16.mxu0 0
    %4567 = vmatpush2.bf16.xpose.msra.mxu0 0
    %4568 = vmatprep.subr.bf16.mxu0 0
    %4569 = vmatpush2.bf16.xpose.msra.mxu0 0
    %4570 = vmatprep.subr.bf16.mxu0 0
    %4571 = vmatpush2.bf16.xpose.msra.mxu0 0
    %4572 = vmatprep.subr.bf16.mxu0 0
    %4573 = vmatpush2.bf16.xpose.msra.mxu0 0
    %4574 = vmatprep.subr.bf16.mxu0 0
    %4575 = vmatpush2.bf16.xpose.msra.mxu0 0
    %4576 = vmatprep.mubr.bf16.mxu0 0
    %4577 = vmatmul.mubr.bf16.gmra.mxu0 %v4539
    %v4578 = vpop.f32.mrf.mxu0
    %v4579 = vadd.f32 0.0, %v4578
    %v4580 = vpop.f32.mrf.mxu0
    %v4581 = vpop.f32.mrf.mxu0
    %v4582 = vpop.f32.mrf.mxu0
    %4583 = vdwg.mxu0
    %v4584 = vsel %vm970, %v4533, -inf
    %4585 = vmax.xlane.f32.xlu0 %v4584
    %v4586 = vpop.xlane.xlu0 %4585
    %v4587 = vsel %vm970, %v4579, -inf
    %4588 = vmax.xlane.f32.xlu0 %v4587
    %v4589 = vpop.xlane.xlu0 %4588
    %v4590 = vsub.f32 %v4533, %v4586
    %v4591 = vsub.f32 %v4579, %v4589
    %v4592 = vmul.f32 %v4590, 1.442695
    %v4593 = vpow.pop %v4592
    %v4594 = vmul.f32 %v4591, 1.442695
    %v4595 = vpow.pop %v4594
    %v4596 = vsel %vm970, %v4593, 0.0
    %4597 = vadd.xlane.f32.xlu0 %v4596
    %v4598 = vpop.xlane.xlu0 %4597
    %v4599 = vsel %vm970, %v4595, 0.0
    %4600 = vadd.xlane.f32.xlu0 %v4599
    %v4601 = vpop.xlane.xlu0 %4600
    %v4602 = vrcp.pop %v4598
    %v4603 = vrcp.pop %v4601
    %v4604 = vmul.f32 %v4593, %v4602
    %v4605 = vmul.f32 %v4595, %v4603
    %v4606 = vpack.c.bf16 %v4604, %v4604
    %v4607 = vpack.c.bf16 %v4605, %v4605
    %v4609 = vsel %vm970, %v4606, 0
    %v4612 = vsel %vm998, %v4490, 0
    %4614 = vmatprep.subr.bf16.mxu0 0
    %4615 = vmatpush1.bf16.msra.mxu0 0
    %4616 = vmatprep.subr.bf16.mxu0 0
    %4617 = vmatpush1.bf16.msra.mxu0 0
    %4618 = vmatprep.subr.bf16.mxu0 0
    %4619 = vmatpush1.bf16.msra.mxu0 0
    %4620 = vmatprep.subr.bf16.mxu0 0
    %4621 = vmatpush1.bf16.msra.mxu0 0
    %4622 = vmatprep.subr.bf16.mxu0 0
    %4623 = vmatpush1.bf16.msra.mxu0 0
    %4624 = vmatprep.subr.bf16.mxu0 0
    %4625 = vmatpush1.bf16.msra.mxu0 0
    %4626 = vmatprep.subr.bf16.mxu0 0
    %4627 = vmatpush1.bf16.msra.mxu0 0
    %4628 = vmatprep.subr.bf16.mxu0 0
    %4629 = vmatpush1.bf16.msra.mxu0 %v4612
    %4630 = vmatprep.subr.bf16.mxu0 0
    %4631 = vmatpush2.bf16.msra.mxu0 0
    %4632 = vmatprep.subr.bf16.mxu0 0
    %4633 = vmatpush2.bf16.msra.mxu0 0
    %4634 = vmatprep.subr.bf16.mxu0 0
    %4635 = vmatpush2.bf16.msra.mxu0 0
    %4636 = vmatprep.subr.bf16.mxu0 0
    %4637 = vmatpush2.bf16.msra.mxu0 0
    %4638 = vmatprep.subr.bf16.mxu0 0
    %4639 = vmatpush2.bf16.msra.mxu0 0
    %4640 = vmatprep.subr.bf16.mxu0 0
    %4641 = vmatpush2.bf16.msra.mxu0 0
    %4642 = vmatprep.subr.bf16.mxu0 0
    %4643 = vmatpush2.bf16.msra.mxu0 0
    %4644 = vmatprep.subr.bf16.mxu0 0
    %4645 = vmatpush2.bf16.msra.mxu0 0
    %4646 = vmatprep.mubr.bf16.mxu0 0
    %4647 = vmatmul.mubr.bf16.gmra.mxu0 %v4609
    %v4648 = vpop.f32.mrf.mxu0
    %v4649 = vadd.f32 0.0, %v4648
    %v4650 = vpop.f32.mrf.mxu0
    %v4651 = vpop.f32.mrf.mxu0
    %v4652 = vpop.f32.mrf.mxu0
    %4653 = vdwg.mxu0
    %v4655 = vsel %vm970, %v4607, 0
    %v4658 = vsel %vm998, %v4491, 0
    %4660 = vmatprep.subr.bf16.mxu0 0
    %4661 = vmatpush1.bf16.msra.mxu0 0
    %4662 = vmatprep.subr.bf16.mxu0 0
    %4663 = vmatpush1.bf16.msra.mxu0 0
    %4664 = vmatprep.subr.bf16.mxu0 0
    %4665 = vmatpush1.bf16.msra.mxu0 0
    %4666 = vmatprep.subr.bf16.mxu0 0
    %4667 = vmatpush1.bf16.msra.mxu0 0
    %4668 = vmatprep.subr.bf16.mxu0 0
    %4669 = vmatpush1.bf16.msra.mxu0 0
    %4670 = vmatprep.subr.bf16.mxu0 0
    %4671 = vmatpush1.bf16.msra.mxu0 0
    %4672 = vmatprep.subr.bf16.mxu0 0
    %4673 = vmatpush1.bf16.msra.mxu0 0
    %4674 = vmatprep.subr.bf16.mxu0 0
    %4675 = vmatpush1.bf16.msra.mxu0 %v4658
    %4676 = vmatprep.subr.bf16.mxu0 0
    %4677 = vmatpush2.bf16.msra.mxu0 0
    %4678 = vmatprep.subr.bf16.mxu0 0
    %4679 = vmatpush2.bf16.msra.mxu0 0
    %4680 = vmatprep.subr.bf16.mxu0 0
    %4681 = vmatpush2.bf16.msra.mxu0 0
    %4682 = vmatprep.subr.bf16.mxu0 0
    %4683 = vmatpush2.bf16.msra.mxu0 0
    %4684 = vmatprep.subr.bf16.mxu0 0
    %4685 = vmatpush2.bf16.msra.mxu0 0
    %4686 = vmatprep.subr.bf16.mxu0 0
    %4687 = vmatpush2.bf16.msra.mxu0 0
    %4688 = vmatprep.subr.bf16.mxu0 0
    %4689 = vmatpush2.bf16.msra.mxu0 0
    %4690 = vmatprep.subr.bf16.mxu0 0
    %4691 = vmatpush2.bf16.msra.mxu0 0
    %4692 = vmatprep.mubr.bf16.mxu0 0
    %4693 = vmatmul.mubr.bf16.gmra.mxu0 %v4655
    %v4694 = vpop.f32.mrf.mxu0
    %v4695 = vadd.f32 0.0, %v4694
    %v4696 = vpop.f32.mrf.mxu0
    %v4697 = vpop.f32.mrf.mxu0
    %v4698 = vpop.f32.mrf.mxu0
    %4699 = vdwg.mxu0
    %v4700 = vpack.c.bf16 %v4695, %v4649
    %4702 = vrot.lane.b32.xlu0 %v4486, 96
    %v4703 = vpop.permute.xlu0 %4702
    %4705 = vrot.lane.b32.xlu0 %v4488, 96
    %v4706 = vpop.permute.xlu0 %4705
    %v4708 = vsel %vm149, %v4703, 0
    %v4711 = vsel %vm149, %v4706, 0
    %4713 = vmatprep.subr.bf16.mxu0 0
    %4714 = vmatpush1.bf16.xpose.msra.mxu0 0
    %4715 = vmatprep.subr.bf16.mxu0 0
    %4716 = vmatpush1.bf16.xpose.msra.mxu0 0
    %4717 = vmatprep.subr.bf16.mxu0 0
    %4718 = vmatpush1.bf16.xpose.msra.mxu0 0
    %4719 = vmatprep.subr.bf16.mxu0 0
    %4720 = vmatpush1.bf16.xpose.msra.mxu0 0
    %4721 = vmatprep.subr.bf16.mxu0 0
    %4722 = vmatpush1.bf16.xpose.msra.mxu0 0
    %4723 = vmatprep.subr.bf16.mxu0 0
    %4724 = vmatpush1.bf16.xpose.msra.mxu0 0
    %4725 = vmatprep.subr.bf16.mxu0 0
    %4726 = vmatpush1.bf16.xpose.msra.mxu0 0
    %4727 = vmatprep.subr.bf16.mxu0 0
    %4728 = vmatpush1.bf16.xpose.msra.mxu0 %v4711
    %4729 = vmatprep.subr.bf16.mxu0 0
    %4730 = vmatpush2.bf16.xpose.msra.mxu0 0
    %4731 = vmatprep.subr.bf16.mxu0 0
    %4732 = vmatpush2.bf16.xpose.msra.mxu0 0
    %4733 = vmatprep.subr.bf16.mxu0 0
    %4734 = vmatpush2.bf16.xpose.msra.mxu0 0
    %4735 = vmatprep.subr.bf16.mxu0 0
    %4736 = vmatpush2.bf16.xpose.msra.mxu0 0
    %4737 = vmatprep.subr.bf16.mxu0 0
    %4738 = vmatpush2.bf16.xpose.msra.mxu0 0
    %4739 = vmatprep.subr.bf16.mxu0 0
    %4740 = vmatpush2.bf16.xpose.msra.mxu0 0
    %4741 = vmatprep.subr.bf16.mxu0 0
    %4742 = vmatpush2.bf16.xpose.msra.mxu0 0
    %4743 = vmatprep.subr.bf16.mxu0 0
    %4744 = vmatpush2.bf16.xpose.msra.mxu0 0
    %4745 = vmatprep.mubr.bf16.mxu0 0
    %4746 = vmatmul.mubr.bf16.gmra.mxu0 %v4708
    %v4747 = vpop.f32.mrf.mxu0
    %v4748 = vadd.f32 0.0, %v4747
    %v4749 = vpop.f32.mrf.mxu0
    %v4750 = vpop.f32.mrf.mxu0
    %v4751 = vpop.f32.mrf.mxu0
    %4752 = vdwg.mxu0
    %4754 = vrot.lane.b32.xlu0 %v4487, 96
    %v4755 = vpop.permute.xlu0 %4754
    %4757 = vrot.lane.b32.xlu0 %v4489, 96
    %v4758 = vpop.permute.xlu0 %4757
    %v4760 = vsel %vm149, %v4755, 0
    %v4763 = vsel %vm149, %v4758, 0
    %4765 = vmatprep.subr.bf16.mxu0 0
    %4766 = vmatpush1.bf16.xpose.msra.mxu0 0
    %4767 = vmatprep.subr.bf16.mxu0 0
    %4768 = vmatpush1.bf16.xpose.msra.mxu0 0
    %4769 = vmatprep.subr.bf16.mxu0 0
    %4770 = vmatpush1.bf16.xpose.msra.mxu0 0
    %4771 = vmatprep.subr.bf16.mxu0 0
    %4772 = vmatpush1.bf16.xpose.msra.mxu0 0
    %4773 = vmatprep.subr.bf16.mxu0 0
    %4774 = vmatpush1.bf16.xpose.msra.mxu0 0
    %4775 = vmatprep.subr.bf16.mxu0 0
    %4776 = vmatpush1.bf16.xpose.msra.mxu0 0
    %4777 = vmatprep.subr.bf16.mxu0 0
    %4778 = vmatpush1.bf16.xpose.msra.mxu0 0
    %4779 = vmatprep.subr.bf16.mxu0 0
    %4780 = vmatpush1.bf16.xpose.msra.mxu0 %v4763
    %4781 = vmatprep.subr.bf16.mxu0 0
    %4782 = vmatpush2.bf16.xpose.msra.mxu0 0
    %4783 = vmatprep.subr.bf16.mxu0 0
    %4784 = vmatpush2.bf16.xpose.msra.mxu0 0
    %4785 = vmatprep.subr.bf16.mxu0 0
    %4786 = vmatpush2.bf16.xpose.msra.mxu0 0
    %4787 = vmatprep.subr.bf16.mxu0 0
    %4788 = vmatpush2.bf16.xpose.msra.mxu0 0
    %4789 = vmatprep.subr.bf16.mxu0 0
    %4790 = vmatpush2.bf16.xpose.msra.mxu0 0
    %4791 = vmatprep.subr.bf16.mxu0 0
    %4792 = vmatpush2.bf16.xpose.msra.mxu0 0
    %4793 = vmatprep.subr.bf16.mxu0 0
    %4794 = vmatpush2.bf16.xpose.msra.mxu0 0
    %4795 = vmatprep.subr.bf16.mxu0 0
    %4796 = vmatpush2.bf16.xpose.msra.mxu0 0
    %4797 = vmatprep.mubr.bf16.mxu0 0
    %4798 = vmatmul.mubr.bf16.gmra.mxu0 %v4760
    %v4799 = vpop.f32.mrf.mxu0
    %v4800 = vadd.f32 0.0, %v4799
    %v4801 = vpop.f32.mrf.mxu0
    %v4802 = vpop.f32.mrf.mxu0
    %v4803 = vpop.f32.mrf.mxu0
    %4804 = vdwg.mxu0
    %v4805 = vsel %vm970, %v4748, -inf
    %4806 = vmax.xlane.f32.xlu0 %v4805
    %v4807 = vpop.xlane.xlu0 %4806
    %v4808 = vsel %vm970, %v4800, -inf
    %4809 = vmax.xlane.f32.xlu0 %v4808
    %v4810 = vpop.xlane.xlu0 %4809
    %v4811 = vsub.f32 %v4748, %v4807
    %v4812 = vsub.f32 %v4800, %v4810
    %v4813 = vmul.f32 %v4811, 1.442695
    %v4814 = vpow.pop %v4813
    %v4815 = vmul.f32 %v4812, 1.442695
    %v4816 = vpow.pop %v4815
    %v4817 = vsel %vm970, %v4814, 0.0
    %4818 = vadd.xlane.f32.xlu0 %v4817
    %v4819 = vpop.xlane.xlu0 %4818
    %v4820 = vsel %vm970, %v4816, 0.0
    %4821 = vadd.xlane.f32.xlu0 %v4820
    %v4822 = vpop.xlane.xlu0 %4821
    %v4823 = vrcp.pop %v4819
    %v4824 = vrcp.pop %v4822
    %v4825 = vmul.f32 %v4814, %v4823
    %v4826 = vmul.f32 %v4816, %v4824
    %v4827 = vpack.c.bf16 %v4825, %v4825
    %v4828 = vpack.c.bf16 %v4826, %v4826
    %4830 = vrot.lane.b32.xlu0 %v4490, 96
    %v4831 = vpop.permute.xlu0 %4830
    %v4833 = vsel %vm970, %v4827, 0
    %v4836 = vsel %vm998, %v4831, 0
    %4838 = vmatprep.subr.bf16.mxu0 0
    %4839 = vmatpush1.bf16.msra.mxu0 0
    %4840 = vmatprep.subr.bf16.mxu0 0
    %4841 = vmatpush1.bf16.msra.mxu0 0
    %4842 = vmatprep.subr.bf16.mxu0 0
    %4843 = vmatpush1.bf16.msra.mxu0 0
    %4844 = vmatprep.subr.bf16.mxu0 0
    %4845 = vmatpush1.bf16.msra.mxu0 0
    %4846 = vmatprep.subr.bf16.mxu0 0
    %4847 = vmatpush1.bf16.msra.mxu0 0
    %4848 = vmatprep.subr.bf16.mxu0 0
    %4849 = vmatpush1.bf16.msra.mxu0 0
    %4850 = vmatprep.subr.bf16.mxu0 0
    %4851 = vmatpush1.bf16.msra.mxu0 0
    %4852 = vmatprep.subr.bf16.mxu0 0
    %4853 = vmatpush1.bf16.msra.mxu0 %v4836
    %4854 = vmatprep.subr.bf16.mxu0 0
    %4855 = vmatpush2.bf16.msra.mxu0 0
    %4856 = vmatprep.subr.bf16.mxu0 0
    %4857 = vmatpush2.bf16.msra.mxu0 0
    %4858 = vmatprep.subr.bf16.mxu0 0
    %4859 = vmatpush2.bf16.msra.mxu0 0
    %4860 = vmatprep.subr.bf16.mxu0 0
    %4861 = vmatpush2.bf16.msra.mxu0 0
    %4862 = vmatprep.subr.bf16.mxu0 0
    %4863 = vmatpush2.bf16.msra.mxu0 0
    %4864 = vmatprep.subr.bf16.mxu0 0
    %4865 = vmatpush2.bf16.msra.mxu0 0
    %4866 = vmatprep.subr.bf16.mxu0 0
    %4867 = vmatpush2.bf16.msra.mxu0 0
    %4868 = vmatprep.subr.bf16.mxu0 0
    %4869 = vmatpush2.bf16.msra.mxu0 0
    %4870 = vmatprep.mubr.bf16.mxu0 0
    %4871 = vmatmul.mubr.bf16.gmra.mxu0 %v4833
    %v4872 = vpop.f32.mrf.mxu0
    %v4873 = vadd.f32 0.0, %v4872
    %v4874 = vpop.f32.mrf.mxu0
    %v4875 = vpop.f32.mrf.mxu0
    %v4876 = vpop.f32.mrf.mxu0
    %4877 = vdwg.mxu0
    %4879 = vrot.lane.b32.xlu0 %v4491, 96
    %v4880 = vpop.permute.xlu0 %4879
    %v4882 = vsel %vm970, %v4828, 0
    %v4885 = vsel %vm998, %v4880, 0
    %4887 = vmatprep.subr.bf16.mxu0 0
    %4888 = vmatpush1.bf16.msra.mxu0 0
    %4889 = vmatprep.subr.bf16.mxu0 0
    %4890 = vmatpush1.bf16.msra.mxu0 0
    %4891 = vmatprep.subr.bf16.mxu0 0
    %4892 = vmatpush1.bf16.msra.mxu0 0
    %4893 = vmatprep.subr.bf16.mxu0 0
    %4894 = vmatpush1.bf16.msra.mxu0 0
    %4895 = vmatprep.subr.bf16.mxu0 0
    %4896 = vmatpush1.bf16.msra.mxu0 0
    %4897 = vmatprep.subr.bf16.mxu0 0
    %4898 = vmatpush1.bf16.msra.mxu0 0
    %4899 = vmatprep.subr.bf16.mxu0 0
    %4900 = vmatpush1.bf16.msra.mxu0 0
    %4901 = vmatprep.subr.bf16.mxu0 0
    %4902 = vmatpush1.bf16.msra.mxu0 %v4885
    %4903 = vmatprep.subr.bf16.mxu0 0
    %4904 = vmatpush2.bf16.msra.mxu0 0
    %4905 = vmatprep.subr.bf16.mxu0 0
    %4906 = vmatpush2.bf16.msra.mxu0 0
    %4907 = vmatprep.subr.bf16.mxu0 0
    %4908 = vmatpush2.bf16.msra.mxu0 0
    %4909 = vmatprep.subr.bf16.mxu0 0
    %4910 = vmatpush2.bf16.msra.mxu0 0
    %4911 = vmatprep.subr.bf16.mxu0 0
    %4912 = vmatpush2.bf16.msra.mxu0 0
    %4913 = vmatprep.subr.bf16.mxu0 0
    %4914 = vmatpush2.bf16.msra.mxu0 0
    %4915 = vmatprep.subr.bf16.mxu0 0
    %4916 = vmatpush2.bf16.msra.mxu0 0
    %4917 = vmatprep.subr.bf16.mxu0 0
    %4918 = vmatpush2.bf16.msra.mxu0 0
    %4919 = vmatprep.mubr.bf16.mxu0 0
    %4920 = vmatmul.mubr.bf16.gmra.mxu0 %v4882
    %v4921 = vpop.f32.mrf.mxu0
    %v4922 = vadd.f32 0.0, %v4921
    %v4923 = vpop.f32.mrf.mxu0
    %v4924 = vpop.f32.mrf.mxu0
    %v4925 = vpop.f32.mrf.mxu0
    %4926 = vdwg.mxu0
    %v4927 = vpack.c.bf16 %v4922, %v4873
    %v4932 = vunpack.c.l.b16 %v4474
    %v4933 = vunpack.c.l.b16 %v4475
    %v4934 = vunpack.c.l.b16 %v4476
    %v4935 = vunpack.c.l.b16 %v4477
    %v4936 = vpack.c.b16 %v4933, %v4932
    %v4937 = vpack.c.b16 %v4935, %v4934
    %v4941 = vsel %vm149, %v4927, 0
    %4943 = vmatprep.subr.bf16.mxu0 0
    %4944 = vmatpush1.bf16.msra.mxu0 0
    %4945 = vmatprep.subr.bf16.mxu0 0
    %4946 = vmatpush1.bf16.msra.mxu0 0
    %4947 = vmatprep.subr.bf16.mxu0 0
    %4948 = vmatpush1.bf16.msra.mxu0 0
    %4949 = vmatprep.subr.bf16.mxu0 0
    %4950 = vmatpush1.bf16.msra.mxu0 0
    %4951 = vmatprep.subr.bf16.mxu0 0
    %4952 = vmatpush1.bf16.msra.mxu0 0
    %4953 = vmatprep.subr.bf16.mxu0 0
    %4954 = vmatpush1.bf16.msra.mxu0 0
    %4955 = vmatprep.subr.bf16.mxu0 0
    %4956 = vmatpush1.bf16.msra.mxu0 %v4937
    %4957 = vmatprep.subr.bf16.mxu0 0
    %4958 = vmatpush1.bf16.msra.mxu0 %v4936
    %4959 = vmatprep.subr.bf16.mxu0 0
    %4960 = vmatpush2.bf16.msra.mxu0 0
    %4961 = vmatprep.subr.bf16.mxu0 0
    %4962 = vmatpush2.bf16.msra.mxu0 0
    %4963 = vmatprep.subr.bf16.mxu0 0
    %4964 = vmatpush2.bf16.msra.mxu0 0
    %4965 = vmatprep.subr.bf16.mxu0 0
    %4966 = vmatpush2.bf16.msra.mxu0 0
    %4967 = vmatprep.subr.bf16.mxu0 0
    %4968 = vmatpush2.bf16.msra.mxu0 0
    %4969 = vmatprep.subr.bf16.mxu0 0
    %4970 = vmatpush2.bf16.msra.mxu0 0
    %4971 = vmatprep.subr.bf16.mxu0 0
    %4972 = vmatpush2.bf16.msra.mxu0 0
    %4973 = vmatprep.subr.bf16.mxu0 0
    %4974 = vmatpush2.bf16.msra.mxu0 0
    %4975 = vmatprep.mubr.bf16.mxu0 0
    %4976 = vmatmul.mubr.bf16.gmra.mxu0 %v4941
    %v4977 = vpop.f32.mrf.mxu0
    %v4978 = vadd.f32 0.0, %v4977
    %v4979 = vpop.f32.mrf.mxu0
    %v4980 = vpop.f32.mrf.mxu0
    %v4981 = vadd.f32 0.0, %v4980
    %v4982 = vpop.f32.mrf.mxu0
    %4983 = vdwg.mxu0
    %v4988 = vunpack.c.l.b16 %v4470
    %v4989 = vunpack.c.l.b16 %v4471
    %v4990 = vunpack.c.l.b16 %v4472
    %v4991 = vunpack.c.l.b16 %v4473
    %v4992 = vpack.c.b16 %v4989, %v4988
    %v4993 = vpack.c.b16 %v4991, %v4990
    %v4997 = vsel %vm149, %v4700, 0
    %4999 = vmatprep.subr.bf16.mxu0 0
    %5000 = vmatpush1.bf16.msra.mxu0 0
    %5001 = vmatprep.subr.bf16.mxu0 0
    %5002 = vmatpush1.bf16.msra.mxu0 0
    %5003 = vmatprep.subr.bf16.mxu0 0
    %5004 = vmatpush1.bf16.msra.mxu0 0
    %5005 = vmatprep.subr.bf16.mxu0 0
    %5006 = vmatpush1.bf16.msra.mxu0 0
    %5007 = vmatprep.subr.bf16.mxu0 0
    %5008 = vmatpush1.bf16.msra.mxu0 0
    %5009 = vmatprep.subr.bf16.mxu0 0
    %5010 = vmatpush1.bf16.msra.mxu0 0
    %5011 = vmatprep.subr.bf16.mxu0 0
    %5012 = vmatpush1.bf16.msra.mxu0 %v4993
    %5013 = vmatprep.subr.bf16.mxu0 0
    %5014 = vmatpush1.bf16.msra.mxu0 %v4992
    %5015 = vmatprep.subr.bf16.mxu0 0
    %5016 = vmatpush2.bf16.msra.mxu0 0
    %5017 = vmatprep.subr.bf16.mxu0 0
    %5018 = vmatpush2.bf16.msra.mxu0 0
    %5019 = vmatprep.subr.bf16.mxu0 0
    %5020 = vmatpush2.bf16.msra.mxu0 0
    %5021 = vmatprep.subr.bf16.mxu0 0
    %5022 = vmatpush2.bf16.msra.mxu0 0
    %5023 = vmatprep.subr.bf16.mxu0 0
    %5024 = vmatpush2.bf16.msra.mxu0 0
    %5025 = vmatprep.subr.bf16.mxu0 0
    %5026 = vmatpush2.bf16.msra.mxu0 0
    %5027 = vmatprep.subr.bf16.mxu0 0
    %5028 = vmatpush2.bf16.msra.mxu0 0
    %5029 = vmatprep.subr.bf16.mxu0 0
    %5030 = vmatpush2.bf16.msra.mxu0 0
    %5031 = vmatprep.mubr.bf16.mxu0 0
    %5032 = vmatmul.mubr.bf16.gmra.mxu0 %v4997
    %v5033 = vpop.f32.mrf.mxu0
    %v5034 = vadd.f32 %v4978, %v5033
    %v5035 = vpop.f32.mrf.mxu0
    %v5036 = vpop.f32.mrf.mxu0
    %v5037 = vadd.f32 %v4981, %v5036
    %v5038 = vpop.f32.mrf.mxu0
    %5039 = vdwg.mxu0
    %5040 = vrot.lane.b32.xlu0 %v4486, 64
    %v5041 = vpop.permute.xlu0 %5040
    %5042 = vrot.lane.b32.xlu0 %v4488, 64
    %v5043 = vpop.permute.xlu0 %5042
    %v5045 = vsel %vm149, %v5041, 0
    %v5048 = vsel %vm149, %v5043, 0
    %5050 = vmatprep.subr.bf16.mxu0 0
    %5051 = vmatpush1.bf16.xpose.msra.mxu0 0
    %5052 = vmatprep.subr.bf16.mxu0 0
    %5053 = vmatpush1.bf16.xpose.msra.mxu0 0
    %5054 = vmatprep.subr.bf16.mxu0 0
    %5055 = vmatpush1.bf16.xpose.msra.mxu0 0
    %5056 = vmatprep.subr.bf16.mxu0 0
    %5057 = vmatpush1.bf16.xpose.msra.mxu0 0
    %5058 = vmatprep.subr.bf16.mxu0 0
    %5059 = vmatpush1.bf16.xpose.msra.mxu0 0
    %5060 = vmatprep.subr.bf16.mxu0 0
    %5061 = vmatpush1.bf16.xpose.msra.mxu0 0
    %5062 = vmatprep.subr.bf16.mxu0 0
    %5063 = vmatpush1.bf16.xpose.msra.mxu0 0
    %5064 = vmatprep.subr.bf16.mxu0 0
    %5065 = vmatpush1.bf16.xpose.msra.mxu0 %v5048
    %5066 = vmatprep.subr.bf16.mxu0 0
    %5067 = vmatpush2.bf16.xpose.msra.mxu0 0
    %5068 = vmatprep.subr.bf16.mxu0 0
    %5069 = vmatpush2.bf16.xpose.msra.mxu0 0
    %5070 = vmatprep.subr.bf16.mxu0 0
    %5071 = vmatpush2.bf16.xpose.msra.mxu0 0
    %5072 = vmatprep.subr.bf16.mxu0 0
    %5073 = vmatpush2.bf16.xpose.msra.mxu0 0
    %5074 = vmatprep.subr.bf16.mxu0 0
    %5075 = vmatpush2.bf16.xpose.msra.mxu0 0
    %5076 = vmatprep.subr.bf16.mxu0 0
    %5077 = vmatpush2.bf16.xpose.msra.mxu0 0
    %5078 = vmatprep.subr.bf16.mxu0 0
    %5079 = vmatpush2.bf16.xpose.msra.mxu0 0
    %5080 = vmatprep.subr.bf16.mxu0 0
    %5081 = vmatpush2.bf16.xpose.msra.mxu0 0
    %5082 = vmatprep.mubr.bf16.mxu0 0
    %5083 = vmatmul.mubr.bf16.gmra.mxu0 %v5045
    %v5084 = vpop.f32.mrf.mxu0
    %v5085 = vadd.f32 0.0, %v5084
    %v5086 = vpop.f32.mrf.mxu0
    %v5087 = vpop.f32.mrf.mxu0
    %v5088 = vpop.f32.mrf.mxu0
    %5089 = vdwg.mxu0
    %5090 = vrot.lane.b32.xlu0 %v4487, 64
    %v5091 = vpop.permute.xlu0 %5090
    %5092 = vrot.lane.b32.xlu0 %v4489, 64
    %v5093 = vpop.permute.xlu0 %5092
    %v5095 = vsel %vm149, %v5091, 0
    %v5098 = vsel %vm149, %v5093, 0
    %5100 = vmatprep.subr.bf16.mxu0 0
    %5101 = vmatpush1.bf16.xpose.msra.mxu0 0
    %5102 = vmatprep.subr.bf16.mxu0 0
    %5103 = vmatpush1.bf16.xpose.msra.mxu0 0
    %5104 = vmatprep.subr.bf16.mxu0 0
    %5105 = vmatpush1.bf16.xpose.msra.mxu0 0
    %5106 = vmatprep.subr.bf16.mxu0 0
    %5107 = vmatpush1.bf16.xpose.msra.mxu0 0
    %5108 = vmatprep.subr.bf16.mxu0 0
    %5109 = vmatpush1.bf16.xpose.msra.mxu0 0
    %5110 = vmatprep.subr.bf16.mxu0 0
    %5111 = vmatpush1.bf16.xpose.msra.mxu0 0
    %5112 = vmatprep.subr.bf16.mxu0 0
    %5113 = vmatpush1.bf16.xpose.msra.mxu0 0
    %5114 = vmatprep.subr.bf16.mxu0 0
    %5115 = vmatpush1.bf16.xpose.msra.mxu0 %v5098
    %5116 = vmatprep.subr.bf16.mxu0 0
    %5117 = vmatpush2.bf16.xpose.msra.mxu0 0
    %5118 = vmatprep.subr.bf16.mxu0 0
    %5119 = vmatpush2.bf16.xpose.msra.mxu0 0
    %5120 = vmatprep.subr.bf16.mxu0 0
    %5121 = vmatpush2.bf16.xpose.msra.mxu0 0
    %5122 = vmatprep.subr.bf16.mxu0 0
    %5123 = vmatpush2.bf16.xpose.msra.mxu0 0
    %5124 = vmatprep.subr.bf16.mxu0 0
    %5125 = vmatpush2.bf16.xpose.msra.mxu0 0
    %5126 = vmatprep.subr.bf16.mxu0 0
    %5127 = vmatpush2.bf16.xpose.msra.mxu0 0
    %5128 = vmatprep.subr.bf16.mxu0 0
    %5129 = vmatpush2.bf16.xpose.msra.mxu0 0
    %5130 = vmatprep.subr.bf16.mxu0 0
    %5131 = vmatpush2.bf16.xpose.msra.mxu0 0
    %5132 = vmatprep.mubr.bf16.mxu0 0
    %5133 = vmatmul.mubr.bf16.gmra.mxu0 %v5095
    %v5134 = vpop.f32.mrf.mxu0
    %v5135 = vadd.f32 0.0, %v5134
    %v5136 = vpop.f32.mrf.mxu0
    %v5137 = vpop.f32.mrf.mxu0
    %v5138 = vpop.f32.mrf.mxu0
    %5139 = vdwg.mxu0
    %v5140 = vsel %vm970, %v5085, -inf
    %5141 = vmax.xlane.f32.xlu0 %v5140
    %v5142 = vpop.xlane.xlu0 %5141
    %v5143 = vsel %vm970, %v5135, -inf
    %5144 = vmax.xlane.f32.xlu0 %v5143
    %v5145 = vpop.xlane.xlu0 %5144
    %v5146 = vsub.f32 %v5085, %v5142
    %v5147 = vsub.f32 %v5135, %v5145
    %v5148 = vmul.f32 %v5146, 1.442695
    %v5149 = vpow.pop %v5148
    %v5150 = vmul.f32 %v5147, 1.442695
    %v5151 = vpow.pop %v5150
    %v5152 = vsel %vm970, %v5149, 0.0
    %5153 = vadd.xlane.f32.xlu0 %v5152
    %v5154 = vpop.xlane.xlu0 %5153
    %v5155 = vsel %vm970, %v5151, 0.0
    %5156 = vadd.xlane.f32.xlu0 %v5155
    %v5157 = vpop.xlane.xlu0 %5156
    %v5158 = vrcp.pop %v5154
    %v5159 = vrcp.pop %v5157
    %v5160 = vmul.f32 %v5149, %v5158
    %v5161 = vmul.f32 %v5151, %v5159
    %v5162 = vpack.c.bf16 %v5160, %v5160
    %v5163 = vpack.c.bf16 %v5161, %v5161
    %5164 = vrot.lane.b32.xlu0 %v4490, 64
    %v5165 = vpop.permute.xlu0 %5164
    %v5167 = vsel %vm970, %v5162, 0
    %v5170 = vsel %vm998, %v5165, 0
    %5172 = vmatprep.subr.bf16.mxu0 0
    %5173 = vmatpush1.bf16.msra.mxu0 0
    %5174 = vmatprep.subr.bf16.mxu0 0
    %5175 = vmatpush1.bf16.msra.mxu0 0
    %5176 = vmatprep.subr.bf16.mxu0 0
    %5177 = vmatpush1.bf16.msra.mxu0 0
    %5178 = vmatprep.subr.bf16.mxu0 0
    %5179 = vmatpush1.bf16.msra.mxu0 0
    %5180 = vmatprep.subr.bf16.mxu0 0
    %5181 = vmatpush1.bf16.msra.mxu0 0
    %5182 = vmatprep.subr.bf16.mxu0 0
    %5183 = vmatpush1.bf16.msra.mxu0 0
    %5184 = vmatprep.subr.bf16.mxu0 0
    %5185 = vmatpush1.bf16.msra.mxu0 0
    %5186 = vmatprep.subr.bf16.mxu0 0
    %5187 = vmatpush1.bf16.msra.mxu0 %v5170
    %5188 = vmatprep.subr.bf16.mxu0 0
    %5189 = vmatpush2.bf16.msra.mxu0 0
    %5190 = vmatprep.subr.bf16.mxu0 0
    %5191 = vmatpush2.bf16.msra.mxu0 0
    %5192 = vmatprep.subr.bf16.mxu0 0
    %5193 = vmatpush2.bf16.msra.mxu0 0
    %5194 = vmatprep.subr.bf16.mxu0 0
    %5195 = vmatpush2.bf16.msra.mxu0 0
    %5196 = vmatprep.subr.bf16.mxu0 0
    %5197 = vmatpush2.bf16.msra.mxu0 0
    %5198 = vmatprep.subr.bf16.mxu0 0
    %5199 = vmatpush2.bf16.msra.mxu0 0
    %5200 = vmatprep.subr.bf16.mxu0 0
    %5201 = vmatpush2.bf16.msra.mxu0 0
    %5202 = vmatprep.subr.bf16.mxu0 0
    %5203 = vmatpush2.bf16.msra.mxu0 0
    %5204 = vmatprep.mubr.bf16.mxu0 0
    %5205 = vmatmul.mubr.bf16.gmra.mxu0 %v5167
    %v5206 = vpop.f32.mrf.mxu0
    %v5207 = vadd.f32 0.0, %v5206
    %v5208 = vpop.f32.mrf.mxu0
    %v5209 = vpop.f32.mrf.mxu0
    %v5210 = vpop.f32.mrf.mxu0
    %5211 = vdwg.mxu0
    %5212 = vrot.lane.b32.xlu0 %v4491, 64
    %v5213 = vpop.permute.xlu0 %5212
    %v5215 = vsel %vm970, %v5163, 0
    %v5218 = vsel %vm998, %v5213, 0
    %5220 = vmatprep.subr.bf16.mxu0 0
    %5221 = vmatpush1.bf16.msra.mxu0 0
    %5222 = vmatprep.subr.bf16.mxu0 0
    %5223 = vmatpush1.bf16.msra.mxu0 0
    %5224 = vmatprep.subr.bf16.mxu0 0
    %5225 = vmatpush1.bf16.msra.mxu0 0
    %5226 = vmatprep.subr.bf16.mxu0 0
    %5227 = vmatpush1.bf16.msra.mxu0 0
    %5228 = vmatprep.subr.bf16.mxu0 0
    %5229 = vmatpush1.bf16.msra.mxu0 0
    %5230 = vmatprep.subr.bf16.mxu0 0
    %5231 = vmatpush1.bf16.msra.mxu0 0
    %5232 = vmatprep.subr.bf16.mxu0 0
    %5233 = vmatpush1.bf16.msra.mxu0 0
    %5234 = vmatprep.subr.bf16.mxu0 0
    %5235 = vmatpush1.bf16.msra.mxu0 %v5218
    %5236 = vmatprep.subr.bf16.mxu0 0
    %5237 = vmatpush2.bf16.msra.mxu0 0
    %5238 = vmatprep.subr.bf16.mxu0 0
    %5239 = vmatpush2.bf16.msra.mxu0 0
    %5240 = vmatprep.subr.bf16.mxu0 0
    %5241 = vmatpush2.bf16.msra.mxu0 0
    %5242 = vmatprep.subr.bf16.mxu0 0
    %5243 = vmatpush2.bf16.msra.mxu0 0
    %5244 = vmatprep.subr.bf16.mxu0 0
    %5245 = vmatpush2.bf16.msra.mxu0 0
    %5246 = vmatprep.subr.bf16.mxu0 0
    %5247 = vmatpush2.bf16.msra.mxu0 0
    %5248 = vmatprep.subr.bf16.mxu0 0
    %5249 = vmatpush2.bf16.msra.mxu0 0
    %5250 = vmatprep.subr.bf16.mxu0 0
    %5251 = vmatpush2.bf16.msra.mxu0 0
    %5252 = vmatprep.mubr.bf16.mxu0 0
    %5253 = vmatmul.mubr.bf16.gmra.mxu0 %v5215
    %v5254 = vpop.f32.mrf.mxu0
    %v5255 = vadd.f32 0.0, %v5254
    %v5256 = vpop.f32.mrf.mxu0
    %v5257 = vpop.f32.mrf.mxu0
    %v5258 = vpop.f32.mrf.mxu0
    %5259 = vdwg.mxu0
    %v5260 = vpack.c.bf16 %v5255, %v5207
    %v5265 = vunpack.c.l.b16 %v4478
    %v5266 = vunpack.c.l.b16 %v4479
    %v5267 = vunpack.c.l.b16 %v4480
    %v5268 = vunpack.c.l.b16 %v4481
    %v5269 = vpack.c.b16 %v5266, %v5265
    %v5270 = vpack.c.b16 %v5268, %v5267
    %v5274 = vsel %vm149, %v5260, 0
    %5276 = vmatprep.subr.bf16.mxu0 0
    %5277 = vmatpush1.bf16.msra.mxu0 0
    %5278 = vmatprep.subr.bf16.mxu0 0
    %5279 = vmatpush1.bf16.msra.mxu0 0
    %5280 = vmatprep.subr.bf16.mxu0 0
    %5281 = vmatpush1.bf16.msra.mxu0 0
    %5282 = vmatprep.subr.bf16.mxu0 0
    %5283 = vmatpush1.bf16.msra.mxu0 0
    %5284 = vmatprep.subr.bf16.mxu0 0
    %5285 = vmatpush1.bf16.msra.mxu0 0
    %5286 = vmatprep.subr.bf16.mxu0 0
    %5287 = vmatpush1.bf16.msra.mxu0 0
    %5288 = vmatprep.subr.bf16.mxu0 0
    %5289 = vmatpush1.bf16.msra.mxu0 %v5270
    %5290 = vmatprep.subr.bf16.mxu0 0
    %5291 = vmatpush1.bf16.msra.mxu0 %v5269
    %5292 = vmatprep.subr.bf16.mxu0 0
    %5293 = vmatpush2.bf16.msra.mxu0 0
    %5294 = vmatprep.subr.bf16.mxu0 0
    %5295 = vmatpush2.bf16.msra.mxu0 0
    %5296 = vmatprep.subr.bf16.mxu0 0
    %5297 = vmatpush2.bf16.msra.mxu0 0
    %5298 = vmatprep.subr.bf16.mxu0 0
    %5299 = vmatpush2.bf16.msra.mxu0 0
    %5300 = vmatprep.subr.bf16.mxu0 0
    %5301 = vmatpush2.bf16.msra.mxu0 0
    %5302 = vmatprep.subr.bf16.mxu0 0
    %5303 = vmatpush2.bf16.msra.mxu0 0
    %5304 = vmatprep.subr.bf16.mxu0 0
    %5305 = vmatpush2.bf16.msra.mxu0 0
    %5306 = vmatprep.subr.bf16.mxu0 0
    %5307 = vmatpush2.bf16.msra.mxu0 0
    %5308 = vmatprep.mubr.bf16.mxu0 0
    %5309 = vmatmul.mubr.bf16.gmra.mxu0 %v5274
    %v5310 = vpop.f32.mrf.mxu0
    %v5311 = vadd.f32 0.0, %v5310
    %v5312 = vpop.f32.mrf.mxu0
    %v5313 = vpop.f32.mrf.mxu0
    %v5314 = vadd.f32 0.0, %v5313
    %v5315 = vpop.f32.mrf.mxu0
    %5316 = vdwg.mxu0
    %v5317 = vadd.f32 %v5034, %v5311
    %v5318 = vadd.f32 %v5037, %v5314
    %5319 = vrot.lane.b32.xlu0 %v4486, 32
    %v5320 = vpop.permute.xlu0 %5319
    %5321 = vrot.lane.b32.xlu0 %v4488, 32
    %v5322 = vpop.permute.xlu0 %5321
    %v5324 = vsel %vm149, %v5320, 0
    %v5327 = vsel %vm149, %v5322, 0
    %5329 = vmatprep.subr.bf16.mxu0 0
    %5330 = vmatpush1.bf16.xpose.msra.mxu0 0
    %5331 = vmatprep.subr.bf16.mxu0 0
    %5332 = vmatpush1.bf16.xpose.msra.mxu0 0
    %5333 = vmatprep.subr.bf16.mxu0 0
    %5334 = vmatpush1.bf16.xpose.msra.mxu0 0
    %5335 = vmatprep.subr.bf16.mxu0 0
    %5336 = vmatpush1.bf16.xpose.msra.mxu0 0
    %5337 = vmatprep.subr.bf16.mxu0 0
    %5338 = vmatpush1.bf16.xpose.msra.mxu0 0
    %5339 = vmatprep.subr.bf16.mxu0 0
    %5340 = vmatpush1.bf16.xpose.msra.mxu0 0
    %5341 = vmatprep.subr.bf16.mxu0 0
    %5342 = vmatpush1.bf16.xpose.msra.mxu0 0
    %5343 = vmatprep.subr.bf16.mxu0 0
    %5344 = vmatpush1.bf16.xpose.msra.mxu0 %v5327
    %5345 = vmatprep.subr.bf16.mxu0 0
    %5346 = vmatpush2.bf16.xpose.msra.mxu0 0
    %5347 = vmatprep.subr.bf16.mxu0 0
    %5348 = vmatpush2.bf16.xpose.msra.mxu0 0
    %5349 = vmatprep.subr.bf16.mxu0 0
    %5350 = vmatpush2.bf16.xpose.msra.mxu0 0
    %5351 = vmatprep.subr.bf16.mxu0 0
    %5352 = vmatpush2.bf16.xpose.msra.mxu0 0
    %5353 = vmatprep.subr.bf16.mxu0 0
    %5354 = vmatpush2.bf16.xpose.msra.mxu0 0
    %5355 = vmatprep.subr.bf16.mxu0 0
    %5356 = vmatpush2.bf16.xpose.msra.mxu0 0
    %5357 = vmatprep.subr.bf16.mxu0 0
    %5358 = vmatpush2.bf16.xpose.msra.mxu0 0
    %5359 = vmatprep.subr.bf16.mxu0 0
    %5360 = vmatpush2.bf16.xpose.msra.mxu0 0
    %5361 = vmatprep.mubr.bf16.mxu0 0
    %5362 = vmatmul.mubr.bf16.gmra.mxu0 %v5324
    %v5363 = vpop.f32.mrf.mxu0
    %v5364 = vadd.f32 0.0, %v5363
    %v5365 = vpop.f32.mrf.mxu0
    %v5366 = vpop.f32.mrf.mxu0
    %v5367 = vpop.f32.mrf.mxu0
    %5368 = vdwg.mxu0
    %5369 = vrot.lane.b32.xlu0 %v4487, 32
    %v5370 = vpop.permute.xlu0 %5369
    %5371 = vrot.lane.b32.xlu0 %v4489, 32
    %v5372 = vpop.permute.xlu0 %5371
    %v5374 = vsel %vm149, %v5370, 0
    %v5377 = vsel %vm149, %v5372, 0
    %5379 = vmatprep.subr.bf16.mxu0 0
    %5380 = vmatpush1.bf16.xpose.msra.mxu0 0
    %5381 = vmatprep.subr.bf16.mxu0 0
    %5382 = vmatpush1.bf16.xpose.msra.mxu0 0
    %5383 = vmatprep.subr.bf16.mxu0 0
    %5384 = vmatpush1.bf16.xpose.msra.mxu0 0
    %5385 = vmatprep.subr.bf16.mxu0 0
    %5386 = vmatpush1.bf16.xpose.msra.mxu0 0
    %5387 = vmatprep.subr.bf16.mxu0 0
    %5388 = vmatpush1.bf16.xpose.msra.mxu0 0
    %5389 = vmatprep.subr.bf16.mxu0 0
    %5390 = vmatpush1.bf16.xpose.msra.mxu0 0
    %5391 = vmatprep.subr.bf16.mxu0 0
    %5392 = vmatpush1.bf16.xpose.msra.mxu0 0
    %5393 = vmatprep.subr.bf16.mxu0 0
    %5394 = vmatpush1.bf16.xpose.msra.mxu0 %v5377
    %5395 = vmatprep.subr.bf16.mxu0 0
    %5396 = vmatpush2.bf16.xpose.msra.mxu0 0
    %5397 = vmatprep.subr.bf16.mxu0 0
    %5398 = vmatpush2.bf16.xpose.msra.mxu0 0
    %5399 = vmatprep.subr.bf16.mxu0 0
    %5400 = vmatpush2.bf16.xpose.msra.mxu0 0
    %5401 = vmatprep.subr.bf16.mxu0 0
    %5402 = vmatpush2.bf16.xpose.msra.mxu0 0
    %5403 = vmatprep.subr.bf16.mxu0 0
    %5404 = vmatpush2.bf16.xpose.msra.mxu0 0
    %5405 = vmatprep.subr.bf16.mxu0 0
    %5406 = vmatpush2.bf16.xpose.msra.mxu0 0
    %5407 = vmatprep.subr.bf16.mxu0 0
    %5408 = vmatpush2.bf16.xpose.msra.mxu0 0
    %5409 = vmatprep.subr.bf16.mxu0 0
    %5410 = vmatpush2.bf16.xpose.msra.mxu0 0
    %5411 = vmatprep.mubr.bf16.mxu0 0
    %5412 = vmatmul.mubr.bf16.gmra.mxu0 %v5374
    %v5413 = vpop.f32.mrf.mxu0
    %v5414 = vadd.f32 0.0, %v5413
    %v5415 = vpop.f32.mrf.mxu0
    %v5416 = vpop.f32.mrf.mxu0
    %v5417 = vpop.f32.mrf.mxu0
    %5418 = vdwg.mxu0
    %v5419 = vsel %vm970, %v5364, -inf
    %5420 = vmax.xlane.f32.xlu0 %v5419
    %v5421 = vpop.xlane.xlu0 %5420
    %v5422 = vsel %vm970, %v5414, -inf
    %5423 = vmax.xlane.f32.xlu0 %v5422
    %v5424 = vpop.xlane.xlu0 %5423
    %v5425 = vsub.f32 %v5364, %v5421
    %v5426 = vsub.f32 %v5414, %v5424
    %v5427 = vmul.f32 %v5425, 1.442695
    %v5428 = vpow.pop %v5427
    %v5429 = vmul.f32 %v5426, 1.442695
    %v5430 = vpow.pop %v5429
    %v5431 = vsel %vm970, %v5428, 0.0
    %5432 = vadd.xlane.f32.xlu0 %v5431
    %v5433 = vpop.xlane.xlu0 %5432
    %v5434 = vsel %vm970, %v5430, 0.0
    %5435 = vadd.xlane.f32.xlu0 %v5434
    %v5436 = vpop.xlane.xlu0 %5435
    %v5437 = vrcp.pop %v5433
    %v5438 = vrcp.pop %v5436
    %v5439 = vmul.f32 %v5428, %v5437
    %v5440 = vmul.f32 %v5430, %v5438
    %v5441 = vpack.c.bf16 %v5439, %v5439
    %v5442 = vpack.c.bf16 %v5440, %v5440
    %5443 = vrot.lane.b32.xlu0 %v4490, 32
    %v5444 = vpop.permute.xlu0 %5443
    %v5446 = vsel %vm970, %v5441, 0
    %v5449 = vsel %vm998, %v5444, 0
    %5451 = vmatprep.subr.bf16.mxu0 0
    %5452 = vmatpush1.bf16.msra.mxu0 0
    %5453 = vmatprep.subr.bf16.mxu0 0
    %5454 = vmatpush1.bf16.msra.mxu0 0
    %5455 = vmatprep.subr.bf16.mxu0 0
    %5456 = vmatpush1.bf16.msra.mxu0 0
    %5457 = vmatprep.subr.bf16.mxu0 0
    %5458 = vmatpush1.bf16.msra.mxu0 0
    %5459 = vmatprep.subr.bf16.mxu0 0
    %5460 = vmatpush1.bf16.msra.mxu0 0
    %5461 = vmatprep.subr.bf16.mxu0 0
    %5462 = vmatpush1.bf16.msra.mxu0 0
    %5463 = vmatprep.subr.bf16.mxu0 0
    %5464 = vmatpush1.bf16.msra.mxu0 0
    %5465 = vmatprep.subr.bf16.mxu0 0
    %5466 = vmatpush1.bf16.msra.mxu0 %v5449
    %5467 = vmatprep.subr.bf16.mxu0 0
    %5468 = vmatpush2.bf16.msra.mxu0 0
    %5469 = vmatprep.subr.bf16.mxu0 0
    %5470 = vmatpush2.bf16.msra.mxu0 0
    %5471 = vmatprep.subr.bf16.mxu0 0
    %5472 = vmatpush2.bf16.msra.mxu0 0
    %5473 = vmatprep.subr.bf16.mxu0 0
    %5474 = vmatpush2.bf16.msra.mxu0 0
    %5475 = vmatprep.subr.bf16.mxu0 0
    %5476 = vmatpush2.bf16.msra.mxu0 0
    %5477 = vmatprep.subr.bf16.mxu0 0
    %5478 = vmatpush2.bf16.msra.mxu0 0
    %5479 = vmatprep.subr.bf16.mxu0 0
    %5480 = vmatpush2.bf16.msra.mxu0 0
    %5481 = vmatprep.subr.bf16.mxu0 0
    %5482 = vmatpush2.bf16.msra.mxu0 0
    %5483 = vmatprep.mubr.bf16.mxu0 0
    %5484 = vmatmul.mubr.bf16.gmra.mxu0 %v5446
    %v5485 = vpop.f32.mrf.mxu0
    %v5486 = vadd.f32 0.0, %v5485
    %v5487 = vpop.f32.mrf.mxu0
    %v5488 = vpop.f32.mrf.mxu0
    %v5489 = vpop.f32.mrf.mxu0
    %5490 = vdwg.mxu0
    %5491 = vrot.lane.b32.xlu0 %v4491, 32
    %v5492 = vpop.permute.xlu0 %5491
    %v5494 = vsel %vm970, %v5442, 0
    %v5497 = vsel %vm998, %v5492, 0
    %5499 = vmatprep.subr.bf16.mxu0 0
    %5500 = vmatpush1.bf16.msra.mxu0 0
    %5501 = vmatprep.subr.bf16.mxu0 0
    %5502 = vmatpush1.bf16.msra.mxu0 0
    %5503 = vmatprep.subr.bf16.mxu0 0
    %5504 = vmatpush1.bf16.msra.mxu0 0
    %5505 = vmatprep.subr.bf16.mxu0 0
    %5506 = vmatpush1.bf16.msra.mxu0 0
    %5507 = vmatprep.subr.bf16.mxu0 0
    %5508 = vmatpush1.bf16.msra.mxu0 0
    %5509 = vmatprep.subr.bf16.mxu0 0
    %5510 = vmatpush1.bf16.msra.mxu0 0
    %5511 = vmatprep.subr.bf16.mxu0 0
    %5512 = vmatpush1.bf16.msra.mxu0 0
    %5513 = vmatprep.subr.bf16.mxu0 0
    %5514 = vmatpush1.bf16.msra.mxu0 %v5497
    %5515 = vmatprep.subr.bf16.mxu0 0
    %5516 = vmatpush2.bf16.msra.mxu0 0
    %5517 = vmatprep.subr.bf16.mxu0 0
    %5518 = vmatpush2.bf16.msra.mxu0 0
    %5519 = vmatprep.subr.bf16.mxu0 0
    %5520 = vmatpush2.bf16.msra.mxu0 0
    %5521 = vmatprep.subr.bf16.mxu0 0
    %5522 = vmatpush2.bf16.msra.mxu0 0
    %5523 = vmatprep.subr.bf16.mxu0 0
    %5524 = vmatpush2.bf16.msra.mxu0 0
    %5525 = vmatprep.subr.bf16.mxu0 0
    %5526 = vmatpush2.bf16.msra.mxu0 0
    %5527 = vmatprep.subr.bf16.mxu0 0
    %5528 = vmatpush2.bf16.msra.mxu0 0
    %5529 = vmatprep.subr.bf16.mxu0 0
    %5530 = vmatpush2.bf16.msra.mxu0 0
    %5531 = vmatprep.mubr.bf16.mxu0 0
    %5532 = vmatmul.mubr.bf16.gmra.mxu0 %v5494
    %v5533 = vpop.f32.mrf.mxu0
    %v5534 = vadd.f32 0.0, %v5533
    %v5535 = vpop.f32.mrf.mxu0
    %v5536 = vpop.f32.mrf.mxu0
    %v5537 = vpop.f32.mrf.mxu0
    %5538 = vdwg.mxu0
    %v5539 = vpack.c.bf16 %v5534, %v5486
    %v5544 = vunpack.c.l.b16 %v4482
    %v5545 = vunpack.c.l.b16 %v4483
    %v5546 = vunpack.c.l.b16 %v4484
    %v5547 = vunpack.c.l.b16 %v4485
    %v5548 = vpack.c.b16 %v5545, %v5544
    %v5549 = vpack.c.b16 %v5547, %v5546
    %v5553 = vsel %vm149, %v5539, 0
    %5555 = vmatprep.subr.bf16.mxu0 0
    %5556 = vmatpush1.bf16.msra.mxu0 0
    %5557 = vmatprep.subr.bf16.mxu0 0
    %5558 = vmatpush1.bf16.msra.mxu0 0
    %5559 = vmatprep.subr.bf16.mxu0 0
    %5560 = vmatpush1.bf16.msra.mxu0 0
    %5561 = vmatprep.subr.bf16.mxu0 0
    %5562 = vmatpush1.bf16.msra.mxu0 0
    %5563 = vmatprep.subr.bf16.mxu0 0
    %5564 = vmatpush1.bf16.msra.mxu0 0
    %5565 = vmatprep.subr.bf16.mxu0 0
    %5566 = vmatpush1.bf16.msra.mxu0 0
    %5567 = vmatprep.subr.bf16.mxu0 0
    %5568 = vmatpush1.bf16.msra.mxu0 %v5549
    %5569 = vmatprep.subr.bf16.mxu0 0
    %5570 = vmatpush1.bf16.msra.mxu0 %v5548
    %5571 = vmatprep.subr.bf16.mxu0 0
    %5572 = vmatpush2.bf16.msra.mxu0 0
    %5573 = vmatprep.subr.bf16.mxu0 0
    %5574 = vmatpush2.bf16.msra.mxu0 0
    %5575 = vmatprep.subr.bf16.mxu0 0
    %5576 = vmatpush2.bf16.msra.mxu0 0
    %5577 = vmatprep.subr.bf16.mxu0 0
    %5578 = vmatpush2.bf16.msra.mxu0 0
    %5579 = vmatprep.subr.bf16.mxu0 0
    %5580 = vmatpush2.bf16.msra.mxu0 0
    %5581 = vmatprep.subr.bf16.mxu0 0
    %5582 = vmatpush2.bf16.msra.mxu0 0
    %5583 = vmatprep.subr.bf16.mxu0 0
    %5584 = vmatpush2.bf16.msra.mxu0 0
    %5585 = vmatprep.subr.bf16.mxu0 0
    %5586 = vmatpush2.bf16.msra.mxu0 0
    %5587 = vmatprep.mubr.bf16.mxu0 0
    %5588 = vmatmul.mubr.bf16.gmra.mxu0 %v5553
    %v5589 = vpop.f32.mrf.mxu0
    %v5590 = vadd.f32 0.0, %v5589
    %v5591 = vpop.f32.mrf.mxu0
    %v5592 = vpop.f32.mrf.mxu0
    %v5593 = vadd.f32 0.0, %v5592
    %v5594 = vpop.f32.mrf.mxu0
    %5595 = vdwg.mxu0
    %v5596 = vadd.f32 %v5317, %v5590
    %v5597 = vadd.f32 %v5318, %v5593
    %v5598 = vlaneseq
    %v5599 = vshrl.u32 %v5598, 7
    %v5600 = vsub.s32 0, %v5599
    %v5601 = vrot.slane %v4204, %v5600
    %v5602 = vadd.f32 %v5596, %v5601
    %v5603 = vadd.f32 %v5597, %v5601
    %v5604 = vadd.f32 %v4201, %v5602
    %v5605 = vadd.f32 %v4202, %v5603
    %5606 = vadd.xlane.f32.xlu0 %v5604
    %v5607 = vpop.xlane.xlu0 %5606
    %5608 = vadd.xlane.f32.xlu0 %v5605
    %v5609 = vpop.xlane.xlu0 %5608
    %v5610 = vmul.f32 %v5607, %v1998
    %v5611 = vmul.f32 %v5609, %v1998
    %v5612 = vsub.f32 %v5604, %v5610
    %v5613 = vsub.f32 %v5605, %v5611
    %v5614 = vmul.f32 %v5612, %v5612
    %v5615 = vmul.f32 %v5613, %v5613
    %5616 = vadd.xlane.f32.xlu0 %v5614
    %v5617 = vpop.xlane.xlu0 %5616
    %5618 = vadd.xlane.f32.xlu0 %v5615
    %v5619 = vpop.xlane.xlu0 %5618
    %v5620 = vmul.f32 %v5617, %v1998
    %v5621 = vmul.f32 %v5619, %v1998
    %v5622 = vadd.f32 %v5620, 1e-05
    %v5623 = vadd.f32 %v5621, 1e-05
    %v5624 = vrsqrt.pop %v5622
    %v5625 = vrsqrt.pop %v5623
    %v5626 = vmul.f32 %v5612, %v5624
    %v5627 = vmul.f32 %v5613, %v5625
    %v5628 = vlaneseq
    %v5629 = vshrl.u32 %v5628, 7
    %v5630 = vsub.s32 1, %v5629
    %v5631 = vrot.slane %v4204, %v5630
    %v5632 = vmul.f32 %v5626, %v5631
    %v5633 = vmul.f32 %v5627, %v5631
    %v5634 = vlaneseq
    %v5635 = vshrl.u32 %v5634, 7
    %v5636 = vsub.s32 2, %v5635
    %v5637 = vrot.slane %v4204, %v5636
    %v5638 = vadd.f32 %v5632, %v5637
    %v5639 = vadd.f32 %v5633, %v5637
    %v5640 = vpack.c.bf16 %v5639, %v5638
    %s5641 = scalar_lea.vmem [#allocation7], 256
    %v5642 = vld [vmem:[%s5641] sm:$0xff]
    %v5643 = vld [vmem:[%s5641 + $0x8] sm:$0xff]
    %v5644 = vld [vmem:[%s5641 + $0x10] sm:$0xff]
    %v5645 = vld [vmem:[%s5641 + $0x18] sm:$0xff]
    %v5646 = vld [vmem:[%s5641 + $0x20] sm:$0xff]
    %v5647 = vld [vmem:[%s5641 + $0x28] sm:$0xff]
    %v5648 = vld [vmem:[%s5641 + $0x30] sm:$0xff]
    %v5649 = vld [vmem:[%s5641 + $0x38] sm:$0xff]
    %v5650 = vld [vmem:[%s5641 + $0x40] sm:$0xff]
    %v5651 = vld [vmem:[%s5641 + $0x48] sm:$0xff]
    %v5652 = vld [vmem:[%s5641 + $0x50] sm:$0xff]
    %v5653 = vld [vmem:[%s5641 + $0x58] sm:$0xff]
    %v5654 = vld [vmem:[%s5641 + $0x60] sm:$0xff]
    %v5655 = vld [vmem:[%s5641 + $0x68] sm:$0xff]
    %v5656 = vld [vmem:[%s5641 + $0x70] sm:$0xff]
    %v5657 = vld [vmem:[%s5641 + $0x78] sm:$0xff]
    %s5658 = scalar_lea.vmem [#allocation8], 4
    %v5659 = vld [vmem:[%s5658] sm:$0x3]
    %v5661 = vlaneseq
    %v5662 = vshrl.u32 %v5661, 7
    %v5663 = vsub.s32 0, %v5662
    %v5664 = vrot.slane %v5659, %v5663
    %v5665 = vlaneseq
    %v5666 = vshrl.u32 %v5665, 7
    %v5667 = vsub.s32 1, %v5666
    %v5668 = vrot.slane %v5659, %v5667
    %v5687 = vunpack.c.l.b16 %v5642
    %v5688 = vunpack.c.h.b16 %v5642
    %v5689 = vunpack.c.l.b16 %v5643
    %v5690 = vunpack.c.h.b16 %v5643
    %v5691 = vunpack.c.l.b16 %v5644
    %v5692 = vunpack.c.h.b16 %v5644
    %v5693 = vunpack.c.l.b16 %v5645
    %v5694 = vunpack.c.h.b16 %v5645
    %v5695 = vunpack.c.l.b16 %v5646
    %v5696 = vunpack.c.h.b16 %v5646
    %v5697 = vunpack.c.l.b16 %v5647
    %v5698 = vunpack.c.h.b16 %v5647
    %v5699 = vunpack.c.l.b16 %v5648
    %v5700 = vunpack.c.h.b16 %v5648
    %v5701 = vunpack.c.l.b16 %v5649
    %v5702 = vunpack.c.h.b16 %v5649
    %v5703 = vunpack.c.l.b16 %v5650
    %v5704 = vunpack.c.h.b16 %v5650
    %v5705 = vunpack.c.l.b16 %v5651
    %v5706 = vunpack.c.h.b16 %v5651
    %v5707 = vunpack.c.l.b16 %v5652
    %v5708 = vunpack.c.h.b16 %v5652
    %v5709 = vunpack.c.l.b16 %v5653
    %v5710 = vunpack.c.h.b16 %v5653
    %v5711 = vunpack.c.l.b16 %v5654
    %v5712 = vunpack.c.h.b16 %v5654
    %v5713 = vunpack.c.l.b16 %v5655
    %v5714 = vunpack.c.h.b16 %v5655
    %v5715 = vunpack.c.l.b16 %v5656
    %v5716 = vunpack.c.h.b16 %v5656
    %v5717 = vunpack.c.l.b16 %v5657
    %v5718 = vunpack.c.h.b16 %v5657
    %v5719 = vpack.c.b16 %v5689, %v5687
    %v5720 = vpack.c.b16 %v5690, %v5688
    %v5721 = vpack.c.b16 %v5693, %v5691
    %v5722 = vpack.c.b16 %v5694, %v5692
    %v5723 = vpack.c.b16 %v5697, %v5695
    %v5724 = vpack.c.b16 %v5698, %v5696
    %v5725 = vpack.c.b16 %v5701, %v5699
    %v5726 = vpack.c.b16 %v5702, %v5700
    %v5727 = vpack.c.b16 %v5705, %v5703
    %v5728 = vpack.c.b16 %v5706, %v5704
    %v5729 = vpack.c.b16 %v5709, %v5707
    %v5730 = vpack.c.b16 %v5710, %v5708
    %v5731 = vpack.c.b16 %v5713, %v5711
    %v5732 = vpack.c.b16 %v5714, %v5712
    %v5733 = vpack.c.b16 %v5717, %v5715
    %v5734 = vpack.c.b16 %v5718, %v5716
    %5751 = vmatprep.subr.bf16.mxu0 %v5734
    %5752 = vmatpush1.bf16.msra.mxu0 %v5733
    %5753 = vmatprep.subr.bf16.mxu0 %v5732
    %5754 = vmatpush1.bf16.msra.mxu0 %v5731
    %5755 = vmatprep.subr.bf16.mxu0 %v5730
    %5756 = vmatpush1.bf16.msra.mxu0 %v5729
    %5757 = vmatprep.subr.bf16.mxu0 %v5728
    %5758 = vmatpush1.bf16.msra.mxu0 %v5727
    %5759 = vmatprep.subr.bf16.mxu0 %v5726
    %5760 = vmatpush1.bf16.msra.mxu0 %v5725
    %5761 = vmatprep.subr.bf16.mxu0 %v5724
    %5762 = vmatpush1.bf16.msra.mxu0 %v5723
    %5763 = vmatprep.subr.bf16.mxu0 %v5722
    %5764 = vmatpush1.bf16.msra.mxu0 %v5721
    %5765 = vmatprep.subr.bf16.mxu0 %v5720
    %5766 = vmatpush1.bf16.msra.mxu0 %v5719
    %5767 = vmatprep.subr.bf16.mxu0 0
    %5768 = vmatpush2.bf16.msra.mxu0 0
    %5769 = vmatprep.subr.bf16.mxu0 0
    %5770 = vmatpush2.bf16.msra.mxu0 0
    %5771 = vmatprep.subr.bf16.mxu0 0
    %5772 = vmatpush2.bf16.msra.mxu0 0
    %5773 = vmatprep.subr.bf16.mxu0 0
    %5774 = vmatpush2.bf16.msra.mxu0 0
    %5775 = vmatprep.subr.bf16.mxu0 0
    %5776 = vmatpush2.bf16.msra.mxu0 0
    %5777 = vmatprep.subr.bf16.mxu0 0
    %5778 = vmatpush2.bf16.msra.mxu0 0
    %5779 = vmatprep.subr.bf16.mxu0 0
    %5780 = vmatpush2.bf16.msra.mxu0 0
    %5781 = vmatprep.subr.bf16.mxu0 0
    %5782 = vmatpush2.bf16.msra.mxu0 0
    %5783 = vmatprep.mubr.bf16.mxu0 0
    %5784 = vmatmul.mubr.bf16.gmra.mxu0 %v5640
    %v5785 = vpop.f32.mrf.mxu0
    %v5786 = vadd.f32 %v5664, %v5785
    %v5787 = vpop.f32.mrf.mxu0
    %v5788 = vadd.f32 %v5668, %v5787
    %v5789 = vpop.f32.mrf.mxu0
    %v5790 = vadd.f32 %v5664, %v5789
    %v5791 = vpop.f32.mrf.mxu0
    %v5792 = vadd.f32 %v5668, %v5791
    %5793 = vdwg.mxu0
    %v5794 = vmax.f32 %v5786, 0.0
    %v5795 = vmax.f32 %v5788, 0.0
    %v5796 = vmax.f32 %v5790, 0.0
    %v5797 = vmax.f32 %v5792, 0.0
    %v5798 = vpack.c.bf16 %v5796, %v5794
    %v5799 = vpack.c.bf16 %v5797, %v5795
    %s5800 = scalar_lea.vmem [#allocation10], 256
    %v5801 = vld [vmem:[%s5800] sm:$0xf]
    %v5802 = vld [vmem:[%s5800 + $0x4] sm:$0xf]
    %v5803 = vld [vmem:[%s5800 + $0x8] sm:$0xf]
    %v5804 = vld [vmem:[%s5800 + $0xc] sm:$0xf]
    %v5805 = vld [vmem:[%s5800 + $0x10] sm:$0xf]
    %v5806 = vld [vmem:[%s5800 + $0x14] sm:$0xf]
    %v5807 = vld [vmem:[%s5800 + $0x18] sm:$0xf]
    %v5808 = vld [vmem:[%s5800 + $0x1c] sm:$0xf]
    %v5809 = vld [vmem:[%s5800 + $0x20] sm:$0xf]
    %v5810 = vld [vmem:[%s5800 + $0x24] sm:$0xf]
    %v5811 = vld [vmem:[%s5800 + $0x28] sm:$0xf]
    %v5812 = vld [vmem:[%s5800 + $0x2c] sm:$0xf]
    %v5813 = vld [vmem:[%s5800 + $0x30] sm:$0xf]
    %v5814 = vld [vmem:[%s5800 + $0x34] sm:$0xf]
    %v5815 = vld [vmem:[%s5800 + $0x38] sm:$0xf]
    %v5816 = vld [vmem:[%s5800 + $0x3c] sm:$0xf]
    %v5817 = vld [vmem:[%s5800 + $0x40] sm:$0xf]
    %v5818 = vld [vmem:[%s5800 + $0x44] sm:$0xf]
    %v5819 = vld [vmem:[%s5800 + $0x48] sm:$0xf]
    %v5820 = vld [vmem:[%s5800 + $0x4c] sm:$0xf]
    %v5821 = vld [vmem:[%s5800 + $0x50] sm:$0xf]
    %v5822 = vld [vmem:[%s5800 + $0x54] sm:$0xf]
    %v5823 = vld [vmem:[%s5800 + $0x58] sm:$0xf]
    %v5824 = vld [vmem:[%s5800 + $0x5c] sm:$0xf]
    %v5825 = vld [vmem:[%s5800 + $0x60] sm:$0xf]
    %v5826 = vld [vmem:[%s5800 + $0x64] sm:$0xf]
    %v5827 = vld [vmem:[%s5800 + $0x68] sm:$0xf]
    %v5828 = vld [vmem:[%s5800 + $0x6c] sm:$0xf]
    %v5829 = vld [vmem:[%s5800 + $0x70] sm:$0xf]
    %v5830 = vld [vmem:[%s5800 + $0x74] sm:$0xf]
    %v5831 = vld [vmem:[%s5800 + $0x78] sm:$0xf]
    %v5832 = vld [vmem:[%s5800 + $0x7c] sm:$0xf]
    %v5833 = vlaneseq
    %v5834 = vshrl.u32 %v5833, 7
    %v5835 = vsub.s32 3, %v5834
    %v5836 = vrot.slane %v4204, %v5835
    %v5869 = vunpack.c.l.b16 %v5801
    %v5870 = vunpack.c.l.b16 %v5802
    %v5871 = vunpack.c.l.b16 %v5803
    %v5872 = vunpack.c.l.b16 %v5804
    %v5873 = vunpack.c.l.b16 %v5805
    %v5874 = vunpack.c.l.b16 %v5806
    %v5875 = vunpack.c.l.b16 %v5807
    %v5876 = vunpack.c.l.b16 %v5808
    %v5877 = vunpack.c.l.b16 %v5809
    %v5878 = vunpack.c.l.b16 %v5810
    %v5879 = vunpack.c.l.b16 %v5811
    %v5880 = vunpack.c.l.b16 %v5812
    %v5881 = vunpack.c.l.b16 %v5813
    %v5882 = vunpack.c.l.b16 %v5814
    %v5883 = vunpack.c.l.b16 %v5815
    %v5884 = vunpack.c.l.b16 %v5816
    %v5885 = vunpack.c.l.b16 %v5817
    %v5886 = vunpack.c.l.b16 %v5818
    %v5887 = vunpack.c.l.b16 %v5819
    %v5888 = vunpack.c.l.b16 %v5820
    %v5889 = vunpack.c.l.b16 %v5821
    %v5890 = vunpack.c.l.b16 %v5822
    %v5891 = vunpack.c.l.b16 %v5823
    %v5892 = vunpack.c.l.b16 %v5824
    %v5893 = vunpack.c.l.b16 %v5825
    %v5894 = vunpack.c.l.b16 %v5826
    %v5895 = vunpack.c.l.b16 %v5827
    %v5896 = vunpack.c.l.b16 %v5828
    %v5897 = vunpack.c.l.b16 %v5829
    %v5898 = vunpack.c.l.b16 %v5830
    %v5899 = vunpack.c.l.b16 %v5831
    %v5900 = vunpack.c.l.b16 %v5832
    %v5901 = vpack.c.b16 %v5870, %v5869
    %v5902 = vpack.c.b16 %v5872, %v5871
    %v5903 = vpack.c.b16 %v5874, %v5873
    %v5904 = vpack.c.b16 %v5876, %v5875
    %v5905 = vpack.c.b16 %v5878, %v5877
    %v5906 = vpack.c.b16 %v5880, %v5879
    %v5907 = vpack.c.b16 %v5882, %v5881
    %v5908 = vpack.c.b16 %v5884, %v5883
    %v5909 = vpack.c.b16 %v5886, %v5885
    %v5910 = vpack.c.b16 %v5888, %v5887
    %v5911 = vpack.c.b16 %v5890, %v5889
    %v5912 = vpack.c.b16 %v5892, %v5891
    %v5913 = vpack.c.b16 %v5894, %v5893
    %v5914 = vpack.c.b16 %v5896, %v5895
    %v5915 = vpack.c.b16 %v5898, %v5897
    %v5916 = vpack.c.b16 %v5900, %v5899
    %5933 = vmatprep.subr.bf16.mxu0 0
    %5934 = vmatpush1.bf16.msra.mxu0 %v5908
    %5935 = vmatprep.subr.bf16.mxu0 0
    %5936 = vmatpush1.bf16.msra.mxu0 %v5907
    %5937 = vmatprep.subr.bf16.mxu0 0
    %5938 = vmatpush1.bf16.msra.mxu0 %v5906
    %5939 = vmatprep.subr.bf16.mxu0 0
    %5940 = vmatpush1.bf16.msra.mxu0 %v5905
    %5941 = vmatprep.subr.bf16.mxu0 0
    %5942 = vmatpush1.bf16.msra.mxu0 %v5904
    %5943 = vmatprep.subr.bf16.mxu0 0
    %5944 = vmatpush1.bf16.msra.mxu0 %v5903
    %5945 = vmatprep.subr.bf16.mxu0 0
    %5946 = vmatpush1.bf16.msra.mxu0 %v5902
    %5947 = vmatprep.subr.bf16.mxu0 0
    %5948 = vmatpush1.bf16.msra.mxu0 %v5901
    %5949 = vmatprep.subr.bf16.mxu0 0
    %5950 = vmatpush2.bf16.msra.mxu0 %v5916
    %5951 = vmatprep.subr.bf16.mxu0 0
    %5952 = vmatpush2.bf16.msra.mxu0 %v5915
    %5953 = vmatprep.subr.bf16.mxu0 0
    %5954 = vmatpush2.bf16.msra.mxu0 %v5914
    %5955 = vmatprep.subr.bf16.mxu0 0
    %5956 = vmatpush2.bf16.msra.mxu0 %v5913
    %5957 = vmatprep.subr.bf16.mxu0 0
    %5958 = vmatpush2.bf16.msra.mxu0 %v5912
    %5959 = vmatprep.subr.bf16.mxu0 0
    %5960 = vmatpush2.bf16.msra.mxu0 %v5911
    %5961 = vmatprep.subr.bf16.mxu0 0
    %5962 = vmatpush2.bf16.msra.mxu0 %v5910
    %5963 = vmatprep.subr.bf16.mxu0 0
    %5964 = vmatpush2.bf16.msra.mxu0 %v5909
    %5965 = vmatprep.mubr.bf16.mxu0 %v5799
    %5966 = vmatmul.mubr.bf16.gmra.mxu0 %v5798
    %v5967 = vpop.f32.mrf.mxu0
    %v5968 = vadd.f32 %v5836, %v5967
    %v5969 = vpop.f32.mrf.mxu0
    %v5970 = vpop.f32.mrf.mxu0
    %v5971 = vadd.f32 %v5836, %v5970
    %v5972 = vpop.f32.mrf.mxu0
    %5973 = vdwg.mxu0
    %v5974 = vadd.f32 %v5638, %v5968
    %v5975 = vadd.f32 %v5639, %v5971
    %5976 = vadd.xlane.f32.xlu0 %v5974
    %v5977 = vpop.xlane.xlu0 %5976
    %5978 = vadd.xlane.f32.xlu0 %v5975
    %v5979 = vpop.xlane.xlu0 %5978
    %v5980 = vmul.f32 %v5977, %v1998
    %v5981 = vmul.f32 %v5979, %v1998
    %v5982 = vsub.f32 %v5974, %v5980
    %v5983 = vsub.f32 %v5975, %v5981
    %v5984 = vmul.f32 %v5982, %v5982
    %v5985 = vmul.f32 %v5983, %v5983
    %5986 = vadd.xlane.f32.xlu0 %v5984
    %v5987 = vpop.xlane.xlu0 %5986
    %5988 = vadd.xlane.f32.xlu0 %v5985
    %v5989 = vpop.xlane.xlu0 %5988
    %v5990 = vmul.f32 %v5987, %v1998
    %v5991 = vmul.f32 %v5989, %v1998
    %v5992 = vadd.f32 %v5990, 1e-05
    %v5993 = vadd.f32 %v5991, 1e-05
    %v5994 = vrsqrt.pop %v5992
    %v5995 = vrsqrt.pop %v5993
    %v5996 = vmul.f32 %v5982, %v5994
    %v5997 = vmul.f32 %v5983, %v5995
    %v5998 = vlaneseq
    %v5999 = vshrl.u32 %v5998, 7
    %v6000 = vsub.s32 4, %v5999
    %v6001 = vrot.slane %v4204, %v6000
    %v6002 = vmul.f32 %v5996, %v6001
    %v6003 = vmul.f32 %v5997, %v6001
    %v6004 = vlaneseq
    %v6005 = vshrl.u32 %v6004, 7
    %v6006 = vsub.s32 5, %v6005
    %v6007 = vrot.slane %v4204, %v6006
    %v6008 = vadd.f32 %v6002, %v6007
    %v6009 = vadd.f32 %v6003, %v6007
    %s6010 = scalar_lea.vmem %s11, 24
    %v6011 = vld [vmem:[%s6010] sm:$0x3f]
    %v6012 = vpack.c.bf16 %v6009, %v6008
    %s6013 = scalar_lea.vmem [#allocation2], 576
    %v6014 = vld [vmem:[%s6013] sm:$0xff]
    %v6015 = vld [vmem:[%s6013 + $0x8] sm:$0xf]
    %v6016 = vld [vmem:[%s6013 + $0xc] sm:$0xff]
    %v6017 = vld [vmem:[%s6013 + $0x14] sm:$0xf]
    %v6018 = vld [vmem:[%s6013 + $0x18] sm:$0xff]
    %v6019 = vld [vmem:[%s6013 + $0x20] sm:$0xf]
    %v6020 = vld [vmem:[%s6013 + $0x24] sm:$0xff]
    %v6021 = vld [vmem:[%s6013 + $0x2c] sm:$0xf]
    %v6022 = vld [vmem:[%s6013 + $0x30] sm:$0xff]
    %v6023 = vld [vmem:[%s6013 + $0x38] sm:$0xf]
    %v6024 = vld [vmem:[%s6013 + $0x3c] sm:$0xff]
    %v6025 = vld [vmem:[%s6013 + $0x44] sm:$0xf]
    %v6026 = vld [vmem:[%s6013 + $0x48] sm:$0xff]
    %v6027 = vld [vmem:[%s6013 + $0x50] sm:$0xf]
    %v6028 = vld [vmem:[%s6013 + $0x54] sm:$0xff]
    %v6029 = vld [vmem:[%s6013 + $0x5c] sm:$0xf]
    %v6030 = vld [vmem:[%s6013 + $0x60] sm:$0xff]
    %v6031 = vld [vmem:[%s6013 + $0x68] sm:$0xf]
    %v6032 = vld [vmem:[%s6013 + $0x6c] sm:$0xff]
    %v6033 = vld [vmem:[%s6013 + $0x74] sm:$0xf]
    %v6034 = vld [vmem:[%s6013 + $0x78] sm:$0xff]
    %v6035 = vld [vmem:[%s6013 + $0x80] sm:$0xf]
    %v6036 = vld [vmem:[%s6013 + $0x84] sm:$0xff]
    %v6037 = vld [vmem:[%s6013 + $0x8c] sm:$0xf]
    %v6038 = vld [vmem:[%s6013 + $0x90] sm:$0xff]
    %v6039 = vld [vmem:[%s6013 + $0x98] sm:$0xf]
    %v6040 = vld [vmem:[%s6013 + $0x9c] sm:$0xff]
    %v6041 = vld [vmem:[%s6013 + $0xa4] sm:$0xf]
    %v6042 = vld [vmem:[%s6013 + $0xa8] sm:$0xff]
    %v6043 = vld [vmem:[%s6013 + $0xb0] sm:$0xf]
    %v6044 = vld [vmem:[%s6013 + $0xb4] sm:$0xff]
    %v6045 = vld [vmem:[%s6013 + $0xbc] sm:$0xf]
    %s6046 = scalar_lea.vmem [#allocation5], 9
    %v6047 = vld [vmem:[%s6046] sm:$0x7]
    %v6049 = vlaneseq
    %v6050 = vshrl.u32 %v6049, 7
    %v6051 = vsub.s32 0, %v6050
    %v6052 = vrot.slane %v6047, %v6051
    %v6053 = vlaneseq
    %v6054 = vshrl.u32 %v6053, 7
    %v6055 = vsub.s32 1, %v6054
    %v6056 = vrot.slane %v6047, %v6055
    %v6057 = vlaneseq
    %v6058 = vshrl.u32 %v6057, 7
    %v6059 = vsub.s32 2, %v6058
    %v6060 = vrot.slane %v6047, %v6059
    %v6096 = vunpack.c.l.b16 %v6014
    %v6097 = vunpack.c.h.b16 %v6014
    %v6098 = vunpack.c.l.b16 %v6015
    %v6099 = vunpack.c.l.b16 %v6016
    %v6100 = vunpack.c.h.b16 %v6016
    %v6101 = vunpack.c.l.b16 %v6017
    %v6102 = vunpack.c.l.b16 %v6018
    %v6103 = vunpack.c.h.b16 %v6018
    %v6104 = vunpack.c.l.b16 %v6019
    %v6105 = vunpack.c.l.b16 %v6020
    %v6106 = vunpack.c.h.b16 %v6020
    %v6107 = vunpack.c.l.b16 %v6021
    %v6108 = vunpack.c.l.b16 %v6022
    %v6109 = vunpack.c.h.b16 %v6022
    %v6110 = vunpack.c.l.b16 %v6023
    %v6111 = vunpack.c.l.b16 %v6024
    %v6112 = vunpack.c.h.b16 %v6024
    %v6113 = vunpack.c.l.b16 %v6025
    %v6114 = vunpack.c.l.b16 %v6026
    %v6115 = vunpack.c.h.b16 %v6026
    %v6116 = vunpack.c.l.b16 %v6027
    %v6117 = vunpack.c.l.b16 %v6028
    %v6118 = vunpack.c.h.b16 %v6028
    %v6119 = vunpack.c.l.b16 %v6029
    %v6120 = vunpack.c.l.b16 %v6030
    %v6121 = vunpack.c.h.b16 %v6030
    %v6122 = vunpack.c.l.b16 %v6031
    %v6123 = vunpack.c.l.b16 %v6032
    %v6124 = vunpack.c.h.b16 %v6032
    %v6125 = vunpack.c.l.b16 %v6033
    %v6126 = vunpack.c.l.b16 %v6034
    %v6127 = vunpack.c.h.b16 %v6034
    %v6128 = vunpack.c.l.b16 %v6035
    %v6129 = vunpack.c.l.b16 %v6036
    %v6130 = vunpack.c.h.b16 %v6036
    %v6131 = vunpack.c.l.b16 %v6037
    %v6132 = vunpack.c.l.b16 %v6038
    %v6133 = vunpack.c.h.b16 %v6038
    %v6134 = vunpack.c.l.b16 %v6039
    %v6135 = vunpack.c.l.b16 %v6040
    %v6136 = vunpack.c.h.b16 %v6040
    %v6137 = vunpack.c.l.b16 %v6041
    %v6138 = vunpack.c.l.b16 %v6042
    %v6139 = vunpack.c.h.b16 %v6042
    %v6140 = vunpack.c.l.b16 %v6043
    %v6141 = vunpack.c.l.b16 %v6044
    %v6142 = vunpack.c.h.b16 %v6044
    %v6143 = vunpack.c.l.b16 %v6045
    %v6144 = vpack.c.b16 %v6099, %v6096
    %v6145 = vpack.c.b16 %v6100, %v6097
    %v6146 = vpack.c.b16 %v6101, %v6098
    %v6147 = vpack.c.b16 %v6105, %v6102
    %v6148 = vpack.c.b16 %v6106, %v6103
    %v6149 = vpack.c.b16 %v6107, %v6104
    %v6150 = vpack.c.b16 %v6111, %v6108
    %v6151 = vpack.c.b16 %v6112, %v6109
    %v6152 = vpack.c.b16 %v6113, %v6110
    %v6153 = vpack.c.b16 %v6117, %v6114
    %v6154 = vpack.c.b16 %v6118, %v6115
    %v6155 = vpack.c.b16 %v6119, %v6116
    %v6156 = vpack.c.b16 %v6123, %v6120
    %v6157 = vpack.c.b16 %v6124, %v6121
    %v6158 = vpack.c.b16 %v6125, %v6122
    %v6159 = vpack.c.b16 %v6129, %v6126
    %v6160 = vpack.c.b16 %v6130, %v6127
    %v6161 = vpack.c.b16 %v6131, %v6128
    %v6162 = vpack.c.b16 %v6135, %v6132
    %v6163 = vpack.c.b16 %v6136, %v6133
    %v6164 = vpack.c.b16 %v6137, %v6134
    %v6165 = vpack.c.b16 %v6141, %v6138
    %v6166 = vpack.c.b16 %v6142, %v6139
    %v6167 = vpack.c.b16 %v6143, %v6140
    %6192 = vmatprep.subr.bf16.mxu0 %v6166
    %6193 = vmatpush1.bf16.msra.mxu0 %v6165
    %6194 = vmatprep.subr.bf16.mxu0 %v6163
    %6195 = vmatpush1.bf16.msra.mxu0 %v6162
    %6196 = vmatprep.subr.bf16.mxu0 %v6160
    %6197 = vmatpush1.bf16.msra.mxu0 %v6159
    %6198 = vmatprep.subr.bf16.mxu0 %v6157
    %6199 = vmatpush1.bf16.msra.mxu0 %v6156
    %6200 = vmatprep.subr.bf16.mxu0 %v6154
    %6201 = vmatpush1.bf16.msra.mxu0 %v6153
    %6202 = vmatprep.subr.bf16.mxu0 %v6151
    %6203 = vmatpush1.bf16.msra.mxu0 %v6150
    %6204 = vmatprep.subr.bf16.mxu0 %v6148
    %6205 = vmatpush1.bf16.msra.mxu0 %v6147
    %6206 = vmatprep.subr.bf16.mxu0 %v6145
    %6207 = vmatpush1.bf16.msra.mxu0 %v6144
    %6208 = vmatprep.subr.bf16.mxu0 0
    %6209 = vmatpush2.bf16.msra.mxu0 0
    %6210 = vmatprep.subr.bf16.mxu0 0
    %6211 = vmatpush2.bf16.msra.mxu0 0
    %6212 = vmatprep.subr.bf16.mxu0 0
    %6213 = vmatpush2.bf16.msra.mxu0 0
    %6214 = vmatprep.subr.bf16.mxu0 0
    %6215 = vmatpush2.bf16.msra.mxu0 0
    %6216 = vmatprep.subr.bf16.mxu0 0
    %6217 = vmatpush2.bf16.msra.mxu0 0
    %6218 = vmatprep.subr.bf16.mxu0 0
    %6219 = vmatpush2.bf16.msra.mxu0 0
    %6220 = vmatprep.subr.bf16.mxu0 0
    %6221 = vmatpush2.bf16.msra.mxu0 0
    %6222 = vmatprep.subr.bf16.mxu0 0
    %6223 = vmatpush2.bf16.msra.mxu0 0
    %6224 = vmatprep.mubr.bf16.mxu0 0
    %6225 = vmatmul.mubr.bf16.gmra.mxu0 %v6012
    %v6226 = vpop.f32.mrf.mxu0
    %v6227 = vadd.f32 %v6052, %v6226
    %v6228 = vpop.f32.mrf.mxu0
    %v6229 = vadd.f32 %v6056, %v6228
    %v6230 = vpop.f32.mrf.mxu0
    %v6231 = vadd.f32 %v6052, %v6230
    %v6232 = vpop.f32.mrf.mxu0
    %v6233 = vadd.f32 %v6056, %v6232
    %6234 = vdwg.mxu0
    %6235 = vmatprep.subr.bf16.mxu0 0
    %6236 = vmatpush1.bf16.msra.mxu0 %v6167
    %6237 = vmatprep.subr.bf16.mxu0 0
    %6238 = vmatpush1.bf16.msra.mxu0 %v6164
    %6239 = vmatprep.subr.bf16.mxu0 0
    %6240 = vmatpush1.bf16.msra.mxu0 %v6161
    %6241 = vmatprep.subr.bf16.mxu0 0
    %6242 = vmatpush1.bf16.msra.mxu0 %v6158
    %6243 = vmatprep.subr.bf16.mxu0 0
    %6244 = vmatpush1.bf16.msra.mxu0 %v6155
    %6245 = vmatprep.subr.bf16.mxu0 0
    %6246 = vmatpush1.bf16.msra.mxu0 %v6152
    %6247 = vmatprep.subr.bf16.mxu0 0
    %6248 = vmatpush1.bf16.msra.mxu0 %v6149
    %6249 = vmatprep.subr.bf16.mxu0 0
    %6250 = vmatpush1.bf16.msra.mxu0 %v6146
    %6251 = vmatprep.subr.bf16.mxu0 0
    %6252 = vmatpush2.bf16.msra.mxu0 0
    %6253 = vmatprep.subr.bf16.mxu0 0
    %6254 = vmatpush2.bf16.msra.mxu0 0
    %6255 = vmatprep.subr.bf16.mxu0 0
    %6256 = vmatpush2.bf16.msra.mxu0 0
    %6257 = vmatprep.subr.bf16.mxu0 0
    %6258 = vmatpush2.bf16.msra.mxu0 0
    %6259 = vmatprep.subr.bf16.mxu0 0
    %6260 = vmatpush2.bf16.msra.mxu0 0
    %6261 = vmatprep.subr.bf16.mxu0 0
    %6262 = vmatpush2.bf16.msra.mxu0 0
    %6263 = vmatprep.subr.bf16.mxu0 0
    %6264 = vmatpush2.bf16.msra.mxu0 0
    %6265 = vmatprep.subr.bf16.mxu0 0
    %6266 = vmatpush2.bf16.msra.mxu0 0
    %6267 = vmatprep.mubr.bf16.mxu0 0
    %6268 = vmatmul.mubr.bf16.gmra.mxu0 %v6012
    %v6269 = vpop.f32.mrf.mxu0
    %v6270 = vadd.f32 %v6060, %v6269
    %v6271 = vpop.f32.mrf.mxu0
    %v6272 = vpop.f32.mrf.mxu0
    %v6273 = vadd.f32 %v6060, %v6272
    %v6274 = vpop.f32.mrf.mxu0
    %6275 = vdwg.mxu0
    %s6276 = scalar_lea.vmem %s7, 192
    %v6277 = vld [vmem:[%s6276] sm:$0xf]
    %v6278 = vld [vmem:[%s6276 + $0x4] sm:$0xf]
    %v6279 = vld [vmem:[%s6276 + $0x8] sm:$0xf]
    %v6280 = vld [vmem:[%s6276 + $0xc] sm:$0xf]
    %v6281 = vld [vmem:[%s6276 + $0x10] sm:$0xf]
    %v6282 = vld [vmem:[%s6276 + $0x14] sm:$0xf]
    %v6283 = vld [vmem:[%s6276 + $0x18] sm:$0xf]
    %v6284 = vld [vmem:[%s6276 + $0x1c] sm:$0xf]
    %v6285 = vld [vmem:[%s6276 + $0x20] sm:$0xf]
    %v6286 = vld [vmem:[%s6276 + $0x24] sm:$0xf]
    %v6287 = vld [vmem:[%s6276 + $0x28] sm:$0xf]
    %v6288 = vld [vmem:[%s6276 + $0x2c] sm:$0xf]
    %v6289 = vld [vmem:[%s6276 + $0x30] sm:$0xf]
    %v6290 = vld [vmem:[%s6276 + $0x34] sm:$0xf]
    %v6291 = vld [vmem:[%s6276 + $0x38] sm:$0xf]
    %v6292 = vld [vmem:[%s6276 + $0x3c] sm:$0xf]
    %v6293 = vpack.c.bf16 %v6227, %v6227
    %v6294 = vpack.c.bf16 %v6231, %v6231
    %v6295 = vpack.c.bf16 %v6229, %v6229
    %v6296 = vpack.c.bf16 %v6233, %v6233
    %v6297 = vpack.c.bf16 %v6270, %v6270
    %v6298 = vpack.c.bf16 %v6273, %v6273
    %v6300 = vsel %vm149, %v6293, 0
    %v6303 = vsel %vm149, %v6295, 0
    %6305 = vmatprep.subr.bf16.mxu0 0
    %6306 = vmatpush1.bf16.xpose.msra.mxu0 0
    %6307 = vmatprep.subr.bf16.mxu0 0
    %6308 = vmatpush1.bf16.xpose.msra.mxu0 0
    %6309 = vmatprep.subr.bf16.mxu0 0
    %6310 = vmatpush1.bf16.xpose.msra.mxu0 0
    %6311 = vmatprep.subr.bf16.mxu0 0
    %6312 = vmatpush1.bf16.xpose.msra.mxu0 0
    %6313 = vmatprep.subr.bf16.mxu0 0
    %6314 = vmatpush1.bf16.xpose.msra.mxu0 0
    %6315 = vmatprep.subr.bf16.mxu0 0
    %6316 = vmatpush1.bf16.xpose.msra.mxu0 0
    %6317 = vmatprep.subr.bf16.mxu0 0
    %6318 = vmatpush1.bf16.xpose.msra.mxu0 0
    %6319 = vmatprep.subr.bf16.mxu0 0
    %6320 = vmatpush1.bf16.xpose.msra.mxu0 %v6303
    %6321 = vmatprep.subr.bf16.mxu0 0
    %6322 = vmatpush2.bf16.xpose.msra.mxu0 0
    %6323 = vmatprep.subr.bf16.mxu0 0
    %6324 = vmatpush2.bf16.xpose.msra.mxu0 0
    %6325 = vmatprep.subr.bf16.mxu0 0
    %6326 = vmatpush2.bf16.xpose.msra.mxu0 0
    %6327 = vmatprep.subr.bf16.mxu0 0
    %6328 = vmatpush2.bf16.xpose.msra.mxu0 0
    %6329 = vmatprep.subr.bf16.mxu0 0
    %6330 = vmatpush2.bf16.xpose.msra.mxu0 0
    %6331 = vmatprep.subr.bf16.mxu0 0
    %6332 = vmatpush2.bf16.xpose.msra.mxu0 0
    %6333 = vmatprep.subr.bf16.mxu0 0
    %6334 = vmatpush2.bf16.xpose.msra.mxu0 0
    %6335 = vmatprep.subr.bf16.mxu0 0
    %6336 = vmatpush2.bf16.xpose.msra.mxu0 0
    %6337 = vmatprep.mubr.bf16.mxu0 0
    %6338 = vmatmul.mubr.bf16.gmra.mxu0 %v6300
    %v6339 = vpop.f32.mrf.mxu0
    %v6340 = vadd.f32 0.0, %v6339
    %v6341 = vpop.f32.mrf.mxu0
    %v6342 = vpop.f32.mrf.mxu0
    %v6343 = vpop.f32.mrf.mxu0
    %6344 = vdwg.mxu0
    %v6346 = vsel %vm149, %v6294, 0
    %v6349 = vsel %vm149, %v6296, 0
    %6351 = vmatprep.subr.bf16.mxu0 0
    %6352 = vmatpush1.bf16.xpose.msra.mxu0 0
    %6353 = vmatprep.subr.bf16.mxu0 0
    %6354 = vmatpush1.bf16.xpose.msra.mxu0 0
    %6355 = vmatprep.subr.bf16.mxu0 0
    %6356 = vmatpush1.bf16.xpose.msra.mxu0 0
    %6357 = vmatprep.subr.bf16.mxu0 0
    %6358 = vmatpush1.bf16.xpose.msra.mxu0 0
    %6359 = vmatprep.subr.bf16.mxu0 0
    %6360 = vmatpush1.bf16.xpose.msra.mxu0 0
    %6361 = vmatprep.subr.bf16.mxu0 0
    %6362 = vmatpush1.bf16.xpose.msra.mxu0 0
    %6363 = vmatprep.subr.bf16.mxu0 0
    %6364 = vmatpush1.bf16.xpose.msra.mxu0 0
    %6365 = vmatprep.subr.bf16.mxu0 0
    %6366 = vmatpush1.bf16.xpose.msra.mxu0 %v6349
    %6367 = vmatprep.subr.bf16.mxu0 0
    %6368 = vmatpush2.bf16.xpose.msra.mxu0 0
    %6369 = vmatprep.subr.bf16.mxu0 0
    %6370 = vmatpush2.bf16.xpose.msra.mxu0 0
    %6371 = vmatprep.subr.bf16.mxu0 0
    %6372 = vmatpush2.bf16.xpose.msra.mxu0 0
    %6373 = vmatprep.subr.bf16.mxu0 0
    %6374 = vmatpush2.bf16.xpose.msra.mxu0 0
    %6375 = vmatprep.subr.bf16.mxu0 0
    %6376 = vmatpush2.bf16.xpose.msra.mxu0 0
    %6377 = vmatprep.subr.bf16.mxu0 0
    %6378 = vmatpush2.bf16.xpose.msra.mxu0 0
    %6379 = vmatprep.subr.bf16.mxu0 0
    %6380 = vmatpush2.bf16.xpose.msra.mxu0 0
    %6381 = vmatprep.subr.bf16.mxu0 0
    %6382 = vmatpush2.bf16.xpose.msra.mxu0 0
    %6383 = vmatprep.mubr.bf16.mxu0 0
    %6384 = vmatmul.mubr.bf16.gmra.mxu0 %v6346
    %v6385 = vpop.f32.mrf.mxu0
    %v6386 = vadd.f32 0.0, %v6385
    %v6387 = vpop.f32.mrf.mxu0
    %v6388 = vpop.f32.mrf.mxu0
    %v6389 = vpop.f32.mrf.mxu0
    %6390 = vdwg.mxu0
    %v6391 = vsel %vm970, %v6340, -inf
    %6392 = vmax.xlane.f32.xlu0 %v6391
    %v6393 = vpop.xlane.xlu0 %6392
    %v6394 = vsel %vm970, %v6386, -inf
    %6395 = vmax.xlane.f32.xlu0 %v6394
    %v6396 = vpop.xlane.xlu0 %6395
    %v6397 = vsub.f32 %v6340, %v6393
    %v6398 = vsub.f32 %v6386, %v6396
    %v6399 = vmul.f32 %v6397, 1.442695
    %v6400 = vpow.pop %v6399
    %v6401 = vmul.f32 %v6398, 1.442695
    %v6402 = vpow.pop %v6401
    %v6403 = vsel %vm970, %v6400, 0.0
    %6404 = vadd.xlane.f32.xlu0 %v6403
    %v6405 = vpop.xlane.xlu0 %6404
    %v6406 = vsel %vm970, %v6402, 0.0
    %6407 = vadd.xlane.f32.xlu0 %v6406
    %v6408 = vpop.xlane.xlu0 %6407
    %v6409 = vrcp.pop %v6405
    %v6410 = vrcp.pop %v6408
    %v6411 = vmul.f32 %v6400, %v6409
    %v6412 = vmul.f32 %v6402, %v6410
    %v6413 = vpack.c.bf16 %v6411, %v6411
    %v6414 = vpack.c.bf16 %v6412, %v6412
    %v6416 = vsel %vm970, %v6413, 0
    %v6419 = vsel %vm998, %v6297, 0
    %6421 = vmatprep.subr.bf16.mxu0 0
    %6422 = vmatpush1.bf16.msra.mxu0 0
    %6423 = vmatprep.subr.bf16.mxu0 0
    %6424 = vmatpush1.bf16.msra.mxu0 0
    %6425 = vmatprep.subr.bf16.mxu0 0
    %6426 = vmatpush1.bf16.msra.mxu0 0
    %6427 = vmatprep.subr.bf16.mxu0 0
    %6428 = vmatpush1.bf16.msra.mxu0 0
    %6429 = vmatprep.subr.bf16.mxu0 0
    %6430 = vmatpush1.bf16.msra.mxu0 0
    %6431 = vmatprep.subr.bf16.mxu0 0
    %6432 = vmatpush1.bf16.msra.mxu0 0
    %6433 = vmatprep.subr.bf16.mxu0 0
    %6434 = vmatpush1.bf16.msra.mxu0 0
    %6435 = vmatprep.subr.bf16.mxu0 0
    %6436 = vmatpush1.bf16.msra.mxu0 %v6419
    %6437 = vmatprep.subr.bf16.mxu0 0
    %6438 = vmatpush2.bf16.msra.mxu0 0
    %6439 = vmatprep.subr.bf16.mxu0 0
    %6440 = vmatpush2.bf16.msra.mxu0 0
    %6441 = vmatprep.subr.bf16.mxu0 0
    %6442 = vmatpush2.bf16.msra.mxu0 0
    %6443 = vmatprep.subr.bf16.mxu0 0
    %6444 = vmatpush2.bf16.msra.mxu0 0
    %6445 = vmatprep.subr.bf16.mxu0 0
    %6446 = vmatpush2.bf16.msra.mxu0 0
    %6447 = vmatprep.subr.bf16.mxu0 0
    %6448 = vmatpush2.bf16.msra.mxu0 0
    %6449 = vmatprep.subr.bf16.mxu0 0
    %6450 = vmatpush2.bf16.msra.mxu0 0
    %6451 = vmatprep.subr.bf16.mxu0 0
    %6452 = vmatpush2.bf16.msra.mxu0 0
    %6453 = vmatprep.mubr.bf16.mxu0 0
    %6454 = vmatmul.mubr.bf16.gmra.mxu0 %v6416
    %v6455 = vpop.f32.mrf.mxu0
    %v6456 = vadd.f32 0.0, %v6455
    %v6457 = vpop.f32.mrf.mxu0
    %v6458 = vpop.f32.mrf.mxu0
    %v6459 = vpop.f32.mrf.mxu0
    %6460 = vdwg.mxu0
    %v6462 = vsel %vm970, %v6414, 0
    %v6465 = vsel %vm998, %v6298, 0
    %6467 = vmatprep.subr.bf16.mxu0 0
    %6468 = vmatpush1.bf16.msra.mxu0 0
    %6469 = vmatprep.subr.bf16.mxu0 0
    %6470 = vmatpush1.bf16.msra.mxu0 0
    %6471 = vmatprep.subr.bf16.mxu0 0
    %6472 = vmatpush1.bf16.msra.mxu0 0
    %6473 = vmatprep.subr.bf16.mxu0 0
    %6474 = vmatpush1.bf16.msra.mxu0 0
    %6475 = vmatprep.subr.bf16.mxu0 0
    %6476 = vmatpush1.bf16.msra.mxu0 0
    %6477 = vmatprep.subr.bf16.mxu0 0
    %6478 = vmatpush1.bf16.msra.mxu0 0
    %6479 = vmatprep.subr.bf16.mxu0 0
    %6480 = vmatpush1.bf16.msra.mxu0 0
    %6481 = vmatprep.subr.bf16.mxu0 0
    %6482 = vmatpush1.bf16.msra.mxu0 %v6465
    %6483 = vmatprep.subr.bf16.mxu0 0
    %6484 = vmatpush2.bf16.msra.mxu0 0
    %6485 = vmatprep.subr.bf16.mxu0 0
    %6486 = vmatpush2.bf16.msra.mxu0 0
    %6487 = vmatprep.subr.bf16.mxu0 0
    %6488 = vmatpush2.bf16.msra.mxu0 0
    %6489 = vmatprep.subr.bf16.mxu0 0
    %6490 = vmatpush2.bf16.msra.mxu0 0
    %6491 = vmatprep.subr.bf16.mxu0 0
    %6492 = vmatpush2.bf16.msra.mxu0 0
    %6493 = vmatprep.subr.bf16.mxu0 0
    %6494 = vmatpush2.bf16.msra.mxu0 0
    %6495 = vmatprep.subr.bf16.mxu0 0
    %6496 = vmatpush2.bf16.msra.mxu0 0
    %6497 = vmatprep.subr.bf16.mxu0 0
    %6498 = vmatpush2.bf16.msra.mxu0 0
    %6499 = vmatprep.mubr.bf16.mxu0 0
    %6500 = vmatmul.mubr.bf16.gmra.mxu0 %v6462
    %v6501 = vpop.f32.mrf.mxu0
    %v6502 = vadd.f32 0.0, %v6501
    %v6503 = vpop.f32.mrf.mxu0
    %v6504 = vpop.f32.mrf.mxu0
    %v6505 = vpop.f32.mrf.mxu0
    %6506 = vdwg.mxu0
    %v6507 = vpack.c.bf16 %v6502, %v6456
    %6509 = vrot.lane.b32.xlu0 %v6293, 96
    %v6510 = vpop.permute.xlu0 %6509
    %6512 = vrot.lane.b32.xlu0 %v6295, 96
    %v6513 = vpop.permute.xlu0 %6512
    %v6515 = vsel %vm149, %v6510, 0
    %v6518 = vsel %vm149, %v6513, 0
    %6520 = vmatprep.subr.bf16.mxu0 0
    %6521 = vmatpush1.bf16.xpose.msra.mxu0 0
    %6522 = vmatprep.subr.bf16.mxu0 0
    %6523 = vmatpush1.bf16.xpose.msra.mxu0 0
    %6524 = vmatprep.subr.bf16.mxu0 0
    %6525 = vmatpush1.bf16.xpose.msra.mxu0 0
    %6526 = vmatprep.subr.bf16.mxu0 0
    %6527 = vmatpush1.bf16.xpose.msra.mxu0 0
    %6528 = vmatprep.subr.bf16.mxu0 0
    %6529 = vmatpush1.bf16.xpose.msra.mxu0 0
    %6530 = vmatprep.subr.bf16.mxu0 0
    %6531 = vmatpush1.bf16.xpose.msra.mxu0 0
    %6532 = vmatprep.subr.bf16.mxu0 0
    %6533 = vmatpush1.bf16.xpose.msra.mxu0 0
    %6534 = vmatprep.subr.bf16.mxu0 0
    %6535 = vmatpush1.bf16.xpose.msra.mxu0 %v6518
    %6536 = vmatprep.subr.bf16.mxu0 0
    %6537 = vmatpush2.bf16.xpose.msra.mxu0 0
    %6538 = vmatprep.subr.bf16.mxu0 0
    %6539 = vmatpush2.bf16.xpose.msra.mxu0 0
    %6540 = vmatprep.subr.bf16.mxu0 0
    %6541 = vmatpush2.bf16.xpose.msra.mxu0 0
    %6542 = vmatprep.subr.bf16.mxu0 0
    %6543 = vmatpush2.bf16.xpose.msra.mxu0 0
    %6544 = vmatprep.subr.bf16.mxu0 0
    %6545 = vmatpush2.bf16.xpose.msra.mxu0 0
    %6546 = vmatprep.subr.bf16.mxu0 0
    %6547 = vmatpush2.bf16.xpose.msra.mxu0 0
    %6548 = vmatprep.subr.bf16.mxu0 0
    %6549 = vmatpush2.bf16.xpose.msra.mxu0 0
    %6550 = vmatprep.subr.bf16.mxu0 0
    %6551 = vmatpush2.bf16.xpose.msra.mxu0 0
    %6552 = vmatprep.mubr.bf16.mxu0 0
    %6553 = vmatmul.mubr.bf16.gmra.mxu0 %v6515
    %v6554 = vpop.f32.mrf.mxu0
    %v6555 = vadd.f32 0.0, %v6554
    %v6556 = vpop.f32.mrf.mxu0
    %v6557 = vpop.f32.mrf.mxu0
    %v6558 = vpop.f32.mrf.mxu0
    %6559 = vdwg.mxu0
    %6561 = vrot.lane.b32.xlu0 %v6294, 96
    %v6562 = vpop.permute.xlu0 %6561
    %6564 = vrot.lane.b32.xlu0 %v6296, 96
    %v6565 = vpop.permute.xlu0 %6564
    %v6567 = vsel %vm149, %v6562, 0
    %v6570 = vsel %vm149, %v6565, 0
    %6572 = vmatprep.subr.bf16.mxu0 0
    %6573 = vmatpush1.bf16.xpose.msra.mxu0 0
    %6574 = vmatprep.subr.bf16.mxu0 0
    %6575 = vmatpush1.bf16.xpose.msra.mxu0 0
    %6576 = vmatprep.subr.bf16.mxu0 0
    %6577 = vmatpush1.bf16.xpose.msra.mxu0 0
    %6578 = vmatprep.subr.bf16.mxu0 0
    %6579 = vmatpush1.bf16.xpose.msra.mxu0 0
    %6580 = vmatprep.subr.bf16.mxu0 0
    %6581 = vmatpush1.bf16.xpose.msra.mxu0 0
    %6582 = vmatprep.subr.bf16.mxu0 0
    %6583 = vmatpush1.bf16.xpose.msra.mxu0 0
    %6584 = vmatprep.subr.bf16.mxu0 0
    %6585 = vmatpush1.bf16.xpose.msra.mxu0 0
    %6586 = vmatprep.subr.bf16.mxu0 0
    %6587 = vmatpush1.bf16.xpose.msra.mxu0 %v6570
    %6588 = vmatprep.subr.bf16.mxu0 0
    %6589 = vmatpush2.bf16.xpose.msra.mxu0 0
    %6590 = vmatprep.subr.bf16.mxu0 0
    %6591 = vmatpush2.bf16.xpose.msra.mxu0 0
    %6592 = vmatprep.subr.bf16.mxu0 0
    %6593 = vmatpush2.bf16.xpose.msra.mxu0 0
    %6594 = vmatprep.subr.bf16.mxu0 0
    %6595 = vmatpush2.bf16.xpose.msra.mxu0 0
    %6596 = vmatprep.subr.bf16.mxu0 0
    %6597 = vmatpush2.bf16.xpose.msra.mxu0 0
    %6598 = vmatprep.subr.bf16.mxu0 0
    %6599 = vmatpush2.bf16.xpose.msra.mxu0 0
    %6600 = vmatprep.subr.bf16.mxu0 0
    %6601 = vmatpush2.bf16.xpose.msra.mxu0 0
    %6602 = vmatprep.subr.bf16.mxu0 0
    %6603 = vmatpush2.bf16.xpose.msra.mxu0 0
    %6604 = vmatprep.mubr.bf16.mxu0 0
    %6605 = vmatmul.mubr.bf16.gmra.mxu0 %v6567
    %v6606 = vpop.f32.mrf.mxu0
    %v6607 = vadd.f32 0.0, %v6606
    %v6608 = vpop.f32.mrf.mxu0
    %v6609 = vpop.f32.mrf.mxu0
    %v6610 = vpop.f32.mrf.mxu0
    %6611 = vdwg.mxu0
    %v6612 = vsel %vm970, %v6555, -inf
    %6613 = vmax.xlane.f32.xlu0 %v6612
    %v6614 = vpop.xlane.xlu0 %6613
    %v6615 = vsel %vm970, %v6607, -inf
    %6616 = vmax.xlane.f32.xlu0 %v6615
    %v6617 = vpop.xlane.xlu0 %6616
    %v6618 = vsub.f32 %v6555, %v6614
    %v6619 = vsub.f32 %v6607, %v6617
    %v6620 = vmul.f32 %v6618, 1.442695
    %v6621 = vpow.pop %v6620
    %v6622 = vmul.f32 %v6619, 1.442695
    %v6623 = vpow.pop %v6622
    %v6624 = vsel %vm970, %v6621, 0.0
    %6625 = vadd.xlane.f32.xlu0 %v6624
    %v6626 = vpop.xlane.xlu0 %6625
    %v6627 = vsel %vm970, %v6623, 0.0
    %6628 = vadd.xlane.f32.xlu0 %v6627
    %v6629 = vpop.xlane.xlu0 %6628
    %v6630 = vrcp.pop %v6626
    %v6631 = vrcp.pop %v6629
    %v6632 = vmul.f32 %v6621, %v6630
    %v6633 = vmul.f32 %v6623, %v6631
    %v6634 = vpack.c.bf16 %v6632, %v6632
    %v6635 = vpack.c.bf16 %v6633, %v6633
    %6637 = vrot.lane.b32.xlu0 %v6297, 96
    %v6638 = vpop.permute.xlu0 %6637
    %v6640 = vsel %vm970, %v6634, 0
    %v6643 = vsel %vm998, %v6638, 0
    %6645 = vmatprep.subr.bf16.mxu0 0
    %6646 = vmatpush1.bf16.msra.mxu0 0
    %6647 = vmatprep.subr.bf16.mxu0 0
    %6648 = vmatpush1.bf16.msra.mxu0 0
    %6649 = vmatprep.subr.bf16.mxu0 0
    %6650 = vmatpush1.bf16.msra.mxu0 0
    %6651 = vmatprep.subr.bf16.mxu0 0
    %6652 = vmatpush1.bf16.msra.mxu0 0
    %6653 = vmatprep.subr.bf16.mxu0 0
    %6654 = vmatpush1.bf16.msra.mxu0 0
    %6655 = vmatprep.subr.bf16.mxu0 0
    %6656 = vmatpush1.bf16.msra.mxu0 0
    %6657 = vmatprep.subr.bf16.mxu0 0
    %6658 = vmatpush1.bf16.msra.mxu0 0
    %6659 = vmatprep.subr.bf16.mxu0 0
    %6660 = vmatpush1.bf16.msra.mxu0 %v6643
    %6661 = vmatprep.subr.bf16.mxu0 0
    %6662 = vmatpush2.bf16.msra.mxu0 0
    %6663 = vmatprep.subr.bf16.mxu0 0
    %6664 = vmatpush2.bf16.msra.mxu0 0
    %6665 = vmatprep.subr.bf16.mxu0 0
    %6666 = vmatpush2.bf16.msra.mxu0 0
    %6667 = vmatprep.subr.bf16.mxu0 0
    %6668 = vmatpush2.bf16.msra.mxu0 0
    %6669 = vmatprep.subr.bf16.mxu0 0
    %6670 = vmatpush2.bf16.msra.mxu0 0
    %6671 = vmatprep.subr.bf16.mxu0 0
    %6672 = vmatpush2.bf16.msra.mxu0 0
    %6673 = vmatprep.subr.bf16.mxu0 0
    %6674 = vmatpush2.bf16.msra.mxu0 0
    %6675 = vmatprep.subr.bf16.mxu0 0
    %6676 = vmatpush2.bf16.msra.mxu0 0
    %6677 = vmatprep.mubr.bf16.mxu0 0
    %6678 = vmatmul.mubr.bf16.gmra.mxu0 %v6640
    %v6679 = vpop.f32.mrf.mxu0
    %v6680 = vadd.f32 0.0, %v6679
    %v6681 = vpop.f32.mrf.mxu0
    %v6682 = vpop.f32.mrf.mxu0
    %v6683 = vpop.f32.mrf.mxu0
    %6684 = vdwg.mxu0
    %6686 = vrot.lane.b32.xlu0 %v6298, 96
    %v6687 = vpop.permute.xlu0 %6686
    %v6689 = vsel %vm970, %v6635, 0
    %v6692 = vsel %vm998, %v6687, 0
    %6694 = vmatprep.subr.bf16.mxu0 0
    %6695 = vmatpush1.bf16.msra.mxu0 0
    %6696 = vmatprep.subr.bf16.mxu0 0
    %6697 = vmatpush1.bf16.msra.mxu0 0
    %6698 = vmatprep.subr.bf16.mxu0 0
    %6699 = vmatpush1.bf16.msra.mxu0 0
    %6700 = vmatprep.subr.bf16.mxu0 0
    %6701 = vmatpush1.bf16.msra.mxu0 0
    %6702 = vmatprep.subr.bf16.mxu0 0
    %6703 = vmatpush1.bf16.msra.mxu0 0
    %6704 = vmatprep.subr.bf16.mxu0 0
    %6705 = vmatpush1.bf16.msra.mxu0 0
    %6706 = vmatprep.subr.bf16.mxu0 0
    %6707 = vmatpush1.bf16.msra.mxu0 0
    %6708 = vmatprep.subr.bf16.mxu0 0
    %6709 = vmatpush1.bf16.msra.mxu0 %v6692
    %6710 = vmatprep.subr.bf16.mxu0 0
    %6711 = vmatpush2.bf16.msra.mxu0 0
    %6712 = vmatprep.subr.bf16.mxu0 0
    %6713 = vmatpush2.bf16.msra.mxu0 0
    %6714 = vmatprep.subr.bf16.mxu0 0
    %6715 = vmatpush2.bf16.msra.mxu0 0
    %6716 = vmatprep.subr.bf16.mxu0 0
    %6717 = vmatpush2.bf16.msra.mxu0 0
    %6718 = vmatprep.subr.bf16.mxu0 0
    %6719 = vmatpush2.bf16.msra.mxu0 0
    %6720 = vmatprep.subr.bf16.mxu0 0
    %6721 = vmatpush2.bf16.msra.mxu0 0
    %6722 = vmatprep.subr.bf16.mxu0 0
    %6723 = vmatpush2.bf16.msra.mxu0 0
    %6724 = vmatprep.subr.bf16.mxu0 0
    %6725 = vmatpush2.bf16.msra.mxu0 0
    %6726 = vmatprep.mubr.bf16.mxu0 0
    %6727 = vmatmul.mubr.bf16.gmra.mxu0 %v6689
    %v6728 = vpop.f32.mrf.mxu0
    %v6729 = vadd.f32 0.0, %v6728
    %v6730 = vpop.f32.mrf.mxu0
    %v6731 = vpop.f32.mrf.mxu0
    %v6732 = vpop.f32.mrf.mxu0
    %6733 = vdwg.mxu0
    %v6734 = vpack.c.bf16 %v6729, %v6680
    %v6739 = vunpack.c.l.b16 %v6281
    %v6740 = vunpack.c.l.b16 %v6282
    %v6741 = vunpack.c.l.b16 %v6283
    %v6742 = vunpack.c.l.b16 %v6284
    %v6743 = vpack.c.b16 %v6740, %v6739
    %v6744 = vpack.c.b16 %v6742, %v6741
    %v6748 = vsel %vm149, %v6734, 0
    %6750 = vmatprep.subr.bf16.mxu0 0
    %6751 = vmatpush1.bf16.msra.mxu0 0
    %6752 = vmatprep.subr.bf16.mxu0 0
    %6753 = vmatpush1.bf16.msra.mxu0 0
    %6754 = vmatprep.subr.bf16.mxu0 0
    %6755 = vmatpush1.bf16.msra.mxu0 0
    %6756 = vmatprep.subr.bf16.mxu0 0
    %6757 = vmatpush1.bf16.msra.mxu0 0
    %6758 = vmatprep.subr.bf16.mxu0 0
    %6759 = vmatpush1.bf16.msra.mxu0 0
    %6760 = vmatprep.subr.bf16.mxu0 0
    %6761 = vmatpush1.bf16.msra.mxu0 0
    %6762 = vmatprep.subr.bf16.mxu0 0
    %6763 = vmatpush1.bf16.msra.mxu0 %v6744
    %6764 = vmatprep.subr.bf16.mxu0 0
    %6765 = vmatpush1.bf16.msra.mxu0 %v6743
    %6766 = vmatprep.subr.bf16.mxu0 0
    %6767 = vmatpush2.bf16.msra.mxu0 0
    %6768 = vmatprep.subr.bf16.mxu0 0
    %6769 = vmatpush2.bf16.msra.mxu0 0
    %6770 = vmatprep.subr.bf16.mxu0 0
    %6771 = vmatpush2.bf16.msra.mxu0 0
    %6772 = vmatprep.subr.bf16.mxu0 0
    %6773 = vmatpush2.bf16.msra.mxu0 0
    %6774 = vmatprep.subr.bf16.mxu0 0
    %6775 = vmatpush2.bf16.msra.mxu0 0
    %6776 = vmatprep.subr.bf16.mxu0 0
    %6777 = vmatpush2.bf16.msra.mxu0 0
    %6778 = vmatprep.subr.bf16.mxu0 0
    %6779 = vmatpush2.bf16.msra.mxu0 0
    %6780 = vmatprep.subr.bf16.mxu0 0
    %6781 = vmatpush2.bf16.msra.mxu0 0
    %6782 = vmatprep.mubr.bf16.mxu0 0
    %6783 = vmatmul.mubr.bf16.gmra.mxu0 %v6748
    %v6784 = vpop.f32.mrf.mxu0
    %v6785 = vadd.f32 0.0, %v6784
    %v6786 = vpop.f32.mrf.mxu0
    %v6787 = vpop.f32.mrf.mxu0
    %v6788 = vadd.f32 0.0, %v6787
    %v6789 = vpop.f32.mrf.mxu0
    %6790 = vdwg.mxu0
    %v6795 = vunpack.c.l.b16 %v6277
    %v6796 = vunpack.c.l.b16 %v6278
    %v6797 = vunpack.c.l.b16 %v6279
    %v6798 = vunpack.c.l.b16 %v6280
    %v6799 = vpack.c.b16 %v6796, %v6795
    %v6800 = vpack.c.b16 %v6798, %v6797
    %v6804 = vsel %vm149, %v6507, 0
    %6806 = vmatprep.subr.bf16.mxu0 0
    %6807 = vmatpush1.bf16.msra.mxu0 0
    %6808 = vmatprep.subr.bf16.mxu0 0
    %6809 = vmatpush1.bf16.msra.mxu0 0
    %6810 = vmatprep.subr.bf16.mxu0 0
    %6811 = vmatpush1.bf16.msra.mxu0 0
    %6812 = vmatprep.subr.bf16.mxu0 0
    %6813 = vmatpush1.bf16.msra.mxu0 0
    %6814 = vmatprep.subr.bf16.mxu0 0
    %6815 = vmatpush1.bf16.msra.mxu0 0
    %6816 = vmatprep.subr.bf16.mxu0 0
    %6817 = vmatpush1.bf16.msra.mxu0 0
    %6818 = vmatprep.subr.bf16.mxu0 0
    %6819 = vmatpush1.bf16.msra.mxu0 %v6800
    %6820 = vmatprep.subr.bf16.mxu0 0
    %6821 = vmatpush1.bf16.msra.mxu0 %v6799
    %6822 = vmatprep.subr.bf16.mxu0 0
    %6823 = vmatpush2.bf16.msra.mxu0 0
    %6824 = vmatprep.subr.bf16.mxu0 0
    %6825 = vmatpush2.bf16.msra.mxu0 0
    %6826 = vmatprep.subr.bf16.mxu0 0
    %6827 = vmatpush2.bf16.msra.mxu0 0
    %6828 = vmatprep.subr.bf16.mxu0 0
    %6829 = vmatpush2.bf16.msra.mxu0 0
    %6830 = vmatprep.subr.bf16.mxu0 0
    %6831 = vmatpush2.bf16.msra.mxu0 0
    %6832 = vmatprep.subr.bf16.mxu0 0
    %6833 = vmatpush2.bf16.msra.mxu0 0
    %6834 = vmatprep.subr.bf16.mxu0 0
    %6835 = vmatpush2.bf16.msra.mxu0 0
    %6836 = vmatprep.subr.bf16.mxu0 0
    %6837 = vmatpush2.bf16.msra.mxu0 0
    %6838 = vmatprep.mubr.bf16.mxu0 0
    %6839 = vmatmul.mubr.bf16.gmra.mxu0 %v6804
    %v6840 = vpop.f32.mrf.mxu0
    %v6841 = vadd.f32 %v6785, %v6840
    %v6842 = vpop.f32.mrf.mxu0
    %v6843 = vpop.f32.mrf.mxu0
    %v6844 = vadd.f32 %v6788, %v6843
    %v6845 = vpop.f32.mrf.mxu0
    %6846 = vdwg.mxu0
    %6847 = vrot.lane.b32.xlu0 %v6293, 64
    %v6848 = vpop.permute.xlu0 %6847
    %6849 = vrot.lane.b32.xlu0 %v6295, 64
    %v6850 = vpop.permute.xlu0 %6849
    %v6852 = vsel %vm149, %v6848, 0
    %v6855 = vsel %vm149, %v6850, 0
    %6857 = vmatprep.subr.bf16.mxu0 0
    %6858 = vmatpush1.bf16.xpose.msra.mxu0 0
    %6859 = vmatprep.subr.bf16.mxu0 0
    %6860 = vmatpush1.bf16.xpose.msra.mxu0 0
    %6861 = vmatprep.subr.bf16.mxu0 0
    %6862 = vmatpush1.bf16.xpose.msra.mxu0 0
    %6863 = vmatprep.subr.bf16.mxu0 0
    %6864 = vmatpush1.bf16.xpose.msra.mxu0 0
    %6865 = vmatprep.subr.bf16.mxu0 0
    %6866 = vmatpush1.bf16.xpose.msra.mxu0 0
    %6867 = vmatprep.subr.bf16.mxu0 0
    %6868 = vmatpush1.bf16.xpose.msra.mxu0 0
    %6869 = vmatprep.subr.bf16.mxu0 0
    %6870 = vmatpush1.bf16.xpose.msra.mxu0 0
    %6871 = vmatprep.subr.bf16.mxu0 0
    %6872 = vmatpush1.bf16.xpose.msra.mxu0 %v6855
    %6873 = vmatprep.subr.bf16.mxu0 0
    %6874 = vmatpush2.bf16.xpose.msra.mxu0 0
    %6875 = vmatprep.subr.bf16.mxu0 0
    %6876 = vmatpush2.bf16.xpose.msra.mxu0 0
    %6877 = vmatprep.subr.bf16.mxu0 0
    %6878 = vmatpush2.bf16.xpose.msra.mxu0 0
    %6879 = vmatprep.subr.bf16.mxu0 0
    %6880 = vmatpush2.bf16.xpose.msra.mxu0 0
    %6881 = vmatprep.subr.bf16.mxu0 0
    %6882 = vmatpush2.bf16.xpose.msra.mxu0 0
    %6883 = vmatprep.subr.bf16.mxu0 0
    %6884 = vmatpush2.bf16.xpose.msra.mxu0 0
    %6885 = vmatprep.subr.bf16.mxu0 0
    %6886 = vmatpush2.bf16.xpose.msra.mxu0 0
    %6887 = vmatprep.subr.bf16.mxu0 0
    %6888 = vmatpush2.bf16.xpose.msra.mxu0 0
    %6889 = vmatprep.mubr.bf16.mxu0 0
    %6890 = vmatmul.mubr.bf16.gmra.mxu0 %v6852
    %v6891 = vpop.f32.mrf.mxu0
    %v6892 = vadd.f32 0.0, %v6891
    %v6893 = vpop.f32.mrf.mxu0
    %v6894 = vpop.f32.mrf.mxu0
    %v6895 = vpop.f32.mrf.mxu0
    %6896 = vdwg.mxu0
    %6897 = vrot.lane.b32.xlu0 %v6294, 64
    %v6898 = vpop.permute.xlu0 %6897
    %6899 = vrot.lane.b32.xlu0 %v6296, 64
    %v6900 = vpop.permute.xlu0 %6899
    %v6902 = vsel %vm149, %v6898, 0
    %v6905 = vsel %vm149, %v6900, 0
    %6907 = vmatprep.subr.bf16.mxu0 0
    %6908 = vmatpush1.bf16.xpose.msra.mxu0 0
    %6909 = vmatprep.subr.bf16.mxu0 0
    %6910 = vmatpush1.bf16.xpose.msra.mxu0 0
    %6911 = vmatprep.subr.bf16.mxu0 0
    %6912 = vmatpush1.bf16.xpose.msra.mxu0 0
    %6913 = vmatprep.subr.bf16.mxu0 0
    %6914 = vmatpush1.bf16.xpose.msra.mxu0 0
    %6915 = vmatprep.subr.bf16.mxu0 0
    %6916 = vmatpush1.bf16.xpose.msra.mxu0 0
    %6917 = vmatprep.subr.bf16.mxu0 0
    %6918 = vmatpush1.bf16.xpose.msra.mxu0 0
    %6919 = vmatprep.subr.bf16.mxu0 0
    %6920 = vmatpush1.bf16.xpose.msra.mxu0 0
    %6921 = vmatprep.subr.bf16.mxu0 0
    %6922 = vmatpush1.bf16.xpose.msra.mxu0 %v6905
    %6923 = vmatprep.subr.bf16.mxu0 0
    %6924 = vmatpush2.bf16.xpose.msra.mxu0 0
    %6925 = vmatprep.subr.bf16.mxu0 0
    %6926 = vmatpush2.bf16.xpose.msra.mxu0 0
    %6927 = vmatprep.subr.bf16.mxu0 0
    %6928 = vmatpush2.bf16.xpose.msra.mxu0 0
    %6929 = vmatprep.subr.bf16.mxu0 0
    %6930 = vmatpush2.bf16.xpose.msra.mxu0 0
    %6931 = vmatprep.subr.bf16.mxu0 0
    %6932 = vmatpush2.bf16.xpose.msra.mxu0 0
    %6933 = vmatprep.subr.bf16.mxu0 0
    %6934 = vmatpush2.bf16.xpose.msra.mxu0 0
    %6935 = vmatprep.subr.bf16.mxu0 0
    %6936 = vmatpush2.bf16.xpose.msra.mxu0 0
    %6937 = vmatprep.subr.bf16.mxu0 0
    %6938 = vmatpush2.bf16.xpose.msra.mxu0 0
    %6939 = vmatprep.mubr.bf16.mxu0 0
    %6940 = vmatmul.mubr.bf16.gmra.mxu0 %v6902
    %v6941 = vpop.f32.mrf.mxu0
    %v6942 = vadd.f32 0.0, %v6941
    %v6943 = vpop.f32.mrf.mxu0
    %v6944 = vpop.f32.mrf.mxu0
    %v6945 = vpop.f32.mrf.mxu0
    %6946 = vdwg.mxu0
    %v6947 = vsel %vm970, %v6892, -inf
    %6948 = vmax.xlane.f32.xlu0 %v6947
    %v6949 = vpop.xlane.xlu0 %6948
    %v6950 = vsel %vm970, %v6942, -inf
    %6951 = vmax.xlane.f32.xlu0 %v6950
    %v6952 = vpop.xlane.xlu0 %6951
    %v6953 = vsub.f32 %v6892, %v6949
    %v6954 = vsub.f32 %v6942, %v6952
    %v6955 = vmul.f32 %v6953, 1.442695
    %v6956 = vpow.pop %v6955
    %v6957 = vmul.f32 %v6954, 1.442695
    %v6958 = vpow.pop %v6957
    %v6959 = vsel %vm970, %v6956, 0.0
    %6960 = vadd.xlane.f32.xlu0 %v6959
    %v6961 = vpop.xlane.xlu0 %6960
    %v6962 = vsel %vm970, %v6958, 0.0
    %6963 = vadd.xlane.f32.xlu0 %v6962
    %v6964 = vpop.xlane.xlu0 %6963
    %v6965 = vrcp.pop %v6961
    %v6966 = vrcp.pop %v6964
    %v6967 = vmul.f32 %v6956, %v6965
    %v6968 = vmul.f32 %v6958, %v6966
    %v6969 = vpack.c.bf16 %v6967, %v6967
    %v6970 = vpack.c.bf16 %v6968, %v6968
    %6971 = vrot.lane.b32.xlu0 %v6297, 64
    %v6972 = vpop.permute.xlu0 %6971
    %v6974 = vsel %vm970, %v6969, 0
    %v6977 = vsel %vm998, %v6972, 0
    %6979 = vmatprep.subr.bf16.mxu0 0
    %6980 = vmatpush1.bf16.msra.mxu0 0
    %6981 = vmatprep.subr.bf16.mxu0 0
    %6982 = vmatpush1.bf16.msra.mxu0 0
    %6983 = vmatprep.subr.bf16.mxu0 0
    %6984 = vmatpush1.bf16.msra.mxu0 0
    %6985 = vmatprep.subr.bf16.mxu0 0
    %6986 = vmatpush1.bf16.msra.mxu0 0
    %6987 = vmatprep.subr.bf16.mxu0 0
    %6988 = vmatpush1.bf16.msra.mxu0 0
    %6989 = vmatprep.subr.bf16.mxu0 0
    %6990 = vmatpush1.bf16.msra.mxu0 0
    %6991 = vmatprep.subr.bf16.mxu0 0
    %6992 = vmatpush1.bf16.msra.mxu0 0
    %6993 = vmatprep.subr.bf16.mxu0 0
    %6994 = vmatpush1.bf16.msra.mxu0 %v6977
    %6995 = vmatprep.subr.bf16.mxu0 0
    %6996 = vmatpush2.bf16.msra.mxu0 0
    %6997 = vmatprep.subr.bf16.mxu0 0
    %6998 = vmatpush2.bf16.msra.mxu0 0
    %6999 = vmatprep.subr.bf16.mxu0 0
    %7000 = vmatpush2.bf16.msra.mxu0 0
    %7001 = vmatprep.subr.bf16.mxu0 0
    %7002 = vmatpush2.bf16.msra.mxu0 0
    %7003 = vmatprep.subr.bf16.mxu0 0
    %7004 = vmatpush2.bf16.msra.mxu0 0
    %7005 = vmatprep.subr.bf16.mxu0 0
    %7006 = vmatpush2.bf16.msra.mxu0 0
    %7007 = vmatprep.subr.bf16.mxu0 0
    %7008 = vmatpush2.bf16.msra.mxu0 0
    %7009 = vmatprep.subr.bf16.mxu0 0
    %7010 = vmatpush2.bf16.msra.mxu0 0
    %7011 = vmatprep.mubr.bf16.mxu0 0
    %7012 = vmatmul.mubr.bf16.gmra.mxu0 %v6974
    %v7013 = vpop.f32.mrf.mxu0
    %v7014 = vadd.f32 0.0, %v7013
    %v7015 = vpop.f32.mrf.mxu0
    %v7016 = vpop.f32.mrf.mxu0
    %v7017 = vpop.f32.mrf.mxu0
    %7018 = vdwg.mxu0
    %7019 = vrot.lane.b32.xlu0 %v6298, 64
    %v7020 = vpop.permute.xlu0 %7019
    %v7022 = vsel %vm970, %v6970, 0
    %v7025 = vsel %vm998, %v7020, 0
    %7027 = vmatprep.subr.bf16.mxu0 0
    %7028 = vmatpush1.bf16.msra.mxu0 0
    %7029 = vmatprep.subr.bf16.mxu0 0
    %7030 = vmatpush1.bf16.msra.mxu0 0
    %7031 = vmatprep.subr.bf16.mxu0 0
    %7032 = vmatpush1.bf16.msra.mxu0 0
    %7033 = vmatprep.subr.bf16.mxu0 0
    %7034 = vmatpush1.bf16.msra.mxu0 0
    %7035 = vmatprep.subr.bf16.mxu0 0
    %7036 = vmatpush1.bf16.msra.mxu0 0
    %7037 = vmatprep.subr.bf16.mxu0 0
    %7038 = vmatpush1.bf16.msra.mxu0 0
    %7039 = vmatprep.subr.bf16.mxu0 0
    %7040 = vmatpush1.bf16.msra.mxu0 0
    %7041 = vmatprep.subr.bf16.mxu0 0
    %7042 = vmatpush1.bf16.msra.mxu0 %v7025
    %7043 = vmatprep.subr.bf16.mxu0 0
    %7044 = vmatpush2.bf16.msra.mxu0 0
    %7045 = vmatprep.subr.bf16.mxu0 0
    %7046 = vmatpush2.bf16.msra.mxu0 0
    %7047 = vmatprep.subr.bf16.mxu0 0
    %7048 = vmatpush2.bf16.msra.mxu0 0
    %7049 = vmatprep.subr.bf16.mxu0 0
    %7050 = vmatpush2.bf16.msra.mxu0 0
    %7051 = vmatprep.subr.bf16.mxu0 0
    %7052 = vmatpush2.bf16.msra.mxu0 0
    %7053 = vmatprep.subr.bf16.mxu0 0
    %7054 = vmatpush2.bf16.msra.mxu0 0
    %7055 = vmatprep.subr.bf16.mxu0 0
    %7056 = vmatpush2.bf16.msra.mxu0 0
    %7057 = vmatprep.subr.bf16.mxu0 0
    %7058 = vmatpush2.bf16.msra.mxu0 0
    %7059 = vmatprep.mubr.bf16.mxu0 0
    %7060 = vmatmul.mubr.bf16.gmra.mxu0 %v7022
    %v7061 = vpop.f32.mrf.mxu0
    %v7062 = vadd.f32 0.0, %v7061
    %v7063 = vpop.f32.mrf.mxu0
    %v7064 = vpop.f32.mrf.mxu0
    %v7065 = vpop.f32.mrf.mxu0
    %7066 = vdwg.mxu0
    %v7067 = vpack.c.bf16 %v7062, %v7014
    %v7072 = vunpack.c.l.b16 %v6285
    %v7073 = vunpack.c.l.b16 %v6286
    %v7074 = vunpack.c.l.b16 %v6287
    %v7075 = vunpack.c.l.b16 %v6288
    %v7076 = vpack.c.b16 %v7073, %v7072
    %v7077 = vpack.c.b16 %v7075, %v7074
    %v7081 = vsel %vm149, %v7067, 0
    %7083 = vmatprep.subr.bf16.mxu0 0
    %7084 = vmatpush1.bf16.msra.mxu0 0
    %7085 = vmatprep.subr.bf16.mxu0 0
    %7086 = vmatpush1.bf16.msra.mxu0 0
    %7087 = vmatprep.subr.bf16.mxu0 0
    %7088 = vmatpush1.bf16.msra.mxu0 0
    %7089 = vmatprep.subr.bf16.mxu0 0
    %7090 = vmatpush1.bf16.msra.mxu0 0
    %7091 = vmatprep.subr.bf16.mxu0 0
    %7092 = vmatpush1.bf16.msra.mxu0 0
    %7093 = vmatprep.subr.bf16.mxu0 0
    %7094 = vmatpush1.bf16.msra.mxu0 0
    %7095 = vmatprep.subr.bf16.mxu0 0
    %7096 = vmatpush1.bf16.msra.mxu0 %v7077
    %7097 = vmatprep.subr.bf16.mxu0 0
    %7098 = vmatpush1.bf16.msra.mxu0 %v7076
    %7099 = vmatprep.subr.bf16.mxu0 0
    %7100 = vmatpush2.bf16.msra.mxu0 0
    %7101 = vmatprep.subr.bf16.mxu0 0
    %7102 = vmatpush2.bf16.msra.mxu0 0
    %7103 = vmatprep.subr.bf16.mxu0 0
    %7104 = vmatpush2.bf16.msra.mxu0 0
    %7105 = vmatprep.subr.bf16.mxu0 0
    %7106 = vmatpush2.bf16.msra.mxu0 0
    %7107 = vmatprep.subr.bf16.mxu0 0
    %7108 = vmatpush2.bf16.msra.mxu0 0
    %7109 = vmatprep.subr.bf16.mxu0 0
    %7110 = vmatpush2.bf16.msra.mxu0 0
    %7111 = vmatprep.subr.bf16.mxu0 0
    %7112 = vmatpush2.bf16.msra.mxu0 0
    %7113 = vmatprep.subr.bf16.mxu0 0
    %7114 = vmatpush2.bf16.msra.mxu0 0
    %7115 = vmatprep.mubr.bf16.mxu0 0
    %7116 = vmatmul.mubr.bf16.gmra.mxu0 %v7081
    %v7117 = vpop.f32.mrf.mxu0
    %v7118 = vadd.f32 0.0, %v7117
    %v7119 = vpop.f32.mrf.mxu0
    %v7120 = vpop.f32.mrf.mxu0
    %v7121 = vadd.f32 0.0, %v7120
    %v7122 = vpop.f32.mrf.mxu0
    %7123 = vdwg.mxu0
    %v7124 = vadd.f32 %v6841, %v7118
    %v7125 = vadd.f32 %v6844, %v7121
    %7126 = vrot.lane.b32.xlu0 %v6293, 32
    %v7127 = vpop.permute.xlu0 %7126
    %7128 = vrot.lane.b32.xlu0 %v6295, 32
    %v7129 = vpop.permute.xlu0 %7128
    %v7131 = vsel %vm149, %v7127, 0
    %v7134 = vsel %vm149, %v7129, 0
    %7136 = vmatprep.subr.bf16.mxu0 0
    %7137 = vmatpush1.bf16.xpose.msra.mxu0 0
    %7138 = vmatprep.subr.bf16.mxu0 0
    %7139 = vmatpush1.bf16.xpose.msra.mxu0 0
    %7140 = vmatprep.subr.bf16.mxu0 0
    %7141 = vmatpush1.bf16.xpose.msra.mxu0 0
    %7142 = vmatprep.subr.bf16.mxu0 0
    %7143 = vmatpush1.bf16.xpose.msra.mxu0 0
    %7144 = vmatprep.subr.bf16.mxu0 0
    %7145 = vmatpush1.bf16.xpose.msra.mxu0 0
    %7146 = vmatprep.subr.bf16.mxu0 0
    %7147 = vmatpush1.bf16.xpose.msra.mxu0 0
    %7148 = vmatprep.subr.bf16.mxu0 0
    %7149 = vmatpush1.bf16.xpose.msra.mxu0 0
    %7150 = vmatprep.subr.bf16.mxu0 0
    %7151 = vmatpush1.bf16.xpose.msra.mxu0 %v7134
    %7152 = vmatprep.subr.bf16.mxu0 0
    %7153 = vmatpush2.bf16.xpose.msra.mxu0 0
    %7154 = vmatprep.subr.bf16.mxu0 0
    %7155 = vmatpush2.bf16.xpose.msra.mxu0 0
    %7156 = vmatprep.subr.bf16.mxu0 0
    %7157 = vmatpush2.bf16.xpose.msra.mxu0 0
    %7158 = vmatprep.subr.bf16.mxu0 0
    %7159 = vmatpush2.bf16.xpose.msra.mxu0 0
    %7160 = vmatprep.subr.bf16.mxu0 0
    %7161 = vmatpush2.bf16.xpose.msra.mxu0 0
    %7162 = vmatprep.subr.bf16.mxu0 0
    %7163 = vmatpush2.bf16.xpose.msra.mxu0 0
    %7164 = vmatprep.subr.bf16.mxu0 0
    %7165 = vmatpush2.bf16.xpose.msra.mxu0 0
    %7166 = vmatprep.subr.bf16.mxu0 0
    %7167 = vmatpush2.bf16.xpose.msra.mxu0 0
    %7168 = vmatprep.mubr.bf16.mxu0 0
    %7169 = vmatmul.mubr.bf16.gmra.mxu0 %v7131
    %v7170 = vpop.f32.mrf.mxu0
    %v7171 = vadd.f32 0.0, %v7170
    %v7172 = vpop.f32.mrf.mxu0
    %v7173 = vpop.f32.mrf.mxu0
    %v7174 = vpop.f32.mrf.mxu0
    %7175 = vdwg.mxu0
    %7176 = vrot.lane.b32.xlu0 %v6294, 32
    %v7177 = vpop.permute.xlu0 %7176
    %7178 = vrot.lane.b32.xlu0 %v6296, 32
    %v7179 = vpop.permute.xlu0 %7178
    %v7181 = vsel %vm149, %v7177, 0
    %v7184 = vsel %vm149, %v7179, 0
    %7186 = vmatprep.subr.bf16.mxu0 0
    %7187 = vmatpush1.bf16.xpose.msra.mxu0 0
    %7188 = vmatprep.subr.bf16.mxu0 0
    %7189 = vmatpush1.bf16.xpose.msra.mxu0 0
    %7190 = vmatprep.subr.bf16.mxu0 0
    %7191 = vmatpush1.bf16.xpose.msra.mxu0 0
    %7192 = vmatprep.subr.bf16.mxu0 0
    %7193 = vmatpush1.bf16.xpose.msra.mxu0 0
    %7194 = vmatprep.subr.bf16.mxu0 0
    %7195 = vmatpush1.bf16.xpose.msra.mxu0 0
    %7196 = vmatprep.subr.bf16.mxu0 0
    %7197 = vmatpush1.bf16.xpose.msra.mxu0 0
    %7198 = vmatprep.subr.bf16.mxu0 0
    %7199 = vmatpush1.bf16.xpose.msra.mxu0 0
    %7200 = vmatprep.subr.bf16.mxu0 0
    %7201 = vmatpush1.bf16.xpose.msra.mxu0 %v7184
    %7202 = vmatprep.subr.bf16.mxu0 0
    %7203 = vmatpush2.bf16.xpose.msra.mxu0 0
    %7204 = vmatprep.subr.bf16.mxu0 0
    %7205 = vmatpush2.bf16.xpose.msra.mxu0 0
    %7206 = vmatprep.subr.bf16.mxu0 0
    %7207 = vmatpush2.bf16.xpose.msra.mxu0 0
    %7208 = vmatprep.subr.bf16.mxu0 0
    %7209 = vmatpush2.bf16.xpose.msra.mxu0 0
    %7210 = vmatprep.subr.bf16.mxu0 0
    %7211 = vmatpush2.bf16.xpose.msra.mxu0 0
    %7212 = vmatprep.subr.bf16.mxu0 0
    %7213 = vmatpush2.bf16.xpose.msra.mxu0 0
    %7214 = vmatprep.subr.bf16.mxu0 0
    %7215 = vmatpush2.bf16.xpose.msra.mxu0 0
    %7216 = vmatprep.subr.bf16.mxu0 0
    %7217 = vmatpush2.bf16.xpose.msra.mxu0 0
    %7218 = vmatprep.mubr.bf16.mxu0 0
    %7219 = vmatmul.mubr.bf16.gmra.mxu0 %v7181
    %v7220 = vpop.f32.mrf.mxu0
    %v7221 = vadd.f32 0.0, %v7220
    %v7222 = vpop.f32.mrf.mxu0
    %v7223 = vpop.f32.mrf.mxu0
    %v7224 = vpop.f32.mrf.mxu0
    %7225 = vdwg.mxu0
    %v7226 = vsel %vm970, %v7171, -inf
    %7227 = vmax.xlane.f32.xlu0 %v7226
    %v7228 = vpop.xlane.xlu0 %7227
    %v7229 = vsel %vm970, %v7221, -inf
    %7230 = vmax.xlane.f32.xlu0 %v7229
    %v7231 = vpop.xlane.xlu0 %7230
    %v7232 = vsub.f32 %v7171, %v7228
    %v7233 = vsub.f32 %v7221, %v7231
    %v7234 = vmul.f32 %v7232, 1.442695
    %v7235 = vpow.pop %v7234
    %v7236 = vmul.f32 %v7233, 1.442695
    %v7237 = vpow.pop %v7236
    %v7238 = vsel %vm970, %v7235, 0.0
    %7239 = vadd.xlane.f32.xlu0 %v7238
    %v7240 = vpop.xlane.xlu0 %7239
    %v7241 = vsel %vm970, %v7237, 0.0
    %7242 = vadd.xlane.f32.xlu0 %v7241
    %v7243 = vpop.xlane.xlu0 %7242
    %v7244 = vrcp.pop %v7240
    %v7245 = vrcp.pop %v7243
    %v7246 = vmul.f32 %v7235, %v7244
    %v7247 = vmul.f32 %v7237, %v7245
    %v7248 = vpack.c.bf16 %v7246, %v7246
    %v7249 = vpack.c.bf16 %v7247, %v7247
    %7250 = vrot.lane.b32.xlu0 %v6297, 32
    %v7251 = vpop.permute.xlu0 %7250
    %v7253 = vsel %vm970, %v7248, 0
    %v7256 = vsel %vm998, %v7251, 0
    %7258 = vmatprep.subr.bf16.mxu0 0
    %7259 = vmatpush1.bf16.msra.mxu0 0
    %7260 = vmatprep.subr.bf16.mxu0 0
    %7261 = vmatpush1.bf16.msra.mxu0 0
    %7262 = vmatprep.subr.bf16.mxu0 0
    %7263 = vmatpush1.bf16.msra.mxu0 0
    %7264 = vmatprep.subr.bf16.mxu0 0
    %7265 = vmatpush1.bf16.msra.mxu0 0
    %7266 = vmatprep.subr.bf16.mxu0 0
    %7267 = vmatpush1.bf16.msra.mxu0 0
    %7268 = vmatprep.subr.bf16.mxu0 0
    %7269 = vmatpush1.bf16.msra.mxu0 0
    %7270 = vmatprep.subr.bf16.mxu0 0
    %7271 = vmatpush1.bf16.msra.mxu0 0
    %7272 = vmatprep.subr.bf16.mxu0 0
    %7273 = vmatpush1.bf16.msra.mxu0 %v7256
    %7274 = vmatprep.subr.bf16.mxu0 0
    %7275 = vmatpush2.bf16.msra.mxu0 0
    %7276 = vmatprep.subr.bf16.mxu0 0
    %7277 = vmatpush2.bf16.msra.mxu0 0
    %7278 = vmatprep.subr.bf16.mxu0 0
    %7279 = vmatpush2.bf16.msra.mxu0 0
    %7280 = vmatprep.subr.bf16.mxu0 0
    %7281 = vmatpush2.bf16.msra.mxu0 0
    %7282 = vmatprep.subr.bf16.mxu0 0
    %7283 = vmatpush2.bf16.msra.mxu0 0
    %7284 = vmatprep.subr.bf16.mxu0 0
    %7285 = vmatpush2.bf16.msra.mxu0 0
    %7286 = vmatprep.subr.bf16.mxu0 0
    %7287 = vmatpush2.bf16.msra.mxu0 0
    %7288 = vmatprep.subr.bf16.mxu0 0
    %7289 = vmatpush2.bf16.msra.mxu0 0
    %7290 = vmatprep.mubr.bf16.mxu0 0
    %7291 = vmatmul.mubr.bf16.gmra.mxu0 %v7253
    %v7292 = vpop.f32.mrf.mxu0
    %v7293 = vadd.f32 0.0, %v7292
    %v7294 = vpop.f32.mrf.mxu0
    %v7295 = vpop.f32.mrf.mxu0
    %v7296 = vpop.f32.mrf.mxu0
    %7297 = vdwg.mxu0
    %7298 = vrot.lane.b32.xlu0 %v6298, 32
    %v7299 = vpop.permute.xlu0 %7298
    %v7301 = vsel %vm970, %v7249, 0
    %v7304 = vsel %vm998, %v7299, 0
    %7306 = vmatprep.subr.bf16.mxu0 0
    %7307 = vmatpush1.bf16.msra.mxu0 0
    %7308 = vmatprep.subr.bf16.mxu0 0
    %7309 = vmatpush1.bf16.msra.mxu0 0
    %7310 = vmatprep.subr.bf16.mxu0 0
    %7311 = vmatpush1.bf16.msra.mxu0 0
    %7312 = vmatprep.subr.bf16.mxu0 0
    %7313 = vmatpush1.bf16.msra.mxu0 0
    %7314 = vmatprep.subr.bf16.mxu0 0
    %7315 = vmatpush1.bf16.msra.mxu0 0
    %7316 = vmatprep.subr.bf16.mxu0 0
    %7317 = vmatpush1.bf16.msra.mxu0 0
    %7318 = vmatprep.subr.bf16.mxu0 0
    %7319 = vmatpush1.bf16.msra.mxu0 0
    %7320 = vmatprep.subr.bf16.mxu0 0
    %7321 = vmatpush1.bf16.msra.mxu0 %v7304
    %7322 = vmatprep.subr.bf16.mxu0 0
    %7323 = vmatpush2.bf16.msra.mxu0 0
    %7324 = vmatprep.subr.bf16.mxu0 0
    %7325 = vmatpush2.bf16.msra.mxu0 0
    %7326 = vmatprep.subr.bf16.mxu0 0
    %7327 = vmatpush2.bf16.msra.mxu0 0
    %7328 = vmatprep.subr.bf16.mxu0 0
    %7329 = vmatpush2.bf16.msra.mxu0 0
    %7330 = vmatprep.subr.bf16.mxu0 0
    %7331 = vmatpush2.bf16.msra.mxu0 0
    %7332 = vmatprep.subr.bf16.mxu0 0
    %7333 = vmatpush2.bf16.msra.mxu0 0
    %7334 = vmatprep.subr.bf16.mxu0 0
    %7335 = vmatpush2.bf16.msra.mxu0 0
    %7336 = vmatprep.subr.bf16.mxu0 0
    %7337 = vmatpush2.bf16.msra.mxu0 0
    %7338 = vmatprep.mubr.bf16.mxu0 0
    %7339 = vmatmul.mubr.bf16.gmra.mxu0 %v7301
    %v7340 = vpop.f32.mrf.mxu0
    %v7341 = vadd.f32 0.0, %v7340
    %v7342 = vpop.f32.mrf.mxu0
    %v7343 = vpop.f32.mrf.mxu0
    %v7344 = vpop.f32.mrf.mxu0
    %7345 = vdwg.mxu0
    %v7346 = vpack.c.bf16 %v7341, %v7293
    %v7351 = vunpack.c.l.b16 %v6289
    %v7352 = vunpack.c.l.b16 %v6290
    %v7353 = vunpack.c.l.b16 %v6291
    %v7354 = vunpack.c.l.b16 %v6292
    %v7355 = vpack.c.b16 %v7352, %v7351
    %v7356 = vpack.c.b16 %v7354, %v7353
    %v7360 = vsel %vm149, %v7346, 0
    %7362 = vmatprep.subr.bf16.mxu0 0
    %7363 = vmatpush1.bf16.msra.mxu0 0
    %7364 = vmatprep.subr.bf16.mxu0 0
    %7365 = vmatpush1.bf16.msra.mxu0 0
    %7366 = vmatprep.subr.bf16.mxu0 0
    %7367 = vmatpush1.bf16.msra.mxu0 0
    %7368 = vmatprep.subr.bf16.mxu0 0
    %7369 = vmatpush1.bf16.msra.mxu0 0
    %7370 = vmatprep.subr.bf16.mxu0 0
    %7371 = vmatpush1.bf16.msra.mxu0 0
    %7372 = vmatprep.subr.bf16.mxu0 0
    %7373 = vmatpush1.bf16.msra.mxu0 0
    %7374 = vmatprep.subr.bf16.mxu0 0
    %7375 = vmatpush1.bf16.msra.mxu0 %v7356
    %7376 = vmatprep.subr.bf16.mxu0 0
    %7377 = vmatpush1.bf16.msra.mxu0 %v7355
    %7378 = vmatprep.subr.bf16.mxu0 0
    %7379 = vmatpush2.bf16.msra.mxu0 0
    %7380 = vmatprep.subr.bf16.mxu0 0
    %7381 = vmatpush2.bf16.msra.mxu0 0
    %7382 = vmatprep.subr.bf16.mxu0 0
    %7383 = vmatpush2.bf16.msra.mxu0 0
    %7384 = vmatprep.subr.bf16.mxu0 0
    %7385 = vmatpush2.bf16.msra.mxu0 0
    %7386 = vmatprep.subr.bf16.mxu0 0
    %7387 = vmatpush2.bf16.msra.mxu0 0
    %7388 = vmatprep.subr.bf16.mxu0 0
    %7389 = vmatpush2.bf16.msra.mxu0 0
    %7390 = vmatprep.subr.bf16.mxu0 0
    %7391 = vmatpush2.bf16.msra.mxu0 0
    %7392 = vmatprep.subr.bf16.mxu0 0
    %7393 = vmatpush2.bf16.msra.mxu0 0
    %7394 = vmatprep.mubr.bf16.mxu0 0
    %7395 = vmatmul.mubr.bf16.gmra.mxu0 %v7360
    %v7396 = vpop.f32.mrf.mxu0
    %v7397 = vadd.f32 0.0, %v7396
    %v7398 = vpop.f32.mrf.mxu0
    %v7399 = vpop.f32.mrf.mxu0
    %v7400 = vadd.f32 0.0, %v7399
    %v7401 = vpop.f32.mrf.mxu0
    %7402 = vdwg.mxu0
    %v7403 = vadd.f32 %v7124, %v7397
    %v7404 = vadd.f32 %v7125, %v7400
    %v7405 = vlaneseq
    %v7406 = vshrl.u32 %v7405, 7
    %v7407 = vsub.s32 0, %v7406
    %v7408 = vrot.slane %v6011, %v7407
    %v7409 = vadd.f32 %v7403, %v7408
    %v7410 = vadd.f32 %v7404, %v7408
    %v7411 = vadd.f32 %v6008, %v7409
    %v7412 = vadd.f32 %v6009, %v7410
    %7413 = vadd.xlane.f32.xlu0 %v7411
    %v7414 = vpop.xlane.xlu0 %7413
    %7415 = vadd.xlane.f32.xlu0 %v7412
    %v7416 = vpop.xlane.xlu0 %7415
    %v7417 = vmul.f32 %v7414, %v1998
    %v7418 = vmul.f32 %v7416, %v1998
    %v7419 = vsub.f32 %v7411, %v7417
    %v7420 = vsub.f32 %v7412, %v7418
    %v7421 = vmul.f32 %v7419, %v7419
    %v7422 = vmul.f32 %v7420, %v7420
    %7423 = vadd.xlane.f32.xlu0 %v7421
    %v7424 = vpop.xlane.xlu0 %7423
    %7425 = vadd.xlane.f32.xlu0 %v7422
    %v7426 = vpop.xlane.xlu0 %7425
    %v7427 = vmul.f32 %v7424, %v1998
    %v7428 = vmul.f32 %v7426, %v1998
    %v7429 = vadd.f32 %v7427, 1e-05
    %v7430 = vadd.f32 %v7428, 1e-05
    %v7431 = vrsqrt.pop %v7429
    %v7432 = vrsqrt.pop %v7430
    %v7433 = vmul.f32 %v7419, %v7431
    %v7434 = vmul.f32 %v7420, %v7432
    %v7435 = vlaneseq
    %v7436 = vshrl.u32 %v7435, 7
    %v7437 = vsub.s32 1, %v7436
    %v7438 = vrot.slane %v6011, %v7437
    %v7439 = vmul.f32 %v7433, %v7438
    %v7440 = vmul.f32 %v7434, %v7438
    %v7441 = vlaneseq
    %v7442 = vshrl.u32 %v7441, 7
    %v7443 = vsub.s32 2, %v7442
    %v7444 = vrot.slane %v6011, %v7443
    %v7445 = vadd.f32 %v7439, %v7444
    %v7446 = vadd.f32 %v7440, %v7444
    %v7447 = vpack.c.bf16 %v7446, %v7445
    %s7448 = scalar_lea.vmem [#allocation7], 384
    %v7449 = vld [vmem:[%s7448] sm:$0xff]
    %v7450 = vld [vmem:[%s7448 + $0x8] sm:$0xff]
    %v7451 = vld [vmem:[%s7448 + $0x10] sm:$0xff]
    %v7452 = vld [vmem:[%s7448 + $0x18] sm:$0xff]
    %v7453 = vld [vmem:[%s7448 + $0x20] sm:$0xff]
    %v7454 = vld [vmem:[%s7448 + $0x28] sm:$0xff]
    %v7455 = vld [vmem:[%s7448 + $0x30] sm:$0xff]
    %v7456 = vld [vmem:[%s7448 + $0x38] sm:$0xff]
    %v7457 = vld [vmem:[%s7448 + $0x40] sm:$0xff]
    %v7458 = vld [vmem:[%s7448 + $0x48] sm:$0xff]
    %v7459 = vld [vmem:[%s7448 + $0x50] sm:$0xff]
    %v7460 = vld [vmem:[%s7448 + $0x58] sm:$0xff]
    %v7461 = vld [vmem:[%s7448 + $0x60] sm:$0xff]
    %v7462 = vld [vmem:[%s7448 + $0x68] sm:$0xff]
    %v7463 = vld [vmem:[%s7448 + $0x70] sm:$0xff]
    %v7464 = vld [vmem:[%s7448 + $0x78] sm:$0xff]
    %s7465 = scalar_lea.vmem [#allocation8], 6
    %v7466 = vld [vmem:[%s7465] sm:$0x3]
    %v7468 = vlaneseq
    %v7469 = vshrl.u32 %v7468, 7
    %v7470 = vsub.s32 0, %v7469
    %v7471 = vrot.slane %v7466, %v7470
    %v7472 = vlaneseq
    %v7473 = vshrl.u32 %v7472, 7
    %v7474 = vsub.s32 1, %v7473
    %v7475 = vrot.slane %v7466, %v7474
    %v7494 = vunpack.c.l.b16 %v7449
    %v7495 = vunpack.c.h.b16 %v7449
    %v7496 = vunpack.c.l.b16 %v7450
    %v7497 = vunpack.c.h.b16 %v7450
    %v7498 = vunpack.c.l.b16 %v7451
    %v7499 = vunpack.c.h.b16 %v7451
    %v7500 = vunpack.c.l.b16 %v7452
    %v7501 = vunpack.c.h.b16 %v7452
    %v7502 = vunpack.c.l.b16 %v7453
    %v7503 = vunpack.c.h.b16 %v7453
    %v7504 = vunpack.c.l.b16 %v7454
    %v7505 = vunpack.c.h.b16 %v7454
    %v7506 = vunpack.c.l.b16 %v7455
    %v7507 = vunpack.c.h.b16 %v7455
    %v7508 = vunpack.c.l.b16 %v7456
    %v7509 = vunpack.c.h.b16 %v7456
    %v7510 = vunpack.c.l.b16 %v7457
    %v7511 = vunpack.c.h.b16 %v7457
    %v7512 = vunpack.c.l.b16 %v7458
    %v7513 = vunpack.c.h.b16 %v7458
    %v7514 = vunpack.c.l.b16 %v7459
    %v7515 = vunpack.c.h.b16 %v7459
    %v7516 = vunpack.c.l.b16 %v7460
    %v7517 = vunpack.c.h.b16 %v7460
    %v7518 = vunpack.c.l.b16 %v7461
    %v7519 = vunpack.c.h.b16 %v7461
    %v7520 = vunpack.c.l.b16 %v7462
    %v7521 = vunpack.c.h.b16 %v7462
    %v7522 = vunpack.c.l.b16 %v7463
    %v7523 = vunpack.c.h.b16 %v7463
    %v7524 = vunpack.c.l.b16 %v7464
    %v7525 = vunpack.c.h.b16 %v7464
    %v7526 = vpack.c.b16 %v7496, %v7494
    %v7527 = vpack.c.b16 %v7497, %v7495
    %v7528 = vpack.c.b16 %v7500, %v7498
    %v7529 = vpack.c.b16 %v7501, %v7499
    %v7530 = vpack.c.b16 %v7504, %v7502
    %v7531 = vpack.c.b16 %v7505, %v7503
    %v7532 = vpack.c.b16 %v7508, %v7506
    %v7533 = vpack.c.b16 %v7509, %v7507
    %v7534 = vpack.c.b16 %v7512, %v7510
    %v7535 = vpack.c.b16 %v7513, %v7511
    %v7536 = vpack.c.b16 %v7516, %v7514
    %v7537 = vpack.c.b16 %v7517, %v7515
    %v7538 = vpack.c.b16 %v7520, %v7518
    %v7539 = vpack.c.b16 %v7521, %v7519
    %v7540 = vpack.c.b16 %v7524, %v7522
    %v7541 = vpack.c.b16 %v7525, %v7523
    %7558 = vmatprep.subr.bf16.mxu0 %v7541
    %7559 = vmatpush1.bf16.msra.mxu0 %v7540
    %7560 = vmatprep.subr.bf16.mxu0 %v7539
    %7561 = vmatpush1.bf16.msra.mxu0 %v7538
    %7562 = vmatprep.subr.bf16.mxu0 %v7537
    %7563 = vmatpush1.bf16.msra.mxu0 %v7536
    %7564 = vmatprep.subr.bf16.mxu0 %v7535
    %7565 = vmatpush1.bf16.msra.mxu0 %v7534
    %7566 = vmatprep.subr.bf16.mxu0 %v7533
    %7567 = vmatpush1.bf16.msra.mxu0 %v7532
    %7568 = vmatprep.subr.bf16.mxu0 %v7531
    %7569 = vmatpush1.bf16.msra.mxu0 %v7530
    %7570 = vmatprep.subr.bf16.mxu0 %v7529
    %7571 = vmatpush1.bf16.msra.mxu0 %v7528
    %7572 = vmatprep.subr.bf16.mxu0 %v7527
    %7573 = vmatpush1.bf16.msra.mxu0 %v7526
    %7574 = vmatprep.subr.bf16.mxu0 0
    %7575 = vmatpush2.bf16.msra.mxu0 0
    %7576 = vmatprep.subr.bf16.mxu0 0
    %7577 = vmatpush2.bf16.msra.mxu0 0
    %7578 = vmatprep.subr.bf16.mxu0 0
    %7579 = vmatpush2.bf16.msra.mxu0 0
    %7580 = vmatprep.subr.bf16.mxu0 0
    %7581 = vmatpush2.bf16.msra.mxu0 0
    %7582 = vmatprep.subr.bf16.mxu0 0
    %7583 = vmatpush2.bf16.msra.mxu0 0
    %7584 = vmatprep.subr.bf16.mxu0 0
    %7585 = vmatpush2.bf16.msra.mxu0 0
    %7586 = vmatprep.subr.bf16.mxu0 0
    %7587 = vmatpush2.bf16.msra.mxu0 0
    %7588 = vmatprep.subr.bf16.mxu0 0
    %7589 = vmatpush2.bf16.msra.mxu0 0
    %7590 = vmatprep.mubr.bf16.mxu0 0
    %7591 = vmatmul.mubr.bf16.gmra.mxu0 %v7447
    %v7592 = vpop.f32.mrf.mxu0
    %v7593 = vadd.f32 %v7471, %v7592
    %v7594 = vpop.f32.mrf.mxu0
    %v7595 = vadd.f32 %v7475, %v7594
    %v7596 = vpop.f32.mrf.mxu0
    %v7597 = vadd.f32 %v7471, %v7596
    %v7598 = vpop.f32.mrf.mxu0
    %v7599 = vadd.f32 %v7475, %v7598
    %7600 = vdwg.mxu0
    %v7601 = vmax.f32 %v7593, 0.0
    %v7602 = vmax.f32 %v7595, 0.0
    %v7603 = vmax.f32 %v7597, 0.0
    %v7604 = vmax.f32 %v7599, 0.0
    %v7605 = vpack.c.bf16 %v7603, %v7601
    %v7606 = vpack.c.bf16 %v7604, %v7602
    %s7607 = scalar_lea.vmem [#allocation10], 384
    %v7608 = vld [vmem:[%s7607] sm:$0xf]
    %v7609 = vld [vmem:[%s7607 + $0x4] sm:$0xf]
    %v7610 = vld [vmem:[%s7607 + $0x8] sm:$0xf]
    %v7611 = vld [vmem:[%s7607 + $0xc] sm:$0xf]
    %v7612 = vld [vmem:[%s7607 + $0x10] sm:$0xf]
    %v7613 = vld [vmem:[%s7607 + $0x14] sm:$0xf]
    %v7614 = vld [vmem:[%s7607 + $0x18] sm:$0xf]
    %v7615 = vld [vmem:[%s7607 + $0x1c] sm:$0xf]
    %v7616 = vld [vmem:[%s7607 + $0x20] sm:$0xf]
    %v7617 = vld [vmem:[%s7607 + $0x24] sm:$0xf]
    %v7618 = vld [vmem:[%s7607 + $0x28] sm:$0xf]
    %v7619 = vld [vmem:[%s7607 + $0x2c] sm:$0xf]
    %v7620 = vld [vmem:[%s7607 + $0x30] sm:$0xf]
    %v7621 = vld [vmem:[%s7607 + $0x34] sm:$0xf]
    %v7622 = vld [vmem:[%s7607 + $0x38] sm:$0xf]
    %v7623 = vld [vmem:[%s7607 + $0x3c] sm:$0xf]
    %v7624 = vld [vmem:[%s7607 + $0x40] sm:$0xf]
    %v7625 = vld [vmem:[%s7607 + $0x44] sm:$0xf]
    %v7626 = vld [vmem:[%s7607 + $0x48] sm:$0xf]
    %v7627 = vld [vmem:[%s7607 + $0x4c] sm:$0xf]
    %v7628 = vld [vmem:[%s7607 + $0x50] sm:$0xf]
    %v7629 = vld [vmem:[%s7607 + $0x54] sm:$0xf]
    %v7630 = vld [vmem:[%s7607 + $0x58] sm:$0xf]
    %v7631 = vld [vmem:[%s7607 + $0x5c] sm:$0xf]
    %v7632 = vld [vmem:[%s7607 + $0x60] sm:$0xf]
    %v7633 = vld [vmem:[%s7607 + $0x64] sm:$0xf]
    %v7634 = vld [vmem:[%s7607 + $0x68] sm:$0xf]
    %v7635 = vld [vmem:[%s7607 + $0x6c] sm:$0xf]
    %v7636 = vld [vmem:[%s7607 + $0x70] sm:$0xf]
    %v7637 = vld [vmem:[%s7607 + $0x74] sm:$0xf]
    %v7638 = vld [vmem:[%s7607 + $0x78] sm:$0xf]
    %v7639 = vld [vmem:[%s7607 + $0x7c] sm:$0xf]
    %v7640 = vlaneseq
    %v7641 = vshrl.u32 %v7640, 7
    %v7642 = vsub.s32 3, %v7641
    %v7643 = vrot.slane %v6011, %v7642
    %v7676 = vunpack.c.l.b16 %v7608
    %v7677 = vunpack.c.l.b16 %v7609
    %v7678 = vunpack.c.l.b16 %v7610
    %v7679 = vunpack.c.l.b16 %v7611
    %v7680 = vunpack.c.l.b16 %v7612
    %v7681 = vunpack.c.l.b16 %v7613
    %v7682 = vunpack.c.l.b16 %v7614
    %v7683 = vunpack.c.l.b16 %v7615
    %v7684 = vunpack.c.l.b16 %v7616
    %v7685 = vunpack.c.l.b16 %v7617
    %v7686 = vunpack.c.l.b16 %v7618
    %v7687 = vunpack.c.l.b16 %v7619
    %v7688 = vunpack.c.l.b16 %v7620
    %v7689 = vunpack.c.l.b16 %v7621
    %v7690 = vunpack.c.l.b16 %v7622
    %v7691 = vunpack.c.l.b16 %v7623
    %v7692 = vunpack.c.l.b16 %v7624
    %v7693 = vunpack.c.l.b16 %v7625
    %v7694 = vunpack.c.l.b16 %v7626
    %v7695 = vunpack.c.l.b16 %v7627
    %v7696 = vunpack.c.l.b16 %v7628
    %v7697 = vunpack.c.l.b16 %v7629
    %v7698 = vunpack.c.l.b16 %v7630
    %v7699 = vunpack.c.l.b16 %v7631
    %v7700 = vunpack.c.l.b16 %v7632
    %v7701 = vunpack.c.l.b16 %v7633
    %v7702 = vunpack.c.l.b16 %v7634
    %v7703 = vunpack.c.l.b16 %v7635
    %v7704 = vunpack.c.l.b16 %v7636
    %v7705 = vunpack.c.l.b16 %v7637
    %v7706 = vunpack.c.l.b16 %v7638
    %v7707 = vunpack.c.l.b16 %v7639
    %v7708 = vpack.c.b16 %v7677, %v7676
    %v7709 = vpack.c.b16 %v7679, %v7678
    %v7710 = vpack.c.b16 %v7681, %v7680
    %v7711 = vpack.c.b16 %v7683, %v7682
    %v7712 = vpack.c.b16 %v7685, %v7684
    %v7713 = vpack.c.b16 %v7687, %v7686
    %v7714 = vpack.c.b16 %v7689, %v7688
    %v7715 = vpack.c.b16 %v7691, %v7690
    %v7716 = vpack.c.b16 %v7693, %v7692
    %v7717 = vpack.c.b16 %v7695, %v7694
    %v7718 = vpack.c.b16 %v7697, %v7696
    %v7719 = vpack.c.b16 %v7699, %v7698
    %v7720 = vpack.c.b16 %v7701, %v7700
    %v7721 = vpack.c.b16 %v7703, %v7702
    %v7722 = vpack.c.b16 %v7705, %v7704
    %v7723 = vpack.c.b16 %v7707, %v7706
    %7740 = vmatprep.subr.bf16.mxu0 0
    %7741 = vmatpush1.bf16.msra.mxu0 %v7715
    %7742 = vmatprep.subr.bf16.mxu0 0
    %7743 = vmatpush1.bf16.msra.mxu0 %v7714
    %7744 = vmatprep.subr.bf16.mxu0 0
    %7745 = vmatpush1.bf16.msra.mxu0 %v7713
    %7746 = vmatprep.subr.bf16.mxu0 0
    %7747 = vmatpush1.bf16.msra.mxu0 %v7712
    %7748 = vmatprep.subr.bf16.mxu0 0
    %7749 = vmatpush1.bf16.msra.mxu0 %v7711
    %7750 = vmatprep.subr.bf16.mxu0 0
    %7751 = vmatpush1.bf16.msra.mxu0 %v7710
    %7752 = vmatprep.subr.bf16.mxu0 0
    %7753 = vmatpush1.bf16.msra.mxu0 %v7709
    %7754 = vmatprep.subr.bf16.mxu0 0
    %7755 = vmatpush1.bf16.msra.mxu0 %v7708
    %7756 = vmatprep.subr.bf16.mxu0 0
    %7757 = vmatpush2.bf16.msra.mxu0 %v7723
    %7758 = vmatprep.subr.bf16.mxu0 0
    %7759 = vmatpush2.bf16.msra.mxu0 %v7722
    %7760 = vmatprep.subr.bf16.mxu0 0
    %7761 = vmatpush2.bf16.msra.mxu0 %v7721
    %7762 = vmatprep.subr.bf16.mxu0 0
    %7763 = vmatpush2.bf16.msra.mxu0 %v7720
    %7764 = vmatprep.subr.bf16.mxu0 0
    %7765 = vmatpush2.bf16.msra.mxu0 %v7719
    %7766 = vmatprep.subr.bf16.mxu0 0
    %7767 = vmatpush2.bf16.msra.mxu0 %v7718
    %7768 = vmatprep.subr.bf16.mxu0 0
    %7769 = vmatpush2.bf16.msra.mxu0 %v7717
    %7770 = vmatprep.subr.bf16.mxu0 0
    %7771 = vmatpush2.bf16.msra.mxu0 %v7716
    %7772 = vmatprep.mubr.bf16.mxu0 %v7606
    %7773 = vmatmul.mubr.bf16.gmra.mxu0 %v7605
    %v7774 = vpop.f32.mrf.mxu0
    %v7775 = vadd.f32 %v7643, %v7774
    %v7776 = vpop.f32.mrf.mxu0
    %v7777 = vpop.f32.mrf.mxu0
    %v7778 = vadd.f32 %v7643, %v7777
    %v7779 = vpop.f32.mrf.mxu0
    %7780 = vdwg.mxu0
    %v7781 = vadd.f32 %v7445, %v7775
    %v7782 = vadd.f32 %v7446, %v7778
    %7783 = vadd.xlane.f32.xlu0 %v7781
    %v7784 = vpop.xlane.xlu0 %7783
    %7785 = vadd.xlane.f32.xlu0 %v7782
    %v7786 = vpop.xlane.xlu0 %7785
    %v7787 = vmul.f32 %v7784, %v1998
    %v7788 = vmul.f32 %v7786, %v1998
    %v7789 = vsub.f32 %v7781, %v7787
    %v7790 = vsub.f32 %v7782, %v7788
    %v7791 = vmul.f32 %v7789, %v7789
    %v7792 = vmul.f32 %v7790, %v7790
    %7793 = vadd.xlane.f32.xlu0 %v7791
    %v7794 = vpop.xlane.xlu0 %7793
    %7795 = vadd.xlane.f32.xlu0 %v7792
    %v7796 = vpop.xlane.xlu0 %7795
    %v7797 = vmul.f32 %v7794, %v1998
    %v7798 = vmul.f32 %v7796, %v1998
    %v7799 = vadd.f32 %v7797, 1e-05
    %v7800 = vadd.f32 %v7798, 1e-05
    %v7801 = vrsqrt.pop %v7799
    %v7802 = vrsqrt.pop %v7800
    %v7803 = vmul.f32 %v7789, %v7801
    %v7804 = vmul.f32 %v7790, %v7802
    %v7805 = vlaneseq
    %v7806 = vshrl.u32 %v7805, 7
    %v7807 = vsub.s32 4, %v7806
    %v7808 = vrot.slane %v6011, %v7807
    %v7809 = vmul.f32 %v7803, %v7808
    %v7810 = vmul.f32 %v7804, %v7808
    %v7811 = vlaneseq
    %v7812 = vshrl.u32 %v7811, 7
    %v7813 = vsub.s32 5, %v7812
    %v7814 = vrot.slane %v6011, %v7813
    %v7815 = vadd.f32 %v7809, %v7814
    %v7816 = vadd.f32 %v7810, %v7814
    %v7817 = vrot.slane %v7815, 4
    %v7818 = vadd.f32 %v7815, %v7817
    %v7819 = vrot.slane %v7818, 2
    %v7820 = vadd.f32 %v7818, %v7819
    %v7821 = vrot.slane %v7820, 1
    %v7822 = vadd.f32 %v7820, %v7821
    %v7823 = vrot.slane %v7816, 4
    %v7824 = vadd.f32 %v7816, %v7823
    %v7825 = vrot.slane %v7824, 2
    %v7826 = vadd.f32 %v7824, %v7825
    %v7827 = vrot.slane %v7826, 1
    %v7828 = vadd.f32 %v7826, %v7827
    %v7829 = vrcp.pop 8.0
    %v7830 = vmul.f32 %v7822, %v7829
    %v7831 = vmul.f32 %v7828, %v7829
    %v7832 = vpack.c.bf16 %v7830, %v7830
    %v7833 = vpack.c.bf16 %v7831, %v7831
    %v7834 = vld [vmem:[%s12] sm:$0xf]
    %v7835 = vld [vmem:[%s12 + $0x4] sm:$0xf]
    %v7836 = vld [vmem:[%s12 + $0x8] sm:$0xf]
    %v7837 = vld [vmem:[%s12 + $0xc] sm:$0xf]
    %v7838 = vld [vmem:[%s12 + $0x10] sm:$0xf]
    %v7839 = vld [vmem:[%s12 + $0x14] sm:$0xf]
    %v7840 = vld [vmem:[%s12 + $0x18] sm:$0xf]
    %v7841 = vld [vmem:[%s12 + $0x1c] sm:$0xf]
    %v7842 = vld [vmem:[%s12 + $0x20] sm:$0xf]
    %v7843 = vld [vmem:[%s12 + $0x24] sm:$0xf]
    %v7844 = vld [vmem:[%s12 + $0x28] sm:$0xf]
    %v7845 = vld [vmem:[%s12 + $0x2c] sm:$0xf]
    %v7846 = vld [vmem:[%s12 + $0x30] sm:$0xf]
    %v7847 = vld [vmem:[%s12 + $0x34] sm:$0xf]
    %v7848 = vld [vmem:[%s12 + $0x38] sm:$0xf]
    %v7849 = vld [vmem:[%s12 + $0x3c] sm:$0xf]
    %v7850 = vlaneseq
    %v7851 = vshrl.u32 %v7850, 7
    %v7852 = vsub.s32 2, %v7851
    %v7853 = vrot.slane %v114, %v7852
    %v7856 = vunpack.c.l.b16 %v7832
    %v7857 = vunpack.c.l.b16 %v7833
    %v7858 = vsel %vm478, %v7857, %v7856
    %v7859 = vpack.c.b16 %v7858, %v7858
    %v7877 = vunpack.c.l.b16 %v7834
    %v7878 = vunpack.c.l.b16 %v7835
    %v7879 = vunpack.c.l.b16 %v7836
    %v7880 = vunpack.c.l.b16 %v7837
    %v7881 = vunpack.c.l.b16 %v7838
    %v7882 = vunpack.c.l.b16 %v7839
    %v7883 = vunpack.c.l.b16 %v7840
    %v7884 = vunpack.c.l.b16 %v7841
    %v7885 = vunpack.c.l.b16 %v7842
    %v7886 = vunpack.c.l.b16 %v7843
    %v7887 = vunpack.c.l.b16 %v7844
    %v7888 = vunpack.c.l.b16 %v7845
    %v7889 = vunpack.c.l.b16 %v7846
    %v7890 = vunpack.c.l.b16 %v7847
    %v7891 = vunpack.c.l.b16 %v7848
    %v7892 = vunpack.c.l.b16 %v7849
    %v7893 = vpack.c.b16 %v7878, %v7877
    %v7894 = vpack.c.b16 %v7880, %v7879
    %v7895 = vpack.c.b16 %v7882, %v7881
    %v7896 = vpack.c.b16 %v7884, %v7883
    %v7897 = vpack.c.b16 %v7886, %v7885
    %v7898 = vpack.c.b16 %v7888, %v7887
    %v7899 = vpack.c.b16 %v7890, %v7889
    %v7900 = vpack.c.b16 %v7892, %v7891
    %7909 = vmatprep.subr.bf16.mxu0 0
    %7910 = vmatpush1.bf16.msra.mxu0 %v7900
    %7911 = vmatprep.subr.bf16.mxu0 0
    %7912 = vmatpush1.bf16.msra.mxu0 %v7899
    %7913 = vmatprep.subr.bf16.mxu0 0
    %7914 = vmatpush1.bf16.msra.mxu0 %v7898
    %7915 = vmatprep.subr.bf16.mxu0 0
    %7916 = vmatpush1.bf16.msra.mxu0 %v7897
    %7917 = vmatprep.subr.bf16.mxu0 0
    %7918 = vmatpush1.bf16.msra.mxu0 %v7896
    %7919 = vmatprep.subr.bf16.mxu0 0
    %7920 = vmatpush1.bf16.msra.mxu0 %v7895
    %7921 = vmatprep.subr.bf16.mxu0 0
    %7922 = vmatpush1.bf16.msra.mxu0 %v7894
    %7923 = vmatprep.subr.bf16.mxu0 0
    %7924 = vmatpush1.bf16.msra.mxu0 %v7893
    %7925 = vmatprep.subr.bf16.mxu0 0
    %7926 = vmatpush2.bf16.msra.mxu0 0
    %7927 = vmatprep.subr.bf16.mxu0 0
    %7928 = vmatpush2.bf16.msra.mxu0 0
    %7929 = vmatprep.subr.bf16.mxu0 0
    %7930 = vmatpush2.bf16.msra.mxu0 0
    %7931 = vmatprep.subr.bf16.mxu0 0
    %7932 = vmatpush2.bf16.msra.mxu0 0
    %7933 = vmatprep.subr.bf16.mxu0 0
    %7934 = vmatpush2.bf16.msra.mxu0 0
    %7935 = vmatprep.subr.bf16.mxu0 0
    %7936 = vmatpush2.bf16.msra.mxu0 0
    %7937 = vmatprep.subr.bf16.mxu0 0
    %7938 = vmatpush2.bf16.msra.mxu0 0
    %7939 = vmatprep.subr.bf16.mxu0 0
    %7940 = vmatpush2.bf16.msra.mxu0 0
    %7941 = vmatprep.mubr.bf16.mxu0 0
    %7942 = vmatmul.mubr.bf16.gmra.mxu0 %v7859
    %v7943 = vpop.f32.mrf.mxu0
    %v7944 = vadd.f32 %v7853, %v7943
    %v7945 = vpop.f32.mrf.mxu0
    %v7946 = vpop.f32.mrf.mxu0
    %v7947 = vpop.f32.mrf.mxu0
    %7948 = vdwg.mxu0
    %v7951 = vunpack.c.l.s4 1966171168
    %v7952 = vunpack.c.0.s8 %v7951
    %v7953 = vlaneseq
    %v7954 = vshrl.u32 %v7953, 7
    %v7955 = vsub.s32 %v7952, %v7954
    %v7956 = vrot.slane %v7944, %v7955
    %v7957 = vcombine.high %v7956, %v7956
    %v7959 = vunpack.c.l.s4 1966171168
    %v7960 = vunpack.c.0.s8 %v7959
    %v7961 = vlaneseq
    %v7962 = vshrl.u32 %v7961, 7
    %v7963 = vsub.s32 %v7960, %v7962
    %v7964 = vrot.slane %v7956, %v7963
    %v7966 = vunpack.c.l.s4 1966171168
    %v7967 = vunpack.c.0.s8 %v7966
    %v7968 = vlaneseq
    %v7969 = vshrl.u32 %v7968, 7
    %v7970 = vsub.s32 %v7967, %v7969
    %v7971 = vrot.slane %v7957, %v7970
    %7974 = vst [vmem:[#allocation11] sm:$0x1] %v7964
    %7975 = vst [vmem:[#allocation11 + $0x1] sm:$0x1] %v7971
    // Predicated region
    $region74: #{transformer_classifier_forward.1} parent=1 // pred_check
      _
    $region75: #{transformer_classifier_forward.1} parent=1 // pred_check_branch
      %7977 = sbr.rel (0) target = $region77
    $region76: #{transformer_classifier_forward.1} parent=1 // pred_region
      %s7979 = ssub.s32 32, 32
      %7980 = vsyncadd [#allocation4], %s7979
      %s7981 = sshll.u32 [#allocation11], 4
      %s7982 = int_to_ptr.vmem [resolvable:$true] %s7981
      %7987 = dma.vmem_to_hbm [thread:$0]  %s7982, 32, %s13, [#allocation4], 16, 16, 1
    $region77: #{transformer_classifier_forward.1} parent=1 // pred_fallthru
      _
    // Predicated region
    $region78: #{transformer_classifier_forward.1} parent=1 // pred_check
      _
    $region79: #{transformer_classifier_forward.1} parent=1 // pred_check_branch
      %7989 = sbr.rel (0) target = $region81
    $region80: #{transformer_classifier_forward.1} parent=1 // pred_region
      %7990 = dma.done [#allocation4], 32
    $region81: #{transformer_classifier_forward.1} parent=1 // pred_fallthru
      _
    %7991 = vsyncpa [#allocation3], 1
    %7992 = vsyncpa [#allocation6], 1
    %7993 = vsyncpa [#allocation9], 1
    %7994 = vsyncpa [#allocation4], 1

</llo_original>
